<compile_context>
chip_gen: v7x
topology: tpu7x:2x2x1
jax: 0.10.0
libtpu: 0.0.40
codegen_flags: <defaults>
</compile_context>

<pallas_src>
import functools

import jax
import jax.numpy as jnp
from jax.experimental import pallas as pl
from jax.experimental.pallas import tpu as pltpu


# ------------------------------ Pallas kernel -------------------------------

def _chamfer_l1_kernel(xt_ref, yt_ref, o_ref, *, n1, n2, inv_batch, dim):
    """One grid step processes TB point clouds.

    xt_ref: (TB, D, n1)  x transposed, lane-dense along n1
    yt_ref: (TB, D, n2)  y transposed, lane-dense along n2
    o_ref:  (1, 1)       running sum of per-cloud chamfer / B  (revisited block)
    """
    step = pl.program_id(0)

    @pl.when(step == 0)
    def _():
        o_ref[...] = jnp.zeros_like(o_ref)

    xt = xt_ref[...].astype(jnp.float32)            # (TB, D, n1)
    yt = yt_ref[...].astype(jnp.float32)            # (TB, D, n2)

    # L1 pairwise distances, accumulated coordinate-by-coordinate on the VPU.
    d = jnp.abs(xt[:, 0, :, None] - yt[:, 0, None, :])          # (TB, n1, n2)
    for k in range(1, dim):
        d = d + jnp.abs(xt[:, k, :, None] - yt[:, k, None, :])

    m1 = jnp.min(d, axis=2)                          # (TB, n1) nearest in y for each x
    m2 = jnp.min(d, axis=1)                          # (TB, n2) nearest in x for each y

    # per-cloud: mean over points of each direction, summed
    per_cloud = (jnp.sum(m1, axis=1, keepdims=True) * (1.0 / n1)
                 + jnp.sum(m2, axis=1, keepdims=True) * (1.0 / n2))   # (TB, 1)

    # accumulate (already divided by B) into the resident output block
    o_ref[...] += jnp.sum(per_cloud, axis=0, keepdims=True) * inv_batch


def _pick_block_batch(batch, n1, n2):
    """Largest divisor of `batch` whose (tb, n1, n2) f32 distance block stays ~8 MiB."""
    budget = 8 * 1024 * 1024
    max_tb = max(1, budget // (n1 * n2 * 4))
    tb = int(min(batch, max_tb))
    while batch % tb != 0:
        tb -= 1
    return tb


def chamfer_distance_l1(x, y, *, block_batch=None):
    """Symmetric L1 chamfer distance (scalar).  x: (B, N1, D), y: (B, N2, D)."""
    B, n1, D = x.shape
    B2, n2, D2 = y.shape
    assert B == B2 and D == D2, "batch / coordinate dims must match"

    # layout plumbing in the wrapper: lane-dense (B, D, N) presentation for the kernel
    xt = jnp.transpose(x, (0, 2, 1))                 # (B, D, n1)
    yt = jnp.transpose(y, (0, 2, 1))                 # (B, D, n2)

    tb = block_batch if block_batch is not None else _pick_block_batch(B, n1, n2)
    assert B % tb == 0, "block_batch must divide the batch"
    grid = (B // tb,)

    out = pl.pallas_call(
        functools.partial(_chamfer_l1_kernel, n1=n1, n2=n2, inv_batch=1.0 / B, dim=D),
        out_shape=jax.ShapeDtypeStruct((1, 1), jnp.float32),
        grid=grid,
        in_specs=[
            pl.BlockSpec((tb, D, n1), lambda i: (i, 0, 0)),
            pl.BlockSpec((tb, D, n2), lambda i: (i, 0, 0)),
        ],
        # same block every step -> VMEM-resident accumulator, single HBM writeback
        out_specs=pl.BlockSpec((1, 1), lambda i: (0, 0)),
        compiler_params=pltpu.CompilerParams(
            # reduction axis (output accumulates across steps) -> must be "arbitrary"
            dimension_semantics=("arbitrary",),
            vmem_limit_bytes=32 * 1024 * 1024,
        ),
    )(xt, yt)
    return out[0, 0]


# ------------------------------ JAX reference --------------------------------

def chamfer_l1_reference(x, y):
    d = jnp.sum(jnp.abs(x[:, :, None, :] - y[:, None, :, :]), axis=-1)   # (B, N1, N2)
    return jnp.mean(jnp.min(d, axis=2)) + jnp.mean(jnp.min(d, axis=1))


# ---------------------------------- main -------------------------------------

if __name__ == "__main__":
    key = jax.random.PRNGKey(0)
    kx, ky = jax.random.split(key)
    B, N1, N2, D = 16, 128, 96, 3
    x = jax.random.normal(kx, (B, N1, D), dtype=jnp.float32)
    y = jax.random.normal(ky, (B, N2, D), dtype=jnp.float32)

    # default: VMEM-budgeted batch block (single grid step here)
    loss = jax.jit(chamfer_distance_l1)(x, y)
    jax.block_until_ready(loss)

    # also exercise the multi-step accumulator path (4 clouds per step, 4 steps)
    loss_tiled = jax.jit(functools.partial(chamfer_distance_l1, block_batch=4))(x, y)
    jax.block_until_ready(loss_tiled)

    ref = chamfer_l1_reference(x, y)
    assert loss.shape == () and bool(jnp.isfinite(loss))
    assert bool(jnp.allclose(loss, ref, rtol=1e-5, atol=1e-5))
    assert bool(jnp.allclose(loss_tiled, ref, rtol=1e-5, atol=1e-5))
    print("KERNEL_OK")
</pallas_src>

<mosaic_0001>
module attributes {stable_mosaic.version = 11 : i64} {
  func.func @_chamfer_l1_kernel(%arg0: i32, %arg1: memref<16x3x128xf32, #tpu.memory_space<vmem>>, %arg2: memref<16x3x96xf32, #tpu.memory_space<vmem>>, %arg3: memref<1x1xf32, #tpu.memory_space<vmem>>) attributes {dimension_semantics = [#tpu.dimension_semantics<arbitrary>], iteration_bounds = array<i64: 1>, scalar_prefetch = 0 : i64, scratch_operands = 0 : i64, tpu.core_type = #tpu.core_type<tc>, window_params = [{transform_indices = @transform_0, window_bounds = array<i64: 16, 3, 128>}, {transform_indices = @transform_1, window_bounds = array<i64: 16, 3, 96>}, {pipeline_mode = #tpu.pipeline_mode<synchronous>, transform_indices = @transform_2, window_bounds = array<i64: 1, 1>}]} {
    %c0_i32 = arith.constant 0 : i32
    %0 = arith.cmpi eq, %arg0, %c0_i32 : i32
    %1 = arith.extui %0 : i1 to i32
    %c0_i32_0 = arith.constant 0 : i32
    %2 = arith.cmpi ne, %1, %c0_i32_0 : i32
    scf.if %2 {
      %cst_17 = arith.constant 0.000000e+00 : f32
      %55 = vector.broadcast %cst_17 : f32 to vector<1x1xf32>
      %c0_18 = arith.constant 0 : index
      %c0_19 = arith.constant 0 : index
      %56 = vector.load %arg3[%c0_18, %c0_19] : memref<1x1xf32, #tpu.memory_space<vmem>>, vector<1x1xf32>
      tpu.vector_store %arg3[%c0_18, %c0_19], %55 {strides = array<i32>} : memref<1x1xf32, #tpu.memory_space<vmem>>, vector<1x1xf32>,
    } else {
    }
    %c0 = arith.constant 0 : index
    %c0_1 = arith.constant 0 : index
    %c0_2 = arith.constant 0 : index
    %3 = vector.load %arg1[%c0, %c0_1, %c0_2] : memref<16x3x128xf32, #tpu.memory_space<vmem>>, vector<16x3x128xf32>
    %c0_3 = arith.constant 0 : index
    %c0_4 = arith.constant 0 : index
    %c0_5 = arith.constant 0 : index
    %4 = vector.load %arg2[%c0_3, %c0_4, %c0_5] : memref<16x3x96xf32, #tpu.memory_space<vmem>>, vector<16x3x96xf32>
    %5 = vector.extract_strided_slice %3 {offsets = [0, 0, 0], sizes = [16, 1, 128], strides = [1, 1, 1]} : vector<16x3x128xf32> to vector<16x1x128xf32>
    %6 = vector.shape_cast %5 : vector<16x1x128xf32> to vector<16x128xf32>
    %7 = vector.shape_cast %6 : vector<16x128xf32> to vector<16x128x1xf32>
    %8 = vector.extract_strided_slice %4 {offsets = [0, 0, 0], sizes = [16, 1, 96], strides = [1, 1, 1]} : vector<16x3x96xf32> to vector<16x1x96xf32>
    %9 = vector.shape_cast %8 : vector<16x1x96xf32> to vector<16x96xf32>
    %10 = vector.shape_cast %9 : vector<16x96xf32> to vector<16x1x96xf32>
    %11 = vector.broadcast %7 : vector<16x128x1xf32> to vector<16x128x96xf32>
    %12 = vector.broadcast %10 : vector<16x1x96xf32> to vector<16x128x96xf32>
    %13 = arith.subf %11, %12 : vector<16x128x96xf32>
    %14 = math.absf %13 : vector<16x128x96xf32>
    %15 = vector.extract_strided_slice %3 {offsets = [0, 1, 0], sizes = [16, 1, 128], strides = [1, 1, 1]} : vector<16x3x128xf32> to vector<16x1x128xf32>
    %16 = vector.shape_cast %15 : vector<16x1x128xf32> to vector<16x128xf32>
    %17 = vector.shape_cast %16 : vector<16x128xf32> to vector<16x128x1xf32>
    %18 = vector.extract_strided_slice %4 {offsets = [0, 1, 0], sizes = [16, 1, 96], strides = [1, 1, 1]} : vector<16x3x96xf32> to vector<16x1x96xf32>
    %19 = vector.shape_cast %18 : vector<16x1x96xf32> to vector<16x96xf32>
    %20 = vector.shape_cast %19 : vector<16x96xf32> to vector<16x1x96xf32>
    %21 = vector.broadcast %17 : vector<16x128x1xf32> to vector<16x128x96xf32>
    %22 = vector.broadcast %20 : vector<16x1x96xf32> to vector<16x128x96xf32>
    %23 = arith.subf %21, %22 : vector<16x128x96xf32>
    %24 = math.absf %23 : vector<16x128x96xf32>
    %25 = arith.addf %14, %24 : vector<16x128x96xf32>
    %26 = vector.extract_strided_slice %3 {offsets = [0, 2, 0], sizes = [16, 1, 128], strides = [1, 1, 1]} : vector<16x3x128xf32> to vector<16x1x128xf32>
    %27 = vector.shape_cast %26 : vector<16x1x128xf32> to vector<16x128xf32>
    %28 = vector.shape_cast %27 : vector<16x128xf32> to vector<16x128x1xf32>
    %29 = vector.extract_strided_slice %4 {offsets = [0, 2, 0], sizes = [16, 1, 96], strides = [1, 1, 1]} : vector<16x3x96xf32> to vector<16x1x96xf32>
    %30 = vector.shape_cast %29 : vector<16x1x96xf32> to vector<16x96xf32>
    %31 = vector.shape_cast %30 : vector<16x96xf32> to vector<16x1x96xf32>
    %32 = vector.broadcast %28 : vector<16x128x1xf32> to vector<16x128x96xf32>
    %33 = vector.broadcast %31 : vector<16x1x96xf32> to vector<16x128x96xf32>
    %34 = arith.subf %32, %33 : vector<16x128x96xf32>
    %35 = math.absf %34 : vector<16x128x96xf32>
    %36 = arith.addf %25, %35 : vector<16x128x96xf32>
    %cst = arith.constant dense<0x7F800000> : vector<16x128xf32>
    %37 = vector.multi_reduction <minimumf>, %36, %cst [2] : vector<16x128x96xf32> to vector<16x128xf32>
    %cst_6 = arith.constant dense<0x7F800000> : vector<16x96xf32>
    %38 = vector.multi_reduction <minimumf>, %36, %cst_6 [1] : vector<16x128x96xf32> to vector<16x96xf32>
    %cst_7 = arith.constant dense<0.000000e+00> : vector<16xf32>
    %39 = vector.multi_reduction <add>, %37, %cst_7 [1] : vector<16x128xf32> to vector<16xf32>
    %40 = vector.shape_cast %39 : vector<16xf32> to vector<16x1xf32>
    %cst_8 = arith.constant 7.812500e-03 : f32
    %41 = vector.broadcast %cst_8 : f32 to vector<16x1xf32>
    %42 = arith.mulf %40, %41 : vector<16x1xf32>
    %cst_9 = arith.constant dense<0.000000e+00> : vector<16xf32>
    %43 = vector.multi_reduction <add>, %38, %cst_9 [1] : vector<16x96xf32> to vector<16xf32>
    %44 = vector.shape_cast %43 : vector<16xf32> to vector<16x1xf32>
    %cst_10 = arith.constant 0.010416667 : f32
    %45 = vector.broadcast %cst_10 : f32 to vector<16x1xf32>
    %46 = arith.mulf %44, %45 : vector<16x1xf32>
    %47 = arith.addf %42, %46 : vector<16x1xf32>
    %c0_11 = arith.constant 0 : index
    %c0_12 = arith.constant 0 : index
    %48 = vector.load %arg3[%c0_11, %c0_12] : memref<1x1xf32, #tpu.memory_space<vmem>>, vector<1x1xf32>
    %cst_13 = arith.constant dense<0.000000e+00> : vector<1xf32>
    %49 = vector.multi_reduction <add>, %47, %cst_13 [0] : vector<16x1xf32> to vector<1xf32>
    %50 = vector.shape_cast %49 : vector<1xf32> to vector<1x1xf32>
    %cst_14 = arith.constant 6.250000e-02 : f32
    %51 = vector.broadcast %cst_14 : f32 to vector<1x1xf32>
    %52 = arith.mulf %50, %51 : vector<1x1xf32>
    %53 = arith.addf %48, %52 : vector<1x1xf32>
    %c0_15 = arith.constant 0 : index
    %c0_16 = arith.constant 0 : index
    %54 = vector.load %arg3[%c0_15, %c0_16] : memref<1x1xf32, #tpu.memory_space<vmem>>, vector<1x1xf32>
    tpu.vector_store %arg3[%c0_15, %c0_16], %53 {strides = array<i32>} : memref<1x1xf32, #tpu.memory_space<vmem>>, vector<1x1xf32>,
    return
  }
  func.func @transform_0(%arg0: i32) -> (i32, i32, i32) {
    %c0_i32 = arith.constant 0 : i32
    %c0_i32_0 = arith.constant 0 : i32
    %c0_i32_1 = arith.constant 0 : i32
    return %arg0, %c0_i32, %c0_i32_0 : i32, i32, i32
  }
  func.func @transform_1(%arg0: i32) -> (i32, i32, i32) {
    %c0_i32 = arith.constant 0 : i32
    %c0_i32_0 = arith.constant 0 : i32
    %c0_i32_1 = arith.constant 0 : i32
    return %arg0, %c0_i32, %c0_i32_0 : i32, i32, i32
  }
  func.func @transform_2(%arg0: i32) -> (i32, i32) {
    %c0_i32 = arith.constant 0 : i32
    %c0_i32_0 = arith.constant 0 : i32
    %c0_i32_1 = arith.constant 0 : i32
    return %c0_i32, %c0_i32_0 : i32, i32
  }
}

</mosaic_0001>

<llo_original>
// kernel: chamfer_distance_l1.1
$region0: #{chamfer_distance_l1.1}
  #allocation0 [shape = 'u32[]', space=smem, size = 0x4, offset = 0x4, fixed_abs, tag = 'smem constant byte address 0x4 - core index']
  #allocation1 [shape = 'u32[144,128]{1,0:T(1,128)}', space=vmem, size = 0x12000, scoped, tag = 'internal scratch']
  %s0 = inlined_call_operand.vmem [shape: f32[16,3,128], index: 0, kind: input, shape index: {}]
  %s1 = inlined_call_operand.vmem [shape: f32[16,3,96], index: 1, kind: input, shape index: {}]
  %s2 = inlined_call_operand.hbm [shape: f32[1,1], index: 2, kind: output, shape index: {}]
  %s3 = sld [smem:[#allocation0]]
  $region22: #{chamfer_distance_l1.1} parent=0
    _
  %s5 = ssub.s32 1, %s3
  %s6 = scalar_select 0, %s5, %s3
  $region1: #{chamfer_distance_l1.1} parent=0
    #allocation2 [shape = 'u8[512]{0}', space=vmem, size = 0x400, scoped, tag = 'output window, operand 0, single buffered']
    #allocation3 [shape = 's32[1]{0}', space=sflag, size = 0x4, scoped, tag = 'scoped memory for chamfer_distance_l1.1']
    %7 = vsyncpa [#allocation3], 0
    // Predicated region
    $region2: #{chamfer_distance_l1.1} parent=1 // pred_check
      _
    $region3: #{chamfer_distance_l1.1} parent=1 // pred_check_branch
      %9 = sbr.rel (0) target = $region5
    $region4: #{chamfer_distance_l1.1} parent=1 // pred_region
      _
    $region5: #{chamfer_distance_l1.1} parent=1 // pred_fallthru
      _
    // Predicated region
    $region6: #{chamfer_distance_l1.1} parent=1 // pred_check
      _
    $region7: #{chamfer_distance_l1.1} parent=1 // pred_check_branch
      %11 = sbr.rel (0) target = $region9
    $region8: #{chamfer_distance_l1.1} parent=1 // pred_region
      _
    $region9: #{chamfer_distance_l1.1} parent=1 // pred_fallthru
      _
    %p12 = scmp.eq.s32.totalorder 0, 0
    // Predicated region
    $region10: #{chamfer_distance_l1.1} parent=1 // pred_check
      %p13 = pneg %p12
    $region11: #{chamfer_distance_l1.1} parent=1 // pred_check_branch
      %15 = sbr.rel (%p13) target = $region13
    $region12: #{chamfer_distance_l1.1} parent=1 // pred_region
      %vm16 = vcmask 0
      %17 = vst.msk [vmem:[#allocation2] sm:$0x1] %vm16, 0.0
    $region13: #{chamfer_distance_l1.1} parent=1 // pred_fallthru
      _
    %v18 = vld [vmem:[%s0] sm:$0x7]
    %v19 = vld [vmem:[%s0 + $0x4] sm:$0x7]
    %v20 = vld [vmem:[%s0 + $0x8] sm:$0x7]
    %v21 = vld [vmem:[%s0 + $0xc] sm:$0x7]
    %v22 = vld [vmem:[%s0 + $0x10] sm:$0x7]
    %v23 = vld [vmem:[%s0 + $0x14] sm:$0x7]
    %v24 = vld [vmem:[%s0 + $0x18] sm:$0x7]
    %v25 = vld [vmem:[%s0 + $0x1c] sm:$0x7]
    %v26 = vld [vmem:[%s0 + $0x20] sm:$0x7]
    %v27 = vld [vmem:[%s0 + $0x24] sm:$0x7]
    %v28 = vld [vmem:[%s0 + $0x28] sm:$0x7]
    %v29 = vld [vmem:[%s0 + $0x2c] sm:$0x7]
    %v30 = vld [vmem:[%s0 + $0x30] sm:$0x7]
    %v31 = vld [vmem:[%s0 + $0x34] sm:$0x7]
    %v32 = vld [vmem:[%s0 + $0x38] sm:$0x7]
    %v33 = vld [vmem:[%s0 + $0x3c] sm:$0x7]
    %v34 = vld [vmem:[%s1] sm:$0x7]
    %v35 = vld [vmem:[%s1 + $0x4] sm:$0x7]
    %v36 = vld [vmem:[%s1 + $0x8] sm:$0x7]
    %v37 = vld [vmem:[%s1 + $0xc] sm:$0x7]
    %v38 = vld [vmem:[%s1 + $0x10] sm:$0x7]
    %v39 = vld [vmem:[%s1 + $0x14] sm:$0x7]
    %v40 = vld [vmem:[%s1 + $0x18] sm:$0x7]
    %v41 = vld [vmem:[%s1 + $0x1c] sm:$0x7]
    %v42 = vld [vmem:[%s1 + $0x20] sm:$0x7]
    %v43 = vld [vmem:[%s1 + $0x24] sm:$0x7]
    %v44 = vld [vmem:[%s1 + $0x28] sm:$0x7]
    %v45 = vld [vmem:[%s1 + $0x2c] sm:$0x7]
    %v46 = vld [vmem:[%s1 + $0x30] sm:$0x7]
    %v47 = vld [vmem:[%s1 + $0x34] sm:$0x7]
    %v48 = vld [vmem:[%s1 + $0x38] sm:$0x7]
    %v49 = vld [vmem:[%s1 + $0x3c] sm:$0x7]
    %v50 = vlaneseq
    %v51 = vshrl.u32 %v50, 7
    %v52 = vsub.s32 0, %v51
    %v53 = vrot.slane %v18, %v52
    %55 = vbcast.lane.b32.xlu0 %v53, 256
    %v56 = vpop.permute.xlu0 %55
    %s58 = sor.u32 256, 8
    %59 = vbcast.lane.b32.xlu0 %v53, %s58
    %v60 = vpop.permute.xlu0 %59
    %s62 = sor.u32 256, 16
    %63 = vbcast.lane.b32.xlu0 %v53, %s62
    %v64 = vpop.permute.xlu0 %63
    %s66 = sor.u32 256, 24
    %67 = vbcast.lane.b32.xlu0 %v53, %s66
    %v68 = vpop.permute.xlu0 %67
    %s70 = sor.u32 256, 32
    %71 = vbcast.lane.b32.xlu0 %v53, %s70
    %v72 = vpop.permute.xlu0 %71
    %s74 = sor.u32 256, 40
    %75 = vbcast.lane.b32.xlu0 %v53, %s74
    %v76 = vpop.permute.xlu0 %75
    %s78 = sor.u32 256, 48
    %79 = vbcast.lane.b32.xlu0 %v53, %s78
    %v80 = vpop.permute.xlu0 %79
    %s82 = sor.u32 256, 56
    %83 = vbcast.lane.b32.xlu0 %v53, %s82
    %v84 = vpop.permute.xlu0 %83
    %s86 = sor.u32 256, 64
    %87 = vbcast.lane.b32.xlu0 %v53, %s86
    %v88 = vpop.permute.xlu0 %87
    %s90 = sor.u32 256, 72
    %91 = vbcast.lane.b32.xlu0 %v53, %s90
    %v92 = vpop.permute.xlu0 %91
    %s94 = sor.u32 256, 80
    %95 = vbcast.lane.b32.xlu0 %v53, %s94
    %v96 = vpop.permute.xlu0 %95
    %s98 = sor.u32 256, 88
    %99 = vbcast.lane.b32.xlu0 %v53, %s98
    %v100 = vpop.permute.xlu0 %99
    %s102 = sor.u32 256, 96
    %103 = vbcast.lane.b32.xlu0 %v53, %s102
    %v104 = vpop.permute.xlu0 %103
    %s106 = sor.u32 256, 104
    %107 = vbcast.lane.b32.xlu0 %v53, %s106
    %v108 = vpop.permute.xlu0 %107
    %s110 = sor.u32 256, 112
    %111 = vbcast.lane.b32.xlu0 %v53, %s110
    %v112 = vpop.permute.xlu0 %111
    %s114 = sor.u32 256, 120
    %115 = vbcast.lane.b32.xlu0 %v53, %s114
    %v116 = vpop.permute.xlu0 %115
    %v117 = vlaneseq
    %v118 = vshrl.u32 %v117, 7
    %v119 = vsub.s32 0, %v118
    %v120 = vrot.slane %v19, %v119
    %122 = vbcast.lane.b32.xlu0 %v120, 256
    %v123 = vpop.permute.xlu0 %122
    %s125 = sor.u32 256, 8
    %126 = vbcast.lane.b32.xlu0 %v120, %s125
    %v127 = vpop.permute.xlu0 %126
    %s129 = sor.u32 256, 16
    %130 = vbcast.lane.b32.xlu0 %v120, %s129
    %v131 = vpop.permute.xlu0 %130
    %s133 = sor.u32 256, 24
    %134 = vbcast.lane.b32.xlu0 %v120, %s133
    %v135 = vpop.permute.xlu0 %134
    %s137 = sor.u32 256, 32
    %138 = vbcast.lane.b32.xlu0 %v120, %s137
    %v139 = vpop.permute.xlu0 %138
    %s141 = sor.u32 256, 40
    %142 = vbcast.lane.b32.xlu0 %v120, %s141
    %v143 = vpop.permute.xlu0 %142
    %s145 = sor.u32 256, 48
    %146 = vbcast.lane.b32.xlu0 %v120, %s145
    %v147 = vpop.permute.xlu0 %146
    %s149 = sor.u32 256, 56
    %150 = vbcast.lane.b32.xlu0 %v120, %s149
    %v151 = vpop.permute.xlu0 %150
    %s153 = sor.u32 256, 64
    %154 = vbcast.lane.b32.xlu0 %v120, %s153
    %v155 = vpop.permute.xlu0 %154
    %s157 = sor.u32 256, 72
    %158 = vbcast.lane.b32.xlu0 %v120, %s157
    %v159 = vpop.permute.xlu0 %158
    %s161 = sor.u32 256, 80
    %162 = vbcast.lane.b32.xlu0 %v120, %s161
    %v163 = vpop.permute.xlu0 %162
    %s165 = sor.u32 256, 88
    %166 = vbcast.lane.b32.xlu0 %v120, %s165
    %v167 = vpop.permute.xlu0 %166
    %s169 = sor.u32 256, 96
    %170 = vbcast.lane.b32.xlu0 %v120, %s169
    %v171 = vpop.permute.xlu0 %170
    %s173 = sor.u32 256, 104
    %174 = vbcast.lane.b32.xlu0 %v120, %s173
    %v175 = vpop.permute.xlu0 %174
    %s177 = sor.u32 256, 112
    %178 = vbcast.lane.b32.xlu0 %v120, %s177
    %v179 = vpop.permute.xlu0 %178
    %s181 = sor.u32 256, 120
    %182 = vbcast.lane.b32.xlu0 %v120, %s181
    %v183 = vpop.permute.xlu0 %182
    %v184 = vlaneseq
    %v185 = vshrl.u32 %v184, 7
    %v186 = vsub.s32 0, %v185
    %v187 = vrot.slane %v20, %v186
    %189 = vbcast.lane.b32.xlu0 %v187, 256
    %v190 = vpop.permute.xlu0 %189
    %s192 = sor.u32 256, 8
    %193 = vbcast.lane.b32.xlu0 %v187, %s192
    %v194 = vpop.permute.xlu0 %193
    %s196 = sor.u32 256, 16
    %197 = vbcast.lane.b32.xlu0 %v187, %s196
    %v198 = vpop.permute.xlu0 %197
    %s200 = sor.u32 256, 24
    %201 = vbcast.lane.b32.xlu0 %v187, %s200
    %v202 = vpop.permute.xlu0 %201
    %s204 = sor.u32 256, 32
    %205 = vbcast.lane.b32.xlu0 %v187, %s204
    %v206 = vpop.permute.xlu0 %205
    %s208 = sor.u32 256, 40
    %209 = vbcast.lane.b32.xlu0 %v187, %s208
    %v210 = vpop.permute.xlu0 %209
    %s212 = sor.u32 256, 48
    %213 = vbcast.lane.b32.xlu0 %v187, %s212
    %v214 = vpop.permute.xlu0 %213
    %s216 = sor.u32 256, 56
    %217 = vbcast.lane.b32.xlu0 %v187, %s216
    %v218 = vpop.permute.xlu0 %217
    %s220 = sor.u32 256, 64
    %221 = vbcast.lane.b32.xlu0 %v187, %s220
    %v222 = vpop.permute.xlu0 %221
    %s224 = sor.u32 256, 72
    %225 = vbcast.lane.b32.xlu0 %v187, %s224
    %v226 = vpop.permute.xlu0 %225
    %s228 = sor.u32 256, 80
    %229 = vbcast.lane.b32.xlu0 %v187, %s228
    %v230 = vpop.permute.xlu0 %229
    %s232 = sor.u32 256, 88
    %233 = vbcast.lane.b32.xlu0 %v187, %s232
    %v234 = vpop.permute.xlu0 %233
    %s236 = sor.u32 256, 96
    %237 = vbcast.lane.b32.xlu0 %v187, %s236
    %v238 = vpop.permute.xlu0 %237
    %s240 = sor.u32 256, 104
    %241 = vbcast.lane.b32.xlu0 %v187, %s240
    %v242 = vpop.permute.xlu0 %241
    %s244 = sor.u32 256, 112
    %245 = vbcast.lane.b32.xlu0 %v187, %s244
    %v246 = vpop.permute.xlu0 %245
    %s248 = sor.u32 256, 120
    %249 = vbcast.lane.b32.xlu0 %v187, %s248
    %v250 = vpop.permute.xlu0 %249
    %v251 = vlaneseq
    %v252 = vshrl.u32 %v251, 7
    %v253 = vsub.s32 0, %v252
    %v254 = vrot.slane %v21, %v253
    %256 = vbcast.lane.b32.xlu0 %v254, 256
    %v257 = vpop.permute.xlu0 %256
    %s259 = sor.u32 256, 8
    %260 = vbcast.lane.b32.xlu0 %v254, %s259
    %v261 = vpop.permute.xlu0 %260
    %s263 = sor.u32 256, 16
    %264 = vbcast.lane.b32.xlu0 %v254, %s263
    %v265 = vpop.permute.xlu0 %264
    %s267 = sor.u32 256, 24
    %268 = vbcast.lane.b32.xlu0 %v254, %s267
    %v269 = vpop.permute.xlu0 %268
    %s271 = sor.u32 256, 32
    %272 = vbcast.lane.b32.xlu0 %v254, %s271
    %v273 = vpop.permute.xlu0 %272
    %s275 = sor.u32 256, 40
    %276 = vbcast.lane.b32.xlu0 %v254, %s275
    %v277 = vpop.permute.xlu0 %276
    %s279 = sor.u32 256, 48
    %280 = vbcast.lane.b32.xlu0 %v254, %s279
    %v281 = vpop.permute.xlu0 %280
    %s283 = sor.u32 256, 56
    %284 = vbcast.lane.b32.xlu0 %v254, %s283
    %v285 = vpop.permute.xlu0 %284
    %s287 = sor.u32 256, 64
    %288 = vbcast.lane.b32.xlu0 %v254, %s287
    %v289 = vpop.permute.xlu0 %288
    %s291 = sor.u32 256, 72
    %292 = vbcast.lane.b32.xlu0 %v254, %s291
    %v293 = vpop.permute.xlu0 %292
    %s295 = sor.u32 256, 80
    %296 = vbcast.lane.b32.xlu0 %v254, %s295
    %v297 = vpop.permute.xlu0 %296
    %s299 = sor.u32 256, 88
    %300 = vbcast.lane.b32.xlu0 %v254, %s299
    %v301 = vpop.permute.xlu0 %300
    %s303 = sor.u32 256, 96
    %304 = vbcast.lane.b32.xlu0 %v254, %s303
    %v305 = vpop.permute.xlu0 %304
    %s307 = sor.u32 256, 104
    %308 = vbcast.lane.b32.xlu0 %v254, %s307
    %v309 = vpop.permute.xlu0 %308
    %s311 = sor.u32 256, 112
    %312 = vbcast.lane.b32.xlu0 %v254, %s311
    %v313 = vpop.permute.xlu0 %312
    %s315 = sor.u32 256, 120
    %316 = vbcast.lane.b32.xlu0 %v254, %s315
    %v317 = vpop.permute.xlu0 %316
    %v318 = vlaneseq
    %v319 = vshrl.u32 %v318, 7
    %v320 = vsub.s32 0, %v319
    %v321 = vrot.slane %v22, %v320
    %323 = vbcast.lane.b32.xlu0 %v321, 256
    %v324 = vpop.permute.xlu0 %323
    %s326 = sor.u32 256, 8
    %327 = vbcast.lane.b32.xlu0 %v321, %s326
    %v328 = vpop.permute.xlu0 %327
    %s330 = sor.u32 256, 16
    %331 = vbcast.lane.b32.xlu0 %v321, %s330
    %v332 = vpop.permute.xlu0 %331
    %s334 = sor.u32 256, 24
    %335 = vbcast.lane.b32.xlu0 %v321, %s334
    %v336 = vpop.permute.xlu0 %335
    %s338 = sor.u32 256, 32
    %339 = vbcast.lane.b32.xlu0 %v321, %s338
    %v340 = vpop.permute.xlu0 %339
    %s342 = sor.u32 256, 40
    %343 = vbcast.lane.b32.xlu0 %v321, %s342
    %v344 = vpop.permute.xlu0 %343
    %s346 = sor.u32 256, 48
    %347 = vbcast.lane.b32.xlu0 %v321, %s346
    %v348 = vpop.permute.xlu0 %347
    %s350 = sor.u32 256, 56
    %351 = vbcast.lane.b32.xlu0 %v321, %s350
    %v352 = vpop.permute.xlu0 %351
    %s354 = sor.u32 256, 64
    %355 = vbcast.lane.b32.xlu0 %v321, %s354
    %v356 = vpop.permute.xlu0 %355
    %s358 = sor.u32 256, 72
    %359 = vbcast.lane.b32.xlu0 %v321, %s358
    %v360 = vpop.permute.xlu0 %359
    %s362 = sor.u32 256, 80
    %363 = vbcast.lane.b32.xlu0 %v321, %s362
    %v364 = vpop.permute.xlu0 %363
    %s366 = sor.u32 256, 88
    %367 = vbcast.lane.b32.xlu0 %v321, %s366
    %v368 = vpop.permute.xlu0 %367
    %s370 = sor.u32 256, 96
    %371 = vbcast.lane.b32.xlu0 %v321, %s370
    %v372 = vpop.permute.xlu0 %371
    %s374 = sor.u32 256, 104
    %375 = vbcast.lane.b32.xlu0 %v321, %s374
    %v376 = vpop.permute.xlu0 %375
    %s378 = sor.u32 256, 112
    %379 = vbcast.lane.b32.xlu0 %v321, %s378
    %v380 = vpop.permute.xlu0 %379
    %s382 = sor.u32 256, 120
    %383 = vbcast.lane.b32.xlu0 %v321, %s382
    %v384 = vpop.permute.xlu0 %383
    %v385 = vlaneseq
    %v386 = vshrl.u32 %v385, 7
    %v387 = vsub.s32 0, %v386
    %v388 = vrot.slane %v23, %v387
    %390 = vbcast.lane.b32.xlu0 %v388, 256
    %v391 = vpop.permute.xlu0 %390
    %s393 = sor.u32 256, 8
    %394 = vbcast.lane.b32.xlu0 %v388, %s393
    %v395 = vpop.permute.xlu0 %394
    %s397 = sor.u32 256, 16
    %398 = vbcast.lane.b32.xlu0 %v388, %s397
    %v399 = vpop.permute.xlu0 %398
    %s401 = sor.u32 256, 24
    %402 = vbcast.lane.b32.xlu0 %v388, %s401
    %v403 = vpop.permute.xlu0 %402
    %s405 = sor.u32 256, 32
    %406 = vbcast.lane.b32.xlu0 %v388, %s405
    %v407 = vpop.permute.xlu0 %406
    %s409 = sor.u32 256, 40
    %410 = vbcast.lane.b32.xlu0 %v388, %s409
    %v411 = vpop.permute.xlu0 %410
    %s413 = sor.u32 256, 48
    %414 = vbcast.lane.b32.xlu0 %v388, %s413
    %v415 = vpop.permute.xlu0 %414
    %s417 = sor.u32 256, 56
    %418 = vbcast.lane.b32.xlu0 %v388, %s417
    %v419 = vpop.permute.xlu0 %418
    %s421 = sor.u32 256, 64
    %422 = vbcast.lane.b32.xlu0 %v388, %s421
    %v423 = vpop.permute.xlu0 %422
    %s425 = sor.u32 256, 72
    %426 = vbcast.lane.b32.xlu0 %v388, %s425
    %v427 = vpop.permute.xlu0 %426
    %s429 = sor.u32 256, 80
    %430 = vbcast.lane.b32.xlu0 %v388, %s429
    %v431 = vpop.permute.xlu0 %430
    %s433 = sor.u32 256, 88
    %434 = vbcast.lane.b32.xlu0 %v388, %s433
    %v435 = vpop.permute.xlu0 %434
    %s437 = sor.u32 256, 96
    %438 = vbcast.lane.b32.xlu0 %v388, %s437
    %v439 = vpop.permute.xlu0 %438
    %s441 = sor.u32 256, 104
    %442 = vbcast.lane.b32.xlu0 %v388, %s441
    %v443 = vpop.permute.xlu0 %442
    %s445 = sor.u32 256, 112
    %446 = vbcast.lane.b32.xlu0 %v388, %s445
    %v447 = vpop.permute.xlu0 %446
    %s449 = sor.u32 256, 120
    %450 = vbcast.lane.b32.xlu0 %v388, %s449
    %v451 = vpop.permute.xlu0 %450
    %v452 = vlaneseq
    %v453 = vshrl.u32 %v452, 7
    %v454 = vsub.s32 0, %v453
    %v455 = vrot.slane %v24, %v454
    %457 = vbcast.lane.b32.xlu0 %v455, 256
    %v458 = vpop.permute.xlu0 %457
    %s460 = sor.u32 256, 8
    %461 = vbcast.lane.b32.xlu0 %v455, %s460
    %v462 = vpop.permute.xlu0 %461
    %s464 = sor.u32 256, 16
    %465 = vbcast.lane.b32.xlu0 %v455, %s464
    %v466 = vpop.permute.xlu0 %465
    %s468 = sor.u32 256, 24
    %469 = vbcast.lane.b32.xlu0 %v455, %s468
    %v470 = vpop.permute.xlu0 %469
    %s472 = sor.u32 256, 32
    %473 = vbcast.lane.b32.xlu0 %v455, %s472
    %v474 = vpop.permute.xlu0 %473
    %s476 = sor.u32 256, 40
    %477 = vbcast.lane.b32.xlu0 %v455, %s476
    %v478 = vpop.permute.xlu0 %477
    %s480 = sor.u32 256, 48
    %481 = vbcast.lane.b32.xlu0 %v455, %s480
    %v482 = vpop.permute.xlu0 %481
    %s484 = sor.u32 256, 56
    %485 = vbcast.lane.b32.xlu0 %v455, %s484
    %v486 = vpop.permute.xlu0 %485
    %s488 = sor.u32 256, 64
    %489 = vbcast.lane.b32.xlu0 %v455, %s488
    %v490 = vpop.permute.xlu0 %489
    %s492 = sor.u32 256, 72
    %493 = vbcast.lane.b32.xlu0 %v455, %s492
    %v494 = vpop.permute.xlu0 %493
    %s496 = sor.u32 256, 80
    %497 = vbcast.lane.b32.xlu0 %v455, %s496
    %v498 = vpop.permute.xlu0 %497
    %s500 = sor.u32 256, 88
    %501 = vbcast.lane.b32.xlu0 %v455, %s500
    %v502 = vpop.permute.xlu0 %501
    %s504 = sor.u32 256, 96
    %505 = vbcast.lane.b32.xlu0 %v455, %s504
    %v506 = vpop.permute.xlu0 %505
    %s508 = sor.u32 256, 104
    %509 = vbcast.lane.b32.xlu0 %v455, %s508
    %v510 = vpop.permute.xlu0 %509
    %s512 = sor.u32 256, 112
    %513 = vbcast.lane.b32.xlu0 %v455, %s512
    %v514 = vpop.permute.xlu0 %513
    %s516 = sor.u32 256, 120
    %517 = vbcast.lane.b32.xlu0 %v455, %s516
    %v518 = vpop.permute.xlu0 %517
    %v519 = vlaneseq
    %v520 = vshrl.u32 %v519, 7
    %v521 = vsub.s32 0, %v520
    %v522 = vrot.slane %v25, %v521
    %524 = vbcast.lane.b32.xlu0 %v522, 256
    %v525 = vpop.permute.xlu0 %524
    %s527 = sor.u32 256, 8
    %528 = vbcast.lane.b32.xlu0 %v522, %s527
    %v529 = vpop.permute.xlu0 %528
    %s531 = sor.u32 256, 16
    %532 = vbcast.lane.b32.xlu0 %v522, %s531
    %v533 = vpop.permute.xlu0 %532
    %s535 = sor.u32 256, 24
    %536 = vbcast.lane.b32.xlu0 %v522, %s535
    %v537 = vpop.permute.xlu0 %536
    %s539 = sor.u32 256, 32
    %540 = vbcast.lane.b32.xlu0 %v522, %s539
    %v541 = vpop.permute.xlu0 %540
    %s543 = sor.u32 256, 40
    %544 = vbcast.lane.b32.xlu0 %v522, %s543
    %v545 = vpop.permute.xlu0 %544
    %s547 = sor.u32 256, 48
    %548 = vbcast.lane.b32.xlu0 %v522, %s547
    %v549 = vpop.permute.xlu0 %548
    %s551 = sor.u32 256, 56
    %552 = vbcast.lane.b32.xlu0 %v522, %s551
    %v553 = vpop.permute.xlu0 %552
    %s555 = sor.u32 256, 64
    %556 = vbcast.lane.b32.xlu0 %v522, %s555
    %v557 = vpop.permute.xlu0 %556
    %s559 = sor.u32 256, 72
    %560 = vbcast.lane.b32.xlu0 %v522, %s559
    %v561 = vpop.permute.xlu0 %560
    %s563 = sor.u32 256, 80
    %564 = vbcast.lane.b32.xlu0 %v522, %s563
    %v565 = vpop.permute.xlu0 %564
    %s567 = sor.u32 256, 88
    %568 = vbcast.lane.b32.xlu0 %v522, %s567
    %v569 = vpop.permute.xlu0 %568
    %s571 = sor.u32 256, 96
    %572 = vbcast.lane.b32.xlu0 %v522, %s571
    %v573 = vpop.permute.xlu0 %572
    %s575 = sor.u32 256, 104
    %576 = vbcast.lane.b32.xlu0 %v522, %s575
    %v577 = vpop.permute.xlu0 %576
    %s579 = sor.u32 256, 112
    %580 = vbcast.lane.b32.xlu0 %v522, %s579
    %v581 = vpop.permute.xlu0 %580
    %s583 = sor.u32 256, 120
    %584 = vbcast.lane.b32.xlu0 %v522, %s583
    %v585 = vpop.permute.xlu0 %584
    %v586 = vlaneseq
    %v587 = vshrl.u32 %v586, 7
    %v588 = vsub.s32 0, %v587
    %v589 = vrot.slane %v26, %v588
    %591 = vbcast.lane.b32.xlu0 %v589, 256
    %v592 = vpop.permute.xlu0 %591
    %s594 = sor.u32 256, 8
    %595 = vbcast.lane.b32.xlu0 %v589, %s594
    %v596 = vpop.permute.xlu0 %595
    %s598 = sor.u32 256, 16
    %599 = vbcast.lane.b32.xlu0 %v589, %s598
    %v600 = vpop.permute.xlu0 %599
    %s602 = sor.u32 256, 24
    %603 = vbcast.lane.b32.xlu0 %v589, %s602
    %v604 = vpop.permute.xlu0 %603
    %s606 = sor.u32 256, 32
    %607 = vbcast.lane.b32.xlu0 %v589, %s606
    %v608 = vpop.permute.xlu0 %607
    %s610 = sor.u32 256, 40
    %611 = vbcast.lane.b32.xlu0 %v589, %s610
    %v612 = vpop.permute.xlu0 %611
    %s614 = sor.u32 256, 48
    %615 = vbcast.lane.b32.xlu0 %v589, %s614
    %v616 = vpop.permute.xlu0 %615
    %s618 = sor.u32 256, 56
    %619 = vbcast.lane.b32.xlu0 %v589, %s618
    %v620 = vpop.permute.xlu0 %619
    %s622 = sor.u32 256, 64
    %623 = vbcast.lane.b32.xlu0 %v589, %s622
    %v624 = vpop.permute.xlu0 %623
    %s626 = sor.u32 256, 72
    %627 = vbcast.lane.b32.xlu0 %v589, %s626
    %v628 = vpop.permute.xlu0 %627
    %s630 = sor.u32 256, 80
    %631 = vbcast.lane.b32.xlu0 %v589, %s630
    %v632 = vpop.permute.xlu0 %631
    %s634 = sor.u32 256, 88
    %635 = vbcast.lane.b32.xlu0 %v589, %s634
    %v636 = vpop.permute.xlu0 %635
    %s638 = sor.u32 256, 96
    %639 = vbcast.lane.b32.xlu0 %v589, %s638
    %v640 = vpop.permute.xlu0 %639
    %s642 = sor.u32 256, 104
    %643 = vbcast.lane.b32.xlu0 %v589, %s642
    %v644 = vpop.permute.xlu0 %643
    %s646 = sor.u32 256, 112
    %647 = vbcast.lane.b32.xlu0 %v589, %s646
    %v648 = vpop.permute.xlu0 %647
    %s650 = sor.u32 256, 120
    %651 = vbcast.lane.b32.xlu0 %v589, %s650
    %v652 = vpop.permute.xlu0 %651
    %v653 = vlaneseq
    %v654 = vshrl.u32 %v653, 7
    %v655 = vsub.s32 0, %v654
    %v656 = vrot.slane %v27, %v655
    %658 = vbcast.lane.b32.xlu0 %v656, 256
    %v659 = vpop.permute.xlu0 %658
    %s661 = sor.u32 256, 8
    %662 = vbcast.lane.b32.xlu0 %v656, %s661
    %v663 = vpop.permute.xlu0 %662
    %s665 = sor.u32 256, 16
    %666 = vbcast.lane.b32.xlu0 %v656, %s665
    %v667 = vpop.permute.xlu0 %666
    %s669 = sor.u32 256, 24
    %670 = vbcast.lane.b32.xlu0 %v656, %s669
    %v671 = vpop.permute.xlu0 %670
    %s673 = sor.u32 256, 32
    %674 = vbcast.lane.b32.xlu0 %v656, %s673
    %v675 = vpop.permute.xlu0 %674
    %s677 = sor.u32 256, 40
    %678 = vbcast.lane.b32.xlu0 %v656, %s677
    %v679 = vpop.permute.xlu0 %678
    %s681 = sor.u32 256, 48
    %682 = vbcast.lane.b32.xlu0 %v656, %s681
    %v683 = vpop.permute.xlu0 %682
    %s685 = sor.u32 256, 56
    %686 = vbcast.lane.b32.xlu0 %v656, %s685
    %v687 = vpop.permute.xlu0 %686
    %s689 = sor.u32 256, 64
    %690 = vbcast.lane.b32.xlu0 %v656, %s689
    %v691 = vpop.permute.xlu0 %690
    %s693 = sor.u32 256, 72
    %694 = vbcast.lane.b32.xlu0 %v656, %s693
    %v695 = vpop.permute.xlu0 %694
    %s697 = sor.u32 256, 80
    %698 = vbcast.lane.b32.xlu0 %v656, %s697
    %v699 = vpop.permute.xlu0 %698
    %s701 = sor.u32 256, 88
    %702 = vbcast.lane.b32.xlu0 %v656, %s701
    %v703 = vpop.permute.xlu0 %702
    %s705 = sor.u32 256, 96
    %706 = vbcast.lane.b32.xlu0 %v656, %s705
    %v707 = vpop.permute.xlu0 %706
    %s709 = sor.u32 256, 104
    %710 = vbcast.lane.b32.xlu0 %v656, %s709
    %v711 = vpop.permute.xlu0 %710
    %s713 = sor.u32 256, 112
    %714 = vbcast.lane.b32.xlu0 %v656, %s713
    %v715 = vpop.permute.xlu0 %714
    %s717 = sor.u32 256, 120
    %718 = vbcast.lane.b32.xlu0 %v656, %s717
    %v719 = vpop.permute.xlu0 %718
    %v720 = vlaneseq
    %v721 = vshrl.u32 %v720, 7
    %v722 = vsub.s32 0, %v721
    %v723 = vrot.slane %v28, %v722
    %725 = vbcast.lane.b32.xlu0 %v723, 256
    %v726 = vpop.permute.xlu0 %725
    %s728 = sor.u32 256, 8
    %729 = vbcast.lane.b32.xlu0 %v723, %s728
    %v730 = vpop.permute.xlu0 %729
    %s732 = sor.u32 256, 16
    %733 = vbcast.lane.b32.xlu0 %v723, %s732
    %v734 = vpop.permute.xlu0 %733
    %s736 = sor.u32 256, 24
    %737 = vbcast.lane.b32.xlu0 %v723, %s736
    %v738 = vpop.permute.xlu0 %737
    %s740 = sor.u32 256, 32
    %741 = vbcast.lane.b32.xlu0 %v723, %s740
    %v742 = vpop.permute.xlu0 %741
    %s744 = sor.u32 256, 40
    %745 = vbcast.lane.b32.xlu0 %v723, %s744
    %v746 = vpop.permute.xlu0 %745
    %s748 = sor.u32 256, 48
    %749 = vbcast.lane.b32.xlu0 %v723, %s748
    %v750 = vpop.permute.xlu0 %749
    %s752 = sor.u32 256, 56
    %753 = vbcast.lane.b32.xlu0 %v723, %s752
    %v754 = vpop.permute.xlu0 %753
    %s756 = sor.u32 256, 64
    %757 = vbcast.lane.b32.xlu0 %v723, %s756
    %v758 = vpop.permute.xlu0 %757
    %s760 = sor.u32 256, 72
    %761 = vbcast.lane.b32.xlu0 %v723, %s760
    %v762 = vpop.permute.xlu0 %761
    %s764 = sor.u32 256, 80
    %765 = vbcast.lane.b32.xlu0 %v723, %s764
    %v766 = vpop.permute.xlu0 %765
    %s768 = sor.u32 256, 88
    %769 = vbcast.lane.b32.xlu0 %v723, %s768
    %v770 = vpop.permute.xlu0 %769
    %s772 = sor.u32 256, 96
    %773 = vbcast.lane.b32.xlu0 %v723, %s772
    %v774 = vpop.permute.xlu0 %773
    %s776 = sor.u32 256, 104
    %777 = vbcast.lane.b32.xlu0 %v723, %s776
    %v778 = vpop.permute.xlu0 %777
    %s780 = sor.u32 256, 112
    %781 = vbcast.lane.b32.xlu0 %v723, %s780
    %v782 = vpop.permute.xlu0 %781
    %s784 = sor.u32 256, 120
    %785 = vbcast.lane.b32.xlu0 %v723, %s784
    %v786 = vpop.permute.xlu0 %785
    %v787 = vlaneseq
    %v788 = vshrl.u32 %v787, 7
    %v789 = vsub.s32 0, %v788
    %v790 = vrot.slane %v29, %v789
    %792 = vbcast.lane.b32.xlu0 %v790, 256
    %v793 = vpop.permute.xlu0 %792
    %s795 = sor.u32 256, 8
    %796 = vbcast.lane.b32.xlu0 %v790, %s795
    %v797 = vpop.permute.xlu0 %796
    %s799 = sor.u32 256, 16
    %800 = vbcast.lane.b32.xlu0 %v790, %s799
    %v801 = vpop.permute.xlu0 %800
    %s803 = sor.u32 256, 24
    %804 = vbcast.lane.b32.xlu0 %v790, %s803
    %v805 = vpop.permute.xlu0 %804
    %s807 = sor.u32 256, 32
    %808 = vbcast.lane.b32.xlu0 %v790, %s807
    %v809 = vpop.permute.xlu0 %808
    %s811 = sor.u32 256, 40
    %812 = vbcast.lane.b32.xlu0 %v790, %s811
    %v813 = vpop.permute.xlu0 %812
    %s815 = sor.u32 256, 48
    %816 = vbcast.lane.b32.xlu0 %v790, %s815
    %v817 = vpop.permute.xlu0 %816
    %s819 = sor.u32 256, 56
    %820 = vbcast.lane.b32.xlu0 %v790, %s819
    %v821 = vpop.permute.xlu0 %820
    %s823 = sor.u32 256, 64
    %824 = vbcast.lane.b32.xlu0 %v790, %s823
    %v825 = vpop.permute.xlu0 %824
    %s827 = sor.u32 256, 72
    %828 = vbcast.lane.b32.xlu0 %v790, %s827
    %v829 = vpop.permute.xlu0 %828
    %s831 = sor.u32 256, 80
    %832 = vbcast.lane.b32.xlu0 %v790, %s831
    %v833 = vpop.permute.xlu0 %832
    %s835 = sor.u32 256, 88
    %836 = vbcast.lane.b32.xlu0 %v790, %s835
    %v837 = vpop.permute.xlu0 %836
    %s839 = sor.u32 256, 96
    %840 = vbcast.lane.b32.xlu0 %v790, %s839
    %v841 = vpop.permute.xlu0 %840
    %s843 = sor.u32 256, 104
    %844 = vbcast.lane.b32.xlu0 %v790, %s843
    %v845 = vpop.permute.xlu0 %844
    %s847 = sor.u32 256, 112
    %848 = vbcast.lane.b32.xlu0 %v790, %s847
    %v849 = vpop.permute.xlu0 %848
    %s851 = sor.u32 256, 120
    %852 = vbcast.lane.b32.xlu0 %v790, %s851
    %v853 = vpop.permute.xlu0 %852
    %v854 = vlaneseq
    %v855 = vshrl.u32 %v854, 7
    %v856 = vsub.s32 0, %v855
    %v857 = vrot.slane %v30, %v856
    %859 = vbcast.lane.b32.xlu0 %v857, 256
    %v860 = vpop.permute.xlu0 %859
    %s862 = sor.u32 256, 8
    %863 = vbcast.lane.b32.xlu0 %v857, %s862
    %v864 = vpop.permute.xlu0 %863
    %s866 = sor.u32 256, 16
    %867 = vbcast.lane.b32.xlu0 %v857, %s866
    %v868 = vpop.permute.xlu0 %867
    %s870 = sor.u32 256, 24
    %871 = vbcast.lane.b32.xlu0 %v857, %s870
    %v872 = vpop.permute.xlu0 %871
    %s874 = sor.u32 256, 32
    %875 = vbcast.lane.b32.xlu0 %v857, %s874
    %v876 = vpop.permute.xlu0 %875
    %s878 = sor.u32 256, 40
    %879 = vbcast.lane.b32.xlu0 %v857, %s878
    %v880 = vpop.permute.xlu0 %879
    %s882 = sor.u32 256, 48
    %883 = vbcast.lane.b32.xlu0 %v857, %s882
    %v884 = vpop.permute.xlu0 %883
    %s886 = sor.u32 256, 56
    %887 = vbcast.lane.b32.xlu0 %v857, %s886
    %v888 = vpop.permute.xlu0 %887
    %s890 = sor.u32 256, 64
    %891 = vbcast.lane.b32.xlu0 %v857, %s890
    %v892 = vpop.permute.xlu0 %891
    %s894 = sor.u32 256, 72
    %895 = vbcast.lane.b32.xlu0 %v857, %s894
    %v896 = vpop.permute.xlu0 %895
    %s898 = sor.u32 256, 80
    %899 = vbcast.lane.b32.xlu0 %v857, %s898
    %v900 = vpop.permute.xlu0 %899
    %s902 = sor.u32 256, 88
    %903 = vbcast.lane.b32.xlu0 %v857, %s902
    %v904 = vpop.permute.xlu0 %903
    %s906 = sor.u32 256, 96
    %907 = vbcast.lane.b32.xlu0 %v857, %s906
    %v908 = vpop.permute.xlu0 %907
    %s910 = sor.u32 256, 104
    %911 = vbcast.lane.b32.xlu0 %v857, %s910
    %v912 = vpop.permute.xlu0 %911
    %s914 = sor.u32 256, 112
    %915 = vbcast.lane.b32.xlu0 %v857, %s914
    %v916 = vpop.permute.xlu0 %915
    %s918 = sor.u32 256, 120
    %919 = vbcast.lane.b32.xlu0 %v857, %s918
    %v920 = vpop.permute.xlu0 %919
    %v921 = vlaneseq
    %v922 = vshrl.u32 %v921, 7
    %v923 = vsub.s32 0, %v922
    %v924 = vrot.slane %v31, %v923
    %926 = vbcast.lane.b32.xlu0 %v924, 256
    %v927 = vpop.permute.xlu0 %926
    %s929 = sor.u32 256, 8
    %930 = vbcast.lane.b32.xlu0 %v924, %s929
    %v931 = vpop.permute.xlu0 %930
    %s933 = sor.u32 256, 16
    %934 = vbcast.lane.b32.xlu0 %v924, %s933
    %v935 = vpop.permute.xlu0 %934
    %s937 = sor.u32 256, 24
    %938 = vbcast.lane.b32.xlu0 %v924, %s937
    %v939 = vpop.permute.xlu0 %938
    %s941 = sor.u32 256, 32
    %942 = vbcast.lane.b32.xlu0 %v924, %s941
    %v943 = vpop.permute.xlu0 %942
    %s945 = sor.u32 256, 40
    %946 = vbcast.lane.b32.xlu0 %v924, %s945
    %v947 = vpop.permute.xlu0 %946
    %s949 = sor.u32 256, 48
    %950 = vbcast.lane.b32.xlu0 %v924, %s949
    %v951 = vpop.permute.xlu0 %950
    %s953 = sor.u32 256, 56
    %954 = vbcast.lane.b32.xlu0 %v924, %s953
    %v955 = vpop.permute.xlu0 %954
    %s957 = sor.u32 256, 64
    %958 = vbcast.lane.b32.xlu0 %v924, %s957
    %v959 = vpop.permute.xlu0 %958
    %s961 = sor.u32 256, 72
    %962 = vbcast.lane.b32.xlu0 %v924, %s961
    %v963 = vpop.permute.xlu0 %962
    %s965 = sor.u32 256, 80
    %966 = vbcast.lane.b32.xlu0 %v924, %s965
    %v967 = vpop.permute.xlu0 %966
    %s969 = sor.u32 256, 88
    %970 = vbcast.lane.b32.xlu0 %v924, %s969
    %v971 = vpop.permute.xlu0 %970
    %s973 = sor.u32 256, 96
    %974 = vbcast.lane.b32.xlu0 %v924, %s973
    %v975 = vpop.permute.xlu0 %974
    %s977 = sor.u32 256, 104
    %978 = vbcast.lane.b32.xlu0 %v924, %s977
    %v979 = vpop.permute.xlu0 %978
    %s981 = sor.u32 256, 112
    %982 = vbcast.lane.b32.xlu0 %v924, %s981
    %v983 = vpop.permute.xlu0 %982
    %s985 = sor.u32 256, 120
    %986 = vbcast.lane.b32.xlu0 %v924, %s985
    %v987 = vpop.permute.xlu0 %986
    %v988 = vlaneseq
    %v989 = vshrl.u32 %v988, 7
    %v990 = vsub.s32 0, %v989
    %v991 = vrot.slane %v32, %v990
    %993 = vbcast.lane.b32.xlu0 %v991, 256
    %v994 = vpop.permute.xlu0 %993
    %s996 = sor.u32 256, 8
    %997 = vbcast.lane.b32.xlu0 %v991, %s996
    %v998 = vpop.permute.xlu0 %997
    %s1000 = sor.u32 256, 16
    %1001 = vbcast.lane.b32.xlu0 %v991, %s1000
    %v1002 = vpop.permute.xlu0 %1001
    %s1004 = sor.u32 256, 24
    %1005 = vbcast.lane.b32.xlu0 %v991, %s1004
    %v1006 = vpop.permute.xlu0 %1005
    %s1008 = sor.u32 256, 32
    %1009 = vbcast.lane.b32.xlu0 %v991, %s1008
    %v1010 = vpop.permute.xlu0 %1009
    %s1012 = sor.u32 256, 40
    %1013 = vbcast.lane.b32.xlu0 %v991, %s1012
    %v1014 = vpop.permute.xlu0 %1013
    %s1016 = sor.u32 256, 48
    %1017 = vbcast.lane.b32.xlu0 %v991, %s1016
    %v1018 = vpop.permute.xlu0 %1017
    %s1020 = sor.u32 256, 56
    %1021 = vbcast.lane.b32.xlu0 %v991, %s1020
    %v1022 = vpop.permute.xlu0 %1021
    %s1024 = sor.u32 256, 64
    %1025 = vbcast.lane.b32.xlu0 %v991, %s1024
    %v1026 = vpop.permute.xlu0 %1025
    %s1028 = sor.u32 256, 72
    %1029 = vbcast.lane.b32.xlu0 %v991, %s1028
    %v1030 = vpop.permute.xlu0 %1029
    %s1032 = sor.u32 256, 80
    %1033 = vbcast.lane.b32.xlu0 %v991, %s1032
    %v1034 = vpop.permute.xlu0 %1033
    %s1036 = sor.u32 256, 88
    %1037 = vbcast.lane.b32.xlu0 %v991, %s1036
    %v1038 = vpop.permute.xlu0 %1037
    %s1040 = sor.u32 256, 96
    %1041 = vbcast.lane.b32.xlu0 %v991, %s1040
    %v1042 = vpop.permute.xlu0 %1041
    %s1044 = sor.u32 256, 104
    %1045 = vbcast.lane.b32.xlu0 %v991, %s1044
    %v1046 = vpop.permute.xlu0 %1045
    %s1048 = sor.u32 256, 112
    %1049 = vbcast.lane.b32.xlu0 %v991, %s1048
    %v1050 = vpop.permute.xlu0 %1049
    %s1052 = sor.u32 256, 120
    %1053 = vbcast.lane.b32.xlu0 %v991, %s1052
    %v1054 = vpop.permute.xlu0 %1053
    %v1055 = vlaneseq
    %v1056 = vshrl.u32 %v1055, 7
    %v1057 = vsub.s32 0, %v1056
    %v1058 = vrot.slane %v33, %v1057
    %1060 = vbcast.lane.b32.xlu0 %v1058, 256
    %v1061 = vpop.permute.xlu0 %1060
    %s1063 = sor.u32 256, 8
    %1064 = vbcast.lane.b32.xlu0 %v1058, %s1063
    %v1065 = vpop.permute.xlu0 %1064
    %s1067 = sor.u32 256, 16
    %1068 = vbcast.lane.b32.xlu0 %v1058, %s1067
    %v1069 = vpop.permute.xlu0 %1068
    %s1071 = sor.u32 256, 24
    %1072 = vbcast.lane.b32.xlu0 %v1058, %s1071
    %v1073 = vpop.permute.xlu0 %1072
    %s1075 = sor.u32 256, 32
    %1076 = vbcast.lane.b32.xlu0 %v1058, %s1075
    %v1077 = vpop.permute.xlu0 %1076
    %s1079 = sor.u32 256, 40
    %1080 = vbcast.lane.b32.xlu0 %v1058, %s1079
    %v1081 = vpop.permute.xlu0 %1080
    %s1083 = sor.u32 256, 48
    %1084 = vbcast.lane.b32.xlu0 %v1058, %s1083
    %v1085 = vpop.permute.xlu0 %1084
    %s1087 = sor.u32 256, 56
    %1088 = vbcast.lane.b32.xlu0 %v1058, %s1087
    %v1089 = vpop.permute.xlu0 %1088
    %s1091 = sor.u32 256, 64
    %1092 = vbcast.lane.b32.xlu0 %v1058, %s1091
    %v1093 = vpop.permute.xlu0 %1092
    %s1095 = sor.u32 256, 72
    %1096 = vbcast.lane.b32.xlu0 %v1058, %s1095
    %v1097 = vpop.permute.xlu0 %1096
    %s1099 = sor.u32 256, 80
    %1100 = vbcast.lane.b32.xlu0 %v1058, %s1099
    %v1101 = vpop.permute.xlu0 %1100
    %s1103 = sor.u32 256, 88
    %1104 = vbcast.lane.b32.xlu0 %v1058, %s1103
    %v1105 = vpop.permute.xlu0 %1104
    %s1107 = sor.u32 256, 96
    %1108 = vbcast.lane.b32.xlu0 %v1058, %s1107
    %v1109 = vpop.permute.xlu0 %1108
    %s1111 = sor.u32 256, 104
    %1112 = vbcast.lane.b32.xlu0 %v1058, %s1111
    %v1113 = vpop.permute.xlu0 %1112
    %s1115 = sor.u32 256, 112
    %1116 = vbcast.lane.b32.xlu0 %v1058, %s1115
    %v1117 = vpop.permute.xlu0 %1116
    %s1119 = sor.u32 256, 120
    %1120 = vbcast.lane.b32.xlu0 %v1058, %s1119
    %v1121 = vpop.permute.xlu0 %1120
    %v1122 = vlaneseq
    %v1123 = vshrl.u32 %v1122, 7
    %v1124 = vsub.s32 0, %v1123
    %v1125 = vrot.slane %v34, %v1124
    %v1126 = vlaneseq
    %v1127 = vshrl.u32 %v1126, 7
    %v1128 = vsub.s32 0, %v1127
    %v1129 = vrot.slane %v35, %v1128
    %v1130 = vlaneseq
    %v1131 = vshrl.u32 %v1130, 7
    %v1132 = vsub.s32 0, %v1131
    %v1133 = vrot.slane %v36, %v1132
    %v1134 = vlaneseq
    %v1135 = vshrl.u32 %v1134, 7
    %v1136 = vsub.s32 0, %v1135
    %v1137 = vrot.slane %v37, %v1136
    %v1138 = vlaneseq
    %v1139 = vshrl.u32 %v1138, 7
    %v1140 = vsub.s32 0, %v1139
    %v1141 = vrot.slane %v38, %v1140
    %v1142 = vlaneseq
    %v1143 = vshrl.u32 %v1142, 7
    %v1144 = vsub.s32 0, %v1143
    %v1145 = vrot.slane %v39, %v1144
    %v1146 = vlaneseq
    %v1147 = vshrl.u32 %v1146, 7
    %v1148 = vsub.s32 0, %v1147
    %v1149 = vrot.slane %v40, %v1148
    %v1150 = vlaneseq
    %v1151 = vshrl.u32 %v1150, 7
    %v1152 = vsub.s32 0, %v1151
    %v1153 = vrot.slane %v41, %v1152
    %v1154 = vlaneseq
    %v1155 = vshrl.u32 %v1154, 7
    %v1156 = vsub.s32 0, %v1155
    %v1157 = vrot.slane %v42, %v1156
    %v1158 = vlaneseq
    %v1159 = vshrl.u32 %v1158, 7
    %v1160 = vsub.s32 0, %v1159
    %v1161 = vrot.slane %v43, %v1160
    %v1162 = vlaneseq
    %v1163 = vshrl.u32 %v1162, 7
    %v1164 = vsub.s32 0, %v1163
    %v1165 = vrot.slane %v44, %v1164
    %v1166 = vlaneseq
    %v1167 = vshrl.u32 %v1166, 7
    %v1168 = vsub.s32 0, %v1167
    %v1169 = vrot.slane %v45, %v1168
    %v1170 = vlaneseq
    %v1171 = vshrl.u32 %v1170, 7
    %v1172 = vsub.s32 0, %v1171
    %v1173 = vrot.slane %v46, %v1172
    %v1174 = vlaneseq
    %v1175 = vshrl.u32 %v1174, 7
    %v1176 = vsub.s32 0, %v1175
    %v1177 = vrot.slane %v47, %v1176
    %v1178 = vlaneseq
    %v1179 = vshrl.u32 %v1178, 7
    %v1180 = vsub.s32 0, %v1179
    %v1181 = vrot.slane %v48, %v1180
    %v1182 = vlaneseq
    %v1183 = vshrl.u32 %v1182, 7
    %v1184 = vsub.s32 0, %v1183
    %v1185 = vrot.slane %v49, %v1184
    %v1186 = vsub.f32 %v56, %v1125
    %v1187 = vsub.f32 %v60, %v1125
    %v1188 = vsub.f32 %v64, %v1125
    %v1189 = vsub.f32 %v68, %v1125
    %v1190 = vsub.f32 %v72, %v1125
    %v1191 = vsub.f32 %v76, %v1125
    %v1192 = vsub.f32 %v80, %v1125
    %v1193 = vsub.f32 %v84, %v1125
    %v1194 = vsub.f32 %v88, %v1125
    %v1195 = vsub.f32 %v92, %v1125
    %v1196 = vsub.f32 %v96, %v1125
    %v1197 = vsub.f32 %v100, %v1125
    %v1198 = vsub.f32 %v104, %v1125
    %v1199 = vsub.f32 %v108, %v1125
    %v1200 = vsub.f32 %v112, %v1125
    %v1201 = vsub.f32 %v116, %v1125
    %v1202 = vsub.f32 %v123, %v1129
    %v1203 = vsub.f32 %v127, %v1129
    %v1204 = vsub.f32 %v131, %v1129
    %v1205 = vsub.f32 %v135, %v1129
    %v1206 = vsub.f32 %v139, %v1129
    %v1207 = vsub.f32 %v143, %v1129
    %v1208 = vsub.f32 %v147, %v1129
    %v1209 = vsub.f32 %v151, %v1129
    %v1210 = vsub.f32 %v155, %v1129
    %v1211 = vsub.f32 %v159, %v1129
    %v1212 = vsub.f32 %v163, %v1129
    %v1213 = vsub.f32 %v167, %v1129
    %v1214 = vsub.f32 %v171, %v1129
    %v1215 = vsub.f32 %v175, %v1129
    %v1216 = vsub.f32 %v179, %v1129
    %v1217 = vsub.f32 %v183, %v1129
    %v1218 = vsub.f32 %v190, %v1133
    %v1219 = vsub.f32 %v194, %v1133
    %v1220 = vsub.f32 %v198, %v1133
    %v1221 = vsub.f32 %v202, %v1133
    %v1222 = vsub.f32 %v206, %v1133
    %v1223 = vsub.f32 %v210, %v1133
    %v1224 = vsub.f32 %v214, %v1133
    %v1225 = vsub.f32 %v218, %v1133
    %v1226 = vsub.f32 %v222, %v1133
    %v1227 = vsub.f32 %v226, %v1133
    %v1228 = vsub.f32 %v230, %v1133
    %v1229 = vsub.f32 %v234, %v1133
    %v1230 = vsub.f32 %v238, %v1133
    %v1231 = vsub.f32 %v242, %v1133
    %v1232 = vsub.f32 %v246, %v1133
    %v1233 = vsub.f32 %v250, %v1133
    %v1234 = vsub.f32 %v257, %v1137
    %v1235 = vsub.f32 %v261, %v1137
    %v1236 = vsub.f32 %v265, %v1137
    %v1237 = vsub.f32 %v269, %v1137
    %v1238 = vsub.f32 %v273, %v1137
    %v1239 = vsub.f32 %v277, %v1137
    %v1240 = vsub.f32 %v281, %v1137
    %v1241 = vsub.f32 %v285, %v1137
    %v1242 = vsub.f32 %v289, %v1137
    %v1243 = vsub.f32 %v293, %v1137
    %v1244 = vsub.f32 %v297, %v1137
    %v1245 = vsub.f32 %v301, %v1137
    %v1246 = vsub.f32 %v305, %v1137
    %v1247 = vsub.f32 %v309, %v1137
    %v1248 = vsub.f32 %v313, %v1137
    %v1249 = vsub.f32 %v317, %v1137
    %v1250 = vsub.f32 %v324, %v1141
    %v1251 = vsub.f32 %v328, %v1141
    %v1252 = vsub.f32 %v332, %v1141
    %v1253 = vsub.f32 %v336, %v1141
    %v1254 = vsub.f32 %v340, %v1141
    %v1255 = vsub.f32 %v344, %v1141
    %v1256 = vsub.f32 %v348, %v1141
    %v1257 = vsub.f32 %v352, %v1141
    %v1258 = vsub.f32 %v356, %v1141
    %v1259 = vsub.f32 %v360, %v1141
    %v1260 = vsub.f32 %v364, %v1141
    %v1261 = vsub.f32 %v368, %v1141
    %v1262 = vsub.f32 %v372, %v1141
    %v1263 = vsub.f32 %v376, %v1141
    %v1264 = vsub.f32 %v380, %v1141
    %v1265 = vsub.f32 %v384, %v1141
    %v1266 = vsub.f32 %v391, %v1145
    %v1267 = vsub.f32 %v395, %v1145
    %v1268 = vsub.f32 %v399, %v1145
    %v1269 = vsub.f32 %v403, %v1145
    %v1270 = vsub.f32 %v407, %v1145
    %v1271 = vsub.f32 %v411, %v1145
    %v1272 = vsub.f32 %v415, %v1145
    %v1273 = vsub.f32 %v419, %v1145
    %v1274 = vsub.f32 %v423, %v1145
    %v1275 = vsub.f32 %v427, %v1145
    %v1276 = vsub.f32 %v431, %v1145
    %v1277 = vsub.f32 %v435, %v1145
    %v1278 = vsub.f32 %v439, %v1145
    %v1279 = vsub.f32 %v443, %v1145
    %v1280 = vsub.f32 %v447, %v1145
    %v1281 = vsub.f32 %v451, %v1145
    %v1282 = vsub.f32 %v458, %v1149
    %v1283 = vsub.f32 %v462, %v1149
    %v1284 = vsub.f32 %v466, %v1149
    %v1285 = vsub.f32 %v470, %v1149
    %v1286 = vsub.f32 %v474, %v1149
    %v1287 = vsub.f32 %v478, %v1149
    %v1288 = vsub.f32 %v482, %v1149
    %v1289 = vsub.f32 %v486, %v1149
    %v1290 = vsub.f32 %v490, %v1149
    %v1291 = vsub.f32 %v494, %v1149
    %v1292 = vsub.f32 %v498, %v1149
    %v1293 = vsub.f32 %v502, %v1149
    %v1294 = vsub.f32 %v506, %v1149
    %v1295 = vsub.f32 %v510, %v1149
    %v1296 = vsub.f32 %v514, %v1149
    %v1297 = vsub.f32 %v518, %v1149
    %v1298 = vsub.f32 %v525, %v1153
    %v1299 = vsub.f32 %v529, %v1153
    %v1300 = vsub.f32 %v533, %v1153
    %v1301 = vsub.f32 %v537, %v1153
    %v1302 = vsub.f32 %v541, %v1153
    %v1303 = vsub.f32 %v545, %v1153
    %v1304 = vsub.f32 %v549, %v1153
    %v1305 = vsub.f32 %v553, %v1153
    %v1306 = vsub.f32 %v557, %v1153
    %v1307 = vsub.f32 %v561, %v1153
    %v1308 = vsub.f32 %v565, %v1153
    %v1309 = vsub.f32 %v569, %v1153
    %v1310 = vsub.f32 %v573, %v1153
    %v1311 = vsub.f32 %v577, %v1153
    %v1312 = vsub.f32 %v581, %v1153
    %v1313 = vsub.f32 %v585, %v1153
    %v1314 = vsub.f32 %v592, %v1157
    %v1315 = vsub.f32 %v596, %v1157
    %v1316 = vsub.f32 %v600, %v1157
    %v1317 = vsub.f32 %v604, %v1157
    %v1318 = vsub.f32 %v608, %v1157
    %v1319 = vsub.f32 %v612, %v1157
    %v1320 = vsub.f32 %v616, %v1157
    %v1321 = vsub.f32 %v620, %v1157
    %v1322 = vsub.f32 %v624, %v1157
    %v1323 = vsub.f32 %v628, %v1157
    %v1324 = vsub.f32 %v632, %v1157
    %v1325 = vsub.f32 %v636, %v1157
    %v1326 = vsub.f32 %v640, %v1157
    %v1327 = vsub.f32 %v644, %v1157
    %v1328 = vsub.f32 %v648, %v1157
    %v1329 = vsub.f32 %v652, %v1157
    %v1330 = vsub.f32 %v659, %v1161
    %v1331 = vsub.f32 %v663, %v1161
    %v1332 = vsub.f32 %v667, %v1161
    %v1333 = vsub.f32 %v671, %v1161
    %v1334 = vsub.f32 %v675, %v1161
    %v1335 = vsub.f32 %v679, %v1161
    %v1336 = vsub.f32 %v683, %v1161
    %v1337 = vsub.f32 %v687, %v1161
    %v1338 = vsub.f32 %v691, %v1161
    %v1339 = vsub.f32 %v695, %v1161
    %v1340 = vsub.f32 %v699, %v1161
    %v1341 = vsub.f32 %v703, %v1161
    %v1342 = vsub.f32 %v707, %v1161
    %v1343 = vsub.f32 %v711, %v1161
    %v1344 = vsub.f32 %v715, %v1161
    %v1345 = vsub.f32 %v719, %v1161
    %v1346 = vsub.f32 %v726, %v1165
    %v1347 = vsub.f32 %v730, %v1165
    %v1348 = vsub.f32 %v734, %v1165
    %v1349 = vsub.f32 %v738, %v1165
    %v1350 = vsub.f32 %v742, %v1165
    %v1351 = vsub.f32 %v746, %v1165
    %v1352 = vsub.f32 %v750, %v1165
    %v1353 = vsub.f32 %v754, %v1165
    %v1354 = vsub.f32 %v758, %v1165
    %v1355 = vsub.f32 %v762, %v1165
    %v1356 = vsub.f32 %v766, %v1165
    %v1357 = vsub.f32 %v770, %v1165
    %v1358 = vsub.f32 %v774, %v1165
    %v1359 = vsub.f32 %v778, %v1165
    %v1360 = vsub.f32 %v782, %v1165
    %v1361 = vsub.f32 %v786, %v1165
    %v1362 = vsub.f32 %v793, %v1169
    %v1363 = vsub.f32 %v797, %v1169
    %v1364 = vsub.f32 %v801, %v1169
    %v1365 = vsub.f32 %v805, %v1169
    %v1366 = vsub.f32 %v809, %v1169
    %v1367 = vsub.f32 %v813, %v1169
    %v1368 = vsub.f32 %v817, %v1169
    %v1369 = vsub.f32 %v821, %v1169
    %v1370 = vsub.f32 %v825, %v1169
    %v1371 = vsub.f32 %v829, %v1169
    %v1372 = vsub.f32 %v833, %v1169
    %v1373 = vsub.f32 %v837, %v1169
    %v1374 = vsub.f32 %v841, %v1169
    %v1375 = vsub.f32 %v845, %v1169
    %v1376 = vsub.f32 %v849, %v1169
    %v1377 = vsub.f32 %v853, %v1169
    %v1378 = vsub.f32 %v860, %v1173
    %v1379 = vsub.f32 %v864, %v1173
    %v1380 = vsub.f32 %v868, %v1173
    %v1381 = vsub.f32 %v872, %v1173
    %v1382 = vsub.f32 %v876, %v1173
    %v1383 = vsub.f32 %v880, %v1173
    %v1384 = vsub.f32 %v884, %v1173
    %v1385 = vsub.f32 %v888, %v1173
    %v1386 = vsub.f32 %v892, %v1173
    %v1387 = vsub.f32 %v896, %v1173
    %v1388 = vsub.f32 %v900, %v1173
    %v1389 = vsub.f32 %v904, %v1173
    %v1390 = vsub.f32 %v908, %v1173
    %v1391 = vsub.f32 %v912, %v1173
    %v1392 = vsub.f32 %v916, %v1173
    %v1393 = vsub.f32 %v920, %v1173
    %v1394 = vsub.f32 %v927, %v1177
    %v1395 = vsub.f32 %v931, %v1177
    %v1396 = vsub.f32 %v935, %v1177
    %v1397 = vsub.f32 %v939, %v1177
    %v1398 = vsub.f32 %v943, %v1177
    %v1399 = vsub.f32 %v947, %v1177
    %v1400 = vsub.f32 %v951, %v1177
    %v1401 = vsub.f32 %v955, %v1177
    %v1402 = vsub.f32 %v959, %v1177
    %v1403 = vsub.f32 %v963, %v1177
    %v1404 = vsub.f32 %v967, %v1177
    %v1405 = vsub.f32 %v971, %v1177
    %v1406 = vsub.f32 %v975, %v1177
    %v1407 = vsub.f32 %v979, %v1177
    %v1408 = vsub.f32 %v983, %v1177
    %v1409 = vsub.f32 %v987, %v1177
    %v1410 = vsub.f32 %v994, %v1181
    %v1411 = vsub.f32 %v998, %v1181
    %v1412 = vsub.f32 %v1002, %v1181
    %v1413 = vsub.f32 %v1006, %v1181
    %v1414 = vsub.f32 %v1010, %v1181
    %v1415 = vsub.f32 %v1014, %v1181
    %v1416 = vsub.f32 %v1018, %v1181
    %v1417 = vsub.f32 %v1022, %v1181
    %v1418 = vsub.f32 %v1026, %v1181
    %v1419 = vsub.f32 %v1030, %v1181
    %v1420 = vsub.f32 %v1034, %v1181
    %v1421 = vsub.f32 %v1038, %v1181
    %v1422 = vsub.f32 %v1042, %v1181
    %v1423 = vsub.f32 %v1046, %v1181
    %v1424 = vsub.f32 %v1050, %v1181
    %v1425 = vsub.f32 %v1054, %v1181
    %v1426 = vsub.f32 %v1061, %v1185
    %v1427 = vsub.f32 %v1065, %v1185
    %v1428 = vsub.f32 %v1069, %v1185
    %v1429 = vsub.f32 %v1073, %v1185
    %v1430 = vsub.f32 %v1077, %v1185
    %v1431 = vsub.f32 %v1081, %v1185
    %v1432 = vsub.f32 %v1085, %v1185
    %v1433 = vsub.f32 %v1089, %v1185
    %v1434 = vsub.f32 %v1093, %v1185
    %v1435 = vsub.f32 %v1097, %v1185
    %v1436 = vsub.f32 %v1101, %v1185
    %v1437 = vsub.f32 %v1105, %v1185
    %v1438 = vsub.f32 %v1109, %v1185
    %v1439 = vsub.f32 %v1113, %v1185
    %v1440 = vsub.f32 %v1117, %v1185
    %v1441 = vsub.f32 %v1121, %v1185
    %v1442 = vand.u32 2147483647, %v1186
    %v1443 = vand.u32 2147483647, %v1187
    %v1444 = vand.u32 2147483647, %v1188
    %v1445 = vand.u32 2147483647, %v1189
    %v1446 = vand.u32 2147483647, %v1190
    %v1447 = vand.u32 2147483647, %v1191
    %v1448 = vand.u32 2147483647, %v1192
    %v1449 = vand.u32 2147483647, %v1193
    %v1450 = vand.u32 2147483647, %v1194
    %v1451 = vand.u32 2147483647, %v1195
    %v1452 = vand.u32 2147483647, %v1196
    %v1453 = vand.u32 2147483647, %v1197
    %v1454 = vand.u32 2147483647, %v1198
    %v1455 = vand.u32 2147483647, %v1199
    %v1456 = vand.u32 2147483647, %v1200
    %v1457 = vand.u32 2147483647, %v1201
    %v1458 = vand.u32 2147483647, %v1202
    %v1459 = vand.u32 2147483647, %v1203
    %v1460 = vand.u32 2147483647, %v1204
    %v1461 = vand.u32 2147483647, %v1205
    %v1462 = vand.u32 2147483647, %v1206
    %v1463 = vand.u32 2147483647, %v1207
    %v1464 = vand.u32 2147483647, %v1208
    %v1465 = vand.u32 2147483647, %v1209
    %v1466 = vand.u32 2147483647, %v1210
    %v1467 = vand.u32 2147483647, %v1211
    %v1468 = vand.u32 2147483647, %v1212
    %v1469 = vand.u32 2147483647, %v1213
    %v1470 = vand.u32 2147483647, %v1214
    %v1471 = vand.u32 2147483647, %v1215
    %v1472 = vand.u32 2147483647, %v1216
    %v1473 = vand.u32 2147483647, %v1217
    %v1474 = vand.u32 2147483647, %v1218
    %v1475 = vand.u32 2147483647, %v1219
    %v1476 = vand.u32 2147483647, %v1220
    %v1477 = vand.u32 2147483647, %v1221
    %v1478 = vand.u32 2147483647, %v1222
    %v1479 = vand.u32 2147483647, %v1223
    %v1480 = vand.u32 2147483647, %v1224
    %v1481 = vand.u32 2147483647, %v1225
    %v1482 = vand.u32 2147483647, %v1226
    %v1483 = vand.u32 2147483647, %v1227
    %v1484 = vand.u32 2147483647, %v1228
    %v1485 = vand.u32 2147483647, %v1229
    %v1486 = vand.u32 2147483647, %v1230
    %v1487 = vand.u32 2147483647, %v1231
    %v1488 = vand.u32 2147483647, %v1232
    %v1489 = vand.u32 2147483647, %v1233
    %v1490 = vand.u32 2147483647, %v1234
    %v1491 = vand.u32 2147483647, %v1235
    %v1492 = vand.u32 2147483647, %v1236
    %v1493 = vand.u32 2147483647, %v1237
    %v1494 = vand.u32 2147483647, %v1238
    %v1495 = vand.u32 2147483647, %v1239
    %v1496 = vand.u32 2147483647, %v1240
    %v1497 = vand.u32 2147483647, %v1241
    %v1498 = vand.u32 2147483647, %v1242
    %v1499 = vand.u32 2147483647, %v1243
    %v1500 = vand.u32 2147483647, %v1244
    %v1501 = vand.u32 2147483647, %v1245
    %v1502 = vand.u32 2147483647, %v1246
    %v1503 = vand.u32 2147483647, %v1247
    %v1504 = vand.u32 2147483647, %v1248
    %v1505 = vand.u32 2147483647, %v1249
    %v1506 = vand.u32 2147483647, %v1250
    %v1507 = vand.u32 2147483647, %v1251
    %v1508 = vand.u32 2147483647, %v1252
    %v1509 = vand.u32 2147483647, %v1253
    %v1510 = vand.u32 2147483647, %v1254
    %v1511 = vand.u32 2147483647, %v1255
    %v1512 = vand.u32 2147483647, %v1256
    %v1513 = vand.u32 2147483647, %v1257
    %v1514 = vand.u32 2147483647, %v1258
    %v1515 = vand.u32 2147483647, %v1259
    %v1516 = vand.u32 2147483647, %v1260
    %v1517 = vand.u32 2147483647, %v1261
    %v1518 = vand.u32 2147483647, %v1262
    %v1519 = vand.u32 2147483647, %v1263
    %v1520 = vand.u32 2147483647, %v1264
    %v1521 = vand.u32 2147483647, %v1265
    %v1522 = vand.u32 2147483647, %v1266
    %v1523 = vand.u32 2147483647, %v1267
    %v1524 = vand.u32 2147483647, %v1268
    %v1525 = vand.u32 2147483647, %v1269
    %v1526 = vand.u32 2147483647, %v1270
    %v1527 = vand.u32 2147483647, %v1271
    %v1528 = vand.u32 2147483647, %v1272
    %v1529 = vand.u32 2147483647, %v1273
    %v1530 = vand.u32 2147483647, %v1274
    %v1531 = vand.u32 2147483647, %v1275
    %v1532 = vand.u32 2147483647, %v1276
    %v1533 = vand.u32 2147483647, %v1277
    %v1534 = vand.u32 2147483647, %v1278
    %v1535 = vand.u32 2147483647, %v1279
    %v1536 = vand.u32 2147483647, %v1280
    %v1537 = vand.u32 2147483647, %v1281
    %v1538 = vand.u32 2147483647, %v1282
    %v1539 = vand.u32 2147483647, %v1283
    %v1540 = vand.u32 2147483647, %v1284
    %v1541 = vand.u32 2147483647, %v1285
    %v1542 = vand.u32 2147483647, %v1286
    %v1543 = vand.u32 2147483647, %v1287
    %v1544 = vand.u32 2147483647, %v1288
    %v1545 = vand.u32 2147483647, %v1289
    %v1546 = vand.u32 2147483647, %v1290
    %v1547 = vand.u32 2147483647, %v1291
    %v1548 = vand.u32 2147483647, %v1292
    %v1549 = vand.u32 2147483647, %v1293
    %v1550 = vand.u32 2147483647, %v1294
    %v1551 = vand.u32 2147483647, %v1295
    %v1552 = vand.u32 2147483647, %v1296
    %v1553 = vand.u32 2147483647, %v1297
    %v1554 = vand.u32 2147483647, %v1298
    %v1555 = vand.u32 2147483647, %v1299
    %v1556 = vand.u32 2147483647, %v1300
    %v1557 = vand.u32 2147483647, %v1301
    %v1558 = vand.u32 2147483647, %v1302
    %v1559 = vand.u32 2147483647, %v1303
    %v1560 = vand.u32 2147483647, %v1304
    %v1561 = vand.u32 2147483647, %v1305
    %v1562 = vand.u32 2147483647, %v1306
    %v1563 = vand.u32 2147483647, %v1307
    %v1564 = vand.u32 2147483647, %v1308
    %v1565 = vand.u32 2147483647, %v1309
    %v1566 = vand.u32 2147483647, %v1310
    %v1567 = vand.u32 2147483647, %v1311
    %v1568 = vand.u32 2147483647, %v1312
    %v1569 = vand.u32 2147483647, %v1313
    %v1570 = vand.u32 2147483647, %v1314
    %v1571 = vand.u32 2147483647, %v1315
    %v1572 = vand.u32 2147483647, %v1316
    %v1573 = vand.u32 2147483647, %v1317
    %v1574 = vand.u32 2147483647, %v1318
    %v1575 = vand.u32 2147483647, %v1319
    %v1576 = vand.u32 2147483647, %v1320
    %v1577 = vand.u32 2147483647, %v1321
    %v1578 = vand.u32 2147483647, %v1322
    %v1579 = vand.u32 2147483647, %v1323
    %v1580 = vand.u32 2147483647, %v1324
    %v1581 = vand.u32 2147483647, %v1325
    %v1582 = vand.u32 2147483647, %v1326
    %v1583 = vand.u32 2147483647, %v1327
    %v1584 = vand.u32 2147483647, %v1328
    %v1585 = vand.u32 2147483647, %v1329
    %v1586 = vand.u32 2147483647, %v1330
    %v1587 = vand.u32 2147483647, %v1331
    %v1588 = vand.u32 2147483647, %v1332
    %v1589 = vand.u32 2147483647, %v1333
    %v1590 = vand.u32 2147483647, %v1334
    %v1591 = vand.u32 2147483647, %v1335
    %v1592 = vand.u32 2147483647, %v1336
    %v1593 = vand.u32 2147483647, %v1337
    %v1594 = vand.u32 2147483647, %v1338
    %v1595 = vand.u32 2147483647, %v1339
    %v1596 = vand.u32 2147483647, %v1340
    %v1597 = vand.u32 2147483647, %v1341
    %v1598 = vand.u32 2147483647, %v1342
    %v1599 = vand.u32 2147483647, %v1343
    %v1600 = vand.u32 2147483647, %v1344
    %v1601 = vand.u32 2147483647, %v1345
    %v1602 = vand.u32 2147483647, %v1346
    %v1603 = vand.u32 2147483647, %v1347
    %v1604 = vand.u32 2147483647, %v1348
    %v1605 = vand.u32 2147483647, %v1349
    %v1606 = vand.u32 2147483647, %v1350
    %v1607 = vand.u32 2147483647, %v1351
    %v1608 = vand.u32 2147483647, %v1352
    %v1609 = vand.u32 2147483647, %v1353
    %v1610 = vand.u32 2147483647, %v1354
    %v1611 = vand.u32 2147483647, %v1355
    %v1612 = vand.u32 2147483647, %v1356
    %v1613 = vand.u32 2147483647, %v1357
    %v1614 = vand.u32 2147483647, %v1358
    %v1615 = vand.u32 2147483647, %v1359
    %v1616 = vand.u32 2147483647, %v1360
    %v1617 = vand.u32 2147483647, %v1361
    %v1618 = vand.u32 2147483647, %v1362
    %v1619 = vand.u32 2147483647, %v1363
    %v1620 = vand.u32 2147483647, %v1364
    %v1621 = vand.u32 2147483647, %v1365
    %v1622 = vand.u32 2147483647, %v1366
    %v1623 = vand.u32 2147483647, %v1367
    %v1624 = vand.u32 2147483647, %v1368
    %v1625 = vand.u32 2147483647, %v1369
    %v1626 = vand.u32 2147483647, %v1370
    %v1627 = vand.u32 2147483647, %v1371
    %v1628 = vand.u32 2147483647, %v1372
    %v1629 = vand.u32 2147483647, %v1373
    %v1630 = vand.u32 2147483647, %v1374
    %v1631 = vand.u32 2147483647, %v1375
    %v1632 = vand.u32 2147483647, %v1376
    %v1633 = vand.u32 2147483647, %v1377
    %v1634 = vand.u32 2147483647, %v1378
    %v1635 = vand.u32 2147483647, %v1379
    %v1636 = vand.u32 2147483647, %v1380
    %v1637 = vand.u32 2147483647, %v1381
    %v1638 = vand.u32 2147483647, %v1382
    %v1639 = vand.u32 2147483647, %v1383
    %v1640 = vand.u32 2147483647, %v1384
    %v1641 = vand.u32 2147483647, %v1385
    %v1642 = vand.u32 2147483647, %v1386
    %v1643 = vand.u32 2147483647, %v1387
    %v1644 = vand.u32 2147483647, %v1388
    %v1645 = vand.u32 2147483647, %v1389
    %v1646 = vand.u32 2147483647, %v1390
    %v1647 = vand.u32 2147483647, %v1391
    %v1648 = vand.u32 2147483647, %v1392
    %v1649 = vand.u32 2147483647, %v1393
    %v1650 = vand.u32 2147483647, %v1394
    %v1651 = vand.u32 2147483647, %v1395
    %v1652 = vand.u32 2147483647, %v1396
    %v1653 = vand.u32 2147483647, %v1397
    %v1654 = vand.u32 2147483647, %v1398
    %v1655 = vand.u32 2147483647, %v1399
    %v1656 = vand.u32 2147483647, %v1400
    %v1657 = vand.u32 2147483647, %v1401
    %v1658 = vand.u32 2147483647, %v1402
    %v1659 = vand.u32 2147483647, %v1403
    %v1660 = vand.u32 2147483647, %v1404
    %v1661 = vand.u32 2147483647, %v1405
    %v1662 = vand.u32 2147483647, %v1406
    %v1663 = vand.u32 2147483647, %v1407
    %v1664 = vand.u32 2147483647, %v1408
    %v1665 = vand.u32 2147483647, %v1409
    %v1666 = vand.u32 2147483647, %v1410
    %v1667 = vand.u32 2147483647, %v1411
    %v1668 = vand.u32 2147483647, %v1412
    %v1669 = vand.u32 2147483647, %v1413
    %v1670 = vand.u32 2147483647, %v1414
    %v1671 = vand.u32 2147483647, %v1415
    %v1672 = vand.u32 2147483647, %v1416
    %v1673 = vand.u32 2147483647, %v1417
    %v1674 = vand.u32 2147483647, %v1418
    %v1675 = vand.u32 2147483647, %v1419
    %v1676 = vand.u32 2147483647, %v1420
    %v1677 = vand.u32 2147483647, %v1421
    %v1678 = vand.u32 2147483647, %v1422
    %v1679 = vand.u32 2147483647, %v1423
    %v1680 = vand.u32 2147483647, %v1424
    %v1681 = vand.u32 2147483647, %v1425
    %v1682 = vand.u32 2147483647, %v1426
    %v1683 = vand.u32 2147483647, %v1427
    %v1684 = vand.u32 2147483647, %v1428
    %v1685 = vand.u32 2147483647, %v1429
    %v1686 = vand.u32 2147483647, %v1430
    %v1687 = vand.u32 2147483647, %v1431
    %v1688 = vand.u32 2147483647, %v1432
    %v1689 = vand.u32 2147483647, %v1433
    %v1690 = vand.u32 2147483647, %v1434
    %v1691 = vand.u32 2147483647, %v1435
    %v1692 = vand.u32 2147483647, %v1436
    %v1693 = vand.u32 2147483647, %v1437
    %v1694 = vand.u32 2147483647, %v1438
    %v1695 = vand.u32 2147483647, %v1439
    %v1696 = vand.u32 2147483647, %v1440
    %v1697 = vand.u32 2147483647, %v1441
    %v1698 = vlaneseq
    %v1699 = vshrl.u32 %v1698, 7
    %v1700 = vsub.s32 1, %v1699
    %v1701 = vrot.slane %v18, %v1700
    %1703 = vbcast.lane.b32.xlu0 %v1701, 256
    %v1704 = vpop.permute.xlu0 %1703
    %s1706 = sor.u32 256, 8
    %1707 = vbcast.lane.b32.xlu0 %v1701, %s1706
    %v1708 = vpop.permute.xlu0 %1707
    %s1710 = sor.u32 256, 16
    %1711 = vbcast.lane.b32.xlu0 %v1701, %s1710
    %v1712 = vpop.permute.xlu0 %1711
    %s1714 = sor.u32 256, 24
    %1715 = vbcast.lane.b32.xlu0 %v1701, %s1714
    %v1716 = vpop.permute.xlu0 %1715
    %s1718 = sor.u32 256, 32
    %1719 = vbcast.lane.b32.xlu0 %v1701, %s1718
    %v1720 = vpop.permute.xlu0 %1719
    %s1722 = sor.u32 256, 40
    %1723 = vbcast.lane.b32.xlu0 %v1701, %s1722
    %v1724 = vpop.permute.xlu0 %1723
    %s1726 = sor.u32 256, 48
    %1727 = vbcast.lane.b32.xlu0 %v1701, %s1726
    %v1728 = vpop.permute.xlu0 %1727
    %s1730 = sor.u32 256, 56
    %1731 = vbcast.lane.b32.xlu0 %v1701, %s1730
    %v1732 = vpop.permute.xlu0 %1731
    %s1734 = sor.u32 256, 64
    %1735 = vbcast.lane.b32.xlu0 %v1701, %s1734
    %v1736 = vpop.permute.xlu0 %1735
    %s1738 = sor.u32 256, 72
    %1739 = vbcast.lane.b32.xlu0 %v1701, %s1738
    %v1740 = vpop.permute.xlu0 %1739
    %s1742 = sor.u32 256, 80
    %1743 = vbcast.lane.b32.xlu0 %v1701, %s1742
    %v1744 = vpop.permute.xlu0 %1743
    %s1746 = sor.u32 256, 88
    %1747 = vbcast.lane.b32.xlu0 %v1701, %s1746
    %v1748 = vpop.permute.xlu0 %1747
    %s1750 = sor.u32 256, 96
    %1751 = vbcast.lane.b32.xlu0 %v1701, %s1750
    %v1752 = vpop.permute.xlu0 %1751
    %s1754 = sor.u32 256, 104
    %1755 = vbcast.lane.b32.xlu0 %v1701, %s1754
    %v1756 = vpop.permute.xlu0 %1755
    %s1758 = sor.u32 256, 112
    %1759 = vbcast.lane.b32.xlu0 %v1701, %s1758
    %v1760 = vpop.permute.xlu0 %1759
    %s1762 = sor.u32 256, 120
    %1763 = vbcast.lane.b32.xlu0 %v1701, %s1762
    %v1764 = vpop.permute.xlu0 %1763
    %v1765 = vlaneseq
    %v1766 = vshrl.u32 %v1765, 7
    %v1767 = vsub.s32 1, %v1766
    %v1768 = vrot.slane %v19, %v1767
    %1770 = vbcast.lane.b32.xlu0 %v1768, 256
    %v1771 = vpop.permute.xlu0 %1770
    %s1773 = sor.u32 256, 8
    %1774 = vbcast.lane.b32.xlu0 %v1768, %s1773
    %v1775 = vpop.permute.xlu0 %1774
    %s1777 = sor.u32 256, 16
    %1778 = vbcast.lane.b32.xlu0 %v1768, %s1777
    %v1779 = vpop.permute.xlu0 %1778
    %s1781 = sor.u32 256, 24
    %1782 = vbcast.lane.b32.xlu0 %v1768, %s1781
    %v1783 = vpop.permute.xlu0 %1782
    %s1785 = sor.u32 256, 32
    %1786 = vbcast.lane.b32.xlu0 %v1768, %s1785
    %v1787 = vpop.permute.xlu0 %1786
    %s1789 = sor.u32 256, 40
    %1790 = vbcast.lane.b32.xlu0 %v1768, %s1789
    %v1791 = vpop.permute.xlu0 %1790
    %s1793 = sor.u32 256, 48
    %1794 = vbcast.lane.b32.xlu0 %v1768, %s1793
    %v1795 = vpop.permute.xlu0 %1794
    %s1797 = sor.u32 256, 56
    %1798 = vbcast.lane.b32.xlu0 %v1768, %s1797
    %v1799 = vpop.permute.xlu0 %1798
    %s1801 = sor.u32 256, 64
    %1802 = vbcast.lane.b32.xlu0 %v1768, %s1801
    %v1803 = vpop.permute.xlu0 %1802
    %s1805 = sor.u32 256, 72
    %1806 = vbcast.lane.b32.xlu0 %v1768, %s1805
    %v1807 = vpop.permute.xlu0 %1806
    %s1809 = sor.u32 256, 80
    %1810 = vbcast.lane.b32.xlu0 %v1768, %s1809
    %v1811 = vpop.permute.xlu0 %1810
    %s1813 = sor.u32 256, 88
    %1814 = vbcast.lane.b32.xlu0 %v1768, %s1813
    %v1815 = vpop.permute.xlu0 %1814
    %s1817 = sor.u32 256, 96
    %1818 = vbcast.lane.b32.xlu0 %v1768, %s1817
    %v1819 = vpop.permute.xlu0 %1818
    %s1821 = sor.u32 256, 104
    %1822 = vbcast.lane.b32.xlu0 %v1768, %s1821
    %v1823 = vpop.permute.xlu0 %1822
    %s1825 = sor.u32 256, 112
    %1826 = vbcast.lane.b32.xlu0 %v1768, %s1825
    %v1827 = vpop.permute.xlu0 %1826
    %s1829 = sor.u32 256, 120
    %1830 = vbcast.lane.b32.xlu0 %v1768, %s1829
    %v1831 = vpop.permute.xlu0 %1830
    %v1832 = vlaneseq
    %v1833 = vshrl.u32 %v1832, 7
    %v1834 = vsub.s32 1, %v1833
    %v1835 = vrot.slane %v20, %v1834
    %1837 = vbcast.lane.b32.xlu0 %v1835, 256
    %v1838 = vpop.permute.xlu0 %1837
    %s1840 = sor.u32 256, 8
    %1841 = vbcast.lane.b32.xlu0 %v1835, %s1840
    %v1842 = vpop.permute.xlu0 %1841
    %s1844 = sor.u32 256, 16
    %1845 = vbcast.lane.b32.xlu0 %v1835, %s1844
    %v1846 = vpop.permute.xlu0 %1845
    %s1848 = sor.u32 256, 24
    %1849 = vbcast.lane.b32.xlu0 %v1835, %s1848
    %v1850 = vpop.permute.xlu0 %1849
    %s1852 = sor.u32 256, 32
    %1853 = vbcast.lane.b32.xlu0 %v1835, %s1852
    %v1854 = vpop.permute.xlu0 %1853
    %s1856 = sor.u32 256, 40
    %1857 = vbcast.lane.b32.xlu0 %v1835, %s1856
    %v1858 = vpop.permute.xlu0 %1857
    %s1860 = sor.u32 256, 48
    %1861 = vbcast.lane.b32.xlu0 %v1835, %s1860
    %v1862 = vpop.permute.xlu0 %1861
    %s1864 = sor.u32 256, 56
    %1865 = vbcast.lane.b32.xlu0 %v1835, %s1864
    %v1866 = vpop.permute.xlu0 %1865
    %s1868 = sor.u32 256, 64
    %1869 = vbcast.lane.b32.xlu0 %v1835, %s1868
    %v1870 = vpop.permute.xlu0 %1869
    %s1872 = sor.u32 256, 72
    %1873 = vbcast.lane.b32.xlu0 %v1835, %s1872
    %v1874 = vpop.permute.xlu0 %1873
    %s1876 = sor.u32 256, 80
    %1877 = vbcast.lane.b32.xlu0 %v1835, %s1876
    %v1878 = vpop.permute.xlu0 %1877
    %s1880 = sor.u32 256, 88
    %1881 = vbcast.lane.b32.xlu0 %v1835, %s1880
    %v1882 = vpop.permute.xlu0 %1881
    %s1884 = sor.u32 256, 96
    %1885 = vbcast.lane.b32.xlu0 %v1835, %s1884
    %v1886 = vpop.permute.xlu0 %1885
    %s1888 = sor.u32 256, 104
    %1889 = vbcast.lane.b32.xlu0 %v1835, %s1888
    %v1890 = vpop.permute.xlu0 %1889
    %s1892 = sor.u32 256, 112
    %1893 = vbcast.lane.b32.xlu0 %v1835, %s1892
    %v1894 = vpop.permute.xlu0 %1893
    %s1896 = sor.u32 256, 120
    %1897 = vbcast.lane.b32.xlu0 %v1835, %s1896
    %v1898 = vpop.permute.xlu0 %1897
    %v1899 = vlaneseq
    %v1900 = vshrl.u32 %v1899, 7
    %v1901 = vsub.s32 1, %v1900
    %v1902 = vrot.slane %v21, %v1901
    %1904 = vbcast.lane.b32.xlu0 %v1902, 256
    %v1905 = vpop.permute.xlu0 %1904
    %s1907 = sor.u32 256, 8
    %1908 = vbcast.lane.b32.xlu0 %v1902, %s1907
    %v1909 = vpop.permute.xlu0 %1908
    %s1911 = sor.u32 256, 16
    %1912 = vbcast.lane.b32.xlu0 %v1902, %s1911
    %v1913 = vpop.permute.xlu0 %1912
    %s1915 = sor.u32 256, 24
    %1916 = vbcast.lane.b32.xlu0 %v1902, %s1915
    %v1917 = vpop.permute.xlu0 %1916
    %s1919 = sor.u32 256, 32
    %1920 = vbcast.lane.b32.xlu0 %v1902, %s1919
    %v1921 = vpop.permute.xlu0 %1920
    %s1923 = sor.u32 256, 40
    %1924 = vbcast.lane.b32.xlu0 %v1902, %s1923
    %v1925 = vpop.permute.xlu0 %1924
    %s1927 = sor.u32 256, 48
    %1928 = vbcast.lane.b32.xlu0 %v1902, %s1927
    %v1929 = vpop.permute.xlu0 %1928
    %s1931 = sor.u32 256, 56
    %1932 = vbcast.lane.b32.xlu0 %v1902, %s1931
    %v1933 = vpop.permute.xlu0 %1932
    %s1935 = sor.u32 256, 64
    %1936 = vbcast.lane.b32.xlu0 %v1902, %s1935
    %v1937 = vpop.permute.xlu0 %1936
    %s1939 = sor.u32 256, 72
    %1940 = vbcast.lane.b32.xlu0 %v1902, %s1939
    %v1941 = vpop.permute.xlu0 %1940
    %s1943 = sor.u32 256, 80
    %1944 = vbcast.lane.b32.xlu0 %v1902, %s1943
    %v1945 = vpop.permute.xlu0 %1944
    %s1947 = sor.u32 256, 88
    %1948 = vbcast.lane.b32.xlu0 %v1902, %s1947
    %v1949 = vpop.permute.xlu0 %1948
    %s1951 = sor.u32 256, 96
    %1952 = vbcast.lane.b32.xlu0 %v1902, %s1951
    %v1953 = vpop.permute.xlu0 %1952
    %s1955 = sor.u32 256, 104
    %1956 = vbcast.lane.b32.xlu0 %v1902, %s1955
    %v1957 = vpop.permute.xlu0 %1956
    %s1959 = sor.u32 256, 112
    %1960 = vbcast.lane.b32.xlu0 %v1902, %s1959
    %v1961 = vpop.permute.xlu0 %1960
    %s1963 = sor.u32 256, 120
    %1964 = vbcast.lane.b32.xlu0 %v1902, %s1963
    %v1965 = vpop.permute.xlu0 %1964
    %v1966 = vlaneseq
    %v1967 = vshrl.u32 %v1966, 7
    %v1968 = vsub.s32 1, %v1967
    %v1969 = vrot.slane %v22, %v1968
    %1971 = vbcast.lane.b32.xlu0 %v1969, 256
    %v1972 = vpop.permute.xlu0 %1971
    %s1974 = sor.u32 256, 8
    %1975 = vbcast.lane.b32.xlu0 %v1969, %s1974
    %v1976 = vpop.permute.xlu0 %1975
    %s1978 = sor.u32 256, 16
    %1979 = vbcast.lane.b32.xlu0 %v1969, %s1978
    %v1980 = vpop.permute.xlu0 %1979
    %s1982 = sor.u32 256, 24
    %1983 = vbcast.lane.b32.xlu0 %v1969, %s1982
    %v1984 = vpop.permute.xlu0 %1983
    %s1986 = sor.u32 256, 32
    %1987 = vbcast.lane.b32.xlu0 %v1969, %s1986
    %v1988 = vpop.permute.xlu0 %1987
    %s1990 = sor.u32 256, 40
    %1991 = vbcast.lane.b32.xlu0 %v1969, %s1990
    %v1992 = vpop.permute.xlu0 %1991
    %s1994 = sor.u32 256, 48
    %1995 = vbcast.lane.b32.xlu0 %v1969, %s1994
    %v1996 = vpop.permute.xlu0 %1995
    %s1998 = sor.u32 256, 56
    %1999 = vbcast.lane.b32.xlu0 %v1969, %s1998
    %v2000 = vpop.permute.xlu0 %1999
    %s2002 = sor.u32 256, 64
    %2003 = vbcast.lane.b32.xlu0 %v1969, %s2002
    %v2004 = vpop.permute.xlu0 %2003
    %s2006 = sor.u32 256, 72
    %2007 = vbcast.lane.b32.xlu0 %v1969, %s2006
    %v2008 = vpop.permute.xlu0 %2007
    %s2010 = sor.u32 256, 80
    %2011 = vbcast.lane.b32.xlu0 %v1969, %s2010
    %v2012 = vpop.permute.xlu0 %2011
    %s2014 = sor.u32 256, 88
    %2015 = vbcast.lane.b32.xlu0 %v1969, %s2014
    %v2016 = vpop.permute.xlu0 %2015
    %s2018 = sor.u32 256, 96
    %2019 = vbcast.lane.b32.xlu0 %v1969, %s2018
    %v2020 = vpop.permute.xlu0 %2019
    %s2022 = sor.u32 256, 104
    %2023 = vbcast.lane.b32.xlu0 %v1969, %s2022
    %v2024 = vpop.permute.xlu0 %2023
    %s2026 = sor.u32 256, 112
    %2027 = vbcast.lane.b32.xlu0 %v1969, %s2026
    %v2028 = vpop.permute.xlu0 %2027
    %s2030 = sor.u32 256, 120
    %2031 = vbcast.lane.b32.xlu0 %v1969, %s2030
    %v2032 = vpop.permute.xlu0 %2031
    %v2033 = vlaneseq
    %v2034 = vshrl.u32 %v2033, 7
    %v2035 = vsub.s32 1, %v2034
    %v2036 = vrot.slane %v23, %v2035
    %2038 = vbcast.lane.b32.xlu0 %v2036, 256
    %v2039 = vpop.permute.xlu0 %2038
    %s2041 = sor.u32 256, 8
    %2042 = vbcast.lane.b32.xlu0 %v2036, %s2041
    %v2043 = vpop.permute.xlu0 %2042
    %s2045 = sor.u32 256, 16
    %2046 = vbcast.lane.b32.xlu0 %v2036, %s2045
    %v2047 = vpop.permute.xlu0 %2046
    %s2049 = sor.u32 256, 24
    %2050 = vbcast.lane.b32.xlu0 %v2036, %s2049
    %v2051 = vpop.permute.xlu0 %2050
    %s2053 = sor.u32 256, 32
    %2054 = vbcast.lane.b32.xlu0 %v2036, %s2053
    %v2055 = vpop.permute.xlu0 %2054
    %s2057 = sor.u32 256, 40
    %2058 = vbcast.lane.b32.xlu0 %v2036, %s2057
    %v2059 = vpop.permute.xlu0 %2058
    %s2061 = sor.u32 256, 48
    %2062 = vbcast.lane.b32.xlu0 %v2036, %s2061
    %v2063 = vpop.permute.xlu0 %2062
    %s2065 = sor.u32 256, 56
    %2066 = vbcast.lane.b32.xlu0 %v2036, %s2065
    %v2067 = vpop.permute.xlu0 %2066
    %s2069 = sor.u32 256, 64
    %2070 = vbcast.lane.b32.xlu0 %v2036, %s2069
    %v2071 = vpop.permute.xlu0 %2070
    %s2073 = sor.u32 256, 72
    %2074 = vbcast.lane.b32.xlu0 %v2036, %s2073
    %v2075 = vpop.permute.xlu0 %2074
    %s2077 = sor.u32 256, 80
    %2078 = vbcast.lane.b32.xlu0 %v2036, %s2077
    %v2079 = vpop.permute.xlu0 %2078
    %s2081 = sor.u32 256, 88
    %2082 = vbcast.lane.b32.xlu0 %v2036, %s2081
    %v2083 = vpop.permute.xlu0 %2082
    %s2085 = sor.u32 256, 96
    %2086 = vbcast.lane.b32.xlu0 %v2036, %s2085
    %v2087 = vpop.permute.xlu0 %2086
    %s2089 = sor.u32 256, 104
    %2090 = vbcast.lane.b32.xlu0 %v2036, %s2089
    %v2091 = vpop.permute.xlu0 %2090
    %s2093 = sor.u32 256, 112
    %2094 = vbcast.lane.b32.xlu0 %v2036, %s2093
    %v2095 = vpop.permute.xlu0 %2094
    %s2097 = sor.u32 256, 120
    %2098 = vbcast.lane.b32.xlu0 %v2036, %s2097
    %v2099 = vpop.permute.xlu0 %2098
    %v2100 = vlaneseq
    %v2101 = vshrl.u32 %v2100, 7
    %v2102 = vsub.s32 1, %v2101
    %v2103 = vrot.slane %v24, %v2102
    %2105 = vbcast.lane.b32.xlu0 %v2103, 256
    %v2106 = vpop.permute.xlu0 %2105
    %s2108 = sor.u32 256, 8
    %2109 = vbcast.lane.b32.xlu0 %v2103, %s2108
    %v2110 = vpop.permute.xlu0 %2109
    %s2112 = sor.u32 256, 16
    %2113 = vbcast.lane.b32.xlu0 %v2103, %s2112
    %v2114 = vpop.permute.xlu0 %2113
    %s2116 = sor.u32 256, 24
    %2117 = vbcast.lane.b32.xlu0 %v2103, %s2116
    %v2118 = vpop.permute.xlu0 %2117
    %s2120 = sor.u32 256, 32
    %2121 = vbcast.lane.b32.xlu0 %v2103, %s2120
    %v2122 = vpop.permute.xlu0 %2121
    %s2124 = sor.u32 256, 40
    %2125 = vbcast.lane.b32.xlu0 %v2103, %s2124
    %v2126 = vpop.permute.xlu0 %2125
    %s2128 = sor.u32 256, 48
    %2129 = vbcast.lane.b32.xlu0 %v2103, %s2128
    %v2130 = vpop.permute.xlu0 %2129
    %s2132 = sor.u32 256, 56
    %2133 = vbcast.lane.b32.xlu0 %v2103, %s2132
    %v2134 = vpop.permute.xlu0 %2133
    %s2136 = sor.u32 256, 64
    %2137 = vbcast.lane.b32.xlu0 %v2103, %s2136
    %v2138 = vpop.permute.xlu0 %2137
    %s2140 = sor.u32 256, 72
    %2141 = vbcast.lane.b32.xlu0 %v2103, %s2140
    %v2142 = vpop.permute.xlu0 %2141
    %s2144 = sor.u32 256, 80
    %2145 = vbcast.lane.b32.xlu0 %v2103, %s2144
    %v2146 = vpop.permute.xlu0 %2145
    %s2148 = sor.u32 256, 88
    %2149 = vbcast.lane.b32.xlu0 %v2103, %s2148
    %v2150 = vpop.permute.xlu0 %2149
    %s2152 = sor.u32 256, 96
    %2153 = vbcast.lane.b32.xlu0 %v2103, %s2152
    %v2154 = vpop.permute.xlu0 %2153
    %s2156 = sor.u32 256, 104
    %2157 = vbcast.lane.b32.xlu0 %v2103, %s2156
    %v2158 = vpop.permute.xlu0 %2157
    %s2160 = sor.u32 256, 112
    %2161 = vbcast.lane.b32.xlu0 %v2103, %s2160
    %v2162 = vpop.permute.xlu0 %2161
    %s2164 = sor.u32 256, 120
    %2165 = vbcast.lane.b32.xlu0 %v2103, %s2164
    %v2166 = vpop.permute.xlu0 %2165
    %v2167 = vlaneseq
    %v2168 = vshrl.u32 %v2167, 7
    %v2169 = vsub.s32 1, %v2168
    %v2170 = vrot.slane %v25, %v2169
    %2172 = vbcast.lane.b32.xlu0 %v2170, 256
    %v2173 = vpop.permute.xlu0 %2172
    %s2175 = sor.u32 256, 8
    %2176 = vbcast.lane.b32.xlu0 %v2170, %s2175
    %v2177 = vpop.permute.xlu0 %2176
    %s2179 = sor.u32 256, 16
    %2180 = vbcast.lane.b32.xlu0 %v2170, %s2179
    %v2181 = vpop.permute.xlu0 %2180
    %s2183 = sor.u32 256, 24
    %2184 = vbcast.lane.b32.xlu0 %v2170, %s2183
    %v2185 = vpop.permute.xlu0 %2184
    %s2187 = sor.u32 256, 32
    %2188 = vbcast.lane.b32.xlu0 %v2170, %s2187
    %v2189 = vpop.permute.xlu0 %2188
    %s2191 = sor.u32 256, 40
    %2192 = vbcast.lane.b32.xlu0 %v2170, %s2191
    %v2193 = vpop.permute.xlu0 %2192
    %s2195 = sor.u32 256, 48
    %2196 = vbcast.lane.b32.xlu0 %v2170, %s2195
    %v2197 = vpop.permute.xlu0 %2196
    %s2199 = sor.u32 256, 56
    %2200 = vbcast.lane.b32.xlu0 %v2170, %s2199
    %v2201 = vpop.permute.xlu0 %2200
    %s2203 = sor.u32 256, 64
    %2204 = vbcast.lane.b32.xlu0 %v2170, %s2203
    %v2205 = vpop.permute.xlu0 %2204
    %s2207 = sor.u32 256, 72
    %2208 = vbcast.lane.b32.xlu0 %v2170, %s2207
    %v2209 = vpop.permute.xlu0 %2208
    %s2211 = sor.u32 256, 80
    %2212 = vbcast.lane.b32.xlu0 %v2170, %s2211
    %v2213 = vpop.permute.xlu0 %2212
    %s2215 = sor.u32 256, 88
    %2216 = vbcast.lane.b32.xlu0 %v2170, %s2215
    %v2217 = vpop.permute.xlu0 %2216
    %s2219 = sor.u32 256, 96
    %2220 = vbcast.lane.b32.xlu0 %v2170, %s2219
    %v2221 = vpop.permute.xlu0 %2220
    %s2223 = sor.u32 256, 104
    %2224 = vbcast.lane.b32.xlu0 %v2170, %s2223
    %v2225 = vpop.permute.xlu0 %2224
    %s2227 = sor.u32 256, 112
    %2228 = vbcast.lane.b32.xlu0 %v2170, %s2227
    %v2229 = vpop.permute.xlu0 %2228
    %s2231 = sor.u32 256, 120
    %2232 = vbcast.lane.b32.xlu0 %v2170, %s2231
    %v2233 = vpop.permute.xlu0 %2232
    %v2234 = vlaneseq
    %v2235 = vshrl.u32 %v2234, 7
    %v2236 = vsub.s32 1, %v2235
    %v2237 = vrot.slane %v26, %v2236
    %2239 = vbcast.lane.b32.xlu0 %v2237, 256
    %v2240 = vpop.permute.xlu0 %2239
    %s2242 = sor.u32 256, 8
    %2243 = vbcast.lane.b32.xlu0 %v2237, %s2242
    %v2244 = vpop.permute.xlu0 %2243
    %s2246 = sor.u32 256, 16
    %2247 = vbcast.lane.b32.xlu0 %v2237, %s2246
    %v2248 = vpop.permute.xlu0 %2247
    %s2250 = sor.u32 256, 24
    %2251 = vbcast.lane.b32.xlu0 %v2237, %s2250
    %v2252 = vpop.permute.xlu0 %2251
    %s2254 = sor.u32 256, 32
    %2255 = vbcast.lane.b32.xlu0 %v2237, %s2254
    %v2256 = vpop.permute.xlu0 %2255
    %s2258 = sor.u32 256, 40
    %2259 = vbcast.lane.b32.xlu0 %v2237, %s2258
    %v2260 = vpop.permute.xlu0 %2259
    %s2262 = sor.u32 256, 48
    %2263 = vbcast.lane.b32.xlu0 %v2237, %s2262
    %v2264 = vpop.permute.xlu0 %2263
    %s2266 = sor.u32 256, 56
    %2267 = vbcast.lane.b32.xlu0 %v2237, %s2266
    %v2268 = vpop.permute.xlu0 %2267
    %s2270 = sor.u32 256, 64
    %2271 = vbcast.lane.b32.xlu0 %v2237, %s2270
    %v2272 = vpop.permute.xlu0 %2271
    %s2274 = sor.u32 256, 72
    %2275 = vbcast.lane.b32.xlu0 %v2237, %s2274
    %v2276 = vpop.permute.xlu0 %2275
    %s2278 = sor.u32 256, 80
    %2279 = vbcast.lane.b32.xlu0 %v2237, %s2278
    %v2280 = vpop.permute.xlu0 %2279
    %s2282 = sor.u32 256, 88
    %2283 = vbcast.lane.b32.xlu0 %v2237, %s2282
    %v2284 = vpop.permute.xlu0 %2283
    %s2286 = sor.u32 256, 96
    %2287 = vbcast.lane.b32.xlu0 %v2237, %s2286
    %v2288 = vpop.permute.xlu0 %2287
    %s2290 = sor.u32 256, 104
    %2291 = vbcast.lane.b32.xlu0 %v2237, %s2290
    %v2292 = vpop.permute.xlu0 %2291
    %s2294 = sor.u32 256, 112
    %2295 = vbcast.lane.b32.xlu0 %v2237, %s2294
    %v2296 = vpop.permute.xlu0 %2295
    %s2298 = sor.u32 256, 120
    %2299 = vbcast.lane.b32.xlu0 %v2237, %s2298
    %v2300 = vpop.permute.xlu0 %2299
    %v2301 = vlaneseq
    %v2302 = vshrl.u32 %v2301, 7
    %v2303 = vsub.s32 1, %v2302
    %v2304 = vrot.slane %v27, %v2303
    %2306 = vbcast.lane.b32.xlu0 %v2304, 256
    %v2307 = vpop.permute.xlu0 %2306
    %s2309 = sor.u32 256, 8
    %2310 = vbcast.lane.b32.xlu0 %v2304, %s2309
    %v2311 = vpop.permute.xlu0 %2310
    %s2313 = sor.u32 256, 16
    %2314 = vbcast.lane.b32.xlu0 %v2304, %s2313
    %v2315 = vpop.permute.xlu0 %2314
    %s2317 = sor.u32 256, 24
    %2318 = vbcast.lane.b32.xlu0 %v2304, %s2317
    %v2319 = vpop.permute.xlu0 %2318
    %s2321 = sor.u32 256, 32
    %2322 = vbcast.lane.b32.xlu0 %v2304, %s2321
    %v2323 = vpop.permute.xlu0 %2322
    %s2325 = sor.u32 256, 40
    %2326 = vbcast.lane.b32.xlu0 %v2304, %s2325
    %v2327 = vpop.permute.xlu0 %2326
    %s2329 = sor.u32 256, 48
    %2330 = vbcast.lane.b32.xlu0 %v2304, %s2329
    %v2331 = vpop.permute.xlu0 %2330
    %s2333 = sor.u32 256, 56
    %2334 = vbcast.lane.b32.xlu0 %v2304, %s2333
    %v2335 = vpop.permute.xlu0 %2334
    %s2337 = sor.u32 256, 64
    %2338 = vbcast.lane.b32.xlu0 %v2304, %s2337
    %v2339 = vpop.permute.xlu0 %2338
    %s2341 = sor.u32 256, 72
    %2342 = vbcast.lane.b32.xlu0 %v2304, %s2341
    %v2343 = vpop.permute.xlu0 %2342
    %s2345 = sor.u32 256, 80
    %2346 = vbcast.lane.b32.xlu0 %v2304, %s2345
    %v2347 = vpop.permute.xlu0 %2346
    %s2349 = sor.u32 256, 88
    %2350 = vbcast.lane.b32.xlu0 %v2304, %s2349
    %v2351 = vpop.permute.xlu0 %2350
    %s2353 = sor.u32 256, 96
    %2354 = vbcast.lane.b32.xlu0 %v2304, %s2353
    %v2355 = vpop.permute.xlu0 %2354
    %s2357 = sor.u32 256, 104
    %2358 = vbcast.lane.b32.xlu0 %v2304, %s2357
    %v2359 = vpop.permute.xlu0 %2358
    %s2361 = sor.u32 256, 112
    %2362 = vbcast.lane.b32.xlu0 %v2304, %s2361
    %v2363 = vpop.permute.xlu0 %2362
    %s2365 = sor.u32 256, 120
    %2366 = vbcast.lane.b32.xlu0 %v2304, %s2365
    %v2367 = vpop.permute.xlu0 %2366
    %v2368 = vlaneseq
    %v2369 = vshrl.u32 %v2368, 7
    %v2370 = vsub.s32 1, %v2369
    %v2371 = vrot.slane %v28, %v2370
    %2373 = vbcast.lane.b32.xlu0 %v2371, 256
    %v2374 = vpop.permute.xlu0 %2373
    %s2376 = sor.u32 256, 8
    %2377 = vbcast.lane.b32.xlu0 %v2371, %s2376
    %v2378 = vpop.permute.xlu0 %2377
    %s2380 = sor.u32 256, 16
    %2381 = vbcast.lane.b32.xlu0 %v2371, %s2380
    %v2382 = vpop.permute.xlu0 %2381
    %s2384 = sor.u32 256, 24
    %2385 = vbcast.lane.b32.xlu0 %v2371, %s2384
    %v2386 = vpop.permute.xlu0 %2385
    %s2388 = sor.u32 256, 32
    %2389 = vbcast.lane.b32.xlu0 %v2371, %s2388
    %v2390 = vpop.permute.xlu0 %2389
    %s2392 = sor.u32 256, 40
    %2393 = vbcast.lane.b32.xlu0 %v2371, %s2392
    %v2394 = vpop.permute.xlu0 %2393
    %s2396 = sor.u32 256, 48
    %2397 = vbcast.lane.b32.xlu0 %v2371, %s2396
    %v2398 = vpop.permute.xlu0 %2397
    %s2400 = sor.u32 256, 56
    %2401 = vbcast.lane.b32.xlu0 %v2371, %s2400
    %v2402 = vpop.permute.xlu0 %2401
    %s2404 = sor.u32 256, 64
    %2405 = vbcast.lane.b32.xlu0 %v2371, %s2404
    %v2406 = vpop.permute.xlu0 %2405
    %s2408 = sor.u32 256, 72
    %2409 = vbcast.lane.b32.xlu0 %v2371, %s2408
    %v2410 = vpop.permute.xlu0 %2409
    %s2412 = sor.u32 256, 80
    %2413 = vbcast.lane.b32.xlu0 %v2371, %s2412
    %v2414 = vpop.permute.xlu0 %2413
    %s2416 = sor.u32 256, 88
    %2417 = vbcast.lane.b32.xlu0 %v2371, %s2416
    %v2418 = vpop.permute.xlu0 %2417
    %s2420 = sor.u32 256, 96
    %2421 = vbcast.lane.b32.xlu0 %v2371, %s2420
    %v2422 = vpop.permute.xlu0 %2421
    %s2424 = sor.u32 256, 104
    %2425 = vbcast.lane.b32.xlu0 %v2371, %s2424
    %v2426 = vpop.permute.xlu0 %2425
    %s2428 = sor.u32 256, 112
    %2429 = vbcast.lane.b32.xlu0 %v2371, %s2428
    %v2430 = vpop.permute.xlu0 %2429
    %s2432 = sor.u32 256, 120
    %2433 = vbcast.lane.b32.xlu0 %v2371, %s2432
    %v2434 = vpop.permute.xlu0 %2433
    %v2435 = vlaneseq
    %v2436 = vshrl.u32 %v2435, 7
    %v2437 = vsub.s32 1, %v2436
    %v2438 = vrot.slane %v29, %v2437
    %2440 = vbcast.lane.b32.xlu0 %v2438, 256
    %v2441 = vpop.permute.xlu0 %2440
    %s2443 = sor.u32 256, 8
    %2444 = vbcast.lane.b32.xlu0 %v2438, %s2443
    %v2445 = vpop.permute.xlu0 %2444
    %s2447 = sor.u32 256, 16
    %2448 = vbcast.lane.b32.xlu0 %v2438, %s2447
    %v2449 = vpop.permute.xlu0 %2448
    %s2451 = sor.u32 256, 24
    %2452 = vbcast.lane.b32.xlu0 %v2438, %s2451
    %v2453 = vpop.permute.xlu0 %2452
    %s2455 = sor.u32 256, 32
    %2456 = vbcast.lane.b32.xlu0 %v2438, %s2455
    %v2457 = vpop.permute.xlu0 %2456
    %s2459 = sor.u32 256, 40
    %2460 = vbcast.lane.b32.xlu0 %v2438, %s2459
    %v2461 = vpop.permute.xlu0 %2460
    %s2463 = sor.u32 256, 48
    %2464 = vbcast.lane.b32.xlu0 %v2438, %s2463
    %v2465 = vpop.permute.xlu0 %2464
    %s2467 = sor.u32 256, 56
    %2468 = vbcast.lane.b32.xlu0 %v2438, %s2467
    %v2469 = vpop.permute.xlu0 %2468
    %s2471 = sor.u32 256, 64
    %2472 = vbcast.lane.b32.xlu0 %v2438, %s2471
    %v2473 = vpop.permute.xlu0 %2472
    %s2475 = sor.u32 256, 72
    %2476 = vbcast.lane.b32.xlu0 %v2438, %s2475
    %v2477 = vpop.permute.xlu0 %2476
    %s2479 = sor.u32 256, 80
    %2480 = vbcast.lane.b32.xlu0 %v2438, %s2479
    %v2481 = vpop.permute.xlu0 %2480
    %s2483 = sor.u32 256, 88
    %2484 = vbcast.lane.b32.xlu0 %v2438, %s2483
    %v2485 = vpop.permute.xlu0 %2484
    %s2487 = sor.u32 256, 96
    %2488 = vbcast.lane.b32.xlu0 %v2438, %s2487
    %v2489 = vpop.permute.xlu0 %2488
    %s2491 = sor.u32 256, 104
    %2492 = vbcast.lane.b32.xlu0 %v2438, %s2491
    %v2493 = vpop.permute.xlu0 %2492
    %s2495 = sor.u32 256, 112
    %2496 = vbcast.lane.b32.xlu0 %v2438, %s2495
    %v2497 = vpop.permute.xlu0 %2496
    %s2499 = sor.u32 256, 120
    %2500 = vbcast.lane.b32.xlu0 %v2438, %s2499
    %v2501 = vpop.permute.xlu0 %2500
    %v2502 = vlaneseq
    %v2503 = vshrl.u32 %v2502, 7
    %v2504 = vsub.s32 1, %v2503
    %v2505 = vrot.slane %v30, %v2504
    %2507 = vbcast.lane.b32.xlu0 %v2505, 256
    %v2508 = vpop.permute.xlu0 %2507
    %s2510 = sor.u32 256, 8
    %2511 = vbcast.lane.b32.xlu0 %v2505, %s2510
    %v2512 = vpop.permute.xlu0 %2511
    %s2514 = sor.u32 256, 16
    %2515 = vbcast.lane.b32.xlu0 %v2505, %s2514
    %v2516 = vpop.permute.xlu0 %2515
    %s2518 = sor.u32 256, 24
    %2519 = vbcast.lane.b32.xlu0 %v2505, %s2518
    %v2520 = vpop.permute.xlu0 %2519
    %s2522 = sor.u32 256, 32
    %2523 = vbcast.lane.b32.xlu0 %v2505, %s2522
    %v2524 = vpop.permute.xlu0 %2523
    %s2526 = sor.u32 256, 40
    %2527 = vbcast.lane.b32.xlu0 %v2505, %s2526
    %v2528 = vpop.permute.xlu0 %2527
    %s2530 = sor.u32 256, 48
    %2531 = vbcast.lane.b32.xlu0 %v2505, %s2530
    %v2532 = vpop.permute.xlu0 %2531
    %s2534 = sor.u32 256, 56
    %2535 = vbcast.lane.b32.xlu0 %v2505, %s2534
    %v2536 = vpop.permute.xlu0 %2535
    %s2538 = sor.u32 256, 64
    %2539 = vbcast.lane.b32.xlu0 %v2505, %s2538
    %v2540 = vpop.permute.xlu0 %2539
    %s2542 = sor.u32 256, 72
    %2543 = vbcast.lane.b32.xlu0 %v2505, %s2542
    %v2544 = vpop.permute.xlu0 %2543
    %s2546 = sor.u32 256, 80
    %2547 = vbcast.lane.b32.xlu0 %v2505, %s2546
    %v2548 = vpop.permute.xlu0 %2547
    %s2550 = sor.u32 256, 88
    %2551 = vbcast.lane.b32.xlu0 %v2505, %s2550
    %v2552 = vpop.permute.xlu0 %2551
    %s2554 = sor.u32 256, 96
    %2555 = vbcast.lane.b32.xlu0 %v2505, %s2554
    %v2556 = vpop.permute.xlu0 %2555
    %s2558 = sor.u32 256, 104
    %2559 = vbcast.lane.b32.xlu0 %v2505, %s2558
    %v2560 = vpop.permute.xlu0 %2559
    %s2562 = sor.u32 256, 112
    %2563 = vbcast.lane.b32.xlu0 %v2505, %s2562
    %v2564 = vpop.permute.xlu0 %2563
    %s2566 = sor.u32 256, 120
    %2567 = vbcast.lane.b32.xlu0 %v2505, %s2566
    %v2568 = vpop.permute.xlu0 %2567
    %v2569 = vlaneseq
    %v2570 = vshrl.u32 %v2569, 7
    %v2571 = vsub.s32 1, %v2570
    %v2572 = vrot.slane %v31, %v2571
    %2574 = vbcast.lane.b32.xlu0 %v2572, 256
    %v2575 = vpop.permute.xlu0 %2574
    %s2577 = sor.u32 256, 8
    %2578 = vbcast.lane.b32.xlu0 %v2572, %s2577
    %v2579 = vpop.permute.xlu0 %2578
    %s2581 = sor.u32 256, 16
    %2582 = vbcast.lane.b32.xlu0 %v2572, %s2581
    %v2583 = vpop.permute.xlu0 %2582
    %s2585 = sor.u32 256, 24
    %2586 = vbcast.lane.b32.xlu0 %v2572, %s2585
    %v2587 = vpop.permute.xlu0 %2586
    %s2589 = sor.u32 256, 32
    %2590 = vbcast.lane.b32.xlu0 %v2572, %s2589
    %v2591 = vpop.permute.xlu0 %2590
    %s2593 = sor.u32 256, 40
    %2594 = vbcast.lane.b32.xlu0 %v2572, %s2593
    %v2595 = vpop.permute.xlu0 %2594
    %s2597 = sor.u32 256, 48
    %2598 = vbcast.lane.b32.xlu0 %v2572, %s2597
    %v2599 = vpop.permute.xlu0 %2598
    %s2601 = sor.u32 256, 56
    %2602 = vbcast.lane.b32.xlu0 %v2572, %s2601
    %v2603 = vpop.permute.xlu0 %2602
    %s2605 = sor.u32 256, 64
    %2606 = vbcast.lane.b32.xlu0 %v2572, %s2605
    %v2607 = vpop.permute.xlu0 %2606
    %s2609 = sor.u32 256, 72
    %2610 = vbcast.lane.b32.xlu0 %v2572, %s2609
    %v2611 = vpop.permute.xlu0 %2610
    %s2613 = sor.u32 256, 80
    %2614 = vbcast.lane.b32.xlu0 %v2572, %s2613
    %v2615 = vpop.permute.xlu0 %2614
    %s2617 = sor.u32 256, 88
    %2618 = vbcast.lane.b32.xlu0 %v2572, %s2617
    %v2619 = vpop.permute.xlu0 %2618
    %s2621 = sor.u32 256, 96
    %2622 = vbcast.lane.b32.xlu0 %v2572, %s2621
    %v2623 = vpop.permute.xlu0 %2622
    %s2625 = sor.u32 256, 104
    %2626 = vbcast.lane.b32.xlu0 %v2572, %s2625
    %v2627 = vpop.permute.xlu0 %2626
    %s2629 = sor.u32 256, 112
    %2630 = vbcast.lane.b32.xlu0 %v2572, %s2629
    %v2631 = vpop.permute.xlu0 %2630
    %s2633 = sor.u32 256, 120
    %2634 = vbcast.lane.b32.xlu0 %v2572, %s2633
    %v2635 = vpop.permute.xlu0 %2634
    %v2636 = vlaneseq
    %v2637 = vshrl.u32 %v2636, 7
    %v2638 = vsub.s32 1, %v2637
    %v2639 = vrot.slane %v32, %v2638
    %2641 = vbcast.lane.b32.xlu0 %v2639, 256
    %v2642 = vpop.permute.xlu0 %2641
    %s2644 = sor.u32 256, 8
    %2645 = vbcast.lane.b32.xlu0 %v2639, %s2644
    %v2646 = vpop.permute.xlu0 %2645
    %s2648 = sor.u32 256, 16
    %2649 = vbcast.lane.b32.xlu0 %v2639, %s2648
    %v2650 = vpop.permute.xlu0 %2649
    %s2652 = sor.u32 256, 24
    %2653 = vbcast.lane.b32.xlu0 %v2639, %s2652
    %v2654 = vpop.permute.xlu0 %2653
    %s2656 = sor.u32 256, 32
    %2657 = vbcast.lane.b32.xlu0 %v2639, %s2656
    %v2658 = vpop.permute.xlu0 %2657
    %s2660 = sor.u32 256, 40
    %2661 = vbcast.lane.b32.xlu0 %v2639, %s2660
    %v2662 = vpop.permute.xlu0 %2661
    %s2664 = sor.u32 256, 48
    %2665 = vbcast.lane.b32.xlu0 %v2639, %s2664
    %v2666 = vpop.permute.xlu0 %2665
    %s2668 = sor.u32 256, 56
    %2669 = vbcast.lane.b32.xlu0 %v2639, %s2668
    %v2670 = vpop.permute.xlu0 %2669
    %s2672 = sor.u32 256, 64
    %2673 = vbcast.lane.b32.xlu0 %v2639, %s2672
    %v2674 = vpop.permute.xlu0 %2673
    %s2676 = sor.u32 256, 72
    %2677 = vbcast.lane.b32.xlu0 %v2639, %s2676
    %v2678 = vpop.permute.xlu0 %2677
    %s2680 = sor.u32 256, 80
    %2681 = vbcast.lane.b32.xlu0 %v2639, %s2680
    %v2682 = vpop.permute.xlu0 %2681
    %s2684 = sor.u32 256, 88
    %2685 = vbcast.lane.b32.xlu0 %v2639, %s2684
    %v2686 = vpop.permute.xlu0 %2685
    %s2688 = sor.u32 256, 96
    %2689 = vbcast.lane.b32.xlu0 %v2639, %s2688
    %v2690 = vpop.permute.xlu0 %2689
    %s2692 = sor.u32 256, 104
    %2693 = vbcast.lane.b32.xlu0 %v2639, %s2692
    %v2694 = vpop.permute.xlu0 %2693
    %s2696 = sor.u32 256, 112
    %2697 = vbcast.lane.b32.xlu0 %v2639, %s2696
    %v2698 = vpop.permute.xlu0 %2697
    %s2700 = sor.u32 256, 120
    %2701 = vbcast.lane.b32.xlu0 %v2639, %s2700
    %v2702 = vpop.permute.xlu0 %2701
    %v2703 = vlaneseq
    %v2704 = vshrl.u32 %v2703, 7
    %v2705 = vsub.s32 1, %v2704
    %v2706 = vrot.slane %v33, %v2705
    %2708 = vbcast.lane.b32.xlu0 %v2706, 256
    %v2709 = vpop.permute.xlu0 %2708
    %s2711 = sor.u32 256, 8
    %2712 = vbcast.lane.b32.xlu0 %v2706, %s2711
    %v2713 = vpop.permute.xlu0 %2712
    %s2715 = sor.u32 256, 16
    %2716 = vbcast.lane.b32.xlu0 %v2706, %s2715
    %v2717 = vpop.permute.xlu0 %2716
    %s2719 = sor.u32 256, 24
    %2720 = vbcast.lane.b32.xlu0 %v2706, %s2719
    %v2721 = vpop.permute.xlu0 %2720
    %s2723 = sor.u32 256, 32
    %2724 = vbcast.lane.b32.xlu0 %v2706, %s2723
    %v2725 = vpop.permute.xlu0 %2724
    %s2727 = sor.u32 256, 40
    %2728 = vbcast.lane.b32.xlu0 %v2706, %s2727
    %v2729 = vpop.permute.xlu0 %2728
    %s2731 = sor.u32 256, 48
    %2732 = vbcast.lane.b32.xlu0 %v2706, %s2731
    %v2733 = vpop.permute.xlu0 %2732
    %s2735 = sor.u32 256, 56
    %2736 = vbcast.lane.b32.xlu0 %v2706, %s2735
    %v2737 = vpop.permute.xlu0 %2736
    %s2739 = sor.u32 256, 64
    %2740 = vbcast.lane.b32.xlu0 %v2706, %s2739
    %v2741 = vpop.permute.xlu0 %2740
    %s2743 = sor.u32 256, 72
    %2744 = vbcast.lane.b32.xlu0 %v2706, %s2743
    %v2745 = vpop.permute.xlu0 %2744
    %s2747 = sor.u32 256, 80
    %2748 = vbcast.lane.b32.xlu0 %v2706, %s2747
    %v2749 = vpop.permute.xlu0 %2748
    %s2751 = sor.u32 256, 88
    %2752 = vbcast.lane.b32.xlu0 %v2706, %s2751
    %v2753 = vpop.permute.xlu0 %2752
    %s2755 = sor.u32 256, 96
    %2756 = vbcast.lane.b32.xlu0 %v2706, %s2755
    %v2757 = vpop.permute.xlu0 %2756
    %s2759 = sor.u32 256, 104
    %2760 = vbcast.lane.b32.xlu0 %v2706, %s2759
    %v2761 = vpop.permute.xlu0 %2760
    %s2763 = sor.u32 256, 112
    %2764 = vbcast.lane.b32.xlu0 %v2706, %s2763
    %v2765 = vpop.permute.xlu0 %2764
    %s2767 = sor.u32 256, 120
    %2768 = vbcast.lane.b32.xlu0 %v2706, %s2767
    %v2769 = vpop.permute.xlu0 %2768
    %v2770 = vlaneseq
    %v2771 = vshrl.u32 %v2770, 7
    %v2772 = vsub.s32 1, %v2771
    %v2773 = vrot.slane %v34, %v2772
    %v2774 = vlaneseq
    %v2775 = vshrl.u32 %v2774, 7
    %v2776 = vsub.s32 1, %v2775
    %v2777 = vrot.slane %v35, %v2776
    %v2778 = vlaneseq
    %v2779 = vshrl.u32 %v2778, 7
    %v2780 = vsub.s32 1, %v2779
    %v2781 = vrot.slane %v36, %v2780
    %v2782 = vlaneseq
    %v2783 = vshrl.u32 %v2782, 7
    %v2784 = vsub.s32 1, %v2783
    %v2785 = vrot.slane %v37, %v2784
    %v2786 = vlaneseq
    %v2787 = vshrl.u32 %v2786, 7
    %v2788 = vsub.s32 1, %v2787
    %v2789 = vrot.slane %v38, %v2788
    %v2790 = vlaneseq
    %v2791 = vshrl.u32 %v2790, 7
    %v2792 = vsub.s32 1, %v2791
    %v2793 = vrot.slane %v39, %v2792
    %v2794 = vlaneseq
    %v2795 = vshrl.u32 %v2794, 7
    %v2796 = vsub.s32 1, %v2795
    %v2797 = vrot.slane %v40, %v2796
    %v2798 = vlaneseq
    %v2799 = vshrl.u32 %v2798, 7
    %v2800 = vsub.s32 1, %v2799
    %v2801 = vrot.slane %v41, %v2800
    %v2802 = vlaneseq
    %v2803 = vshrl.u32 %v2802, 7
    %v2804 = vsub.s32 1, %v2803
    %v2805 = vrot.slane %v42, %v2804
    %v2806 = vlaneseq
    %v2807 = vshrl.u32 %v2806, 7
    %v2808 = vsub.s32 1, %v2807
    %v2809 = vrot.slane %v43, %v2808
    %v2810 = vlaneseq
    %v2811 = vshrl.u32 %v2810, 7
    %v2812 = vsub.s32 1, %v2811
    %v2813 = vrot.slane %v44, %v2812
    %v2814 = vlaneseq
    %v2815 = vshrl.u32 %v2814, 7
    %v2816 = vsub.s32 1, %v2815
    %v2817 = vrot.slane %v45, %v2816
    %v2818 = vlaneseq
    %v2819 = vshrl.u32 %v2818, 7
    %v2820 = vsub.s32 1, %v2819
    %v2821 = vrot.slane %v46, %v2820
    %v2822 = vlaneseq
    %v2823 = vshrl.u32 %v2822, 7
    %v2824 = vsub.s32 1, %v2823
    %v2825 = vrot.slane %v47, %v2824
    %v2826 = vlaneseq
    %v2827 = vshrl.u32 %v2826, 7
    %v2828 = vsub.s32 1, %v2827
    %v2829 = vrot.slane %v48, %v2828
    %v2830 = vlaneseq
    %v2831 = vshrl.u32 %v2830, 7
    %v2832 = vsub.s32 1, %v2831
    %v2833 = vrot.slane %v49, %v2832
    %v2834 = vsub.f32 %v1704, %v2773
    %v2835 = vsub.f32 %v1708, %v2773
    %v2836 = vsub.f32 %v1712, %v2773
    %v2837 = vsub.f32 %v1716, %v2773
    %v2838 = vsub.f32 %v1720, %v2773
    %v2839 = vsub.f32 %v1724, %v2773
    %v2840 = vsub.f32 %v1728, %v2773
    %v2841 = vsub.f32 %v1732, %v2773
    %v2842 = vsub.f32 %v1736, %v2773
    %v2843 = vsub.f32 %v1740, %v2773
    %v2844 = vsub.f32 %v1744, %v2773
    %v2845 = vsub.f32 %v1748, %v2773
    %v2846 = vsub.f32 %v1752, %v2773
    %v2847 = vsub.f32 %v1756, %v2773
    %v2848 = vsub.f32 %v1760, %v2773
    %v2849 = vsub.f32 %v1764, %v2773
    %v2850 = vsub.f32 %v1771, %v2777
    %v2851 = vsub.f32 %v1775, %v2777
    %v2852 = vsub.f32 %v1779, %v2777
    %v2853 = vsub.f32 %v1783, %v2777
    %v2854 = vsub.f32 %v1787, %v2777
    %v2855 = vsub.f32 %v1791, %v2777
    %v2856 = vsub.f32 %v1795, %v2777
    %v2857 = vsub.f32 %v1799, %v2777
    %v2858 = vsub.f32 %v1803, %v2777
    %v2859 = vsub.f32 %v1807, %v2777
    %v2860 = vsub.f32 %v1811, %v2777
    %v2861 = vsub.f32 %v1815, %v2777
    %v2862 = vsub.f32 %v1819, %v2777
    %v2863 = vsub.f32 %v1823, %v2777
    %v2864 = vsub.f32 %v1827, %v2777
    %v2865 = vsub.f32 %v1831, %v2777
    %v2866 = vsub.f32 %v1838, %v2781
    %v2867 = vsub.f32 %v1842, %v2781
    %v2868 = vsub.f32 %v1846, %v2781
    %v2869 = vsub.f32 %v1850, %v2781
    %v2870 = vsub.f32 %v1854, %v2781
    %v2871 = vsub.f32 %v1858, %v2781
    %v2872 = vsub.f32 %v1862, %v2781
    %v2873 = vsub.f32 %v1866, %v2781
    %v2874 = vsub.f32 %v1870, %v2781
    %v2875 = vsub.f32 %v1874, %v2781
    %v2876 = vsub.f32 %v1878, %v2781
    %v2877 = vsub.f32 %v1882, %v2781
    %v2878 = vsub.f32 %v1886, %v2781
    %v2879 = vsub.f32 %v1890, %v2781
    %v2880 = vsub.f32 %v1894, %v2781
    %v2881 = vsub.f32 %v1898, %v2781
    %v2882 = vsub.f32 %v1905, %v2785
    %v2883 = vsub.f32 %v1909, %v2785
    %v2884 = vsub.f32 %v1913, %v2785
    %v2885 = vsub.f32 %v1917, %v2785
    %v2886 = vsub.f32 %v1921, %v2785
    %v2887 = vsub.f32 %v1925, %v2785
    %v2888 = vsub.f32 %v1929, %v2785
    %v2889 = vsub.f32 %v1933, %v2785
    %v2890 = vsub.f32 %v1937, %v2785
    %v2891 = vsub.f32 %v1941, %v2785
    %v2892 = vsub.f32 %v1945, %v2785
    %v2893 = vsub.f32 %v1949, %v2785
    %v2894 = vsub.f32 %v1953, %v2785
    %v2895 = vsub.f32 %v1957, %v2785
    %v2896 = vsub.f32 %v1961, %v2785
    %v2897 = vsub.f32 %v1965, %v2785
    %v2898 = vsub.f32 %v1972, %v2789
    %v2899 = vsub.f32 %v1976, %v2789
    %v2900 = vsub.f32 %v1980, %v2789
    %v2901 = vsub.f32 %v1984, %v2789
    %v2902 = vsub.f32 %v1988, %v2789
    %v2903 = vsub.f32 %v1992, %v2789
    %v2904 = vsub.f32 %v1996, %v2789
    %v2905 = vsub.f32 %v2000, %v2789
    %v2906 = vsub.f32 %v2004, %v2789
    %v2907 = vsub.f32 %v2008, %v2789
    %v2908 = vsub.f32 %v2012, %v2789
    %v2909 = vsub.f32 %v2016, %v2789
    %v2910 = vsub.f32 %v2020, %v2789
    %v2911 = vsub.f32 %v2024, %v2789
    %v2912 = vsub.f32 %v2028, %v2789
    %v2913 = vsub.f32 %v2032, %v2789
    %v2914 = vsub.f32 %v2039, %v2793
    %v2915 = vsub.f32 %v2043, %v2793
    %v2916 = vsub.f32 %v2047, %v2793
    %v2917 = vsub.f32 %v2051, %v2793
    %v2918 = vsub.f32 %v2055, %v2793
    %v2919 = vsub.f32 %v2059, %v2793
    %v2920 = vsub.f32 %v2063, %v2793
    %v2921 = vsub.f32 %v2067, %v2793
    %v2922 = vsub.f32 %v2071, %v2793
    %v2923 = vsub.f32 %v2075, %v2793
    %v2924 = vsub.f32 %v2079, %v2793
    %v2925 = vsub.f32 %v2083, %v2793
    %v2926 = vsub.f32 %v2087, %v2793
    %v2927 = vsub.f32 %v2091, %v2793
    %v2928 = vsub.f32 %v2095, %v2793
    %v2929 = vsub.f32 %v2099, %v2793
    %v2930 = vsub.f32 %v2106, %v2797
    %v2931 = vsub.f32 %v2110, %v2797
    %v2932 = vsub.f32 %v2114, %v2797
    %v2933 = vsub.f32 %v2118, %v2797
    %v2934 = vsub.f32 %v2122, %v2797
    %v2935 = vsub.f32 %v2126, %v2797
    %v2936 = vsub.f32 %v2130, %v2797
    %v2937 = vsub.f32 %v2134, %v2797
    %v2938 = vsub.f32 %v2138, %v2797
    %v2939 = vsub.f32 %v2142, %v2797
    %v2940 = vsub.f32 %v2146, %v2797
    %v2941 = vsub.f32 %v2150, %v2797
    %v2942 = vsub.f32 %v2154, %v2797
    %v2943 = vsub.f32 %v2158, %v2797
    %v2944 = vsub.f32 %v2162, %v2797
    %v2945 = vsub.f32 %v2166, %v2797
    %v2946 = vsub.f32 %v2173, %v2801
    %v2947 = vsub.f32 %v2177, %v2801
    %v2948 = vsub.f32 %v2181, %v2801
    %v2949 = vsub.f32 %v2185, %v2801
    %v2950 = vsub.f32 %v2189, %v2801
    %v2951 = vsub.f32 %v2193, %v2801
    %v2952 = vsub.f32 %v2197, %v2801
    %v2953 = vsub.f32 %v2201, %v2801
    %v2954 = vsub.f32 %v2205, %v2801
    %v2955 = vsub.f32 %v2209, %v2801
    %v2956 = vsub.f32 %v2213, %v2801
    %v2957 = vsub.f32 %v2217, %v2801
    %v2958 = vsub.f32 %v2221, %v2801
    %v2959 = vsub.f32 %v2225, %v2801
    %v2960 = vsub.f32 %v2229, %v2801
    %v2961 = vsub.f32 %v2233, %v2801
    %v2962 = vsub.f32 %v2240, %v2805
    %v2963 = vsub.f32 %v2244, %v2805
    %v2964 = vsub.f32 %v2248, %v2805
    %v2965 = vsub.f32 %v2252, %v2805
    %v2966 = vsub.f32 %v2256, %v2805
    %v2967 = vsub.f32 %v2260, %v2805
    %v2968 = vsub.f32 %v2264, %v2805
    %v2969 = vsub.f32 %v2268, %v2805
    %v2970 = vsub.f32 %v2272, %v2805
    %v2971 = vsub.f32 %v2276, %v2805
    %v2972 = vsub.f32 %v2280, %v2805
    %v2973 = vsub.f32 %v2284, %v2805
    %v2974 = vsub.f32 %v2288, %v2805
    %v2975 = vsub.f32 %v2292, %v2805
    %v2976 = vsub.f32 %v2296, %v2805
    %v2977 = vsub.f32 %v2300, %v2805
    %v2978 = vsub.f32 %v2307, %v2809
    %v2979 = vsub.f32 %v2311, %v2809
    %v2980 = vsub.f32 %v2315, %v2809
    %v2981 = vsub.f32 %v2319, %v2809
    %v2982 = vsub.f32 %v2323, %v2809
    %v2983 = vsub.f32 %v2327, %v2809
    %v2984 = vsub.f32 %v2331, %v2809
    %v2985 = vsub.f32 %v2335, %v2809
    %v2986 = vsub.f32 %v2339, %v2809
    %v2987 = vsub.f32 %v2343, %v2809
    %v2988 = vsub.f32 %v2347, %v2809
    %v2989 = vsub.f32 %v2351, %v2809
    %v2990 = vsub.f32 %v2355, %v2809
    %v2991 = vsub.f32 %v2359, %v2809
    %v2992 = vsub.f32 %v2363, %v2809
    %v2993 = vsub.f32 %v2367, %v2809
    %v2994 = vsub.f32 %v2374, %v2813
    %v2995 = vsub.f32 %v2378, %v2813
    %v2996 = vsub.f32 %v2382, %v2813
    %v2997 = vsub.f32 %v2386, %v2813
    %v2998 = vsub.f32 %v2390, %v2813
    %v2999 = vsub.f32 %v2394, %v2813
    %v3000 = vsub.f32 %v2398, %v2813
    %v3001 = vsub.f32 %v2402, %v2813
    %v3002 = vsub.f32 %v2406, %v2813
    %v3003 = vsub.f32 %v2410, %v2813
    %v3004 = vsub.f32 %v2414, %v2813
    %v3005 = vsub.f32 %v2418, %v2813
    %v3006 = vsub.f32 %v2422, %v2813
    %v3007 = vsub.f32 %v2426, %v2813
    %v3008 = vsub.f32 %v2430, %v2813
    %v3009 = vsub.f32 %v2434, %v2813
    %v3010 = vsub.f32 %v2441, %v2817
    %v3011 = vsub.f32 %v2445, %v2817
    %v3012 = vsub.f32 %v2449, %v2817
    %v3013 = vsub.f32 %v2453, %v2817
    %v3014 = vsub.f32 %v2457, %v2817
    %v3015 = vsub.f32 %v2461, %v2817
    %v3016 = vsub.f32 %v2465, %v2817
    %v3017 = vsub.f32 %v2469, %v2817
    %v3018 = vsub.f32 %v2473, %v2817
    %v3019 = vsub.f32 %v2477, %v2817
    %v3020 = vsub.f32 %v2481, %v2817
    %v3021 = vsub.f32 %v2485, %v2817
    %v3022 = vsub.f32 %v2489, %v2817
    %v3023 = vsub.f32 %v2493, %v2817
    %v3024 = vsub.f32 %v2497, %v2817
    %v3025 = vsub.f32 %v2501, %v2817
    %v3026 = vsub.f32 %v2508, %v2821
    %v3027 = vsub.f32 %v2512, %v2821
    %v3028 = vsub.f32 %v2516, %v2821
    %v3029 = vsub.f32 %v2520, %v2821
    %v3030 = vsub.f32 %v2524, %v2821
    %v3031 = vsub.f32 %v2528, %v2821
    %v3032 = vsub.f32 %v2532, %v2821
    %v3033 = vsub.f32 %v2536, %v2821
    %v3034 = vsub.f32 %v2540, %v2821
    %v3035 = vsub.f32 %v2544, %v2821
    %v3036 = vsub.f32 %v2548, %v2821
    %v3037 = vsub.f32 %v2552, %v2821
    %v3038 = vsub.f32 %v2556, %v2821
    %v3039 = vsub.f32 %v2560, %v2821
    %v3040 = vsub.f32 %v2564, %v2821
    %v3041 = vsub.f32 %v2568, %v2821
    %v3042 = vsub.f32 %v2575, %v2825
    %v3043 = vsub.f32 %v2579, %v2825
    %v3044 = vsub.f32 %v2583, %v2825
    %v3045 = vsub.f32 %v2587, %v2825
    %v3046 = vsub.f32 %v2591, %v2825
    %v3047 = vsub.f32 %v2595, %v2825
    %v3048 = vsub.f32 %v2599, %v2825
    %v3049 = vsub.f32 %v2603, %v2825
    %v3050 = vsub.f32 %v2607, %v2825
    %v3051 = vsub.f32 %v2611, %v2825
    %v3052 = vsub.f32 %v2615, %v2825
    %v3053 = vsub.f32 %v2619, %v2825
    %v3054 = vsub.f32 %v2623, %v2825
    %v3055 = vsub.f32 %v2627, %v2825
    %v3056 = vsub.f32 %v2631, %v2825
    %v3057 = vsub.f32 %v2635, %v2825
    %v3058 = vsub.f32 %v2642, %v2829
    %v3059 = vsub.f32 %v2646, %v2829
    %v3060 = vsub.f32 %v2650, %v2829
    %v3061 = vsub.f32 %v2654, %v2829
    %v3062 = vsub.f32 %v2658, %v2829
    %v3063 = vsub.f32 %v2662, %v2829
    %v3064 = vsub.f32 %v2666, %v2829
    %v3065 = vsub.f32 %v2670, %v2829
    %v3066 = vsub.f32 %v2674, %v2829
    %v3067 = vsub.f32 %v2678, %v2829
    %v3068 = vsub.f32 %v2682, %v2829
    %v3069 = vsub.f32 %v2686, %v2829
    %v3070 = vsub.f32 %v2690, %v2829
    %v3071 = vsub.f32 %v2694, %v2829
    %v3072 = vsub.f32 %v2698, %v2829
    %v3073 = vsub.f32 %v2702, %v2829
    %v3074 = vsub.f32 %v2709, %v2833
    %v3075 = vsub.f32 %v2713, %v2833
    %v3076 = vsub.f32 %v2717, %v2833
    %v3077 = vsub.f32 %v2721, %v2833
    %v3078 = vsub.f32 %v2725, %v2833
    %v3079 = vsub.f32 %v2729, %v2833
    %v3080 = vsub.f32 %v2733, %v2833
    %v3081 = vsub.f32 %v2737, %v2833
    %v3082 = vsub.f32 %v2741, %v2833
    %v3083 = vsub.f32 %v2745, %v2833
    %v3084 = vsub.f32 %v2749, %v2833
    %v3085 = vsub.f32 %v2753, %v2833
    %v3086 = vsub.f32 %v2757, %v2833
    %v3087 = vsub.f32 %v2761, %v2833
    %v3088 = vsub.f32 %v2765, %v2833
    %v3089 = vsub.f32 %v2769, %v2833
    %v3090 = vand.u32 2147483647, %v2834
    %v3091 = vand.u32 2147483647, %v2835
    %v3092 = vand.u32 2147483647, %v2836
    %v3093 = vand.u32 2147483647, %v2837
    %v3094 = vand.u32 2147483647, %v2838
    %v3095 = vand.u32 2147483647, %v2839
    %v3096 = vand.u32 2147483647, %v2840
    %v3097 = vand.u32 2147483647, %v2841
    %v3098 = vand.u32 2147483647, %v2842
    %v3099 = vand.u32 2147483647, %v2843
    %v3100 = vand.u32 2147483647, %v2844
    %v3101 = vand.u32 2147483647, %v2845
    %v3102 = vand.u32 2147483647, %v2846
    %v3103 = vand.u32 2147483647, %v2847
    %v3104 = vand.u32 2147483647, %v2848
    %v3105 = vand.u32 2147483647, %v2849
    %v3106 = vand.u32 2147483647, %v2850
    %v3107 = vand.u32 2147483647, %v2851
    %v3108 = vand.u32 2147483647, %v2852
    %v3109 = vand.u32 2147483647, %v2853
    %v3110 = vand.u32 2147483647, %v2854
    %v3111 = vand.u32 2147483647, %v2855
    %v3112 = vand.u32 2147483647, %v2856
    %v3113 = vand.u32 2147483647, %v2857
    %v3114 = vand.u32 2147483647, %v2858
    %v3115 = vand.u32 2147483647, %v2859
    %v3116 = vand.u32 2147483647, %v2860
    %v3117 = vand.u32 2147483647, %v2861
    %v3118 = vand.u32 2147483647, %v2862
    %v3119 = vand.u32 2147483647, %v2863
    %v3120 = vand.u32 2147483647, %v2864
    %v3121 = vand.u32 2147483647, %v2865
    %v3122 = vand.u32 2147483647, %v2866
    %v3123 = vand.u32 2147483647, %v2867
    %v3124 = vand.u32 2147483647, %v2868
    %v3125 = vand.u32 2147483647, %v2869
    %v3126 = vand.u32 2147483647, %v2870
    %v3127 = vand.u32 2147483647, %v2871
    %v3128 = vand.u32 2147483647, %v2872
    %v3129 = vand.u32 2147483647, %v2873
    %v3130 = vand.u32 2147483647, %v2874
    %v3131 = vand.u32 2147483647, %v2875
    %v3132 = vand.u32 2147483647, %v2876
    %v3133 = vand.u32 2147483647, %v2877
    %v3134 = vand.u32 2147483647, %v2878
    %v3135 = vand.u32 2147483647, %v2879
    %v3136 = vand.u32 2147483647, %v2880
    %v3137 = vand.u32 2147483647, %v2881
    %v3138 = vand.u32 2147483647, %v2882
    %v3139 = vand.u32 2147483647, %v2883
    %v3140 = vand.u32 2147483647, %v2884
    %v3141 = vand.u32 2147483647, %v2885
    %v3142 = vand.u32 2147483647, %v2886
    %v3143 = vand.u32 2147483647, %v2887
    %v3144 = vand.u32 2147483647, %v2888
    %v3145 = vand.u32 2147483647, %v2889
    %v3146 = vand.u32 2147483647, %v2890
    %v3147 = vand.u32 2147483647, %v2891
    %v3148 = vand.u32 2147483647, %v2892
    %v3149 = vand.u32 2147483647, %v2893
    %v3150 = vand.u32 2147483647, %v2894
    %v3151 = vand.u32 2147483647, %v2895
    %v3152 = vand.u32 2147483647, %v2896
    %v3153 = vand.u32 2147483647, %v2897
    %v3154 = vand.u32 2147483647, %v2898
    %v3155 = vand.u32 2147483647, %v2899
    %v3156 = vand.u32 2147483647, %v2900
    %v3157 = vand.u32 2147483647, %v2901
    %v3158 = vand.u32 2147483647, %v2902
    %v3159 = vand.u32 2147483647, %v2903
    %v3160 = vand.u32 2147483647, %v2904
    %v3161 = vand.u32 2147483647, %v2905
    %v3162 = vand.u32 2147483647, %v2906
    %v3163 = vand.u32 2147483647, %v2907
    %v3164 = vand.u32 2147483647, %v2908
    %v3165 = vand.u32 2147483647, %v2909
    %v3166 = vand.u32 2147483647, %v2910
    %v3167 = vand.u32 2147483647, %v2911
    %v3168 = vand.u32 2147483647, %v2912
    %v3169 = vand.u32 2147483647, %v2913
    %v3170 = vand.u32 2147483647, %v2914
    %v3171 = vand.u32 2147483647, %v2915
    %v3172 = vand.u32 2147483647, %v2916
    %v3173 = vand.u32 2147483647, %v2917
    %v3174 = vand.u32 2147483647, %v2918
    %v3175 = vand.u32 2147483647, %v2919
    %v3176 = vand.u32 2147483647, %v2920
    %v3177 = vand.u32 2147483647, %v2921
    %v3178 = vand.u32 2147483647, %v2922
    %v3179 = vand.u32 2147483647, %v2923
    %v3180 = vand.u32 2147483647, %v2924
    %v3181 = vand.u32 2147483647, %v2925
    %v3182 = vand.u32 2147483647, %v2926
    %v3183 = vand.u32 2147483647, %v2927
    %v3184 = vand.u32 2147483647, %v2928
    %v3185 = vand.u32 2147483647, %v2929
    %v3186 = vand.u32 2147483647, %v2930
    %v3187 = vand.u32 2147483647, %v2931
    %v3188 = vand.u32 2147483647, %v2932
    %v3189 = vand.u32 2147483647, %v2933
    %v3190 = vand.u32 2147483647, %v2934
    %v3191 = vand.u32 2147483647, %v2935
    %v3192 = vand.u32 2147483647, %v2936
    %v3193 = vand.u32 2147483647, %v2937
    %v3194 = vand.u32 2147483647, %v2938
    %v3195 = vand.u32 2147483647, %v2939
    %v3196 = vand.u32 2147483647, %v2940
    %v3197 = vand.u32 2147483647, %v2941
    %v3198 = vand.u32 2147483647, %v2942
    %v3199 = vand.u32 2147483647, %v2943
    %v3200 = vand.u32 2147483647, %v2944
    %v3201 = vand.u32 2147483647, %v2945
    %v3202 = vand.u32 2147483647, %v2946
    %v3203 = vand.u32 2147483647, %v2947
    %v3204 = vand.u32 2147483647, %v2948
    %v3205 = vand.u32 2147483647, %v2949
    %v3206 = vand.u32 2147483647, %v2950
    %v3207 = vand.u32 2147483647, %v2951
    %v3208 = vand.u32 2147483647, %v2952
    %v3209 = vand.u32 2147483647, %v2953
    %v3210 = vand.u32 2147483647, %v2954
    %v3211 = vand.u32 2147483647, %v2955
    %v3212 = vand.u32 2147483647, %v2956
    %v3213 = vand.u32 2147483647, %v2957
    %v3214 = vand.u32 2147483647, %v2958
    %v3215 = vand.u32 2147483647, %v2959
    %v3216 = vand.u32 2147483647, %v2960
    %v3217 = vand.u32 2147483647, %v2961
    %v3218 = vand.u32 2147483647, %v2962
    %v3219 = vand.u32 2147483647, %v2963
    %v3220 = vand.u32 2147483647, %v2964
    %v3221 = vand.u32 2147483647, %v2965
    %v3222 = vand.u32 2147483647, %v2966
    %v3223 = vand.u32 2147483647, %v2967
    %v3224 = vand.u32 2147483647, %v2968
    %v3225 = vand.u32 2147483647, %v2969
    %v3226 = vand.u32 2147483647, %v2970
    %v3227 = vand.u32 2147483647, %v2971
    %v3228 = vand.u32 2147483647, %v2972
    %v3229 = vand.u32 2147483647, %v2973
    %v3230 = vand.u32 2147483647, %v2974
    %v3231 = vand.u32 2147483647, %v2975
    %v3232 = vand.u32 2147483647, %v2976
    %v3233 = vand.u32 2147483647, %v2977
    %v3234 = vand.u32 2147483647, %v2978
    %v3235 = vand.u32 2147483647, %v2979
    %v3236 = vand.u32 2147483647, %v2980
    %v3237 = vand.u32 2147483647, %v2981
    %v3238 = vand.u32 2147483647, %v2982
    %v3239 = vand.u32 2147483647, %v2983
    %v3240 = vand.u32 2147483647, %v2984
    %v3241 = vand.u32 2147483647, %v2985
    %v3242 = vand.u32 2147483647, %v2986
    %v3243 = vand.u32 2147483647, %v2987
    %v3244 = vand.u32 2147483647, %v2988
    %v3245 = vand.u32 2147483647, %v2989
    %v3246 = vand.u32 2147483647, %v2990
    %v3247 = vand.u32 2147483647, %v2991
    %v3248 = vand.u32 2147483647, %v2992
    %v3249 = vand.u32 2147483647, %v2993
    %v3250 = vand.u32 2147483647, %v2994
    %v3251 = vand.u32 2147483647, %v2995
    %v3252 = vand.u32 2147483647, %v2996
    %v3253 = vand.u32 2147483647, %v2997
    %v3254 = vand.u32 2147483647, %v2998
    %v3255 = vand.u32 2147483647, %v2999
    %v3256 = vand.u32 2147483647, %v3000
    %v3257 = vand.u32 2147483647, %v3001
    %v3258 = vand.u32 2147483647, %v3002
    %v3259 = vand.u32 2147483647, %v3003
    %v3260 = vand.u32 2147483647, %v3004
    %v3261 = vand.u32 2147483647, %v3005
    %v3262 = vand.u32 2147483647, %v3006
    %v3263 = vand.u32 2147483647, %v3007
    %v3264 = vand.u32 2147483647, %v3008
    %v3265 = vand.u32 2147483647, %v3009
    %v3266 = vand.u32 2147483647, %v3010
    %v3267 = vand.u32 2147483647, %v3011
    %v3268 = vand.u32 2147483647, %v3012
    %v3269 = vand.u32 2147483647, %v3013
    %v3270 = vand.u32 2147483647, %v3014
    %v3271 = vand.u32 2147483647, %v3015
    %v3272 = vand.u32 2147483647, %v3016
    %v3273 = vand.u32 2147483647, %v3017
    %v3274 = vand.u32 2147483647, %v3018
    %v3275 = vand.u32 2147483647, %v3019
    %v3276 = vand.u32 2147483647, %v3020
    %v3277 = vand.u32 2147483647, %v3021
    %v3278 = vand.u32 2147483647, %v3022
    %v3279 = vand.u32 2147483647, %v3023
    %v3280 = vand.u32 2147483647, %v3024
    %v3281 = vand.u32 2147483647, %v3025
    %v3282 = vand.u32 2147483647, %v3026
    %v3283 = vand.u32 2147483647, %v3027
    %v3284 = vand.u32 2147483647, %v3028
    %v3285 = vand.u32 2147483647, %v3029
    %v3286 = vand.u32 2147483647, %v3030
    %v3287 = vand.u32 2147483647, %v3031
    %v3288 = vand.u32 2147483647, %v3032
    %v3289 = vand.u32 2147483647, %v3033
    %v3290 = vand.u32 2147483647, %v3034
    %v3291 = vand.u32 2147483647, %v3035
    %v3292 = vand.u32 2147483647, %v3036
    %v3293 = vand.u32 2147483647, %v3037
    %v3294 = vand.u32 2147483647, %v3038
    %v3295 = vand.u32 2147483647, %v3039
    %v3296 = vand.u32 2147483647, %v3040
    %v3297 = vand.u32 2147483647, %v3041
    %v3298 = vand.u32 2147483647, %v3042
    %v3299 = vand.u32 2147483647, %v3043
    %v3300 = vand.u32 2147483647, %v3044
    %v3301 = vand.u32 2147483647, %v3045
    %v3302 = vand.u32 2147483647, %v3046
    %v3303 = vand.u32 2147483647, %v3047
    %v3304 = vand.u32 2147483647, %v3048
    %v3305 = vand.u32 2147483647, %v3049
    %v3306 = vand.u32 2147483647, %v3050
    %v3307 = vand.u32 2147483647, %v3051
    %v3308 = vand.u32 2147483647, %v3052
    %v3309 = vand.u32 2147483647, %v3053
    %v3310 = vand.u32 2147483647, %v3054
    %v3311 = vand.u32 2147483647, %v3055
    %v3312 = vand.u32 2147483647, %v3056
    %v3313 = vand.u32 2147483647, %v3057
    %v3314 = vand.u32 2147483647, %v3058
    %v3315 = vand.u32 2147483647, %v3059
    %v3316 = vand.u32 2147483647, %v3060
    %v3317 = vand.u32 2147483647, %v3061
    %v3318 = vand.u32 2147483647, %v3062
    %v3319 = vand.u32 2147483647, %v3063
    %v3320 = vand.u32 2147483647, %v3064
    %v3321 = vand.u32 2147483647, %v3065
    %v3322 = vand.u32 2147483647, %v3066
    %v3323 = vand.u32 2147483647, %v3067
    %v3324 = vand.u32 2147483647, %v3068
    %v3325 = vand.u32 2147483647, %v3069
    %v3326 = vand.u32 2147483647, %v3070
    %v3327 = vand.u32 2147483647, %v3071
    %v3328 = vand.u32 2147483647, %v3072
    %v3329 = vand.u32 2147483647, %v3073
    %v3330 = vand.u32 2147483647, %v3074
    %v3331 = vand.u32 2147483647, %v3075
    %v3332 = vand.u32 2147483647, %v3076
    %v3333 = vand.u32 2147483647, %v3077
    %v3334 = vand.u32 2147483647, %v3078
    %v3335 = vand.u32 2147483647, %v3079
    %v3336 = vand.u32 2147483647, %v3080
    %v3337 = vand.u32 2147483647, %v3081
    %v3338 = vand.u32 2147483647, %v3082
    %v3339 = vand.u32 2147483647, %v3083
    %v3340 = vand.u32 2147483647, %v3084
    %v3341 = vand.u32 2147483647, %v3085
    %v3342 = vand.u32 2147483647, %v3086
    %v3343 = vand.u32 2147483647, %v3087
    %v3344 = vand.u32 2147483647, %v3088
    %v3345 = vand.u32 2147483647, %v3089
    %v3346 = vadd.f32 %v1442, %v3090
    %v3347 = vadd.f32 %v1443, %v3091
    %v3348 = vadd.f32 %v1444, %v3092
    %v3349 = vadd.f32 %v1445, %v3093
    %v3350 = vadd.f32 %v1446, %v3094
    %v3351 = vadd.f32 %v1447, %v3095
    %v3352 = vadd.f32 %v1448, %v3096
    %v3353 = vadd.f32 %v1449, %v3097
    %v3354 = vadd.f32 %v1450, %v3098
    %v3355 = vadd.f32 %v1451, %v3099
    %v3356 = vadd.f32 %v1452, %v3100
    %v3357 = vadd.f32 %v1453, %v3101
    %v3358 = vadd.f32 %v1454, %v3102
    %v3359 = vadd.f32 %v1455, %v3103
    %v3360 = vadd.f32 %v1456, %v3104
    %v3361 = vadd.f32 %v1457, %v3105
    %v3362 = vadd.f32 %v1458, %v3106
    %v3363 = vadd.f32 %v1459, %v3107
    %v3364 = vadd.f32 %v1460, %v3108
    %v3365 = vadd.f32 %v1461, %v3109
    %v3366 = vadd.f32 %v1462, %v3110
    %v3367 = vadd.f32 %v1463, %v3111
    %v3368 = vadd.f32 %v1464, %v3112
    %v3369 = vadd.f32 %v1465, %v3113
    %v3370 = vadd.f32 %v1466, %v3114
    %v3371 = vadd.f32 %v1467, %v3115
    %v3372 = vadd.f32 %v1468, %v3116
    %v3373 = vadd.f32 %v1469, %v3117
    %v3374 = vadd.f32 %v1470, %v3118
    %v3375 = vadd.f32 %v1471, %v3119
    %v3376 = vadd.f32 %v1472, %v3120
    %v3377 = vadd.f32 %v1473, %v3121
    %v3378 = vadd.f32 %v1474, %v3122
    %v3379 = vadd.f32 %v1475, %v3123
    %v3380 = vadd.f32 %v1476, %v3124
    %v3381 = vadd.f32 %v1477, %v3125
    %v3382 = vadd.f32 %v1478, %v3126
    %v3383 = vadd.f32 %v1479, %v3127
    %v3384 = vadd.f32 %v1480, %v3128
    %v3385 = vadd.f32 %v1481, %v3129
    %v3386 = vadd.f32 %v1482, %v3130
    %v3387 = vadd.f32 %v1483, %v3131
    %v3388 = vadd.f32 %v1484, %v3132
    %v3389 = vadd.f32 %v1485, %v3133
    %v3390 = vadd.f32 %v1486, %v3134
    %v3391 = vadd.f32 %v1487, %v3135
    %v3392 = vadd.f32 %v1488, %v3136
    %v3393 = vadd.f32 %v1489, %v3137
    %v3394 = vadd.f32 %v1490, %v3138
    %v3395 = vadd.f32 %v1491, %v3139
    %v3396 = vadd.f32 %v1492, %v3140
    %v3397 = vadd.f32 %v1493, %v3141
    %v3398 = vadd.f32 %v1494, %v3142
    %v3399 = vadd.f32 %v1495, %v3143
    %v3400 = vadd.f32 %v1496, %v3144
    %v3401 = vadd.f32 %v1497, %v3145
    %v3402 = vadd.f32 %v1498, %v3146
    %v3403 = vadd.f32 %v1499, %v3147
    %v3404 = vadd.f32 %v1500, %v3148
    %v3405 = vadd.f32 %v1501, %v3149
    %v3406 = vadd.f32 %v1502, %v3150
    %v3407 = vadd.f32 %v1503, %v3151
    %v3408 = vadd.f32 %v1504, %v3152
    %v3409 = vadd.f32 %v1505, %v3153
    %v3410 = vadd.f32 %v1506, %v3154
    %v3411 = vadd.f32 %v1507, %v3155
    %v3412 = vadd.f32 %v1508, %v3156
    %v3413 = vadd.f32 %v1509, %v3157
    %v3414 = vadd.f32 %v1510, %v3158
    %v3415 = vadd.f32 %v1511, %v3159
    %v3416 = vadd.f32 %v1512, %v3160
    %v3417 = vadd.f32 %v1513, %v3161
    %v3418 = vadd.f32 %v1514, %v3162
    %v3419 = vadd.f32 %v1515, %v3163
    %v3420 = vadd.f32 %v1516, %v3164
    %v3421 = vadd.f32 %v1517, %v3165
    %v3422 = vadd.f32 %v1518, %v3166
    %v3423 = vadd.f32 %v1519, %v3167
    %v3424 = vadd.f32 %v1520, %v3168
    %v3425 = vadd.f32 %v1521, %v3169
    %v3426 = vadd.f32 %v1522, %v3170
    %v3427 = vadd.f32 %v1523, %v3171
    %v3428 = vadd.f32 %v1524, %v3172
    %v3429 = vadd.f32 %v1525, %v3173
    %v3430 = vadd.f32 %v1526, %v3174
    %v3431 = vadd.f32 %v1527, %v3175
    %v3432 = vadd.f32 %v1528, %v3176
    %v3433 = vadd.f32 %v1529, %v3177
    %v3434 = vadd.f32 %v1530, %v3178
    %v3435 = vadd.f32 %v1531, %v3179
    %v3436 = vadd.f32 %v1532, %v3180
    %v3437 = vadd.f32 %v1533, %v3181
    %v3438 = vadd.f32 %v1534, %v3182
    %v3439 = vadd.f32 %v1535, %v3183
    %v3440 = vadd.f32 %v1536, %v3184
    %v3441 = vadd.f32 %v1537, %v3185
    %v3442 = vadd.f32 %v1538, %v3186
    %v3443 = vadd.f32 %v1539, %v3187
    %v3444 = vadd.f32 %v1540, %v3188
    %v3445 = vadd.f32 %v1541, %v3189
    %v3446 = vadd.f32 %v1542, %v3190
    %v3447 = vadd.f32 %v1543, %v3191
    %v3448 = vadd.f32 %v1544, %v3192
    %v3449 = vadd.f32 %v1545, %v3193
    %v3450 = vadd.f32 %v1546, %v3194
    %v3451 = vadd.f32 %v1547, %v3195
    %v3452 = vadd.f32 %v1548, %v3196
    %v3453 = vadd.f32 %v1549, %v3197
    %v3454 = vadd.f32 %v1550, %v3198
    %v3455 = vadd.f32 %v1551, %v3199
    %v3456 = vadd.f32 %v1552, %v3200
    %v3457 = vadd.f32 %v1553, %v3201
    %v3458 = vadd.f32 %v1554, %v3202
    %v3459 = vadd.f32 %v1555, %v3203
    %v3460 = vadd.f32 %v1556, %v3204
    %v3461 = vadd.f32 %v1557, %v3205
    %v3462 = vadd.f32 %v1558, %v3206
    %v3463 = vadd.f32 %v1559, %v3207
    %v3464 = vadd.f32 %v1560, %v3208
    %v3465 = vadd.f32 %v1561, %v3209
    %v3466 = vadd.f32 %v1562, %v3210
    %v3467 = vadd.f32 %v1563, %v3211
    %v3468 = vadd.f32 %v1564, %v3212
    %v3469 = vadd.f32 %v1565, %v3213
    %v3470 = vadd.f32 %v1566, %v3214
    %v3471 = vadd.f32 %v1567, %v3215
    %v3472 = vadd.f32 %v1568, %v3216
    %v3473 = vadd.f32 %v1569, %v3217
    %v3474 = vadd.f32 %v1570, %v3218
    %v3475 = vadd.f32 %v1571, %v3219
    %v3476 = vadd.f32 %v1572, %v3220
    %v3477 = vadd.f32 %v1573, %v3221
    %v3478 = vadd.f32 %v1574, %v3222
    %v3479 = vadd.f32 %v1575, %v3223
    %v3480 = vadd.f32 %v1576, %v3224
    %v3481 = vadd.f32 %v1577, %v3225
    %v3482 = vadd.f32 %v1578, %v3226
    %v3483 = vadd.f32 %v1579, %v3227
    %v3484 = vadd.f32 %v1580, %v3228
    %v3485 = vadd.f32 %v1581, %v3229
    %v3486 = vadd.f32 %v1582, %v3230
    %v3487 = vadd.f32 %v1583, %v3231
    %v3488 = vadd.f32 %v1584, %v3232
    %v3489 = vadd.f32 %v1585, %v3233
    %v3490 = vadd.f32 %v1586, %v3234
    %v3491 = vadd.f32 %v1587, %v3235
    %v3492 = vadd.f32 %v1588, %v3236
    %v3493 = vadd.f32 %v1589, %v3237
    %v3494 = vadd.f32 %v1590, %v3238
    %v3495 = vadd.f32 %v1591, %v3239
    %v3496 = vadd.f32 %v1592, %v3240
    %v3497 = vadd.f32 %v1593, %v3241
    %v3498 = vadd.f32 %v1594, %v3242
    %v3499 = vadd.f32 %v1595, %v3243
    %v3500 = vadd.f32 %v1596, %v3244
    %v3501 = vadd.f32 %v1597, %v3245
    %v3502 = vadd.f32 %v1598, %v3246
    %v3503 = vadd.f32 %v1599, %v3247
    %v3504 = vadd.f32 %v1600, %v3248
    %v3505 = vadd.f32 %v1601, %v3249
    %v3506 = vadd.f32 %v1602, %v3250
    %v3507 = vadd.f32 %v1603, %v3251
    %v3508 = vadd.f32 %v1604, %v3252
    %v3509 = vadd.f32 %v1605, %v3253
    %v3510 = vadd.f32 %v1606, %v3254
    %v3511 = vadd.f32 %v1607, %v3255
    %v3512 = vadd.f32 %v1608, %v3256
    %v3513 = vadd.f32 %v1609, %v3257
    %v3514 = vadd.f32 %v1610, %v3258
    %v3515 = vadd.f32 %v1611, %v3259
    %v3516 = vadd.f32 %v1612, %v3260
    %v3517 = vadd.f32 %v1613, %v3261
    %v3518 = vadd.f32 %v1614, %v3262
    %v3519 = vadd.f32 %v1615, %v3263
    %v3520 = vadd.f32 %v1616, %v3264
    %v3521 = vadd.f32 %v1617, %v3265
    %v3522 = vadd.f32 %v1618, %v3266
    %v3523 = vadd.f32 %v1619, %v3267
    %v3524 = vadd.f32 %v1620, %v3268
    %v3525 = vadd.f32 %v1621, %v3269
    %v3526 = vadd.f32 %v1622, %v3270
    %v3527 = vadd.f32 %v1623, %v3271
    %v3528 = vadd.f32 %v1624, %v3272
    %v3529 = vadd.f32 %v1625, %v3273
    %v3530 = vadd.f32 %v1626, %v3274
    %v3531 = vadd.f32 %v1627, %v3275
    %v3532 = vadd.f32 %v1628, %v3276
    %v3533 = vadd.f32 %v1629, %v3277
    %v3534 = vadd.f32 %v1630, %v3278
    %v3535 = vadd.f32 %v1631, %v3279
    %v3536 = vadd.f32 %v1632, %v3280
    %v3537 = vadd.f32 %v1633, %v3281
    %v3538 = vadd.f32 %v1634, %v3282
    %v3539 = vadd.f32 %v1635, %v3283
    %v3540 = vadd.f32 %v1636, %v3284
    %v3541 = vadd.f32 %v1637, %v3285
    %v3542 = vadd.f32 %v1638, %v3286
    %v3543 = vadd.f32 %v1639, %v3287
    %v3544 = vadd.f32 %v1640, %v3288
    %v3545 = vadd.f32 %v1641, %v3289
    %v3546 = vadd.f32 %v1642, %v3290
    %v3547 = vadd.f32 %v1643, %v3291
    %v3548 = vadd.f32 %v1644, %v3292
    %v3549 = vadd.f32 %v1645, %v3293
    %v3550 = vadd.f32 %v1646, %v3294
    %v3551 = vadd.f32 %v1647, %v3295
    %v3552 = vadd.f32 %v1648, %v3296
    %v3553 = vadd.f32 %v1649, %v3297
    %v3554 = vadd.f32 %v1650, %v3298
    %v3555 = vadd.f32 %v1651, %v3299
    %v3556 = vadd.f32 %v1652, %v3300
    %v3557 = vadd.f32 %v1653, %v3301
    %v3558 = vadd.f32 %v1654, %v3302
    %v3559 = vadd.f32 %v1655, %v3303
    %v3560 = vadd.f32 %v1656, %v3304
    %v3561 = vadd.f32 %v1657, %v3305
    %v3562 = vadd.f32 %v1658, %v3306
    %v3563 = vadd.f32 %v1659, %v3307
    %v3564 = vadd.f32 %v1660, %v3308
    %v3565 = vadd.f32 %v1661, %v3309
    %v3566 = vadd.f32 %v1662, %v3310
    %v3567 = vadd.f32 %v1663, %v3311
    %v3568 = vadd.f32 %v1664, %v3312
    %v3569 = vadd.f32 %v1665, %v3313
    %v3570 = vadd.f32 %v1666, %v3314
    %v3571 = vadd.f32 %v1667, %v3315
    %v3572 = vadd.f32 %v1668, %v3316
    %v3573 = vadd.f32 %v1669, %v3317
    %v3574 = vadd.f32 %v1670, %v3318
    %v3575 = vadd.f32 %v1671, %v3319
    %v3576 = vadd.f32 %v1672, %v3320
    %v3577 = vadd.f32 %v1673, %v3321
    %v3578 = vadd.f32 %v1674, %v3322
    %v3579 = vadd.f32 %v1675, %v3323
    %v3580 = vadd.f32 %v1676, %v3324
    %v3581 = vadd.f32 %v1677, %v3325
    %v3582 = vadd.f32 %v1678, %v3326
    %v3583 = vadd.f32 %v1679, %v3327
    %v3584 = vadd.f32 %v1680, %v3328
    %v3585 = vadd.f32 %v1681, %v3329
    %v3586 = vadd.f32 %v1682, %v3330
    %v3587 = vadd.f32 %v1683, %v3331
    %v3588 = vadd.f32 %v1684, %v3332
    %v3589 = vadd.f32 %v1685, %v3333
    %v3590 = vadd.f32 %v1686, %v3334
    %v3591 = vadd.f32 %v1687, %v3335
    %v3592 = vadd.f32 %v1688, %v3336
    %v3593 = vadd.f32 %v1689, %v3337
    %v3594 = vadd.f32 %v1690, %v3338
    %v3595 = vadd.f32 %v1691, %v3339
    %v3596 = vadd.f32 %v1692, %v3340
    %v3597 = vadd.f32 %v1693, %v3341
    %v3598 = vadd.f32 %v1694, %v3342
    %v3599 = vadd.f32 %v1695, %v3343
    %v3600 = vadd.f32 %v1696, %v3344
    %v3601 = vadd.f32 %v1697, %v3345
    %v3602 = vlaneseq
    %v3603 = vshrl.u32 %v3602, 7
    %v3604 = vsub.s32 2, %v3603
    %v3605 = vrot.slane %v18, %v3604
    %3607 = vbcast.lane.b32.xlu0 %v3605, 256
    %v3608 = vpop.permute.xlu0 %3607
    %s3610 = sor.u32 256, 8
    %3611 = vbcast.lane.b32.xlu0 %v3605, %s3610
    %v3612 = vpop.permute.xlu0 %3611
    %s3614 = sor.u32 256, 16
    %3615 = vbcast.lane.b32.xlu0 %v3605, %s3614
    %v3616 = vpop.permute.xlu0 %3615
    %s3618 = sor.u32 256, 24
    %3619 = vbcast.lane.b32.xlu0 %v3605, %s3618
    %v3620 = vpop.permute.xlu0 %3619
    %s3622 = sor.u32 256, 32
    %3623 = vbcast.lane.b32.xlu0 %v3605, %s3622
    %v3624 = vpop.permute.xlu0 %3623
    %s3626 = sor.u32 256, 40
    %3627 = vbcast.lane.b32.xlu0 %v3605, %s3626
    %v3628 = vpop.permute.xlu0 %3627
    %s3630 = sor.u32 256, 48
    %3631 = vbcast.lane.b32.xlu0 %v3605, %s3630
    %v3632 = vpop.permute.xlu0 %3631
    %s3634 = sor.u32 256, 56
    %3635 = vbcast.lane.b32.xlu0 %v3605, %s3634
    %v3636 = vpop.permute.xlu0 %3635
    %s3638 = sor.u32 256, 64
    %3639 = vbcast.lane.b32.xlu0 %v3605, %s3638
    %v3640 = vpop.permute.xlu0 %3639
    %s3642 = sor.u32 256, 72
    %3643 = vbcast.lane.b32.xlu0 %v3605, %s3642
    %v3644 = vpop.permute.xlu0 %3643
    %s3646 = sor.u32 256, 80
    %3647 = vbcast.lane.b32.xlu0 %v3605, %s3646
    %v3648 = vpop.permute.xlu0 %3647
    %s3650 = sor.u32 256, 88
    %3651 = vbcast.lane.b32.xlu0 %v3605, %s3650
    %v3652 = vpop.permute.xlu0 %3651
    %s3654 = sor.u32 256, 96
    %3655 = vbcast.lane.b32.xlu0 %v3605, %s3654
    %v3656 = vpop.permute.xlu0 %3655
    %s3658 = sor.u32 256, 104
    %3659 = vbcast.lane.b32.xlu0 %v3605, %s3658
    %v3660 = vpop.permute.xlu0 %3659
    %s3662 = sor.u32 256, 112
    %3663 = vbcast.lane.b32.xlu0 %v3605, %s3662
    %v3664 = vpop.permute.xlu0 %3663
    %s3666 = sor.u32 256, 120
    %3667 = vbcast.lane.b32.xlu0 %v3605, %s3666
    %v3668 = vpop.permute.xlu0 %3667
    %v3669 = vlaneseq
    %v3670 = vshrl.u32 %v3669, 7
    %v3671 = vsub.s32 2, %v3670
    %v3672 = vrot.slane %v19, %v3671
    %3674 = vbcast.lane.b32.xlu0 %v3672, 256
    %v3675 = vpop.permute.xlu0 %3674
    %s3677 = sor.u32 256, 8
    %3678 = vbcast.lane.b32.xlu0 %v3672, %s3677
    %v3679 = vpop.permute.xlu0 %3678
    %s3681 = sor.u32 256, 16
    %3682 = vbcast.lane.b32.xlu0 %v3672, %s3681
    %v3683 = vpop.permute.xlu0 %3682
    %s3685 = sor.u32 256, 24
    %3686 = vbcast.lane.b32.xlu0 %v3672, %s3685
    %v3687 = vpop.permute.xlu0 %3686
    %s3689 = sor.u32 256, 32
    %3690 = vbcast.lane.b32.xlu0 %v3672, %s3689
    %v3691 = vpop.permute.xlu0 %3690
    %s3693 = sor.u32 256, 40
    %3694 = vbcast.lane.b32.xlu0 %v3672, %s3693
    %v3695 = vpop.permute.xlu0 %3694
    %s3697 = sor.u32 256, 48
    %3698 = vbcast.lane.b32.xlu0 %v3672, %s3697
    %v3699 = vpop.permute.xlu0 %3698
    %s3701 = sor.u32 256, 56
    %3702 = vbcast.lane.b32.xlu0 %v3672, %s3701
    %v3703 = vpop.permute.xlu0 %3702
    %s3705 = sor.u32 256, 64
    %3706 = vbcast.lane.b32.xlu0 %v3672, %s3705
    %v3707 = vpop.permute.xlu0 %3706
    %s3709 = sor.u32 256, 72
    %3710 = vbcast.lane.b32.xlu0 %v3672, %s3709
    %v3711 = vpop.permute.xlu0 %3710
    %s3713 = sor.u32 256, 80
    %3714 = vbcast.lane.b32.xlu0 %v3672, %s3713
    %v3715 = vpop.permute.xlu0 %3714
    %s3717 = sor.u32 256, 88
    %3718 = vbcast.lane.b32.xlu0 %v3672, %s3717
    %v3719 = vpop.permute.xlu0 %3718
    %s3721 = sor.u32 256, 96
    %3722 = vbcast.lane.b32.xlu0 %v3672, %s3721
    %v3723 = vpop.permute.xlu0 %3722
    %s3725 = sor.u32 256, 104
    %3726 = vbcast.lane.b32.xlu0 %v3672, %s3725
    %v3727 = vpop.permute.xlu0 %3726
    %s3729 = sor.u32 256, 112
    %3730 = vbcast.lane.b32.xlu0 %v3672, %s3729
    %v3731 = vpop.permute.xlu0 %3730
    %s3733 = sor.u32 256, 120
    %3734 = vbcast.lane.b32.xlu0 %v3672, %s3733
    %v3735 = vpop.permute.xlu0 %3734
    %v3736 = vlaneseq
    %v3737 = vshrl.u32 %v3736, 7
    %v3738 = vsub.s32 2, %v3737
    %v3739 = vrot.slane %v20, %v3738
    %3741 = vbcast.lane.b32.xlu0 %v3739, 256
    %v3742 = vpop.permute.xlu0 %3741
    %s3744 = sor.u32 256, 8
    %3745 = vbcast.lane.b32.xlu0 %v3739, %s3744
    %v3746 = vpop.permute.xlu0 %3745
    %s3748 = sor.u32 256, 16
    %3749 = vbcast.lane.b32.xlu0 %v3739, %s3748
    %v3750 = vpop.permute.xlu0 %3749
    %s3752 = sor.u32 256, 24
    %3753 = vbcast.lane.b32.xlu0 %v3739, %s3752
    %v3754 = vpop.permute.xlu0 %3753
    %s3756 = sor.u32 256, 32
    %3757 = vbcast.lane.b32.xlu0 %v3739, %s3756
    %v3758 = vpop.permute.xlu0 %3757
    %s3760 = sor.u32 256, 40
    %3761 = vbcast.lane.b32.xlu0 %v3739, %s3760
    %v3762 = vpop.permute.xlu0 %3761
    %s3764 = sor.u32 256, 48
    %3765 = vbcast.lane.b32.xlu0 %v3739, %s3764
    %v3766 = vpop.permute.xlu0 %3765
    %s3768 = sor.u32 256, 56
    %3769 = vbcast.lane.b32.xlu0 %v3739, %s3768
    %v3770 = vpop.permute.xlu0 %3769
    %s3772 = sor.u32 256, 64
    %3773 = vbcast.lane.b32.xlu0 %v3739, %s3772
    %v3774 = vpop.permute.xlu0 %3773
    %s3776 = sor.u32 256, 72
    %3777 = vbcast.lane.b32.xlu0 %v3739, %s3776
    %v3778 = vpop.permute.xlu0 %3777
    %s3780 = sor.u32 256, 80
    %3781 = vbcast.lane.b32.xlu0 %v3739, %s3780
    %v3782 = vpop.permute.xlu0 %3781
    %s3784 = sor.u32 256, 88
    %3785 = vbcast.lane.b32.xlu0 %v3739, %s3784
    %v3786 = vpop.permute.xlu0 %3785
    %s3788 = sor.u32 256, 96
    %3789 = vbcast.lane.b32.xlu0 %v3739, %s3788
    %v3790 = vpop.permute.xlu0 %3789
    %s3792 = sor.u32 256, 104
    %3793 = vbcast.lane.b32.xlu0 %v3739, %s3792
    %v3794 = vpop.permute.xlu0 %3793
    %s3796 = sor.u32 256, 112
    %3797 = vbcast.lane.b32.xlu0 %v3739, %s3796
    %v3798 = vpop.permute.xlu0 %3797
    %s3800 = sor.u32 256, 120
    %3801 = vbcast.lane.b32.xlu0 %v3739, %s3800
    %v3802 = vpop.permute.xlu0 %3801
    %v3803 = vlaneseq
    %v3804 = vshrl.u32 %v3803, 7
    %v3805 = vsub.s32 2, %v3804
    %v3806 = vrot.slane %v21, %v3805
    %3808 = vbcast.lane.b32.xlu0 %v3806, 256
    %v3809 = vpop.permute.xlu0 %3808
    %s3811 = sor.u32 256, 8
    %3812 = vbcast.lane.b32.xlu0 %v3806, %s3811
    %v3813 = vpop.permute.xlu0 %3812
    %s3815 = sor.u32 256, 16
    %3816 = vbcast.lane.b32.xlu0 %v3806, %s3815
    %v3817 = vpop.permute.xlu0 %3816
    %s3819 = sor.u32 256, 24
    %3820 = vbcast.lane.b32.xlu0 %v3806, %s3819
    %v3821 = vpop.permute.xlu0 %3820
    %s3823 = sor.u32 256, 32
    %3824 = vbcast.lane.b32.xlu0 %v3806, %s3823
    %v3825 = vpop.permute.xlu0 %3824
    %s3827 = sor.u32 256, 40
    %3828 = vbcast.lane.b32.xlu0 %v3806, %s3827
    %v3829 = vpop.permute.xlu0 %3828
    %s3831 = sor.u32 256, 48
    %3832 = vbcast.lane.b32.xlu0 %v3806, %s3831
    %v3833 = vpop.permute.xlu0 %3832
    %s3835 = sor.u32 256, 56
    %3836 = vbcast.lane.b32.xlu0 %v3806, %s3835
    %v3837 = vpop.permute.xlu0 %3836
    %s3839 = sor.u32 256, 64
    %3840 = vbcast.lane.b32.xlu0 %v3806, %s3839
    %v3841 = vpop.permute.xlu0 %3840
    %s3843 = sor.u32 256, 72
    %3844 = vbcast.lane.b32.xlu0 %v3806, %s3843
    %v3845 = vpop.permute.xlu0 %3844
    %s3847 = sor.u32 256, 80
    %3848 = vbcast.lane.b32.xlu0 %v3806, %s3847
    %v3849 = vpop.permute.xlu0 %3848
    %s3851 = sor.u32 256, 88
    %3852 = vbcast.lane.b32.xlu0 %v3806, %s3851
    %v3853 = vpop.permute.xlu0 %3852
    %s3855 = sor.u32 256, 96
    %3856 = vbcast.lane.b32.xlu0 %v3806, %s3855
    %v3857 = vpop.permute.xlu0 %3856
    %s3859 = sor.u32 256, 104
    %3860 = vbcast.lane.b32.xlu0 %v3806, %s3859
    %v3861 = vpop.permute.xlu0 %3860
    %s3863 = sor.u32 256, 112
    %3864 = vbcast.lane.b32.xlu0 %v3806, %s3863
    %v3865 = vpop.permute.xlu0 %3864
    %s3867 = sor.u32 256, 120
    %3868 = vbcast.lane.b32.xlu0 %v3806, %s3867
    %v3869 = vpop.permute.xlu0 %3868
    %v3870 = vlaneseq
    %v3871 = vshrl.u32 %v3870, 7
    %v3872 = vsub.s32 2, %v3871
    %v3873 = vrot.slane %v22, %v3872
    %3875 = vbcast.lane.b32.xlu0 %v3873, 256
    %v3876 = vpop.permute.xlu0 %3875
    %s3878 = sor.u32 256, 8
    %3879 = vbcast.lane.b32.xlu0 %v3873, %s3878
    %v3880 = vpop.permute.xlu0 %3879
    %s3882 = sor.u32 256, 16
    %3883 = vbcast.lane.b32.xlu0 %v3873, %s3882
    %v3884 = vpop.permute.xlu0 %3883
    %s3886 = sor.u32 256, 24
    %3887 = vbcast.lane.b32.xlu0 %v3873, %s3886
    %v3888 = vpop.permute.xlu0 %3887
    %s3890 = sor.u32 256, 32
    %3891 = vbcast.lane.b32.xlu0 %v3873, %s3890
    %v3892 = vpop.permute.xlu0 %3891
    %s3894 = sor.u32 256, 40
    %3895 = vbcast.lane.b32.xlu0 %v3873, %s3894
    %v3896 = vpop.permute.xlu0 %3895
    %s3898 = sor.u32 256, 48
    %3899 = vbcast.lane.b32.xlu0 %v3873, %s3898
    %v3900 = vpop.permute.xlu0 %3899
    %s3902 = sor.u32 256, 56
    %3903 = vbcast.lane.b32.xlu0 %v3873, %s3902
    %v3904 = vpop.permute.xlu0 %3903
    %s3906 = sor.u32 256, 64
    %3907 = vbcast.lane.b32.xlu0 %v3873, %s3906
    %v3908 = vpop.permute.xlu0 %3907
    %s3910 = sor.u32 256, 72
    %3911 = vbcast.lane.b32.xlu0 %v3873, %s3910
    %v3912 = vpop.permute.xlu0 %3911
    %s3914 = sor.u32 256, 80
    %3915 = vbcast.lane.b32.xlu0 %v3873, %s3914
    %v3916 = vpop.permute.xlu0 %3915
    %s3918 = sor.u32 256, 88
    %3919 = vbcast.lane.b32.xlu0 %v3873, %s3918
    %v3920 = vpop.permute.xlu0 %3919
    %s3922 = sor.u32 256, 96
    %3923 = vbcast.lane.b32.xlu0 %v3873, %s3922
    %v3924 = vpop.permute.xlu0 %3923
    %s3926 = sor.u32 256, 104
    %3927 = vbcast.lane.b32.xlu0 %v3873, %s3926
    %v3928 = vpop.permute.xlu0 %3927
    %s3930 = sor.u32 256, 112
    %3931 = vbcast.lane.b32.xlu0 %v3873, %s3930
    %v3932 = vpop.permute.xlu0 %3931
    %s3934 = sor.u32 256, 120
    %3935 = vbcast.lane.b32.xlu0 %v3873, %s3934
    %v3936 = vpop.permute.xlu0 %3935
    %v3937 = vlaneseq
    %v3938 = vshrl.u32 %v3937, 7
    %v3939 = vsub.s32 2, %v3938
    %v3940 = vrot.slane %v23, %v3939
    %3942 = vbcast.lane.b32.xlu0 %v3940, 256
    %v3943 = vpop.permute.xlu0 %3942
    %s3945 = sor.u32 256, 8
    %3946 = vbcast.lane.b32.xlu0 %v3940, %s3945
    %v3947 = vpop.permute.xlu0 %3946
    %s3949 = sor.u32 256, 16
    %3950 = vbcast.lane.b32.xlu0 %v3940, %s3949
    %v3951 = vpop.permute.xlu0 %3950
    %s3953 = sor.u32 256, 24
    %3954 = vbcast.lane.b32.xlu0 %v3940, %s3953
    %v3955 = vpop.permute.xlu0 %3954
    %s3957 = sor.u32 256, 32
    %3958 = vbcast.lane.b32.xlu0 %v3940, %s3957
    %v3959 = vpop.permute.xlu0 %3958
    %s3961 = sor.u32 256, 40
    %3962 = vbcast.lane.b32.xlu0 %v3940, %s3961
    %v3963 = vpop.permute.xlu0 %3962
    %s3965 = sor.u32 256, 48
    %3966 = vbcast.lane.b32.xlu0 %v3940, %s3965
    %v3967 = vpop.permute.xlu0 %3966
    %s3969 = sor.u32 256, 56
    %3970 = vbcast.lane.b32.xlu0 %v3940, %s3969
    %v3971 = vpop.permute.xlu0 %3970
    %s3973 = sor.u32 256, 64
    %3974 = vbcast.lane.b32.xlu0 %v3940, %s3973
    %v3975 = vpop.permute.xlu0 %3974
    %s3977 = sor.u32 256, 72
    %3978 = vbcast.lane.b32.xlu0 %v3940, %s3977
    %v3979 = vpop.permute.xlu0 %3978
    %s3981 = sor.u32 256, 80
    %3982 = vbcast.lane.b32.xlu0 %v3940, %s3981
    %v3983 = vpop.permute.xlu0 %3982
    %s3985 = sor.u32 256, 88
    %3986 = vbcast.lane.b32.xlu0 %v3940, %s3985
    %v3987 = vpop.permute.xlu0 %3986
    %s3989 = sor.u32 256, 96
    %3990 = vbcast.lane.b32.xlu0 %v3940, %s3989
    %v3991 = vpop.permute.xlu0 %3990
    %s3993 = sor.u32 256, 104
    %3994 = vbcast.lane.b32.xlu0 %v3940, %s3993
    %v3995 = vpop.permute.xlu0 %3994
    %s3997 = sor.u32 256, 112
    %3998 = vbcast.lane.b32.xlu0 %v3940, %s3997
    %v3999 = vpop.permute.xlu0 %3998
    %s4001 = sor.u32 256, 120
    %4002 = vbcast.lane.b32.xlu0 %v3940, %s4001
    %v4003 = vpop.permute.xlu0 %4002
    %v4004 = vlaneseq
    %v4005 = vshrl.u32 %v4004, 7
    %v4006 = vsub.s32 2, %v4005
    %v4007 = vrot.slane %v24, %v4006
    %4009 = vbcast.lane.b32.xlu0 %v4007, 256
    %v4010 = vpop.permute.xlu0 %4009
    %s4012 = sor.u32 256, 8
    %4013 = vbcast.lane.b32.xlu0 %v4007, %s4012
    %v4014 = vpop.permute.xlu0 %4013
    %s4016 = sor.u32 256, 16
    %4017 = vbcast.lane.b32.xlu0 %v4007, %s4016
    %v4018 = vpop.permute.xlu0 %4017
    %s4020 = sor.u32 256, 24
    %4021 = vbcast.lane.b32.xlu0 %v4007, %s4020
    %v4022 = vpop.permute.xlu0 %4021
    %s4024 = sor.u32 256, 32
    %4025 = vbcast.lane.b32.xlu0 %v4007, %s4024
    %v4026 = vpop.permute.xlu0 %4025
    %s4028 = sor.u32 256, 40
    %4029 = vbcast.lane.b32.xlu0 %v4007, %s4028
    %v4030 = vpop.permute.xlu0 %4029
    %s4032 = sor.u32 256, 48
    %4033 = vbcast.lane.b32.xlu0 %v4007, %s4032
    %v4034 = vpop.permute.xlu0 %4033
    %s4036 = sor.u32 256, 56
    %4037 = vbcast.lane.b32.xlu0 %v4007, %s4036
    %v4038 = vpop.permute.xlu0 %4037
    %s4040 = sor.u32 256, 64
    %4041 = vbcast.lane.b32.xlu0 %v4007, %s4040
    %v4042 = vpop.permute.xlu0 %4041
    %s4044 = sor.u32 256, 72
    %4045 = vbcast.lane.b32.xlu0 %v4007, %s4044
    %v4046 = vpop.permute.xlu0 %4045
    %s4048 = sor.u32 256, 80
    %4049 = vbcast.lane.b32.xlu0 %v4007, %s4048
    %v4050 = vpop.permute.xlu0 %4049
    %s4052 = sor.u32 256, 88
    %4053 = vbcast.lane.b32.xlu0 %v4007, %s4052
    %v4054 = vpop.permute.xlu0 %4053
    %s4056 = sor.u32 256, 96
    %4057 = vbcast.lane.b32.xlu0 %v4007, %s4056
    %v4058 = vpop.permute.xlu0 %4057
    %s4060 = sor.u32 256, 104
    %4061 = vbcast.lane.b32.xlu0 %v4007, %s4060
    %v4062 = vpop.permute.xlu0 %4061
    %s4064 = sor.u32 256, 112
    %4065 = vbcast.lane.b32.xlu0 %v4007, %s4064
    %v4066 = vpop.permute.xlu0 %4065
    %s4068 = sor.u32 256, 120
    %4069 = vbcast.lane.b32.xlu0 %v4007, %s4068
    %v4070 = vpop.permute.xlu0 %4069
    %v4071 = vlaneseq
    %v4072 = vshrl.u32 %v4071, 7
    %v4073 = vsub.s32 2, %v4072
    %v4074 = vrot.slane %v25, %v4073
    %4076 = vbcast.lane.b32.xlu0 %v4074, 256
    %v4077 = vpop.permute.xlu0 %4076
    %s4079 = sor.u32 256, 8
    %4080 = vbcast.lane.b32.xlu0 %v4074, %s4079
    %v4081 = vpop.permute.xlu0 %4080
    %s4083 = sor.u32 256, 16
    %4084 = vbcast.lane.b32.xlu0 %v4074, %s4083
    %v4085 = vpop.permute.xlu0 %4084
    %s4087 = sor.u32 256, 24
    %4088 = vbcast.lane.b32.xlu0 %v4074, %s4087
    %v4089 = vpop.permute.xlu0 %4088
    %s4091 = sor.u32 256, 32
    %4092 = vbcast.lane.b32.xlu0 %v4074, %s4091
    %v4093 = vpop.permute.xlu0 %4092
    %s4095 = sor.u32 256, 40
    %4096 = vbcast.lane.b32.xlu0 %v4074, %s4095
    %v4097 = vpop.permute.xlu0 %4096
    %s4099 = sor.u32 256, 48
    %4100 = vbcast.lane.b32.xlu0 %v4074, %s4099
    %v4101 = vpop.permute.xlu0 %4100
    %s4103 = sor.u32 256, 56
    %4104 = vbcast.lane.b32.xlu0 %v4074, %s4103
    %v4105 = vpop.permute.xlu0 %4104
    %s4107 = sor.u32 256, 64
    %4108 = vbcast.lane.b32.xlu0 %v4074, %s4107
    %v4109 = vpop.permute.xlu0 %4108
    %s4111 = sor.u32 256, 72
    %4112 = vbcast.lane.b32.xlu0 %v4074, %s4111
    %v4113 = vpop.permute.xlu0 %4112
    %s4115 = sor.u32 256, 80
    %4116 = vbcast.lane.b32.xlu0 %v4074, %s4115
    %v4117 = vpop.permute.xlu0 %4116
    %s4119 = sor.u32 256, 88
    %4120 = vbcast.lane.b32.xlu0 %v4074, %s4119
    %v4121 = vpop.permute.xlu0 %4120
    %s4123 = sor.u32 256, 96
    %4124 = vbcast.lane.b32.xlu0 %v4074, %s4123
    %v4125 = vpop.permute.xlu0 %4124
    %s4127 = sor.u32 256, 104
    %4128 = vbcast.lane.b32.xlu0 %v4074, %s4127
    %v4129 = vpop.permute.xlu0 %4128
    %s4131 = sor.u32 256, 112
    %4132 = vbcast.lane.b32.xlu0 %v4074, %s4131
    %v4133 = vpop.permute.xlu0 %4132
    %s4135 = sor.u32 256, 120
    %4136 = vbcast.lane.b32.xlu0 %v4074, %s4135
    %v4137 = vpop.permute.xlu0 %4136
    %v4138 = vlaneseq
    %v4139 = vshrl.u32 %v4138, 7
    %v4140 = vsub.s32 2, %v4139
    %v4141 = vrot.slane %v26, %v4140
    %4143 = vbcast.lane.b32.xlu0 %v4141, 256
    %v4144 = vpop.permute.xlu0 %4143
    %s4146 = sor.u32 256, 8
    %4147 = vbcast.lane.b32.xlu0 %v4141, %s4146
    %v4148 = vpop.permute.xlu0 %4147
    %s4150 = sor.u32 256, 16
    %4151 = vbcast.lane.b32.xlu0 %v4141, %s4150
    %v4152 = vpop.permute.xlu0 %4151
    %s4154 = sor.u32 256, 24
    %4155 = vbcast.lane.b32.xlu0 %v4141, %s4154
    %v4156 = vpop.permute.xlu0 %4155
    %s4158 = sor.u32 256, 32
    %4159 = vbcast.lane.b32.xlu0 %v4141, %s4158
    %v4160 = vpop.permute.xlu0 %4159
    %s4162 = sor.u32 256, 40
    %4163 = vbcast.lane.b32.xlu0 %v4141, %s4162
    %v4164 = vpop.permute.xlu0 %4163
    %s4166 = sor.u32 256, 48
    %4167 = vbcast.lane.b32.xlu0 %v4141, %s4166
    %v4168 = vpop.permute.xlu0 %4167
    %s4170 = sor.u32 256, 56
    %4171 = vbcast.lane.b32.xlu0 %v4141, %s4170
    %v4172 = vpop.permute.xlu0 %4171
    %s4174 = sor.u32 256, 64
    %4175 = vbcast.lane.b32.xlu0 %v4141, %s4174
    %v4176 = vpop.permute.xlu0 %4175
    %s4178 = sor.u32 256, 72
    %4179 = vbcast.lane.b32.xlu0 %v4141, %s4178
    %v4180 = vpop.permute.xlu0 %4179
    %s4182 = sor.u32 256, 80
    %4183 = vbcast.lane.b32.xlu0 %v4141, %s4182
    %v4184 = vpop.permute.xlu0 %4183
    %s4186 = sor.u32 256, 88
    %4187 = vbcast.lane.b32.xlu0 %v4141, %s4186
    %v4188 = vpop.permute.xlu0 %4187
    %s4190 = sor.u32 256, 96
    %4191 = vbcast.lane.b32.xlu0 %v4141, %s4190
    %v4192 = vpop.permute.xlu0 %4191
    %s4194 = sor.u32 256, 104
    %4195 = vbcast.lane.b32.xlu0 %v4141, %s4194
    %v4196 = vpop.permute.xlu0 %4195
    %s4198 = sor.u32 256, 112
    %4199 = vbcast.lane.b32.xlu0 %v4141, %s4198
    %v4200 = vpop.permute.xlu0 %4199
    %s4202 = sor.u32 256, 120
    %4203 = vbcast.lane.b32.xlu0 %v4141, %s4202
    %v4204 = vpop.permute.xlu0 %4203
    %v4205 = vlaneseq
    %v4206 = vshrl.u32 %v4205, 7
    %v4207 = vsub.s32 2, %v4206
    %v4208 = vrot.slane %v27, %v4207
    %4210 = vbcast.lane.b32.xlu0 %v4208, 256
    %v4211 = vpop.permute.xlu0 %4210
    %s4213 = sor.u32 256, 8
    %4214 = vbcast.lane.b32.xlu0 %v4208, %s4213
    %v4215 = vpop.permute.xlu0 %4214
    %s4217 = sor.u32 256, 16
    %4218 = vbcast.lane.b32.xlu0 %v4208, %s4217
    %v4219 = vpop.permute.xlu0 %4218
    %s4221 = sor.u32 256, 24
    %4222 = vbcast.lane.b32.xlu0 %v4208, %s4221
    %v4223 = vpop.permute.xlu0 %4222
    %s4225 = sor.u32 256, 32
    %4226 = vbcast.lane.b32.xlu0 %v4208, %s4225
    %v4227 = vpop.permute.xlu0 %4226
    %s4229 = sor.u32 256, 40
    %4230 = vbcast.lane.b32.xlu0 %v4208, %s4229
    %v4231 = vpop.permute.xlu0 %4230
    %s4233 = sor.u32 256, 48
    %4234 = vbcast.lane.b32.xlu0 %v4208, %s4233
    %v4235 = vpop.permute.xlu0 %4234
    %s4237 = sor.u32 256, 56
    %4238 = vbcast.lane.b32.xlu0 %v4208, %s4237
    %v4239 = vpop.permute.xlu0 %4238
    %s4241 = sor.u32 256, 64
    %4242 = vbcast.lane.b32.xlu0 %v4208, %s4241
    %v4243 = vpop.permute.xlu0 %4242
    %s4245 = sor.u32 256, 72
    %4246 = vbcast.lane.b32.xlu0 %v4208, %s4245
    %v4247 = vpop.permute.xlu0 %4246
    %s4249 = sor.u32 256, 80
    %4250 = vbcast.lane.b32.xlu0 %v4208, %s4249
    %v4251 = vpop.permute.xlu0 %4250
    %s4253 = sor.u32 256, 88
    %4254 = vbcast.lane.b32.xlu0 %v4208, %s4253
    %v4255 = vpop.permute.xlu0 %4254
    %s4257 = sor.u32 256, 96
    %4258 = vbcast.lane.b32.xlu0 %v4208, %s4257
    %v4259 = vpop.permute.xlu0 %4258
    %s4261 = sor.u32 256, 104
    %4262 = vbcast.lane.b32.xlu0 %v4208, %s4261
    %v4263 = vpop.permute.xlu0 %4262
    %s4265 = sor.u32 256, 112
    %4266 = vbcast.lane.b32.xlu0 %v4208, %s4265
    %v4267 = vpop.permute.xlu0 %4266
    %s4269 = sor.u32 256, 120
    %4270 = vbcast.lane.b32.xlu0 %v4208, %s4269
    %v4271 = vpop.permute.xlu0 %4270
    %v4272 = vlaneseq
    %v4273 = vshrl.u32 %v4272, 7
    %v4274 = vsub.s32 2, %v4273
    %v4275 = vrot.slane %v28, %v4274
    %4277 = vbcast.lane.b32.xlu0 %v4275, 256
    %v4278 = vpop.permute.xlu0 %4277
    %s4280 = sor.u32 256, 8
    %4281 = vbcast.lane.b32.xlu0 %v4275, %s4280
    %v4282 = vpop.permute.xlu0 %4281
    %s4284 = sor.u32 256, 16
    %4285 = vbcast.lane.b32.xlu0 %v4275, %s4284
    %v4286 = vpop.permute.xlu0 %4285
    %s4288 = sor.u32 256, 24
    %4289 = vbcast.lane.b32.xlu0 %v4275, %s4288
    %v4290 = vpop.permute.xlu0 %4289
    %s4292 = sor.u32 256, 32
    %4293 = vbcast.lane.b32.xlu0 %v4275, %s4292
    %v4294 = vpop.permute.xlu0 %4293
    %s4296 = sor.u32 256, 40
    %4297 = vbcast.lane.b32.xlu0 %v4275, %s4296
    %v4298 = vpop.permute.xlu0 %4297
    %s4300 = sor.u32 256, 48
    %4301 = vbcast.lane.b32.xlu0 %v4275, %s4300
    %v4302 = vpop.permute.xlu0 %4301
    %s4304 = sor.u32 256, 56
    %4305 = vbcast.lane.b32.xlu0 %v4275, %s4304
    %v4306 = vpop.permute.xlu0 %4305
    %s4308 = sor.u32 256, 64
    %4309 = vbcast.lane.b32.xlu0 %v4275, %s4308
    %v4310 = vpop.permute.xlu0 %4309
    %s4312 = sor.u32 256, 72
    %4313 = vbcast.lane.b32.xlu0 %v4275, %s4312
    %v4314 = vpop.permute.xlu0 %4313
    %s4316 = sor.u32 256, 80
    %4317 = vbcast.lane.b32.xlu0 %v4275, %s4316
    %v4318 = vpop.permute.xlu0 %4317
    %s4320 = sor.u32 256, 88
    %4321 = vbcast.lane.b32.xlu0 %v4275, %s4320
    %v4322 = vpop.permute.xlu0 %4321
    %s4324 = sor.u32 256, 96
    %4325 = vbcast.lane.b32.xlu0 %v4275, %s4324
    %v4326 = vpop.permute.xlu0 %4325
    %s4328 = sor.u32 256, 104
    %4329 = vbcast.lane.b32.xlu0 %v4275, %s4328
    %v4330 = vpop.permute.xlu0 %4329
    %s4332 = sor.u32 256, 112
    %4333 = vbcast.lane.b32.xlu0 %v4275, %s4332
    %v4334 = vpop.permute.xlu0 %4333
    %s4336 = sor.u32 256, 120
    %4337 = vbcast.lane.b32.xlu0 %v4275, %s4336
    %v4338 = vpop.permute.xlu0 %4337
    %v4339 = vlaneseq
    %v4340 = vshrl.u32 %v4339, 7
    %v4341 = vsub.s32 2, %v4340
    %v4342 = vrot.slane %v29, %v4341
    %4344 = vbcast.lane.b32.xlu0 %v4342, 256
    %v4345 = vpop.permute.xlu0 %4344
    %s4347 = sor.u32 256, 8
    %4348 = vbcast.lane.b32.xlu0 %v4342, %s4347
    %v4349 = vpop.permute.xlu0 %4348
    %s4351 = sor.u32 256, 16
    %4352 = vbcast.lane.b32.xlu0 %v4342, %s4351
    %v4353 = vpop.permute.xlu0 %4352
    %s4355 = sor.u32 256, 24
    %4356 = vbcast.lane.b32.xlu0 %v4342, %s4355
    %v4357 = vpop.permute.xlu0 %4356
    %s4359 = sor.u32 256, 32
    %4360 = vbcast.lane.b32.xlu0 %v4342, %s4359
    %v4361 = vpop.permute.xlu0 %4360
    %s4363 = sor.u32 256, 40
    %4364 = vbcast.lane.b32.xlu0 %v4342, %s4363
    %v4365 = vpop.permute.xlu0 %4364
    %s4367 = sor.u32 256, 48
    %4368 = vbcast.lane.b32.xlu0 %v4342, %s4367
    %v4369 = vpop.permute.xlu0 %4368
    %s4371 = sor.u32 256, 56
    %4372 = vbcast.lane.b32.xlu0 %v4342, %s4371
    %v4373 = vpop.permute.xlu0 %4372
    %s4375 = sor.u32 256, 64
    %4376 = vbcast.lane.b32.xlu0 %v4342, %s4375
    %v4377 = vpop.permute.xlu0 %4376
    %s4379 = sor.u32 256, 72
    %4380 = vbcast.lane.b32.xlu0 %v4342, %s4379
    %v4381 = vpop.permute.xlu0 %4380
    %s4383 = sor.u32 256, 80
    %4384 = vbcast.lane.b32.xlu0 %v4342, %s4383
    %v4385 = vpop.permute.xlu0 %4384
    %s4387 = sor.u32 256, 88
    %4388 = vbcast.lane.b32.xlu0 %v4342, %s4387
    %v4389 = vpop.permute.xlu0 %4388
    %s4391 = sor.u32 256, 96
    %4392 = vbcast.lane.b32.xlu0 %v4342, %s4391
    %v4393 = vpop.permute.xlu0 %4392
    %s4395 = sor.u32 256, 104
    %4396 = vbcast.lane.b32.xlu0 %v4342, %s4395
    %v4397 = vpop.permute.xlu0 %4396
    %s4399 = sor.u32 256, 112
    %4400 = vbcast.lane.b32.xlu0 %v4342, %s4399
    %v4401 = vpop.permute.xlu0 %4400
    %s4403 = sor.u32 256, 120
    %4404 = vbcast.lane.b32.xlu0 %v4342, %s4403
    %v4405 = vpop.permute.xlu0 %4404
    %v4406 = vlaneseq
    %v4407 = vshrl.u32 %v4406, 7
    %v4408 = vsub.s32 2, %v4407
    %v4409 = vrot.slane %v30, %v4408
    %4411 = vbcast.lane.b32.xlu0 %v4409, 256
    %v4412 = vpop.permute.xlu0 %4411
    %s4414 = sor.u32 256, 8
    %4415 = vbcast.lane.b32.xlu0 %v4409, %s4414
    %v4416 = vpop.permute.xlu0 %4415
    %s4418 = sor.u32 256, 16
    %4419 = vbcast.lane.b32.xlu0 %v4409, %s4418
    %v4420 = vpop.permute.xlu0 %4419
    %s4422 = sor.u32 256, 24
    %4423 = vbcast.lane.b32.xlu0 %v4409, %s4422
    %v4424 = vpop.permute.xlu0 %4423
    %s4426 = sor.u32 256, 32
    %4427 = vbcast.lane.b32.xlu0 %v4409, %s4426
    %v4428 = vpop.permute.xlu0 %4427
    %s4430 = sor.u32 256, 40
    %4431 = vbcast.lane.b32.xlu0 %v4409, %s4430
    %v4432 = vpop.permute.xlu0 %4431
    %s4434 = sor.u32 256, 48
    %4435 = vbcast.lane.b32.xlu0 %v4409, %s4434
    %v4436 = vpop.permute.xlu0 %4435
    %s4438 = sor.u32 256, 56
    %4439 = vbcast.lane.b32.xlu0 %v4409, %s4438
    %v4440 = vpop.permute.xlu0 %4439
    %s4442 = sor.u32 256, 64
    %4443 = vbcast.lane.b32.xlu0 %v4409, %s4442
    %v4444 = vpop.permute.xlu0 %4443
    %s4446 = sor.u32 256, 72
    %4447 = vbcast.lane.b32.xlu0 %v4409, %s4446
    %v4448 = vpop.permute.xlu0 %4447
    %s4450 = sor.u32 256, 80
    %4451 = vbcast.lane.b32.xlu0 %v4409, %s4450
    %v4452 = vpop.permute.xlu0 %4451
    %s4454 = sor.u32 256, 88
    %4455 = vbcast.lane.b32.xlu0 %v4409, %s4454
    %v4456 = vpop.permute.xlu0 %4455
    %s4458 = sor.u32 256, 96
    %4459 = vbcast.lane.b32.xlu0 %v4409, %s4458
    %v4460 = vpop.permute.xlu0 %4459
    %s4462 = sor.u32 256, 104
    %4463 = vbcast.lane.b32.xlu0 %v4409, %s4462
    %v4464 = vpop.permute.xlu0 %4463
    %s4466 = sor.u32 256, 112
    %4467 = vbcast.lane.b32.xlu0 %v4409, %s4466
    %v4468 = vpop.permute.xlu0 %4467
    %s4470 = sor.u32 256, 120
    %4471 = vbcast.lane.b32.xlu0 %v4409, %s4470
    %v4472 = vpop.permute.xlu0 %4471
    %v4473 = vlaneseq
    %v4474 = vshrl.u32 %v4473, 7
    %v4475 = vsub.s32 2, %v4474
    %v4476 = vrot.slane %v31, %v4475
    %4478 = vbcast.lane.b32.xlu0 %v4476, 256
    %v4479 = vpop.permute.xlu0 %4478
    %s4481 = sor.u32 256, 8
    %4482 = vbcast.lane.b32.xlu0 %v4476, %s4481
    %v4483 = vpop.permute.xlu0 %4482
    %s4485 = sor.u32 256, 16
    %4486 = vbcast.lane.b32.xlu0 %v4476, %s4485
    %v4487 = vpop.permute.xlu0 %4486
    %s4489 = sor.u32 256, 24
    %4490 = vbcast.lane.b32.xlu0 %v4476, %s4489
    %v4491 = vpop.permute.xlu0 %4490
    %s4493 = sor.u32 256, 32
    %4494 = vbcast.lane.b32.xlu0 %v4476, %s4493
    %v4495 = vpop.permute.xlu0 %4494
    %s4497 = sor.u32 256, 40
    %4498 = vbcast.lane.b32.xlu0 %v4476, %s4497
    %v4499 = vpop.permute.xlu0 %4498
    %s4501 = sor.u32 256, 48
    %4502 = vbcast.lane.b32.xlu0 %v4476, %s4501
    %v4503 = vpop.permute.xlu0 %4502
    %s4505 = sor.u32 256, 56
    %4506 = vbcast.lane.b32.xlu0 %v4476, %s4505
    %v4507 = vpop.permute.xlu0 %4506
    %s4509 = sor.u32 256, 64
    %4510 = vbcast.lane.b32.xlu0 %v4476, %s4509
    %v4511 = vpop.permute.xlu0 %4510
    %s4513 = sor.u32 256, 72
    %4514 = vbcast.lane.b32.xlu0 %v4476, %s4513
    %v4515 = vpop.permute.xlu0 %4514
    %s4517 = sor.u32 256, 80
    %4518 = vbcast.lane.b32.xlu0 %v4476, %s4517
    %v4519 = vpop.permute.xlu0 %4518
    %s4521 = sor.u32 256, 88
    %4522 = vbcast.lane.b32.xlu0 %v4476, %s4521
    %v4523 = vpop.permute.xlu0 %4522
    %s4525 = sor.u32 256, 96
    %4526 = vbcast.lane.b32.xlu0 %v4476, %s4525
    %v4527 = vpop.permute.xlu0 %4526
    %s4529 = sor.u32 256, 104
    %4530 = vbcast.lane.b32.xlu0 %v4476, %s4529
    %v4531 = vpop.permute.xlu0 %4530
    %s4533 = sor.u32 256, 112
    %4534 = vbcast.lane.b32.xlu0 %v4476, %s4533
    %v4535 = vpop.permute.xlu0 %4534
    %s4537 = sor.u32 256, 120
    %4538 = vbcast.lane.b32.xlu0 %v4476, %s4537
    %v4539 = vpop.permute.xlu0 %4538
    %v4540 = vlaneseq
    %v4541 = vshrl.u32 %v4540, 7
    %v4542 = vsub.s32 2, %v4541
    %v4543 = vrot.slane %v32, %v4542
    %4545 = vbcast.lane.b32.xlu0 %v4543, 256
    %v4546 = vpop.permute.xlu0 %4545
    %s4548 = sor.u32 256, 8
    %4549 = vbcast.lane.b32.xlu0 %v4543, %s4548
    %v4550 = vpop.permute.xlu0 %4549
    %s4552 = sor.u32 256, 16
    %4553 = vbcast.lane.b32.xlu0 %v4543, %s4552
    %v4554 = vpop.permute.xlu0 %4553
    %s4556 = sor.u32 256, 24
    %4557 = vbcast.lane.b32.xlu0 %v4543, %s4556
    %v4558 = vpop.permute.xlu0 %4557
    %s4560 = sor.u32 256, 32
    %4561 = vbcast.lane.b32.xlu0 %v4543, %s4560
    %v4562 = vpop.permute.xlu0 %4561
    %s4564 = sor.u32 256, 40
    %4565 = vbcast.lane.b32.xlu0 %v4543, %s4564
    %v4566 = vpop.permute.xlu0 %4565
    %s4568 = sor.u32 256, 48
    %4569 = vbcast.lane.b32.xlu0 %v4543, %s4568
    %v4570 = vpop.permute.xlu0 %4569
    %s4572 = sor.u32 256, 56
    %4573 = vbcast.lane.b32.xlu0 %v4543, %s4572
    %v4574 = vpop.permute.xlu0 %4573
    %s4576 = sor.u32 256, 64
    %4577 = vbcast.lane.b32.xlu0 %v4543, %s4576
    %v4578 = vpop.permute.xlu0 %4577
    %s4580 = sor.u32 256, 72
    %4581 = vbcast.lane.b32.xlu0 %v4543, %s4580
    %v4582 = vpop.permute.xlu0 %4581
    %s4584 = sor.u32 256, 80
    %4585 = vbcast.lane.b32.xlu0 %v4543, %s4584
    %v4586 = vpop.permute.xlu0 %4585
    %s4588 = sor.u32 256, 88
    %4589 = vbcast.lane.b32.xlu0 %v4543, %s4588
    %v4590 = vpop.permute.xlu0 %4589
    %s4592 = sor.u32 256, 96
    %4593 = vbcast.lane.b32.xlu0 %v4543, %s4592
    %v4594 = vpop.permute.xlu0 %4593
    %s4596 = sor.u32 256, 104
    %4597 = vbcast.lane.b32.xlu0 %v4543, %s4596
    %v4598 = vpop.permute.xlu0 %4597
    %s4600 = sor.u32 256, 112
    %4601 = vbcast.lane.b32.xlu0 %v4543, %s4600
    %v4602 = vpop.permute.xlu0 %4601
    %s4604 = sor.u32 256, 120
    %4605 = vbcast.lane.b32.xlu0 %v4543, %s4604
    %v4606 = vpop.permute.xlu0 %4605
    %v4607 = vlaneseq
    %v4608 = vshrl.u32 %v4607, 7
    %v4609 = vsub.s32 2, %v4608
    %v4610 = vrot.slane %v33, %v4609
    %4612 = vbcast.lane.b32.xlu0 %v4610, 256
    %v4613 = vpop.permute.xlu0 %4612
    %s4615 = sor.u32 256, 8
    %4616 = vbcast.lane.b32.xlu0 %v4610, %s4615
    %v4617 = vpop.permute.xlu0 %4616
    %s4619 = sor.u32 256, 16
    %4620 = vbcast.lane.b32.xlu0 %v4610, %s4619
    %v4621 = vpop.permute.xlu0 %4620
    %s4623 = sor.u32 256, 24
    %4624 = vbcast.lane.b32.xlu0 %v4610, %s4623
    %v4625 = vpop.permute.xlu0 %4624
    %s4627 = sor.u32 256, 32
    %4628 = vbcast.lane.b32.xlu0 %v4610, %s4627
    %v4629 = vpop.permute.xlu0 %4628
    %s4631 = sor.u32 256, 40
    %4632 = vbcast.lane.b32.xlu0 %v4610, %s4631
    %v4633 = vpop.permute.xlu0 %4632
    %s4635 = sor.u32 256, 48
    %4636 = vbcast.lane.b32.xlu0 %v4610, %s4635
    %v4637 = vpop.permute.xlu0 %4636
    %s4639 = sor.u32 256, 56
    %4640 = vbcast.lane.b32.xlu0 %v4610, %s4639
    %v4641 = vpop.permute.xlu0 %4640
    %s4643 = sor.u32 256, 64
    %4644 = vbcast.lane.b32.xlu0 %v4610, %s4643
    %v4645 = vpop.permute.xlu0 %4644
    %s4647 = sor.u32 256, 72
    %4648 = vbcast.lane.b32.xlu0 %v4610, %s4647
    %v4649 = vpop.permute.xlu0 %4648
    %s4651 = sor.u32 256, 80
    %4652 = vbcast.lane.b32.xlu0 %v4610, %s4651
    %v4653 = vpop.permute.xlu0 %4652
    %s4655 = sor.u32 256, 88
    %4656 = vbcast.lane.b32.xlu0 %v4610, %s4655
    %v4657 = vpop.permute.xlu0 %4656
    %s4659 = sor.u32 256, 96
    %4660 = vbcast.lane.b32.xlu0 %v4610, %s4659
    %v4661 = vpop.permute.xlu0 %4660
    %s4663 = sor.u32 256, 104
    %4664 = vbcast.lane.b32.xlu0 %v4610, %s4663
    %v4665 = vpop.permute.xlu0 %4664
    %s4667 = sor.u32 256, 112
    %4668 = vbcast.lane.b32.xlu0 %v4610, %s4667
    %v4669 = vpop.permute.xlu0 %4668
    %s4671 = sor.u32 256, 120
    %4672 = vbcast.lane.b32.xlu0 %v4610, %s4671
    %v4673 = vpop.permute.xlu0 %4672
    %v4674 = vlaneseq
    %v4675 = vshrl.u32 %v4674, 7
    %v4676 = vsub.s32 2, %v4675
    %v4677 = vrot.slane %v34, %v4676
    %v4678 = vlaneseq
    %v4679 = vshrl.u32 %v4678, 7
    %v4680 = vsub.s32 2, %v4679
    %v4681 = vrot.slane %v35, %v4680
    %v4682 = vlaneseq
    %v4683 = vshrl.u32 %v4682, 7
    %v4684 = vsub.s32 2, %v4683
    %v4685 = vrot.slane %v36, %v4684
    %v4686 = vlaneseq
    %v4687 = vshrl.u32 %v4686, 7
    %v4688 = vsub.s32 2, %v4687
    %v4689 = vrot.slane %v37, %v4688
    %v4690 = vlaneseq
    %v4691 = vshrl.u32 %v4690, 7
    %v4692 = vsub.s32 2, %v4691
    %v4693 = vrot.slane %v38, %v4692
    %v4694 = vlaneseq
    %v4695 = vshrl.u32 %v4694, 7
    %v4696 = vsub.s32 2, %v4695
    %v4697 = vrot.slane %v39, %v4696
    %v4698 = vlaneseq
    %v4699 = vshrl.u32 %v4698, 7
    %v4700 = vsub.s32 2, %v4699
    %v4701 = vrot.slane %v40, %v4700
    %v4702 = vlaneseq
    %v4703 = vshrl.u32 %v4702, 7
    %v4704 = vsub.s32 2, %v4703
    %v4705 = vrot.slane %v41, %v4704
    %v4706 = vlaneseq
    %v4707 = vshrl.u32 %v4706, 7
    %v4708 = vsub.s32 2, %v4707
    %v4709 = vrot.slane %v42, %v4708
    %v4710 = vlaneseq
    %v4711 = vshrl.u32 %v4710, 7
    %v4712 = vsub.s32 2, %v4711
    %v4713 = vrot.slane %v43, %v4712
    %v4714 = vlaneseq
    %v4715 = vshrl.u32 %v4714, 7
    %v4716 = vsub.s32 2, %v4715
    %v4717 = vrot.slane %v44, %v4716
    %v4718 = vlaneseq
    %v4719 = vshrl.u32 %v4718, 7
    %v4720 = vsub.s32 2, %v4719
    %v4721 = vrot.slane %v45, %v4720
    %v4722 = vlaneseq
    %v4723 = vshrl.u32 %v4722, 7
    %v4724 = vsub.s32 2, %v4723
    %v4725 = vrot.slane %v46, %v4724
    %v4726 = vlaneseq
    %v4727 = vshrl.u32 %v4726, 7
    %v4728 = vsub.s32 2, %v4727
    %v4729 = vrot.slane %v47, %v4728
    %v4730 = vlaneseq
    %v4731 = vshrl.u32 %v4730, 7
    %v4732 = vsub.s32 2, %v4731
    %v4733 = vrot.slane %v48, %v4732
    %v4734 = vlaneseq
    %v4735 = vshrl.u32 %v4734, 7
    %v4736 = vsub.s32 2, %v4735
    %v4737 = vrot.slane %v49, %v4736
    %v4738 = vsub.f32 %v3608, %v4677
    %v4739 = vsub.f32 %v3612, %v4677
    %v4740 = vsub.f32 %v3616, %v4677
    %v4741 = vsub.f32 %v3620, %v4677
    %v4742 = vsub.f32 %v3624, %v4677
    %v4743 = vsub.f32 %v3628, %v4677
    %v4744 = vsub.f32 %v3632, %v4677
    %v4745 = vsub.f32 %v3636, %v4677
    %v4746 = vsub.f32 %v3640, %v4677
    %v4747 = vsub.f32 %v3644, %v4677
    %v4748 = vsub.f32 %v3648, %v4677
    %v4749 = vsub.f32 %v3652, %v4677
    %v4750 = vsub.f32 %v3656, %v4677
    %v4751 = vsub.f32 %v3660, %v4677
    %v4752 = vsub.f32 %v3664, %v4677
    %v4753 = vsub.f32 %v3668, %v4677
    %v4754 = vsub.f32 %v3675, %v4681
    %v4755 = vsub.f32 %v3679, %v4681
    %v4756 = vsub.f32 %v3683, %v4681
    %v4757 = vsub.f32 %v3687, %v4681
    %v4758 = vsub.f32 %v3691, %v4681
    %v4759 = vsub.f32 %v3695, %v4681
    %v4760 = vsub.f32 %v3699, %v4681
    %v4761 = vsub.f32 %v3703, %v4681
    %v4762 = vsub.f32 %v3707, %v4681
    %v4763 = vsub.f32 %v3711, %v4681
    %v4764 = vsub.f32 %v3715, %v4681
    %v4765 = vsub.f32 %v3719, %v4681
    %v4766 = vsub.f32 %v3723, %v4681
    %v4767 = vsub.f32 %v3727, %v4681
    %v4768 = vsub.f32 %v3731, %v4681
    %v4769 = vsub.f32 %v3735, %v4681
    %v4770 = vsub.f32 %v3742, %v4685
    %v4771 = vsub.f32 %v3746, %v4685
    %v4772 = vsub.f32 %v3750, %v4685
    %v4773 = vsub.f32 %v3754, %v4685
    %v4774 = vsub.f32 %v3758, %v4685
    %v4775 = vsub.f32 %v3762, %v4685
    %v4776 = vsub.f32 %v3766, %v4685
    %v4777 = vsub.f32 %v3770, %v4685
    %v4778 = vsub.f32 %v3774, %v4685
    %v4779 = vsub.f32 %v3778, %v4685
    %v4780 = vsub.f32 %v3782, %v4685
    %v4781 = vsub.f32 %v3786, %v4685
    %v4782 = vsub.f32 %v3790, %v4685
    %v4783 = vsub.f32 %v3794, %v4685
    %v4784 = vsub.f32 %v3798, %v4685
    %v4785 = vsub.f32 %v3802, %v4685
    %v4786 = vsub.f32 %v3809, %v4689
    %v4787 = vsub.f32 %v3813, %v4689
    %v4788 = vsub.f32 %v3817, %v4689
    %v4789 = vsub.f32 %v3821, %v4689
    %v4790 = vsub.f32 %v3825, %v4689
    %v4791 = vsub.f32 %v3829, %v4689
    %v4792 = vsub.f32 %v3833, %v4689
    %v4793 = vsub.f32 %v3837, %v4689
    %v4794 = vsub.f32 %v3841, %v4689
    %v4795 = vsub.f32 %v3845, %v4689
    %v4796 = vsub.f32 %v3849, %v4689
    %v4797 = vsub.f32 %v3853, %v4689
    %v4798 = vsub.f32 %v3857, %v4689
    %v4799 = vsub.f32 %v3861, %v4689
    %v4800 = vsub.f32 %v3865, %v4689
    %v4801 = vsub.f32 %v3869, %v4689
    %v4802 = vsub.f32 %v3876, %v4693
    %v4803 = vsub.f32 %v3880, %v4693
    %v4804 = vsub.f32 %v3884, %v4693
    %v4805 = vsub.f32 %v3888, %v4693
    %v4806 = vsub.f32 %v3892, %v4693
    %v4807 = vsub.f32 %v3896, %v4693
    %v4808 = vsub.f32 %v3900, %v4693
    %v4809 = vsub.f32 %v3904, %v4693
    %v4810 = vsub.f32 %v3908, %v4693
    %v4811 = vsub.f32 %v3912, %v4693
    %v4812 = vsub.f32 %v3916, %v4693
    %v4813 = vsub.f32 %v3920, %v4693
    %v4814 = vsub.f32 %v3924, %v4693
    %v4815 = vsub.f32 %v3928, %v4693
    %v4816 = vsub.f32 %v3932, %v4693
    %v4817 = vsub.f32 %v3936, %v4693
    %v4818 = vsub.f32 %v3943, %v4697
    %v4819 = vsub.f32 %v3947, %v4697
    %v4820 = vsub.f32 %v3951, %v4697
    %v4821 = vsub.f32 %v3955, %v4697
    %v4822 = vsub.f32 %v3959, %v4697
    %v4823 = vsub.f32 %v3963, %v4697
    %v4824 = vsub.f32 %v3967, %v4697
    %v4825 = vsub.f32 %v3971, %v4697
    %v4826 = vsub.f32 %v3975, %v4697
    %v4827 = vsub.f32 %v3979, %v4697
    %v4828 = vsub.f32 %v3983, %v4697
    %v4829 = vsub.f32 %v3987, %v4697
    %v4830 = vsub.f32 %v3991, %v4697
    %v4831 = vsub.f32 %v3995, %v4697
    %v4832 = vsub.f32 %v3999, %v4697
    %v4833 = vsub.f32 %v4003, %v4697
    %v4834 = vsub.f32 %v4010, %v4701
    %v4835 = vsub.f32 %v4014, %v4701
    %v4836 = vsub.f32 %v4018, %v4701
    %v4837 = vsub.f32 %v4022, %v4701
    %v4838 = vsub.f32 %v4026, %v4701
    %v4839 = vsub.f32 %v4030, %v4701
    %v4840 = vsub.f32 %v4034, %v4701
    %v4841 = vsub.f32 %v4038, %v4701
    %v4842 = vsub.f32 %v4042, %v4701
    %v4843 = vsub.f32 %v4046, %v4701
    %v4844 = vsub.f32 %v4050, %v4701
    %v4845 = vsub.f32 %v4054, %v4701
    %v4846 = vsub.f32 %v4058, %v4701
    %v4847 = vsub.f32 %v4062, %v4701
    %v4848 = vsub.f32 %v4066, %v4701
    %v4849 = vsub.f32 %v4070, %v4701
    %v4850 = vsub.f32 %v4077, %v4705
    %v4851 = vsub.f32 %v4081, %v4705
    %v4852 = vsub.f32 %v4085, %v4705
    %v4853 = vsub.f32 %v4089, %v4705
    %v4854 = vsub.f32 %v4093, %v4705
    %v4855 = vsub.f32 %v4097, %v4705
    %v4856 = vsub.f32 %v4101, %v4705
    %v4857 = vsub.f32 %v4105, %v4705
    %v4858 = vsub.f32 %v4109, %v4705
    %v4859 = vsub.f32 %v4113, %v4705
    %v4860 = vsub.f32 %v4117, %v4705
    %v4861 = vsub.f32 %v4121, %v4705
    %v4862 = vsub.f32 %v4125, %v4705
    %v4863 = vsub.f32 %v4129, %v4705
    %v4864 = vsub.f32 %v4133, %v4705
    %v4865 = vsub.f32 %v4137, %v4705
    %v4866 = vsub.f32 %v4144, %v4709
    %v4867 = vsub.f32 %v4148, %v4709
    %v4868 = vsub.f32 %v4152, %v4709
    %v4869 = vsub.f32 %v4156, %v4709
    %v4870 = vsub.f32 %v4160, %v4709
    %v4871 = vsub.f32 %v4164, %v4709
    %v4872 = vsub.f32 %v4168, %v4709
    %v4873 = vsub.f32 %v4172, %v4709
    %v4874 = vsub.f32 %v4176, %v4709
    %v4875 = vsub.f32 %v4180, %v4709
    %v4876 = vsub.f32 %v4184, %v4709
    %v4877 = vsub.f32 %v4188, %v4709
    %v4878 = vsub.f32 %v4192, %v4709
    %v4879 = vsub.f32 %v4196, %v4709
    %v4880 = vsub.f32 %v4200, %v4709
    %v4881 = vsub.f32 %v4204, %v4709
    %v4882 = vsub.f32 %v4211, %v4713
    %v4883 = vsub.f32 %v4215, %v4713
    %v4884 = vsub.f32 %v4219, %v4713
    %v4885 = vsub.f32 %v4223, %v4713
    %v4886 = vsub.f32 %v4227, %v4713
    %v4887 = vsub.f32 %v4231, %v4713
    %v4888 = vsub.f32 %v4235, %v4713
    %v4889 = vsub.f32 %v4239, %v4713
    %v4890 = vsub.f32 %v4243, %v4713
    %v4891 = vsub.f32 %v4247, %v4713
    %v4892 = vsub.f32 %v4251, %v4713
    %v4893 = vsub.f32 %v4255, %v4713
    %v4894 = vsub.f32 %v4259, %v4713
    %v4895 = vsub.f32 %v4263, %v4713
    %v4896 = vsub.f32 %v4267, %v4713
    %v4897 = vsub.f32 %v4271, %v4713
    %v4898 = vsub.f32 %v4278, %v4717
    %v4899 = vsub.f32 %v4282, %v4717
    %v4900 = vsub.f32 %v4286, %v4717
    %v4901 = vsub.f32 %v4290, %v4717
    %v4902 = vsub.f32 %v4294, %v4717
    %v4903 = vsub.f32 %v4298, %v4717
    %v4904 = vsub.f32 %v4302, %v4717
    %v4905 = vsub.f32 %v4306, %v4717
    %v4906 = vsub.f32 %v4310, %v4717
    %v4907 = vsub.f32 %v4314, %v4717
    %v4908 = vsub.f32 %v4318, %v4717
    %v4909 = vsub.f32 %v4322, %v4717
    %v4910 = vsub.f32 %v4326, %v4717
    %v4911 = vsub.f32 %v4330, %v4717
    %v4912 = vsub.f32 %v4334, %v4717
    %v4913 = vsub.f32 %v4338, %v4717
    %v4914 = vsub.f32 %v4345, %v4721
    %v4915 = vsub.f32 %v4349, %v4721
    %v4916 = vsub.f32 %v4353, %v4721
    %v4917 = vsub.f32 %v4357, %v4721
    %v4918 = vsub.f32 %v4361, %v4721
    %v4919 = vsub.f32 %v4365, %v4721
    %v4920 = vsub.f32 %v4369, %v4721
    %v4921 = vsub.f32 %v4373, %v4721
    %v4922 = vsub.f32 %v4377, %v4721
    %v4923 = vsub.f32 %v4381, %v4721
    %v4924 = vsub.f32 %v4385, %v4721
    %v4925 = vsub.f32 %v4389, %v4721
    %v4926 = vsub.f32 %v4393, %v4721
    %v4927 = vsub.f32 %v4397, %v4721
    %v4928 = vsub.f32 %v4401, %v4721
    %v4929 = vsub.f32 %v4405, %v4721
    %v4930 = vsub.f32 %v4412, %v4725
    %v4931 = vsub.f32 %v4416, %v4725
    %v4932 = vsub.f32 %v4420, %v4725
    %v4933 = vsub.f32 %v4424, %v4725
    %v4934 = vsub.f32 %v4428, %v4725
    %v4935 = vsub.f32 %v4432, %v4725
    %v4936 = vsub.f32 %v4436, %v4725
    %v4937 = vsub.f32 %v4440, %v4725
    %v4938 = vsub.f32 %v4444, %v4725
    %v4939 = vsub.f32 %v4448, %v4725
    %v4940 = vsub.f32 %v4452, %v4725
    %v4941 = vsub.f32 %v4456, %v4725
    %v4942 = vsub.f32 %v4460, %v4725
    %v4943 = vsub.f32 %v4464, %v4725
    %v4944 = vsub.f32 %v4468, %v4725
    %v4945 = vsub.f32 %v4472, %v4725
    %v4946 = vsub.f32 %v4479, %v4729
    %v4947 = vsub.f32 %v4483, %v4729
    %v4948 = vsub.f32 %v4487, %v4729
    %v4949 = vsub.f32 %v4491, %v4729
    %v4950 = vsub.f32 %v4495, %v4729
    %v4951 = vsub.f32 %v4499, %v4729
    %v4952 = vsub.f32 %v4503, %v4729
    %v4953 = vsub.f32 %v4507, %v4729
    %v4954 = vsub.f32 %v4511, %v4729
    %v4955 = vsub.f32 %v4515, %v4729
    %v4956 = vsub.f32 %v4519, %v4729
    %v4957 = vsub.f32 %v4523, %v4729
    %v4958 = vsub.f32 %v4527, %v4729
    %v4959 = vsub.f32 %v4531, %v4729
    %v4960 = vsub.f32 %v4535, %v4729
    %v4961 = vsub.f32 %v4539, %v4729
    %v4962 = vsub.f32 %v4546, %v4733
    %v4963 = vsub.f32 %v4550, %v4733
    %v4964 = vsub.f32 %v4554, %v4733
    %v4965 = vsub.f32 %v4558, %v4733
    %v4966 = vsub.f32 %v4562, %v4733
    %v4967 = vsub.f32 %v4566, %v4733
    %v4968 = vsub.f32 %v4570, %v4733
    %v4969 = vsub.f32 %v4574, %v4733
    %v4970 = vsub.f32 %v4578, %v4733
    %v4971 = vsub.f32 %v4582, %v4733
    %v4972 = vsub.f32 %v4586, %v4733
    %v4973 = vsub.f32 %v4590, %v4733
    %v4974 = vsub.f32 %v4594, %v4733
    %v4975 = vsub.f32 %v4598, %v4733
    %v4976 = vsub.f32 %v4602, %v4733
    %v4977 = vsub.f32 %v4606, %v4733
    %v4978 = vsub.f32 %v4613, %v4737
    %v4979 = vsub.f32 %v4617, %v4737
    %v4980 = vsub.f32 %v4621, %v4737
    %v4981 = vsub.f32 %v4625, %v4737
    %v4982 = vsub.f32 %v4629, %v4737
    %v4983 = vsub.f32 %v4633, %v4737
    %v4984 = vsub.f32 %v4637, %v4737
    %v4985 = vsub.f32 %v4641, %v4737
    %v4986 = vsub.f32 %v4645, %v4737
    %v4987 = vsub.f32 %v4649, %v4737
    %v4988 = vsub.f32 %v4653, %v4737
    %v4989 = vsub.f32 %v4657, %v4737
    %v4990 = vsub.f32 %v4661, %v4737
    %v4991 = vsub.f32 %v4665, %v4737
    %v4992 = vsub.f32 %v4669, %v4737
    %v4993 = vsub.f32 %v4673, %v4737
    %v4994 = vand.u32 2147483647, %v4738
    %v4995 = vand.u32 2147483647, %v4739
    %v4996 = vand.u32 2147483647, %v4740
    %v4997 = vand.u32 2147483647, %v4741
    %v4998 = vand.u32 2147483647, %v4742
    %v4999 = vand.u32 2147483647, %v4743
    %v5000 = vand.u32 2147483647, %v4744
    %v5001 = vand.u32 2147483647, %v4745
    %v5002 = vand.u32 2147483647, %v4746
    %v5003 = vand.u32 2147483647, %v4747
    %v5004 = vand.u32 2147483647, %v4748
    %v5005 = vand.u32 2147483647, %v4749
    %v5006 = vand.u32 2147483647, %v4750
    %v5007 = vand.u32 2147483647, %v4751
    %v5008 = vand.u32 2147483647, %v4752
    %v5009 = vand.u32 2147483647, %v4753
    %v5010 = vand.u32 2147483647, %v4754
    %v5011 = vand.u32 2147483647, %v4755
    %v5012 = vand.u32 2147483647, %v4756
    %v5013 = vand.u32 2147483647, %v4757
    %v5014 = vand.u32 2147483647, %v4758
    %v5015 = vand.u32 2147483647, %v4759
    %v5016 = vand.u32 2147483647, %v4760
    %v5017 = vand.u32 2147483647, %v4761
    %v5018 = vand.u32 2147483647, %v4762
    %v5019 = vand.u32 2147483647, %v4763
    %v5020 = vand.u32 2147483647, %v4764
    %v5021 = vand.u32 2147483647, %v4765
    %v5022 = vand.u32 2147483647, %v4766
    %v5023 = vand.u32 2147483647, %v4767
    %v5024 = vand.u32 2147483647, %v4768
    %v5025 = vand.u32 2147483647, %v4769
    %v5026 = vand.u32 2147483647, %v4770
    %v5027 = vand.u32 2147483647, %v4771
    %v5028 = vand.u32 2147483647, %v4772
    %v5029 = vand.u32 2147483647, %v4773
    %v5030 = vand.u32 2147483647, %v4774
    %v5031 = vand.u32 2147483647, %v4775
    %v5032 = vand.u32 2147483647, %v4776
    %v5033 = vand.u32 2147483647, %v4777
    %v5034 = vand.u32 2147483647, %v4778
    %v5035 = vand.u32 2147483647, %v4779
    %v5036 = vand.u32 2147483647, %v4780
    %v5037 = vand.u32 2147483647, %v4781
    %v5038 = vand.u32 2147483647, %v4782
    %v5039 = vand.u32 2147483647, %v4783
    %v5040 = vand.u32 2147483647, %v4784
    %v5041 = vand.u32 2147483647, %v4785
    %v5042 = vand.u32 2147483647, %v4786
    %v5043 = vand.u32 2147483647, %v4787
    %v5044 = vand.u32 2147483647, %v4788
    %v5045 = vand.u32 2147483647, %v4789
    %v5046 = vand.u32 2147483647, %v4790
    %v5047 = vand.u32 2147483647, %v4791
    %v5048 = vand.u32 2147483647, %v4792
    %v5049 = vand.u32 2147483647, %v4793
    %v5050 = vand.u32 2147483647, %v4794
    %v5051 = vand.u32 2147483647, %v4795
    %v5052 = vand.u32 2147483647, %v4796
    %v5053 = vand.u32 2147483647, %v4797
    %v5054 = vand.u32 2147483647, %v4798
    %v5055 = vand.u32 2147483647, %v4799
    %v5056 = vand.u32 2147483647, %v4800
    %v5057 = vand.u32 2147483647, %v4801
    %v5058 = vand.u32 2147483647, %v4802
    %v5059 = vand.u32 2147483647, %v4803
    %v5060 = vand.u32 2147483647, %v4804
    %v5061 = vand.u32 2147483647, %v4805
    %v5062 = vand.u32 2147483647, %v4806
    %v5063 = vand.u32 2147483647, %v4807
    %v5064 = vand.u32 2147483647, %v4808
    %v5065 = vand.u32 2147483647, %v4809
    %v5066 = vand.u32 2147483647, %v4810
    %v5067 = vand.u32 2147483647, %v4811
    %v5068 = vand.u32 2147483647, %v4812
    %v5069 = vand.u32 2147483647, %v4813
    %v5070 = vand.u32 2147483647, %v4814
    %v5071 = vand.u32 2147483647, %v4815
    %v5072 = vand.u32 2147483647, %v4816
    %v5073 = vand.u32 2147483647, %v4817
    %v5074 = vand.u32 2147483647, %v4818
    %v5075 = vand.u32 2147483647, %v4819
    %v5076 = vand.u32 2147483647, %v4820
    %v5077 = vand.u32 2147483647, %v4821
    %v5078 = vand.u32 2147483647, %v4822
    %v5079 = vand.u32 2147483647, %v4823
    %v5080 = vand.u32 2147483647, %v4824
    %v5081 = vand.u32 2147483647, %v4825
    %v5082 = vand.u32 2147483647, %v4826
    %v5083 = vand.u32 2147483647, %v4827
    %v5084 = vand.u32 2147483647, %v4828
    %v5085 = vand.u32 2147483647, %v4829
    %v5086 = vand.u32 2147483647, %v4830
    %v5087 = vand.u32 2147483647, %v4831
    %v5088 = vand.u32 2147483647, %v4832
    %v5089 = vand.u32 2147483647, %v4833
    %v5090 = vand.u32 2147483647, %v4834
    %v5091 = vand.u32 2147483647, %v4835
    %v5092 = vand.u32 2147483647, %v4836
    %v5093 = vand.u32 2147483647, %v4837
    %v5094 = vand.u32 2147483647, %v4838
    %v5095 = vand.u32 2147483647, %v4839
    %v5096 = vand.u32 2147483647, %v4840
    %v5097 = vand.u32 2147483647, %v4841
    %v5098 = vand.u32 2147483647, %v4842
    %v5099 = vand.u32 2147483647, %v4843
    %v5100 = vand.u32 2147483647, %v4844
    %v5101 = vand.u32 2147483647, %v4845
    %v5102 = vand.u32 2147483647, %v4846
    %v5103 = vand.u32 2147483647, %v4847
    %v5104 = vand.u32 2147483647, %v4848
    %v5105 = vand.u32 2147483647, %v4849
    %v5106 = vand.u32 2147483647, %v4850
    %v5107 = vand.u32 2147483647, %v4851
    %v5108 = vand.u32 2147483647, %v4852
    %v5109 = vand.u32 2147483647, %v4853
    %v5110 = vand.u32 2147483647, %v4854
    %v5111 = vand.u32 2147483647, %v4855
    %v5112 = vand.u32 2147483647, %v4856
    %v5113 = vand.u32 2147483647, %v4857
    %v5114 = vand.u32 2147483647, %v4858
    %v5115 = vand.u32 2147483647, %v4859
    %v5116 = vand.u32 2147483647, %v4860
    %v5117 = vand.u32 2147483647, %v4861
    %v5118 = vand.u32 2147483647, %v4862
    %v5119 = vand.u32 2147483647, %v4863
    %v5120 = vand.u32 2147483647, %v4864
    %v5121 = vand.u32 2147483647, %v4865
    %v5122 = vand.u32 2147483647, %v4866
    %v5123 = vand.u32 2147483647, %v4867
    %v5124 = vand.u32 2147483647, %v4868
    %v5125 = vand.u32 2147483647, %v4869
    %v5126 = vand.u32 2147483647, %v4870
    %v5127 = vand.u32 2147483647, %v4871
    %v5128 = vand.u32 2147483647, %v4872
    %v5129 = vand.u32 2147483647, %v4873
    %v5130 = vand.u32 2147483647, %v4874
    %v5131 = vand.u32 2147483647, %v4875
    %v5132 = vand.u32 2147483647, %v4876
    %v5133 = vand.u32 2147483647, %v4877
    %v5134 = vand.u32 2147483647, %v4878
    %v5135 = vand.u32 2147483647, %v4879
    %v5136 = vand.u32 2147483647, %v4880
    %v5137 = vand.u32 2147483647, %v4881
    %v5138 = vand.u32 2147483647, %v4882
    %v5139 = vand.u32 2147483647, %v4883
    %v5140 = vand.u32 2147483647, %v4884
    %v5141 = vand.u32 2147483647, %v4885
    %v5142 = vand.u32 2147483647, %v4886
    %v5143 = vand.u32 2147483647, %v4887
    %v5144 = vand.u32 2147483647, %v4888
    %v5145 = vand.u32 2147483647, %v4889
    %v5146 = vand.u32 2147483647, %v4890
    %v5147 = vand.u32 2147483647, %v4891
    %v5148 = vand.u32 2147483647, %v4892
    %v5149 = vand.u32 2147483647, %v4893
    %v5150 = vand.u32 2147483647, %v4894
    %v5151 = vand.u32 2147483647, %v4895
    %v5152 = vand.u32 2147483647, %v4896
    %v5153 = vand.u32 2147483647, %v4897
    %v5154 = vand.u32 2147483647, %v4898
    %v5155 = vand.u32 2147483647, %v4899
    %v5156 = vand.u32 2147483647, %v4900
    %v5157 = vand.u32 2147483647, %v4901
    %v5158 = vand.u32 2147483647, %v4902
    %v5159 = vand.u32 2147483647, %v4903
    %v5160 = vand.u32 2147483647, %v4904
    %v5161 = vand.u32 2147483647, %v4905
    %v5162 = vand.u32 2147483647, %v4906
    %v5163 = vand.u32 2147483647, %v4907
    %v5164 = vand.u32 2147483647, %v4908
    %v5165 = vand.u32 2147483647, %v4909
    %v5166 = vand.u32 2147483647, %v4910
    %v5167 = vand.u32 2147483647, %v4911
    %v5168 = vand.u32 2147483647, %v4912
    %v5169 = vand.u32 2147483647, %v4913
    %v5170 = vand.u32 2147483647, %v4914
    %v5171 = vand.u32 2147483647, %v4915
    %v5172 = vand.u32 2147483647, %v4916
    %v5173 = vand.u32 2147483647, %v4917
    %v5174 = vand.u32 2147483647, %v4918
    %v5175 = vand.u32 2147483647, %v4919
    %v5176 = vand.u32 2147483647, %v4920
    %v5177 = vand.u32 2147483647, %v4921
    %v5178 = vand.u32 2147483647, %v4922
    %v5179 = vand.u32 2147483647, %v4923
    %v5180 = vand.u32 2147483647, %v4924
    %v5181 = vand.u32 2147483647, %v4925
    %v5182 = vand.u32 2147483647, %v4926
    %v5183 = vand.u32 2147483647, %v4927
    %v5184 = vand.u32 2147483647, %v4928
    %v5185 = vand.u32 2147483647, %v4929
    %v5186 = vand.u32 2147483647, %v4930
    %v5187 = vand.u32 2147483647, %v4931
    %v5188 = vand.u32 2147483647, %v4932
    %v5189 = vand.u32 2147483647, %v4933
    %v5190 = vand.u32 2147483647, %v4934
    %v5191 = vand.u32 2147483647, %v4935
    %v5192 = vand.u32 2147483647, %v4936
    %v5193 = vand.u32 2147483647, %v4937
    %v5194 = vand.u32 2147483647, %v4938
    %v5195 = vand.u32 2147483647, %v4939
    %v5196 = vand.u32 2147483647, %v4940
    %v5197 = vand.u32 2147483647, %v4941
    %v5198 = vand.u32 2147483647, %v4942
    %v5199 = vand.u32 2147483647, %v4943
    %v5200 = vand.u32 2147483647, %v4944
    %v5201 = vand.u32 2147483647, %v4945
    %v5202 = vand.u32 2147483647, %v4946
    %v5203 = vand.u32 2147483647, %v4947
    %v5204 = vand.u32 2147483647, %v4948
    %v5205 = vand.u32 2147483647, %v4949
    %v5206 = vand.u32 2147483647, %v4950
    %v5207 = vand.u32 2147483647, %v4951
    %v5208 = vand.u32 2147483647, %v4952
    %v5209 = vand.u32 2147483647, %v4953
    %v5210 = vand.u32 2147483647, %v4954
    %v5211 = vand.u32 2147483647, %v4955
    %v5212 = vand.u32 2147483647, %v4956
    %v5213 = vand.u32 2147483647, %v4957
    %v5214 = vand.u32 2147483647, %v4958
    %v5215 = vand.u32 2147483647, %v4959
    %v5216 = vand.u32 2147483647, %v4960
    %v5217 = vand.u32 2147483647, %v4961
    %v5218 = vand.u32 2147483647, %v4962
    %v5219 = vand.u32 2147483647, %v4963
    %v5220 = vand.u32 2147483647, %v4964
    %v5221 = vand.u32 2147483647, %v4965
    %v5222 = vand.u32 2147483647, %v4966
    %v5223 = vand.u32 2147483647, %v4967
    %v5224 = vand.u32 2147483647, %v4968
    %v5225 = vand.u32 2147483647, %v4969
    %v5226 = vand.u32 2147483647, %v4970
    %v5227 = vand.u32 2147483647, %v4971
    %v5228 = vand.u32 2147483647, %v4972
    %v5229 = vand.u32 2147483647, %v4973
    %v5230 = vand.u32 2147483647, %v4974
    %v5231 = vand.u32 2147483647, %v4975
    %v5232 = vand.u32 2147483647, %v4976
    %v5233 = vand.u32 2147483647, %v4977
    %v5234 = vand.u32 2147483647, %v4978
    %v5235 = vand.u32 2147483647, %v4979
    %v5236 = vand.u32 2147483647, %v4980
    %v5237 = vand.u32 2147483647, %v4981
    %v5238 = vand.u32 2147483647, %v4982
    %v5239 = vand.u32 2147483647, %v4983
    %v5240 = vand.u32 2147483647, %v4984
    %v5241 = vand.u32 2147483647, %v4985
    %v5242 = vand.u32 2147483647, %v4986
    %v5243 = vand.u32 2147483647, %v4987
    %v5244 = vand.u32 2147483647, %v4988
    %v5245 = vand.u32 2147483647, %v4989
    %v5246 = vand.u32 2147483647, %v4990
    %v5247 = vand.u32 2147483647, %v4991
    %v5248 = vand.u32 2147483647, %v4992
    %v5249 = vand.u32 2147483647, %v4993
    %v5250 = vadd.f32 %v3346, %v4994
    %v5251 = vadd.f32 %v3347, %v4995
    %v5252 = vadd.f32 %v3348, %v4996
    %v5253 = vadd.f32 %v3349, %v4997
    %v5254 = vadd.f32 %v3350, %v4998
    %v5255 = vadd.f32 %v3351, %v4999
    %v5256 = vadd.f32 %v3352, %v5000
    %v5257 = vadd.f32 %v3353, %v5001
    %v5258 = vadd.f32 %v3354, %v5002
    %v5259 = vadd.f32 %v3355, %v5003
    %v5260 = vadd.f32 %v3356, %v5004
    %v5261 = vadd.f32 %v3357, %v5005
    %v5262 = vadd.f32 %v3358, %v5006
    %v5263 = vadd.f32 %v3359, %v5007
    %v5264 = vadd.f32 %v3360, %v5008
    %v5265 = vadd.f32 %v3361, %v5009
    %v5266 = vadd.f32 %v3362, %v5010
    %v5267 = vadd.f32 %v3363, %v5011
    %v5268 = vadd.f32 %v3364, %v5012
    %v5269 = vadd.f32 %v3365, %v5013
    %v5270 = vadd.f32 %v3366, %v5014
    %v5271 = vadd.f32 %v3367, %v5015
    %v5272 = vadd.f32 %v3368, %v5016
    %v5273 = vadd.f32 %v3369, %v5017
    %v5274 = vadd.f32 %v3370, %v5018
    %v5275 = vadd.f32 %v3371, %v5019
    %v5276 = vadd.f32 %v3372, %v5020
    %v5277 = vadd.f32 %v3373, %v5021
    %v5278 = vadd.f32 %v3374, %v5022
    %v5279 = vadd.f32 %v3375, %v5023
    %v5280 = vadd.f32 %v3376, %v5024
    %v5281 = vadd.f32 %v3377, %v5025
    %v5282 = vadd.f32 %v3378, %v5026
    %v5283 = vadd.f32 %v3379, %v5027
    %v5284 = vadd.f32 %v3380, %v5028
    %v5285 = vadd.f32 %v3381, %v5029
    %v5286 = vadd.f32 %v3382, %v5030
    %v5287 = vadd.f32 %v3383, %v5031
    %v5288 = vadd.f32 %v3384, %v5032
    %v5289 = vadd.f32 %v3385, %v5033
    %v5290 = vadd.f32 %v3386, %v5034
    %v5291 = vadd.f32 %v3387, %v5035
    %v5292 = vadd.f32 %v3388, %v5036
    %v5293 = vadd.f32 %v3389, %v5037
    %v5294 = vadd.f32 %v3390, %v5038
    %v5295 = vadd.f32 %v3391, %v5039
    %v5296 = vadd.f32 %v3392, %v5040
    %v5297 = vadd.f32 %v3393, %v5041
    %v5298 = vadd.f32 %v3394, %v5042
    %v5299 = vadd.f32 %v3395, %v5043
    %v5300 = vadd.f32 %v3396, %v5044
    %v5301 = vadd.f32 %v3397, %v5045
    %v5302 = vadd.f32 %v3398, %v5046
    %v5303 = vadd.f32 %v3399, %v5047
    %v5304 = vadd.f32 %v3400, %v5048
    %v5305 = vadd.f32 %v3401, %v5049
    %v5306 = vadd.f32 %v3402, %v5050
    %v5307 = vadd.f32 %v3403, %v5051
    %v5308 = vadd.f32 %v3404, %v5052
    %v5309 = vadd.f32 %v3405, %v5053
    %v5310 = vadd.f32 %v3406, %v5054
    %v5311 = vadd.f32 %v3407, %v5055
    %v5312 = vadd.f32 %v3408, %v5056
    %v5313 = vadd.f32 %v3409, %v5057
    %v5314 = vadd.f32 %v3410, %v5058
    %v5315 = vadd.f32 %v3411, %v5059
    %v5316 = vadd.f32 %v3412, %v5060
    %v5317 = vadd.f32 %v3413, %v5061
    %v5318 = vadd.f32 %v3414, %v5062
    %v5319 = vadd.f32 %v3415, %v5063
    %v5320 = vadd.f32 %v3416, %v5064
    %v5321 = vadd.f32 %v3417, %v5065
    %v5322 = vadd.f32 %v3418, %v5066
    %v5323 = vadd.f32 %v3419, %v5067
    %v5324 = vadd.f32 %v3420, %v5068
    %v5325 = vadd.f32 %v3421, %v5069
    %v5326 = vadd.f32 %v3422, %v5070
    %v5327 = vadd.f32 %v3423, %v5071
    %v5328 = vadd.f32 %v3424, %v5072
    %v5329 = vadd.f32 %v3425, %v5073
    %v5330 = vadd.f32 %v3426, %v5074
    %v5331 = vadd.f32 %v3427, %v5075
    %v5332 = vadd.f32 %v3428, %v5076
    %v5333 = vadd.f32 %v3429, %v5077
    %v5334 = vadd.f32 %v3430, %v5078
    %v5335 = vadd.f32 %v3431, %v5079
    %v5336 = vadd.f32 %v3432, %v5080
    %v5337 = vadd.f32 %v3433, %v5081
    %v5338 = vadd.f32 %v3434, %v5082
    %v5339 = vadd.f32 %v3435, %v5083
    %v5340 = vadd.f32 %v3436, %v5084
    %v5341 = vadd.f32 %v3437, %v5085
    %v5342 = vadd.f32 %v3438, %v5086
    %v5343 = vadd.f32 %v3439, %v5087
    %v5344 = vadd.f32 %v3440, %v5088
    %v5345 = vadd.f32 %v3441, %v5089
    %v5346 = vadd.f32 %v3442, %v5090
    %v5347 = vadd.f32 %v3443, %v5091
    %v5348 = vadd.f32 %v3444, %v5092
    %v5349 = vadd.f32 %v3445, %v5093
    %v5350 = vadd.f32 %v3446, %v5094
    %v5351 = vadd.f32 %v3447, %v5095
    %v5352 = vadd.f32 %v3448, %v5096
    %v5353 = vadd.f32 %v3449, %v5097
    %v5354 = vadd.f32 %v3450, %v5098
    %v5355 = vadd.f32 %v3451, %v5099
    %v5356 = vadd.f32 %v3452, %v5100
    %v5357 = vadd.f32 %v3453, %v5101
    %v5358 = vadd.f32 %v3454, %v5102
    %v5359 = vadd.f32 %v3455, %v5103
    %v5360 = vadd.f32 %v3456, %v5104
    %v5361 = vadd.f32 %v3457, %v5105
    %v5362 = vadd.f32 %v3458, %v5106
    %v5363 = vadd.f32 %v3459, %v5107
    %v5364 = vadd.f32 %v3460, %v5108
    %v5365 = vadd.f32 %v3461, %v5109
    %v5366 = vadd.f32 %v3462, %v5110
    %v5367 = vadd.f32 %v3463, %v5111
    %v5368 = vadd.f32 %v3464, %v5112
    %v5369 = vadd.f32 %v3465, %v5113
    %v5370 = vadd.f32 %v3466, %v5114
    %v5371 = vadd.f32 %v3467, %v5115
    %v5372 = vadd.f32 %v3468, %v5116
    %v5373 = vadd.f32 %v3469, %v5117
    %v5374 = vadd.f32 %v3470, %v5118
    %v5375 = vadd.f32 %v3471, %v5119
    %v5376 = vadd.f32 %v3472, %v5120
    %v5377 = vadd.f32 %v3473, %v5121
    %v5378 = vadd.f32 %v3474, %v5122
    %v5379 = vadd.f32 %v3475, %v5123
    %v5380 = vadd.f32 %v3476, %v5124
    %v5381 = vadd.f32 %v3477, %v5125
    %v5382 = vadd.f32 %v3478, %v5126
    %v5383 = vadd.f32 %v3479, %v5127
    %v5384 = vadd.f32 %v3480, %v5128
    %v5385 = vadd.f32 %v3481, %v5129
    %v5386 = vadd.f32 %v3482, %v5130
    %v5387 = vadd.f32 %v3483, %v5131
    %v5388 = vadd.f32 %v3484, %v5132
    %v5389 = vadd.f32 %v3485, %v5133
    %v5390 = vadd.f32 %v3486, %v5134
    %v5391 = vadd.f32 %v3487, %v5135
    %v5392 = vadd.f32 %v3488, %v5136
    %v5393 = vadd.f32 %v3489, %v5137
    %v5394 = vadd.f32 %v3490, %v5138
    %v5395 = vadd.f32 %v3491, %v5139
    %v5396 = vadd.f32 %v3492, %v5140
    %v5397 = vadd.f32 %v3493, %v5141
    %v5398 = vadd.f32 %v3494, %v5142
    %v5399 = vadd.f32 %v3495, %v5143
    %v5400 = vadd.f32 %v3496, %v5144
    %v5401 = vadd.f32 %v3497, %v5145
    %v5402 = vadd.f32 %v3498, %v5146
    %v5403 = vadd.f32 %v3499, %v5147
    %v5404 = vadd.f32 %v3500, %v5148
    %v5405 = vadd.f32 %v3501, %v5149
    %v5406 = vadd.f32 %v3502, %v5150
    %v5407 = vadd.f32 %v3503, %v5151
    %v5408 = vadd.f32 %v3504, %v5152
    %v5409 = vadd.f32 %v3505, %v5153
    %v5410 = vadd.f32 %v3506, %v5154
    %v5411 = vadd.f32 %v3507, %v5155
    %v5412 = vadd.f32 %v3508, %v5156
    %v5413 = vadd.f32 %v3509, %v5157
    %v5414 = vadd.f32 %v3510, %v5158
    %v5415 = vadd.f32 %v3511, %v5159
    %v5416 = vadd.f32 %v3512, %v5160
    %v5417 = vadd.f32 %v3513, %v5161
    %v5418 = vadd.f32 %v3514, %v5162
    %v5419 = vadd.f32 %v3515, %v5163
    %v5420 = vadd.f32 %v3516, %v5164
    %v5421 = vadd.f32 %v3517, %v5165
    %v5422 = vadd.f32 %v3518, %v5166
    %v5423 = vadd.f32 %v3519, %v5167
    %v5424 = vadd.f32 %v3520, %v5168
    %v5425 = vadd.f32 %v3521, %v5169
    %v5426 = vadd.f32 %v3522, %v5170
    %v5427 = vadd.f32 %v3523, %v5171
    %v5428 = vadd.f32 %v3524, %v5172
    %v5429 = vadd.f32 %v3525, %v5173
    %v5430 = vadd.f32 %v3526, %v5174
    %v5431 = vadd.f32 %v3527, %v5175
    %v5432 = vadd.f32 %v3528, %v5176
    %v5433 = vadd.f32 %v3529, %v5177
    %v5434 = vadd.f32 %v3530, %v5178
    %v5435 = vadd.f32 %v3531, %v5179
    %v5436 = vadd.f32 %v3532, %v5180
    %v5437 = vadd.f32 %v3533, %v5181
    %v5438 = vadd.f32 %v3534, %v5182
    %v5439 = vadd.f32 %v3535, %v5183
    %v5440 = vadd.f32 %v3536, %v5184
    %v5441 = vadd.f32 %v3537, %v5185
    %v5442 = vadd.f32 %v3538, %v5186
    %v5443 = vadd.f32 %v3539, %v5187
    %v5444 = vadd.f32 %v3540, %v5188
    %v5445 = vadd.f32 %v3541, %v5189
    %v5446 = vadd.f32 %v3542, %v5190
    %v5447 = vadd.f32 %v3543, %v5191
    %v5448 = vadd.f32 %v3544, %v5192
    %v5449 = vadd.f32 %v3545, %v5193
    %v5450 = vadd.f32 %v3546, %v5194
    %v5451 = vadd.f32 %v3547, %v5195
    %v5452 = vadd.f32 %v3548, %v5196
    %v5453 = vadd.f32 %v3549, %v5197
    %v5454 = vadd.f32 %v3550, %v5198
    %v5455 = vadd.f32 %v3551, %v5199
    %v5456 = vadd.f32 %v3552, %v5200
    %v5457 = vadd.f32 %v3553, %v5201
    %v5458 = vadd.f32 %v3554, %v5202
    %v5459 = vadd.f32 %v3555, %v5203
    %v5460 = vadd.f32 %v3556, %v5204
    %v5461 = vadd.f32 %v3557, %v5205
    %v5462 = vadd.f32 %v3558, %v5206
    %v5463 = vadd.f32 %v3559, %v5207
    %v5464 = vadd.f32 %v3560, %v5208
    %v5465 = vadd.f32 %v3561, %v5209
    %v5466 = vadd.f32 %v3562, %v5210
    %v5467 = vadd.f32 %v3563, %v5211
    %v5468 = vadd.f32 %v3564, %v5212
    %v5469 = vadd.f32 %v3565, %v5213
    %v5470 = vadd.f32 %v3566, %v5214
    %v5471 = vadd.f32 %v3567, %v5215
    %v5472 = vadd.f32 %v3568, %v5216
    %v5473 = vadd.f32 %v3569, %v5217
    %v5474 = vadd.f32 %v3570, %v5218
    %v5475 = vadd.f32 %v3571, %v5219
    %v5476 = vadd.f32 %v3572, %v5220
    %v5477 = vadd.f32 %v3573, %v5221
    %v5478 = vadd.f32 %v3574, %v5222
    %v5479 = vadd.f32 %v3575, %v5223
    %v5480 = vadd.f32 %v3576, %v5224
    %v5481 = vadd.f32 %v3577, %v5225
    %v5482 = vadd.f32 %v3578, %v5226
    %v5483 = vadd.f32 %v3579, %v5227
    %v5484 = vadd.f32 %v3580, %v5228
    %v5485 = vadd.f32 %v3581, %v5229
    %v5486 = vadd.f32 %v3582, %v5230
    %v5487 = vadd.f32 %v3583, %v5231
    %v5488 = vadd.f32 %v3584, %v5232
    %v5489 = vadd.f32 %v3585, %v5233
    %v5490 = vadd.f32 %v3586, %v5234
    %v5491 = vadd.f32 %v3587, %v5235
    %v5492 = vadd.f32 %v3588, %v5236
    %v5493 = vadd.f32 %v3589, %v5237
    %v5494 = vadd.f32 %v3590, %v5238
    %v5495 = vadd.f32 %v3591, %v5239
    %v5496 = vadd.f32 %v3592, %v5240
    %v5497 = vadd.f32 %v3593, %v5241
    %v5498 = vadd.f32 %v3594, %v5242
    %v5499 = vadd.f32 %v3595, %v5243
    %v5500 = vadd.f32 %v3596, %v5244
    %v5501 = vadd.f32 %v3597, %v5245
    %v5502 = vadd.f32 %v3598, %v5246
    %v5503 = vadd.f32 %v3599, %v5247
    %v5504 = vadd.f32 %v3600, %v5248
    %v5505 = vadd.f32 %v3601, %v5249
    %vm5506 = vcmask 785408
    %v5507 = vsel %vm5506, %v5250, inf
    %5508 = vmin.xlane.f32.xlu0 %v5507
    %v5509 = vpop.xlane.xlu0 %5508
    %v5510 = vsel %vm5506, %v5251, inf
    %5511 = vmin.xlane.f32.xlu0 %v5510
    %v5512 = vpop.xlane.xlu0 %5511
    %v5513 = vsel %vm5506, %v5252, inf
    %5514 = vmin.xlane.f32.xlu0 %v5513
    %v5515 = vpop.xlane.xlu0 %5514
    %v5516 = vsel %vm5506, %v5253, inf
    %5517 = vmin.xlane.f32.xlu0 %v5516
    %v5518 = vpop.xlane.xlu0 %5517
    %v5519 = vsel %vm5506, %v5254, inf
    %5520 = vmin.xlane.f32.xlu0 %v5519
    %v5521 = vpop.xlane.xlu0 %5520
    %v5522 = vsel %vm5506, %v5255, inf
    %5523 = vmin.xlane.f32.xlu0 %v5522
    %v5524 = vpop.xlane.xlu0 %5523
    %v5525 = vsel %vm5506, %v5256, inf
    %5526 = vmin.xlane.f32.xlu0 %v5525
    %v5527 = vpop.xlane.xlu0 %5526
    %v5528 = vsel %vm5506, %v5257, inf
    %5529 = vmin.xlane.f32.xlu0 %v5528
    %v5530 = vpop.xlane.xlu0 %5529
    %v5531 = vsel %vm5506, %v5258, inf
    %5532 = vmin.xlane.f32.xlu0 %v5531
    %v5533 = vpop.xlane.xlu0 %5532
    %v5534 = vsel %vm5506, %v5259, inf
    %5535 = vmin.xlane.f32.xlu0 %v5534
    %v5536 = vpop.xlane.xlu0 %5535
    %v5537 = vsel %vm5506, %v5260, inf
    %5538 = vmin.xlane.f32.xlu0 %v5537
    %v5539 = vpop.xlane.xlu0 %5538
    %v5540 = vsel %vm5506, %v5261, inf
    %5541 = vmin.xlane.f32.xlu0 %v5540
    %v5542 = vpop.xlane.xlu0 %5541
    %v5543 = vsel %vm5506, %v5262, inf
    %5544 = vmin.xlane.f32.xlu0 %v5543
    %v5545 = vpop.xlane.xlu0 %5544
    %v5546 = vsel %vm5506, %v5263, inf
    %5547 = vmin.xlane.f32.xlu0 %v5546
    %v5548 = vpop.xlane.xlu0 %5547
    %v5549 = vsel %vm5506, %v5264, inf
    %5550 = vmin.xlane.f32.xlu0 %v5549
    %v5551 = vpop.xlane.xlu0 %5550
    %v5552 = vsel %vm5506, %v5265, inf
    %5553 = vmin.xlane.f32.xlu0 %v5552
    %v5554 = vpop.xlane.xlu0 %5553
    %v5555 = vsel %vm5506, %v5266, inf
    %5556 = vmin.xlane.f32.xlu0 %v5555
    %v5557 = vpop.xlane.xlu0 %5556
    %v5558 = vsel %vm5506, %v5267, inf
    %5559 = vmin.xlane.f32.xlu0 %v5558
    %v5560 = vpop.xlane.xlu0 %5559
    %v5561 = vsel %vm5506, %v5268, inf
    %5562 = vmin.xlane.f32.xlu0 %v5561
    %v5563 = vpop.xlane.xlu0 %5562
    %v5564 = vsel %vm5506, %v5269, inf
    %5565 = vmin.xlane.f32.xlu0 %v5564
    %v5566 = vpop.xlane.xlu0 %5565
    %v5567 = vsel %vm5506, %v5270, inf
    %5568 = vmin.xlane.f32.xlu0 %v5567
    %v5569 = vpop.xlane.xlu0 %5568
    %v5570 = vsel %vm5506, %v5271, inf
    %5571 = vmin.xlane.f32.xlu0 %v5570
    %v5572 = vpop.xlane.xlu0 %5571
    %v5573 = vsel %vm5506, %v5272, inf
    %5574 = vmin.xlane.f32.xlu0 %v5573
    %v5575 = vpop.xlane.xlu0 %5574
    %v5576 = vsel %vm5506, %v5273, inf
    %5577 = vmin.xlane.f32.xlu0 %v5576
    %v5578 = vpop.xlane.xlu0 %5577
    %v5579 = vsel %vm5506, %v5274, inf
    %5580 = vmin.xlane.f32.xlu0 %v5579
    %v5581 = vpop.xlane.xlu0 %5580
    %v5582 = vsel %vm5506, %v5275, inf
    %5583 = vmin.xlane.f32.xlu0 %v5582
    %v5584 = vpop.xlane.xlu0 %5583
    %v5585 = vsel %vm5506, %v5276, inf
    %5586 = vmin.xlane.f32.xlu0 %v5585
    %v5587 = vpop.xlane.xlu0 %5586
    %v5588 = vsel %vm5506, %v5277, inf
    %5589 = vmin.xlane.f32.xlu0 %v5588
    %v5590 = vpop.xlane.xlu0 %5589
    %v5591 = vsel %vm5506, %v5278, inf
    %5592 = vmin.xlane.f32.xlu0 %v5591
    %v5593 = vpop.xlane.xlu0 %5592
    %v5594 = vsel %vm5506, %v5279, inf
    %5595 = vmin.xlane.f32.xlu0 %v5594
    %v5596 = vpop.xlane.xlu0 %5595
    %v5597 = vsel %vm5506, %v5280, inf
    %5598 = vmin.xlane.f32.xlu0 %v5597
    %v5599 = vpop.xlane.xlu0 %5598
    %v5600 = vsel %vm5506, %v5281, inf
    %5601 = vmin.xlane.f32.xlu0 %v5600
    %v5602 = vpop.xlane.xlu0 %5601
    %v5603 = vsel %vm5506, %v5282, inf
    %5604 = vmin.xlane.f32.xlu0 %v5603
    %v5605 = vpop.xlane.xlu0 %5604
    %v5606 = vsel %vm5506, %v5283, inf
    %5607 = vmin.xlane.f32.xlu0 %v5606
    %v5608 = vpop.xlane.xlu0 %5607
    %v5609 = vsel %vm5506, %v5284, inf
    %5610 = vmin.xlane.f32.xlu0 %v5609
    %v5611 = vpop.xlane.xlu0 %5610
    %v5612 = vsel %vm5506, %v5285, inf
    %5613 = vmin.xlane.f32.xlu0 %v5612
    %v5614 = vpop.xlane.xlu0 %5613
    %v5615 = vsel %vm5506, %v5286, inf
    %5616 = vmin.xlane.f32.xlu0 %v5615
    %v5617 = vpop.xlane.xlu0 %5616
    %v5618 = vsel %vm5506, %v5287, inf
    %5619 = vmin.xlane.f32.xlu0 %v5618
    %v5620 = vpop.xlane.xlu0 %5619
    %v5621 = vsel %vm5506, %v5288, inf
    %5622 = vmin.xlane.f32.xlu0 %v5621
    %v5623 = vpop.xlane.xlu0 %5622
    %v5624 = vsel %vm5506, %v5289, inf
    %5625 = vmin.xlane.f32.xlu0 %v5624
    %v5626 = vpop.xlane.xlu0 %5625
    %v5627 = vsel %vm5506, %v5290, inf
    %5628 = vmin.xlane.f32.xlu0 %v5627
    %v5629 = vpop.xlane.xlu0 %5628
    %v5630 = vsel %vm5506, %v5291, inf
    %5631 = vmin.xlane.f32.xlu0 %v5630
    %v5632 = vpop.xlane.xlu0 %5631
    %v5633 = vsel %vm5506, %v5292, inf
    %5634 = vmin.xlane.f32.xlu0 %v5633
    %v5635 = vpop.xlane.xlu0 %5634
    %v5636 = vsel %vm5506, %v5293, inf
    %5637 = vmin.xlane.f32.xlu0 %v5636
    %v5638 = vpop.xlane.xlu0 %5637
    %v5639 = vsel %vm5506, %v5294, inf
    %5640 = vmin.xlane.f32.xlu0 %v5639
    %v5641 = vpop.xlane.xlu0 %5640
    %v5642 = vsel %vm5506, %v5295, inf
    %5643 = vmin.xlane.f32.xlu0 %v5642
    %v5644 = vpop.xlane.xlu0 %5643
    %v5645 = vsel %vm5506, %v5296, inf
    %5646 = vmin.xlane.f32.xlu0 %v5645
    %v5647 = vpop.xlane.xlu0 %5646
    %v5648 = vsel %vm5506, %v5297, inf
    %5649 = vmin.xlane.f32.xlu0 %v5648
    %v5650 = vpop.xlane.xlu0 %5649
    %v5651 = vsel %vm5506, %v5298, inf
    %5652 = vmin.xlane.f32.xlu0 %v5651
    %v5653 = vpop.xlane.xlu0 %5652
    %v5654 = vsel %vm5506, %v5299, inf
    %5655 = vmin.xlane.f32.xlu0 %v5654
    %v5656 = vpop.xlane.xlu0 %5655
    %v5657 = vsel %vm5506, %v5300, inf
    %5658 = vmin.xlane.f32.xlu0 %v5657
    %v5659 = vpop.xlane.xlu0 %5658
    %v5660 = vsel %vm5506, %v5301, inf
    %5661 = vmin.xlane.f32.xlu0 %v5660
    %v5662 = vpop.xlane.xlu0 %5661
    %v5663 = vsel %vm5506, %v5302, inf
    %5664 = vmin.xlane.f32.xlu0 %v5663
    %v5665 = vpop.xlane.xlu0 %5664
    %v5666 = vsel %vm5506, %v5303, inf
    %5667 = vmin.xlane.f32.xlu0 %v5666
    %v5668 = vpop.xlane.xlu0 %5667
    %v5669 = vsel %vm5506, %v5304, inf
    %5670 = vmin.xlane.f32.xlu0 %v5669
    %v5671 = vpop.xlane.xlu0 %5670
    %v5672 = vsel %vm5506, %v5305, inf
    %5673 = vmin.xlane.f32.xlu0 %v5672
    %v5674 = vpop.xlane.xlu0 %5673
    %v5675 = vsel %vm5506, %v5306, inf
    %5676 = vmin.xlane.f32.xlu0 %v5675
    %v5677 = vpop.xlane.xlu0 %5676
    %v5678 = vsel %vm5506, %v5307, inf
    %5679 = vmin.xlane.f32.xlu0 %v5678
    %v5680 = vpop.xlane.xlu0 %5679
    %v5681 = vsel %vm5506, %v5308, inf
    %5682 = vmin.xlane.f32.xlu0 %v5681
    %v5683 = vpop.xlane.xlu0 %5682
    %v5684 = vsel %vm5506, %v5309, inf
    %5685 = vmin.xlane.f32.xlu0 %v5684
    %v5686 = vpop.xlane.xlu0 %5685
    %v5687 = vsel %vm5506, %v5310, inf
    %5688 = vmin.xlane.f32.xlu0 %v5687
    %v5689 = vpop.xlane.xlu0 %5688
    %v5690 = vsel %vm5506, %v5311, inf
    %5691 = vmin.xlane.f32.xlu0 %v5690
    %v5692 = vpop.xlane.xlu0 %5691
    %v5693 = vsel %vm5506, %v5312, inf
    %5694 = vmin.xlane.f32.xlu0 %v5693
    %v5695 = vpop.xlane.xlu0 %5694
    %v5696 = vsel %vm5506, %v5313, inf
    %5697 = vmin.xlane.f32.xlu0 %v5696
    %v5698 = vpop.xlane.xlu0 %5697
    %v5699 = vsel %vm5506, %v5314, inf
    %5700 = vmin.xlane.f32.xlu0 %v5699
    %v5701 = vpop.xlane.xlu0 %5700
    %v5702 = vsel %vm5506, %v5315, inf
    %5703 = vmin.xlane.f32.xlu0 %v5702
    %v5704 = vpop.xlane.xlu0 %5703
    %v5705 = vsel %vm5506, %v5316, inf
    %5706 = vmin.xlane.f32.xlu0 %v5705
    %v5707 = vpop.xlane.xlu0 %5706
    %v5708 = vsel %vm5506, %v5317, inf
    %5709 = vmin.xlane.f32.xlu0 %v5708
    %v5710 = vpop.xlane.xlu0 %5709
    %v5711 = vsel %vm5506, %v5318, inf
    %5712 = vmin.xlane.f32.xlu0 %v5711
    %v5713 = vpop.xlane.xlu0 %5712
    %v5714 = vsel %vm5506, %v5319, inf
    %5715 = vmin.xlane.f32.xlu0 %v5714
    %v5716 = vpop.xlane.xlu0 %5715
    %v5717 = vsel %vm5506, %v5320, inf
    %5718 = vmin.xlane.f32.xlu0 %v5717
    %v5719 = vpop.xlane.xlu0 %5718
    %v5720 = vsel %vm5506, %v5321, inf
    %5721 = vmin.xlane.f32.xlu0 %v5720
    %v5722 = vpop.xlane.xlu0 %5721
    %v5723 = vsel %vm5506, %v5322, inf
    %5724 = vmin.xlane.f32.xlu0 %v5723
    %v5725 = vpop.xlane.xlu0 %5724
    %v5726 = vsel %vm5506, %v5323, inf
    %5727 = vmin.xlane.f32.xlu0 %v5726
    %v5728 = vpop.xlane.xlu0 %5727
    %v5729 = vsel %vm5506, %v5324, inf
    %5730 = vmin.xlane.f32.xlu0 %v5729
    %v5731 = vpop.xlane.xlu0 %5730
    %v5732 = vsel %vm5506, %v5325, inf
    %5733 = vmin.xlane.f32.xlu0 %v5732
    %v5734 = vpop.xlane.xlu0 %5733
    %v5735 = vsel %vm5506, %v5326, inf
    %5736 = vmin.xlane.f32.xlu0 %v5735
    %v5737 = vpop.xlane.xlu0 %5736
    %v5738 = vsel %vm5506, %v5327, inf
    %5739 = vmin.xlane.f32.xlu0 %v5738
    %v5740 = vpop.xlane.xlu0 %5739
    %v5741 = vsel %vm5506, %v5328, inf
    %5742 = vmin.xlane.f32.xlu0 %v5741
    %v5743 = vpop.xlane.xlu0 %5742
    %v5744 = vsel %vm5506, %v5329, inf
    %5745 = vmin.xlane.f32.xlu0 %v5744
    %v5746 = vpop.xlane.xlu0 %5745
    %v5747 = vsel %vm5506, %v5330, inf
    %5748 = vmin.xlane.f32.xlu0 %v5747
    %v5749 = vpop.xlane.xlu0 %5748
    %v5750 = vsel %vm5506, %v5331, inf
    %5751 = vmin.xlane.f32.xlu0 %v5750
    %v5752 = vpop.xlane.xlu0 %5751
    %v5753 = vsel %vm5506, %v5332, inf
    %5754 = vmin.xlane.f32.xlu0 %v5753
    %v5755 = vpop.xlane.xlu0 %5754
    %v5756 = vsel %vm5506, %v5333, inf
    %5757 = vmin.xlane.f32.xlu0 %v5756
    %v5758 = vpop.xlane.xlu0 %5757
    %v5759 = vsel %vm5506, %v5334, inf
    %5760 = vmin.xlane.f32.xlu0 %v5759
    %v5761 = vpop.xlane.xlu0 %5760
    %v5762 = vsel %vm5506, %v5335, inf
    %5763 = vmin.xlane.f32.xlu0 %v5762
    %v5764 = vpop.xlane.xlu0 %5763
    %v5765 = vsel %vm5506, %v5336, inf
    %5766 = vmin.xlane.f32.xlu0 %v5765
    %v5767 = vpop.xlane.xlu0 %5766
    %v5768 = vsel %vm5506, %v5337, inf
    %5769 = vmin.xlane.f32.xlu0 %v5768
    %v5770 = vpop.xlane.xlu0 %5769
    %v5771 = vsel %vm5506, %v5338, inf
    %5772 = vmin.xlane.f32.xlu0 %v5771
    %v5773 = vpop.xlane.xlu0 %5772
    %v5774 = vsel %vm5506, %v5339, inf
    %5775 = vmin.xlane.f32.xlu0 %v5774
    %v5776 = vpop.xlane.xlu0 %5775
    %v5777 = vsel %vm5506, %v5340, inf
    %5778 = vmin.xlane.f32.xlu0 %v5777
    %v5779 = vpop.xlane.xlu0 %5778
    %v5780 = vsel %vm5506, %v5341, inf
    %5781 = vmin.xlane.f32.xlu0 %v5780
    %v5782 = vpop.xlane.xlu0 %5781
    %v5783 = vsel %vm5506, %v5342, inf
    %5784 = vmin.xlane.f32.xlu0 %v5783
    %v5785 = vpop.xlane.xlu0 %5784
    %v5786 = vsel %vm5506, %v5343, inf
    %5787 = vmin.xlane.f32.xlu0 %v5786
    %v5788 = vpop.xlane.xlu0 %5787
    %v5789 = vsel %vm5506, %v5344, inf
    %5790 = vmin.xlane.f32.xlu0 %v5789
    %v5791 = vpop.xlane.xlu0 %5790
    %v5792 = vsel %vm5506, %v5345, inf
    %5793 = vmin.xlane.f32.xlu0 %v5792
    %v5794 = vpop.xlane.xlu0 %5793
    %v5795 = vsel %vm5506, %v5346, inf
    %5796 = vmin.xlane.f32.xlu0 %v5795
    %v5797 = vpop.xlane.xlu0 %5796
    %v5798 = vsel %vm5506, %v5347, inf
    %5799 = vmin.xlane.f32.xlu0 %v5798
    %v5800 = vpop.xlane.xlu0 %5799
    %v5801 = vsel %vm5506, %v5348, inf
    %5802 = vmin.xlane.f32.xlu0 %v5801
    %v5803 = vpop.xlane.xlu0 %5802
    %v5804 = vsel %vm5506, %v5349, inf
    %5805 = vmin.xlane.f32.xlu0 %v5804
    %v5806 = vpop.xlane.xlu0 %5805
    %v5807 = vsel %vm5506, %v5350, inf
    %5808 = vmin.xlane.f32.xlu0 %v5807
    %v5809 = vpop.xlane.xlu0 %5808
    %v5810 = vsel %vm5506, %v5351, inf
    %5811 = vmin.xlane.f32.xlu0 %v5810
    %v5812 = vpop.xlane.xlu0 %5811
    %v5813 = vsel %vm5506, %v5352, inf
    %5814 = vmin.xlane.f32.xlu0 %v5813
    %v5815 = vpop.xlane.xlu0 %5814
    %v5816 = vsel %vm5506, %v5353, inf
    %5817 = vmin.xlane.f32.xlu0 %v5816
    %v5818 = vpop.xlane.xlu0 %5817
    %v5819 = vsel %vm5506, %v5354, inf
    %5820 = vmin.xlane.f32.xlu0 %v5819
    %v5821 = vpop.xlane.xlu0 %5820
    %v5822 = vsel %vm5506, %v5355, inf
    %5823 = vmin.xlane.f32.xlu0 %v5822
    %v5824 = vpop.xlane.xlu0 %5823
    %v5825 = vsel %vm5506, %v5356, inf
    %5826 = vmin.xlane.f32.xlu0 %v5825
    %v5827 = vpop.xlane.xlu0 %5826
    %v5828 = vsel %vm5506, %v5357, inf
    %5829 = vmin.xlane.f32.xlu0 %v5828
    %v5830 = vpop.xlane.xlu0 %5829
    %v5831 = vsel %vm5506, %v5358, inf
    %5832 = vmin.xlane.f32.xlu0 %v5831
    %v5833 = vpop.xlane.xlu0 %5832
    %v5834 = vsel %vm5506, %v5359, inf
    %5835 = vmin.xlane.f32.xlu0 %v5834
    %v5836 = vpop.xlane.xlu0 %5835
    %v5837 = vsel %vm5506, %v5360, inf
    %5838 = vmin.xlane.f32.xlu0 %v5837
    %v5839 = vpop.xlane.xlu0 %5838
    %v5840 = vsel %vm5506, %v5361, inf
    %5841 = vmin.xlane.f32.xlu0 %v5840
    %v5842 = vpop.xlane.xlu0 %5841
    %v5843 = vsel %vm5506, %v5362, inf
    %5844 = vmin.xlane.f32.xlu0 %v5843
    %v5845 = vpop.xlane.xlu0 %5844
    %v5846 = vsel %vm5506, %v5363, inf
    %5847 = vmin.xlane.f32.xlu0 %v5846
    %v5848 = vpop.xlane.xlu0 %5847
    %v5849 = vsel %vm5506, %v5364, inf
    %5850 = vmin.xlane.f32.xlu0 %v5849
    %v5851 = vpop.xlane.xlu0 %5850
    %v5852 = vsel %vm5506, %v5365, inf
    %5853 = vmin.xlane.f32.xlu0 %v5852
    %v5854 = vpop.xlane.xlu0 %5853
    %v5855 = vsel %vm5506, %v5366, inf
    %5856 = vmin.xlane.f32.xlu0 %v5855
    %v5857 = vpop.xlane.xlu0 %5856
    %v5858 = vsel %vm5506, %v5367, inf
    %5859 = vmin.xlane.f32.xlu0 %v5858
    %v5860 = vpop.xlane.xlu0 %5859
    %v5861 = vsel %vm5506, %v5368, inf
    %5862 = vmin.xlane.f32.xlu0 %v5861
    %v5863 = vpop.xlane.xlu0 %5862
    %v5864 = vsel %vm5506, %v5369, inf
    %5865 = vmin.xlane.f32.xlu0 %v5864
    %v5866 = vpop.xlane.xlu0 %5865
    %v5867 = vsel %vm5506, %v5370, inf
    %5868 = vmin.xlane.f32.xlu0 %v5867
    %v5869 = vpop.xlane.xlu0 %5868
    %v5870 = vsel %vm5506, %v5371, inf
    %5871 = vmin.xlane.f32.xlu0 %v5870
    %v5872 = vpop.xlane.xlu0 %5871
    %v5873 = vsel %vm5506, %v5372, inf
    %5874 = vmin.xlane.f32.xlu0 %v5873
    %v5875 = vpop.xlane.xlu0 %5874
    %v5876 = vsel %vm5506, %v5373, inf
    %5877 = vmin.xlane.f32.xlu0 %v5876
    %v5878 = vpop.xlane.xlu0 %5877
    %v5879 = vsel %vm5506, %v5374, inf
    %5880 = vmin.xlane.f32.xlu0 %v5879
    %v5881 = vpop.xlane.xlu0 %5880
    %v5882 = vsel %vm5506, %v5375, inf
    %5883 = vmin.xlane.f32.xlu0 %v5882
    %v5884 = vpop.xlane.xlu0 %5883
    %v5885 = vsel %vm5506, %v5376, inf
    %5886 = vmin.xlane.f32.xlu0 %v5885
    %v5887 = vpop.xlane.xlu0 %5886
    %v5888 = vsel %vm5506, %v5377, inf
    %5889 = vmin.xlane.f32.xlu0 %v5888
    %v5890 = vpop.xlane.xlu0 %5889
    %v5891 = vsel %vm5506, %v5378, inf
    %5892 = vmin.xlane.f32.xlu0 %v5891
    %v5893 = vpop.xlane.xlu0 %5892
    %v5894 = vsel %vm5506, %v5379, inf
    %5895 = vmin.xlane.f32.xlu0 %v5894
    %v5896 = vpop.xlane.xlu0 %5895
    %v5897 = vsel %vm5506, %v5380, inf
    %5898 = vmin.xlane.f32.xlu0 %v5897
    %v5899 = vpop.xlane.xlu0 %5898
    %v5900 = vsel %vm5506, %v5381, inf
    %5901 = vmin.xlane.f32.xlu0 %v5900
    %v5902 = vpop.xlane.xlu0 %5901
    %v5903 = vsel %vm5506, %v5382, inf
    %5904 = vmin.xlane.f32.xlu0 %v5903
    %v5905 = vpop.xlane.xlu0 %5904
    %v5906 = vsel %vm5506, %v5383, inf
    %5907 = vmin.xlane.f32.xlu0 %v5906
    %v5908 = vpop.xlane.xlu0 %5907
    %v5909 = vsel %vm5506, %v5384, inf
    %5910 = vmin.xlane.f32.xlu0 %v5909
    %v5911 = vpop.xlane.xlu0 %5910
    %v5912 = vsel %vm5506, %v5385, inf
    %5913 = vmin.xlane.f32.xlu0 %v5912
    %v5914 = vpop.xlane.xlu0 %5913
    %v5915 = vsel %vm5506, %v5386, inf
    %5916 = vmin.xlane.f32.xlu0 %v5915
    %v5917 = vpop.xlane.xlu0 %5916
    %v5918 = vsel %vm5506, %v5387, inf
    %5919 = vmin.xlane.f32.xlu0 %v5918
    %v5920 = vpop.xlane.xlu0 %5919
    %v5921 = vsel %vm5506, %v5388, inf
    %5922 = vmin.xlane.f32.xlu0 %v5921
    %v5923 = vpop.xlane.xlu0 %5922
    %v5924 = vsel %vm5506, %v5389, inf
    %5925 = vmin.xlane.f32.xlu0 %v5924
    %v5926 = vpop.xlane.xlu0 %5925
    %v5927 = vsel %vm5506, %v5390, inf
    %5928 = vmin.xlane.f32.xlu0 %v5927
    %v5929 = vpop.xlane.xlu0 %5928
    %v5930 = vsel %vm5506, %v5391, inf
    %5931 = vmin.xlane.f32.xlu0 %v5930
    %v5932 = vpop.xlane.xlu0 %5931
    %v5933 = vsel %vm5506, %v5392, inf
    %5934 = vmin.xlane.f32.xlu0 %v5933
    %v5935 = vpop.xlane.xlu0 %5934
    %v5936 = vsel %vm5506, %v5393, inf
    %5937 = vmin.xlane.f32.xlu0 %v5936
    %v5938 = vpop.xlane.xlu0 %5937
    %v5939 = vsel %vm5506, %v5394, inf
    %5940 = vmin.xlane.f32.xlu0 %v5939
    %v5941 = vpop.xlane.xlu0 %5940
    %v5942 = vsel %vm5506, %v5395, inf
    %5943 = vmin.xlane.f32.xlu0 %v5942
    %v5944 = vpop.xlane.xlu0 %5943
    %v5945 = vsel %vm5506, %v5396, inf
    %5946 = vmin.xlane.f32.xlu0 %v5945
    %v5947 = vpop.xlane.xlu0 %5946
    %v5948 = vsel %vm5506, %v5397, inf
    %5949 = vmin.xlane.f32.xlu0 %v5948
    %v5950 = vpop.xlane.xlu0 %5949
    %v5951 = vsel %vm5506, %v5398, inf
    %5952 = vmin.xlane.f32.xlu0 %v5951
    %v5953 = vpop.xlane.xlu0 %5952
    %v5954 = vsel %vm5506, %v5399, inf
    %5955 = vmin.xlane.f32.xlu0 %v5954
    %v5956 = vpop.xlane.xlu0 %5955
    %v5957 = vsel %vm5506, %v5400, inf
    %5958 = vmin.xlane.f32.xlu0 %v5957
    %v5959 = vpop.xlane.xlu0 %5958
    %v5960 = vsel %vm5506, %v5401, inf
    %5961 = vmin.xlane.f32.xlu0 %v5960
    %v5962 = vpop.xlane.xlu0 %5961
    %v5963 = vsel %vm5506, %v5402, inf
    %5964 = vmin.xlane.f32.xlu0 %v5963
    %v5965 = vpop.xlane.xlu0 %5964
    %v5966 = vsel %vm5506, %v5403, inf
    %5967 = vmin.xlane.f32.xlu0 %v5966
    %v5968 = vpop.xlane.xlu0 %5967
    %v5969 = vsel %vm5506, %v5404, inf
    %5970 = vmin.xlane.f32.xlu0 %v5969
    %v5971 = vpop.xlane.xlu0 %5970
    %v5972 = vsel %vm5506, %v5405, inf
    %5973 = vmin.xlane.f32.xlu0 %v5972
    %v5974 = vpop.xlane.xlu0 %5973
    %v5975 = vsel %vm5506, %v5406, inf
    %5976 = vmin.xlane.f32.xlu0 %v5975
    %v5977 = vpop.xlane.xlu0 %5976
    %v5978 = vsel %vm5506, %v5407, inf
    %5979 = vmin.xlane.f32.xlu0 %v5978
    %v5980 = vpop.xlane.xlu0 %5979
    %v5981 = vsel %vm5506, %v5408, inf
    %5982 = vmin.xlane.f32.xlu0 %v5981
    %v5983 = vpop.xlane.xlu0 %5982
    %v5984 = vsel %vm5506, %v5409, inf
    %5985 = vmin.xlane.f32.xlu0 %v5984
    %v5986 = vpop.xlane.xlu0 %5985
    %v5987 = vsel %vm5506, %v5410, inf
    %5988 = vmin.xlane.f32.xlu0 %v5987
    %v5989 = vpop.xlane.xlu0 %5988
    %v5990 = vsel %vm5506, %v5411, inf
    %5991 = vmin.xlane.f32.xlu0 %v5990
    %v5992 = vpop.xlane.xlu0 %5991
    %v5993 = vsel %vm5506, %v5412, inf
    %5994 = vmin.xlane.f32.xlu0 %v5993
    %v5995 = vpop.xlane.xlu0 %5994
    %v5996 = vsel %vm5506, %v5413, inf
    %5997 = vmin.xlane.f32.xlu0 %v5996
    %v5998 = vpop.xlane.xlu0 %5997
    %v5999 = vsel %vm5506, %v5414, inf
    %6000 = vmin.xlane.f32.xlu0 %v5999
    %v6001 = vpop.xlane.xlu0 %6000
    %v6002 = vsel %vm5506, %v5415, inf
    %6003 = vmin.xlane.f32.xlu0 %v6002
    %v6004 = vpop.xlane.xlu0 %6003
    %v6005 = vsel %vm5506, %v5416, inf
    %6006 = vmin.xlane.f32.xlu0 %v6005
    %v6007 = vpop.xlane.xlu0 %6006
    %v6008 = vsel %vm5506, %v5417, inf
    %6009 = vmin.xlane.f32.xlu0 %v6008
    %v6010 = vpop.xlane.xlu0 %6009
    %v6011 = vsel %vm5506, %v5418, inf
    %6012 = vmin.xlane.f32.xlu0 %v6011
    %v6013 = vpop.xlane.xlu0 %6012
    %v6014 = vsel %vm5506, %v5419, inf
    %6015 = vmin.xlane.f32.xlu0 %v6014
    %v6016 = vpop.xlane.xlu0 %6015
    %v6017 = vsel %vm5506, %v5420, inf
    %6018 = vmin.xlane.f32.xlu0 %v6017
    %v6019 = vpop.xlane.xlu0 %6018
    %v6020 = vsel %vm5506, %v5421, inf
    %6021 = vmin.xlane.f32.xlu0 %v6020
    %v6022 = vpop.xlane.xlu0 %6021
    %v6023 = vsel %vm5506, %v5422, inf
    %6024 = vmin.xlane.f32.xlu0 %v6023
    %v6025 = vpop.xlane.xlu0 %6024
    %v6026 = vsel %vm5506, %v5423, inf
    %6027 = vmin.xlane.f32.xlu0 %v6026
    %v6028 = vpop.xlane.xlu0 %6027
    %v6029 = vsel %vm5506, %v5424, inf
    %6030 = vmin.xlane.f32.xlu0 %v6029
    %v6031 = vpop.xlane.xlu0 %6030
    %v6032 = vsel %vm5506, %v5425, inf
    %6033 = vmin.xlane.f32.xlu0 %v6032
    %v6034 = vpop.xlane.xlu0 %6033
    %v6035 = vsel %vm5506, %v5426, inf
    %6036 = vmin.xlane.f32.xlu0 %v6035
    %v6037 = vpop.xlane.xlu0 %6036
    %v6038 = vsel %vm5506, %v5427, inf
    %6039 = vmin.xlane.f32.xlu0 %v6038
    %v6040 = vpop.xlane.xlu0 %6039
    %v6041 = vsel %vm5506, %v5428, inf
    %6042 = vmin.xlane.f32.xlu0 %v6041
    %v6043 = vpop.xlane.xlu0 %6042
    %v6044 = vsel %vm5506, %v5429, inf
    %6045 = vmin.xlane.f32.xlu0 %v6044
    %v6046 = vpop.xlane.xlu0 %6045
    %v6047 = vsel %vm5506, %v5430, inf
    %6048 = vmin.xlane.f32.xlu0 %v6047
    %v6049 = vpop.xlane.xlu0 %6048
    %v6050 = vsel %vm5506, %v5431, inf
    %6051 = vmin.xlane.f32.xlu0 %v6050
    %v6052 = vpop.xlane.xlu0 %6051
    %v6053 = vsel %vm5506, %v5432, inf
    %6054 = vmin.xlane.f32.xlu0 %v6053
    %v6055 = vpop.xlane.xlu0 %6054
    %v6056 = vsel %vm5506, %v5433, inf
    %6057 = vmin.xlane.f32.xlu0 %v6056
    %v6058 = vpop.xlane.xlu0 %6057
    %v6059 = vsel %vm5506, %v5434, inf
    %6060 = vmin.xlane.f32.xlu0 %v6059
    %v6061 = vpop.xlane.xlu0 %6060
    %v6062 = vsel %vm5506, %v5435, inf
    %6063 = vmin.xlane.f32.xlu0 %v6062
    %v6064 = vpop.xlane.xlu0 %6063
    %v6065 = vsel %vm5506, %v5436, inf
    %6066 = vmin.xlane.f32.xlu0 %v6065
    %v6067 = vpop.xlane.xlu0 %6066
    %v6068 = vsel %vm5506, %v5437, inf
    %6069 = vmin.xlane.f32.xlu0 %v6068
    %v6070 = vpop.xlane.xlu0 %6069
    %v6071 = vsel %vm5506, %v5438, inf
    %6072 = vmin.xlane.f32.xlu0 %v6071
    %v6073 = vpop.xlane.xlu0 %6072
    %v6074 = vsel %vm5506, %v5439, inf
    %6075 = vmin.xlane.f32.xlu0 %v6074
    %v6076 = vpop.xlane.xlu0 %6075
    %v6077 = vsel %vm5506, %v5440, inf
    %6078 = vmin.xlane.f32.xlu0 %v6077
    %v6079 = vpop.xlane.xlu0 %6078
    %v6080 = vsel %vm5506, %v5441, inf
    %6081 = vmin.xlane.f32.xlu0 %v6080
    %v6082 = vpop.xlane.xlu0 %6081
    %v6083 = vsel %vm5506, %v5442, inf
    %6084 = vmin.xlane.f32.xlu0 %v6083
    %v6085 = vpop.xlane.xlu0 %6084
    %v6086 = vsel %vm5506, %v5443, inf
    %6087 = vmin.xlane.f32.xlu0 %v6086
    %v6088 = vpop.xlane.xlu0 %6087
    %v6089 = vsel %vm5506, %v5444, inf
    %6090 = vmin.xlane.f32.xlu0 %v6089
    %v6091 = vpop.xlane.xlu0 %6090
    %v6092 = vsel %vm5506, %v5445, inf
    %6093 = vmin.xlane.f32.xlu0 %v6092
    %v6094 = vpop.xlane.xlu0 %6093
    %v6095 = vsel %vm5506, %v5446, inf
    %6096 = vmin.xlane.f32.xlu0 %v6095
    %v6097 = vpop.xlane.xlu0 %6096
    %v6098 = vsel %vm5506, %v5447, inf
    %6099 = vmin.xlane.f32.xlu0 %v6098
    %v6100 = vpop.xlane.xlu0 %6099
    %v6101 = vsel %vm5506, %v5448, inf
    %6102 = vmin.xlane.f32.xlu0 %v6101
    %v6103 = vpop.xlane.xlu0 %6102
    %v6104 = vsel %vm5506, %v5449, inf
    %6105 = vmin.xlane.f32.xlu0 %v6104
    %v6106 = vpop.xlane.xlu0 %6105
    %v6107 = vsel %vm5506, %v5450, inf
    %6108 = vmin.xlane.f32.xlu0 %v6107
    %v6109 = vpop.xlane.xlu0 %6108
    %v6110 = vsel %vm5506, %v5451, inf
    %6111 = vmin.xlane.f32.xlu0 %v6110
    %v6112 = vpop.xlane.xlu0 %6111
    %v6113 = vsel %vm5506, %v5452, inf
    %6114 = vmin.xlane.f32.xlu0 %v6113
    %v6115 = vpop.xlane.xlu0 %6114
    %v6116 = vsel %vm5506, %v5453, inf
    %6117 = vmin.xlane.f32.xlu0 %v6116
    %v6118 = vpop.xlane.xlu0 %6117
    %v6119 = vsel %vm5506, %v5454, inf
    %6120 = vmin.xlane.f32.xlu0 %v6119
    %v6121 = vpop.xlane.xlu0 %6120
    %v6122 = vsel %vm5506, %v5455, inf
    %6123 = vmin.xlane.f32.xlu0 %v6122
    %v6124 = vpop.xlane.xlu0 %6123
    %v6125 = vsel %vm5506, %v5456, inf
    %6126 = vmin.xlane.f32.xlu0 %v6125
    %v6127 = vpop.xlane.xlu0 %6126
    %v6128 = vsel %vm5506, %v5457, inf
    %6129 = vmin.xlane.f32.xlu0 %v6128
    %v6130 = vpop.xlane.xlu0 %6129
    %v6131 = vsel %vm5506, %v5458, inf
    %6132 = vmin.xlane.f32.xlu0 %v6131
    %v6133 = vpop.xlane.xlu0 %6132
    %v6134 = vsel %vm5506, %v5459, inf
    %6135 = vmin.xlane.f32.xlu0 %v6134
    %v6136 = vpop.xlane.xlu0 %6135
    %v6137 = vsel %vm5506, %v5460, inf
    %6138 = vmin.xlane.f32.xlu0 %v6137
    %v6139 = vpop.xlane.xlu0 %6138
    %v6140 = vsel %vm5506, %v5461, inf
    %6141 = vmin.xlane.f32.xlu0 %v6140
    %v6142 = vpop.xlane.xlu0 %6141
    %v6143 = vsel %vm5506, %v5462, inf
    %6144 = vmin.xlane.f32.xlu0 %v6143
    %v6145 = vpop.xlane.xlu0 %6144
    %v6146 = vsel %vm5506, %v5463, inf
    %6147 = vmin.xlane.f32.xlu0 %v6146
    %v6148 = vpop.xlane.xlu0 %6147
    %v6149 = vsel %vm5506, %v5464, inf
    %6150 = vmin.xlane.f32.xlu0 %v6149
    %v6151 = vpop.xlane.xlu0 %6150
    %v6152 = vsel %vm5506, %v5465, inf
    %6153 = vmin.xlane.f32.xlu0 %v6152
    %v6154 = vpop.xlane.xlu0 %6153
    %v6155 = vsel %vm5506, %v5466, inf
    %6156 = vmin.xlane.f32.xlu0 %v6155
    %v6157 = vpop.xlane.xlu0 %6156
    %v6158 = vsel %vm5506, %v5467, inf
    %6159 = vmin.xlane.f32.xlu0 %v6158
    %v6160 = vpop.xlane.xlu0 %6159
    %v6161 = vsel %vm5506, %v5468, inf
    %6162 = vmin.xlane.f32.xlu0 %v6161
    %v6163 = vpop.xlane.xlu0 %6162
    %v6164 = vsel %vm5506, %v5469, inf
    %6165 = vmin.xlane.f32.xlu0 %v6164
    %v6166 = vpop.xlane.xlu0 %6165
    %v6167 = vsel %vm5506, %v5470, inf
    %6168 = vmin.xlane.f32.xlu0 %v6167
    %v6169 = vpop.xlane.xlu0 %6168
    %v6170 = vsel %vm5506, %v5471, inf
    %6171 = vmin.xlane.f32.xlu0 %v6170
    %v6172 = vpop.xlane.xlu0 %6171
    %v6173 = vsel %vm5506, %v5472, inf
    %6174 = vmin.xlane.f32.xlu0 %v6173
    %v6175 = vpop.xlane.xlu0 %6174
    %v6176 = vsel %vm5506, %v5473, inf
    %6177 = vmin.xlane.f32.xlu0 %v6176
    %v6178 = vpop.xlane.xlu0 %6177
    %v6179 = vsel %vm5506, %v5474, inf
    %6180 = vmin.xlane.f32.xlu0 %v6179
    %v6181 = vpop.xlane.xlu0 %6180
    %v6182 = vsel %vm5506, %v5475, inf
    %6183 = vmin.xlane.f32.xlu0 %v6182
    %v6184 = vpop.xlane.xlu0 %6183
    %v6185 = vsel %vm5506, %v5476, inf
    %6186 = vmin.xlane.f32.xlu0 %v6185
    %v6187 = vpop.xlane.xlu0 %6186
    %v6188 = vsel %vm5506, %v5477, inf
    %6189 = vmin.xlane.f32.xlu0 %v6188
    %v6190 = vpop.xlane.xlu0 %6189
    %v6191 = vsel %vm5506, %v5478, inf
    %6192 = vmin.xlane.f32.xlu0 %v6191
    %v6193 = vpop.xlane.xlu0 %6192
    %v6194 = vsel %vm5506, %v5479, inf
    %6195 = vmin.xlane.f32.xlu0 %v6194
    %v6196 = vpop.xlane.xlu0 %6195
    %v6197 = vsel %vm5506, %v5480, inf
    %6198 = vmin.xlane.f32.xlu0 %v6197
    %v6199 = vpop.xlane.xlu0 %6198
    %v6200 = vsel %vm5506, %v5481, inf
    %6201 = vmin.xlane.f32.xlu0 %v6200
    %v6202 = vpop.xlane.xlu0 %6201
    %v6203 = vsel %vm5506, %v5482, inf
    %6204 = vmin.xlane.f32.xlu0 %v6203
    %v6205 = vpop.xlane.xlu0 %6204
    %v6206 = vsel %vm5506, %v5483, inf
    %6207 = vmin.xlane.f32.xlu0 %v6206
    %v6208 = vpop.xlane.xlu0 %6207
    %v6209 = vsel %vm5506, %v5484, inf
    %6210 = vmin.xlane.f32.xlu0 %v6209
    %v6211 = vpop.xlane.xlu0 %6210
    %v6212 = vsel %vm5506, %v5485, inf
    %6213 = vmin.xlane.f32.xlu0 %v6212
    %v6214 = vpop.xlane.xlu0 %6213
    %v6215 = vsel %vm5506, %v5486, inf
    %6216 = vmin.xlane.f32.xlu0 %v6215
    %v6217 = vpop.xlane.xlu0 %6216
    %v6218 = vsel %vm5506, %v5487, inf
    %6219 = vmin.xlane.f32.xlu0 %v6218
    %v6220 = vpop.xlane.xlu0 %6219
    %v6221 = vsel %vm5506, %v5488, inf
    %6222 = vmin.xlane.f32.xlu0 %v6221
    %v6223 = vpop.xlane.xlu0 %6222
    %v6224 = vsel %vm5506, %v5489, inf
    %6225 = vmin.xlane.f32.xlu0 %v6224
    %v6226 = vpop.xlane.xlu0 %6225
    %v6227 = vsel %vm5506, %v5490, inf
    %6228 = vmin.xlane.f32.xlu0 %v6227
    %v6229 = vpop.xlane.xlu0 %6228
    %v6230 = vsel %vm5506, %v5491, inf
    %6231 = vmin.xlane.f32.xlu0 %v6230
    %v6232 = vpop.xlane.xlu0 %6231
    %v6233 = vsel %vm5506, %v5492, inf
    %6234 = vmin.xlane.f32.xlu0 %v6233
    %v6235 = vpop.xlane.xlu0 %6234
    %v6236 = vsel %vm5506, %v5493, inf
    %6237 = vmin.xlane.f32.xlu0 %v6236
    %v6238 = vpop.xlane.xlu0 %6237
    %v6239 = vsel %vm5506, %v5494, inf
    %6240 = vmin.xlane.f32.xlu0 %v6239
    %v6241 = vpop.xlane.xlu0 %6240
    %v6242 = vsel %vm5506, %v5495, inf
    %6243 = vmin.xlane.f32.xlu0 %v6242
    %v6244 = vpop.xlane.xlu0 %6243
    %v6245 = vsel %vm5506, %v5496, inf
    %6246 = vmin.xlane.f32.xlu0 %v6245
    %v6247 = vpop.xlane.xlu0 %6246
    %v6248 = vsel %vm5506, %v5497, inf
    %6249 = vmin.xlane.f32.xlu0 %v6248
    %v6250 = vpop.xlane.xlu0 %6249
    %v6251 = vsel %vm5506, %v5498, inf
    %6252 = vmin.xlane.f32.xlu0 %v6251
    %v6253 = vpop.xlane.xlu0 %6252
    %v6254 = vsel %vm5506, %v5499, inf
    %6255 = vmin.xlane.f32.xlu0 %v6254
    %v6256 = vpop.xlane.xlu0 %6255
    %v6257 = vsel %vm5506, %v5500, inf
    %6258 = vmin.xlane.f32.xlu0 %v6257
    %v6259 = vpop.xlane.xlu0 %6258
    %v6260 = vsel %vm5506, %v5501, inf
    %6261 = vmin.xlane.f32.xlu0 %v6260
    %v6262 = vpop.xlane.xlu0 %6261
    %v6263 = vsel %vm5506, %v5502, inf
    %6264 = vmin.xlane.f32.xlu0 %v6263
    %v6265 = vpop.xlane.xlu0 %6264
    %v6266 = vsel %vm5506, %v5503, inf
    %6267 = vmin.xlane.f32.xlu0 %v6266
    %v6268 = vpop.xlane.xlu0 %6267
    %v6269 = vsel %vm5506, %v5504, inf
    %6270 = vmin.xlane.f32.xlu0 %v6269
    %v6271 = vpop.xlane.xlu0 %6270
    %v6272 = vsel %vm5506, %v5505, inf
    %6273 = vmin.xlane.f32.xlu0 %v6272
    %v6274 = vpop.xlane.xlu0 %6273
    %v6275 = vmin.f32 %v5507, %v5510
    %v6276 = vmin.f32 %v6275, %v5513
    %v6277 = vmin.f32 %v6276, %v5516
    %v6278 = vmin.f32 %v6277, %v5519
    %v6279 = vmin.f32 %v6278, %v5522
    %v6280 = vmin.f32 %v6279, %v5525
    %v6281 = vmin.f32 %v6280, %v5528
    %v6282 = vmin.f32 %v6281, %v5531
    %v6283 = vmin.f32 %v6282, %v5534
    %v6284 = vmin.f32 %v6283, %v5537
    %v6285 = vmin.f32 %v6284, %v5540
    %v6286 = vmin.f32 %v6285, %v5543
    %v6287 = vmin.f32 %v6286, %v5546
    %v6288 = vmin.f32 %v6287, %v5549
    %v6289 = vmin.f32 %v6288, %v5552
    %v6290 = vrot.slane %v6289, 4
    %v6291 = vmin.f32 %v6289, %v6290
    %v6292 = vrot.slane %v6291, 2
    %v6293 = vmin.f32 %v6291, %v6292
    %v6294 = vrot.slane %v6293, 1
    %v6295 = vmin.f32 %v6293, %v6294
    %v6296 = vmin.f32 %v5555, %v5558
    %v6297 = vmin.f32 %v6296, %v5561
    %v6298 = vmin.f32 %v6297, %v5564
    %v6299 = vmin.f32 %v6298, %v5567
    %v6300 = vmin.f32 %v6299, %v5570
    %v6301 = vmin.f32 %v6300, %v5573
    %v6302 = vmin.f32 %v6301, %v5576
    %v6303 = vmin.f32 %v6302, %v5579
    %v6304 = vmin.f32 %v6303, %v5582
    %v6305 = vmin.f32 %v6304, %v5585
    %v6306 = vmin.f32 %v6305, %v5588
    %v6307 = vmin.f32 %v6306, %v5591
    %v6308 = vmin.f32 %v6307, %v5594
    %v6309 = vmin.f32 %v6308, %v5597
    %v6310 = vmin.f32 %v6309, %v5600
    %v6311 = vrot.slane %v6310, 4
    %v6312 = vmin.f32 %v6310, %v6311
    %v6313 = vrot.slane %v6312, 2
    %v6314 = vmin.f32 %v6312, %v6313
    %v6315 = vrot.slane %v6314, 1
    %v6316 = vmin.f32 %v6314, %v6315
    %v6317 = vmin.f32 %v5603, %v5606
    %v6318 = vmin.f32 %v6317, %v5609
    %v6319 = vmin.f32 %v6318, %v5612
    %v6320 = vmin.f32 %v6319, %v5615
    %v6321 = vmin.f32 %v6320, %v5618
    %v6322 = vmin.f32 %v6321, %v5621
    %v6323 = vmin.f32 %v6322, %v5624
    %v6324 = vmin.f32 %v6323, %v5627
    %v6325 = vmin.f32 %v6324, %v5630
    %v6326 = vmin.f32 %v6325, %v5633
    %v6327 = vmin.f32 %v6326, %v5636
    %v6328 = vmin.f32 %v6327, %v5639
    %v6329 = vmin.f32 %v6328, %v5642
    %v6330 = vmin.f32 %v6329, %v5645
    %v6331 = vmin.f32 %v6330, %v5648
    %v6332 = vrot.slane %v6331, 4
    %v6333 = vmin.f32 %v6331, %v6332
    %v6334 = vrot.slane %v6333, 2
    %v6335 = vmin.f32 %v6333, %v6334
    %v6336 = vrot.slane %v6335, 1
    %v6337 = vmin.f32 %v6335, %v6336
    %v6338 = vmin.f32 %v5651, %v5654
    %v6339 = vmin.f32 %v6338, %v5657
    %v6340 = vmin.f32 %v6339, %v5660
    %v6341 = vmin.f32 %v6340, %v5663
    %v6342 = vmin.f32 %v6341, %v5666
    %v6343 = vmin.f32 %v6342, %v5669
    %v6344 = vmin.f32 %v6343, %v5672
    %v6345 = vmin.f32 %v6344, %v5675
    %v6346 = vmin.f32 %v6345, %v5678
    %v6347 = vmin.f32 %v6346, %v5681
    %v6348 = vmin.f32 %v6347, %v5684
    %v6349 = vmin.f32 %v6348, %v5687
    %v6350 = vmin.f32 %v6349, %v5690
    %v6351 = vmin.f32 %v6350, %v5693
    %v6352 = vmin.f32 %v6351, %v5696
    %v6353 = vrot.slane %v6352, 4
    %v6354 = vmin.f32 %v6352, %v6353
    %v6355 = vrot.slane %v6354, 2
    %v6356 = vmin.f32 %v6354, %v6355
    %v6357 = vrot.slane %v6356, 1
    %v6358 = vmin.f32 %v6356, %v6357
    %v6359 = vmin.f32 %v5699, %v5702
    %v6360 = vmin.f32 %v6359, %v5705
    %v6361 = vmin.f32 %v6360, %v5708
    %v6362 = vmin.f32 %v6361, %v5711
    %v6363 = vmin.f32 %v6362, %v5714
    %v6364 = vmin.f32 %v6363, %v5717
    %v6365 = vmin.f32 %v6364, %v5720
    %v6366 = vmin.f32 %v6365, %v5723
    %v6367 = vmin.f32 %v6366, %v5726
    %v6368 = vmin.f32 %v6367, %v5729
    %v6369 = vmin.f32 %v6368, %v5732
    %v6370 = vmin.f32 %v6369, %v5735
    %v6371 = vmin.f32 %v6370, %v5738
    %v6372 = vmin.f32 %v6371, %v5741
    %v6373 = vmin.f32 %v6372, %v5744
    %v6374 = vrot.slane %v6373, 4
    %v6375 = vmin.f32 %v6373, %v6374
    %v6376 = vrot.slane %v6375, 2
    %v6377 = vmin.f32 %v6375, %v6376
    %v6378 = vrot.slane %v6377, 1
    %v6379 = vmin.f32 %v6377, %v6378
    %v6380 = vmin.f32 %v5747, %v5750
    %v6381 = vmin.f32 %v6380, %v5753
    %v6382 = vmin.f32 %v6381, %v5756
    %v6383 = vmin.f32 %v6382, %v5759
    %v6384 = vmin.f32 %v6383, %v5762
    %v6385 = vmin.f32 %v6384, %v5765
    %v6386 = vmin.f32 %v6385, %v5768
    %v6387 = vmin.f32 %v6386, %v5771
    %v6388 = vmin.f32 %v6387, %v5774
    %v6389 = vmin.f32 %v6388, %v5777
    %v6390 = vmin.f32 %v6389, %v5780
    %v6391 = vmin.f32 %v6390, %v5783
    %v6392 = vmin.f32 %v6391, %v5786
    %v6393 = vmin.f32 %v6392, %v5789
    %v6394 = vmin.f32 %v6393, %v5792
    %v6395 = vrot.slane %v6394, 4
    %v6396 = vmin.f32 %v6394, %v6395
    %v6397 = vrot.slane %v6396, 2
    %v6398 = vmin.f32 %v6396, %v6397
    %v6399 = vrot.slane %v6398, 1
    %v6400 = vmin.f32 %v6398, %v6399
    %v6401 = vmin.f32 %v5795, %v5798
    %v6402 = vmin.f32 %v6401, %v5801
    %v6403 = vmin.f32 %v6402, %v5804
    %v6404 = vmin.f32 %v6403, %v5807
    %v6405 = vmin.f32 %v6404, %v5810
    %v6406 = vmin.f32 %v6405, %v5813
    %v6407 = vmin.f32 %v6406, %v5816
    %v6408 = vmin.f32 %v6407, %v5819
    %v6409 = vmin.f32 %v6408, %v5822
    %v6410 = vmin.f32 %v6409, %v5825
    %v6411 = vmin.f32 %v6410, %v5828
    %v6412 = vmin.f32 %v6411, %v5831
    %v6413 = vmin.f32 %v6412, %v5834
    %v6414 = vmin.f32 %v6413, %v5837
    %v6415 = vmin.f32 %v6414, %v5840
    %v6416 = vrot.slane %v6415, 4
    %v6417 = vmin.f32 %v6415, %v6416
    %v6418 = vrot.slane %v6417, 2
    %v6419 = vmin.f32 %v6417, %v6418
    %v6420 = vrot.slane %v6419, 1
    %v6421 = vmin.f32 %v6419, %v6420
    %v6422 = vmin.f32 %v5843, %v5846
    %v6423 = vmin.f32 %v6422, %v5849
    %v6424 = vmin.f32 %v6423, %v5852
    %v6425 = vmin.f32 %v6424, %v5855
    %v6426 = vmin.f32 %v6425, %v5858
    %v6427 = vmin.f32 %v6426, %v5861
    %v6428 = vmin.f32 %v6427, %v5864
    %v6429 = vmin.f32 %v6428, %v5867
    %v6430 = vmin.f32 %v6429, %v5870
    %v6431 = vmin.f32 %v6430, %v5873
    %v6432 = vmin.f32 %v6431, %v5876
    %v6433 = vmin.f32 %v6432, %v5879
    %v6434 = vmin.f32 %v6433, %v5882
    %v6435 = vmin.f32 %v6434, %v5885
    %v6436 = vmin.f32 %v6435, %v5888
    %v6437 = vrot.slane %v6436, 4
    %v6438 = vmin.f32 %v6436, %v6437
    %v6439 = vrot.slane %v6438, 2
    %v6440 = vmin.f32 %v6438, %v6439
    %v6441 = vrot.slane %v6440, 1
    %v6442 = vmin.f32 %v6440, %v6441
    %v6443 = vmin.f32 %v5891, %v5894
    %v6444 = vmin.f32 %v6443, %v5897
    %v6445 = vmin.f32 %v6444, %v5900
    %v6446 = vmin.f32 %v6445, %v5903
    %v6447 = vmin.f32 %v6446, %v5906
    %v6448 = vmin.f32 %v6447, %v5909
    %v6449 = vmin.f32 %v6448, %v5912
    %v6450 = vmin.f32 %v6449, %v5915
    %v6451 = vmin.f32 %v6450, %v5918
    %v6452 = vmin.f32 %v6451, %v5921
    %v6453 = vmin.f32 %v6452, %v5924
    %v6454 = vmin.f32 %v6453, %v5927
    %v6455 = vmin.f32 %v6454, %v5930
    %v6456 = vmin.f32 %v6455, %v5933
    %v6457 = vmin.f32 %v6456, %v5936
    %v6458 = vrot.slane %v6457, 4
    %v6459 = vmin.f32 %v6457, %v6458
    %v6460 = vrot.slane %v6459, 2
    %v6461 = vmin.f32 %v6459, %v6460
    %v6462 = vrot.slane %v6461, 1
    %v6463 = vmin.f32 %v6461, %v6462
    %v6464 = vmin.f32 %v5939, %v5942
    %v6465 = vmin.f32 %v6464, %v5945
    %v6466 = vmin.f32 %v6465, %v5948
    %v6467 = vmin.f32 %v6466, %v5951
    %v6468 = vmin.f32 %v6467, %v5954
    %v6469 = vmin.f32 %v6468, %v5957
    %v6470 = vmin.f32 %v6469, %v5960
    %v6471 = vmin.f32 %v6470, %v5963
    %v6472 = vmin.f32 %v6471, %v5966
    %v6473 = vmin.f32 %v6472, %v5969
    %v6474 = vmin.f32 %v6473, %v5972
    %v6475 = vmin.f32 %v6474, %v5975
    %v6476 = vmin.f32 %v6475, %v5978
    %v6477 = vmin.f32 %v6476, %v5981
    %v6478 = vmin.f32 %v6477, %v5984
    %v6479 = vrot.slane %v6478, 4
    %v6480 = vmin.f32 %v6478, %v6479
    %v6481 = vrot.slane %v6480, 2
    %v6482 = vmin.f32 %v6480, %v6481
    %v6483 = vrot.slane %v6482, 1
    %v6484 = vmin.f32 %v6482, %v6483
    %v6485 = vmin.f32 %v5987, %v5990
    %v6486 = vmin.f32 %v6485, %v5993
    %v6487 = vmin.f32 %v6486, %v5996
    %v6488 = vmin.f32 %v6487, %v5999
    %v6489 = vmin.f32 %v6488, %v6002
    %v6490 = vmin.f32 %v6489, %v6005
    %v6491 = vmin.f32 %v6490, %v6008
    %v6492 = vmin.f32 %v6491, %v6011
    %v6493 = vmin.f32 %v6492, %v6014
    %v6494 = vmin.f32 %v6493, %v6017
    %v6495 = vmin.f32 %v6494, %v6020
    %v6496 = vmin.f32 %v6495, %v6023
    %v6497 = vmin.f32 %v6496, %v6026
    %v6498 = vmin.f32 %v6497, %v6029
    %v6499 = vmin.f32 %v6498, %v6032
    %v6500 = vrot.slane %v6499, 4
    %v6501 = vmin.f32 %v6499, %v6500
    %v6502 = vrot.slane %v6501, 2
    %v6503 = vmin.f32 %v6501, %v6502
    %v6504 = vrot.slane %v6503, 1
    %v6505 = vmin.f32 %v6503, %v6504
    %v6506 = vmin.f32 %v6035, %v6038
    %v6507 = vmin.f32 %v6506, %v6041
    %v6508 = vmin.f32 %v6507, %v6044
    %v6509 = vmin.f32 %v6508, %v6047
    %v6510 = vmin.f32 %v6509, %v6050
    %v6511 = vmin.f32 %v6510, %v6053
    %v6512 = vmin.f32 %v6511, %v6056
    %v6513 = vmin.f32 %v6512, %v6059
    %v6514 = vmin.f32 %v6513, %v6062
    %v6515 = vmin.f32 %v6514, %v6065
    %v6516 = vmin.f32 %v6515, %v6068
    %v6517 = vmin.f32 %v6516, %v6071
    %v6518 = vmin.f32 %v6517, %v6074
    %v6519 = vmin.f32 %v6518, %v6077
    %v6520 = vmin.f32 %v6519, %v6080
    %v6521 = vrot.slane %v6520, 4
    %v6522 = vmin.f32 %v6520, %v6521
    %v6523 = vrot.slane %v6522, 2
    %v6524 = vmin.f32 %v6522, %v6523
    %v6525 = vrot.slane %v6524, 1
    %v6526 = vmin.f32 %v6524, %v6525
    %v6527 = vmin.f32 %v6083, %v6086
    %v6528 = vmin.f32 %v6527, %v6089
    %v6529 = vmin.f32 %v6528, %v6092
    %v6530 = vmin.f32 %v6529, %v6095
    %v6531 = vmin.f32 %v6530, %v6098
    %v6532 = vmin.f32 %v6531, %v6101
    %v6533 = vmin.f32 %v6532, %v6104
    %v6534 = vmin.f32 %v6533, %v6107
    %v6535 = vmin.f32 %v6534, %v6110
    %v6536 = vmin.f32 %v6535, %v6113
    %v6537 = vmin.f32 %v6536, %v6116
    %v6538 = vmin.f32 %v6537, %v6119
    %v6539 = vmin.f32 %v6538, %v6122
    %v6540 = vmin.f32 %v6539, %v6125
    %v6541 = vmin.f32 %v6540, %v6128
    %v6542 = vrot.slane %v6541, 4
    %v6543 = vmin.f32 %v6541, %v6542
    %v6544 = vrot.slane %v6543, 2
    %v6545 = vmin.f32 %v6543, %v6544
    %v6546 = vrot.slane %v6545, 1
    %v6547 = vmin.f32 %v6545, %v6546
    %v6548 = vmin.f32 %v6131, %v6134
    %v6549 = vmin.f32 %v6548, %v6137
    %v6550 = vmin.f32 %v6549, %v6140
    %v6551 = vmin.f32 %v6550, %v6143
    %v6552 = vmin.f32 %v6551, %v6146
    %v6553 = vmin.f32 %v6552, %v6149
    %v6554 = vmin.f32 %v6553, %v6152
    %v6555 = vmin.f32 %v6554, %v6155
    %v6556 = vmin.f32 %v6555, %v6158
    %v6557 = vmin.f32 %v6556, %v6161
    %v6558 = vmin.f32 %v6557, %v6164
    %v6559 = vmin.f32 %v6558, %v6167
    %v6560 = vmin.f32 %v6559, %v6170
    %v6561 = vmin.f32 %v6560, %v6173
    %v6562 = vmin.f32 %v6561, %v6176
    %v6563 = vrot.slane %v6562, 4
    %v6564 = vmin.f32 %v6562, %v6563
    %v6565 = vrot.slane %v6564, 2
    %v6566 = vmin.f32 %v6564, %v6565
    %v6567 = vrot.slane %v6566, 1
    %v6568 = vmin.f32 %v6566, %v6567
    %v6569 = vmin.f32 %v6179, %v6182
    %v6570 = vmin.f32 %v6569, %v6185
    %v6571 = vmin.f32 %v6570, %v6188
    %v6572 = vmin.f32 %v6571, %v6191
    %v6573 = vmin.f32 %v6572, %v6194
    %v6574 = vmin.f32 %v6573, %v6197
    %v6575 = vmin.f32 %v6574, %v6200
    %v6576 = vmin.f32 %v6575, %v6203
    %v6577 = vmin.f32 %v6576, %v6206
    %v6578 = vmin.f32 %v6577, %v6209
    %v6579 = vmin.f32 %v6578, %v6212
    %v6580 = vmin.f32 %v6579, %v6215
    %v6581 = vmin.f32 %v6580, %v6218
    %v6582 = vmin.f32 %v6581, %v6221
    %v6583 = vmin.f32 %v6582, %v6224
    %v6584 = vrot.slane %v6583, 4
    %v6585 = vmin.f32 %v6583, %v6584
    %v6586 = vrot.slane %v6585, 2
    %v6587 = vmin.f32 %v6585, %v6586
    %v6588 = vrot.slane %v6587, 1
    %v6589 = vmin.f32 %v6587, %v6588
    %v6590 = vmin.f32 %v6227, %v6230
    %v6591 = vmin.f32 %v6590, %v6233
    %v6592 = vmin.f32 %v6591, %v6236
    %v6593 = vmin.f32 %v6592, %v6239
    %v6594 = vmin.f32 %v6593, %v6242
    %v6595 = vmin.f32 %v6594, %v6245
    %v6596 = vmin.f32 %v6595, %v6248
    %v6597 = vmin.f32 %v6596, %v6251
    %v6598 = vmin.f32 %v6597, %v6254
    %v6599 = vmin.f32 %v6598, %v6257
    %v6600 = vmin.f32 %v6599, %v6260
    %v6601 = vmin.f32 %v6600, %v6263
    %v6602 = vmin.f32 %v6601, %v6266
    %v6603 = vmin.f32 %v6602, %v6269
    %v6604 = vmin.f32 %v6603, %v6272
    %v6605 = vrot.slane %v6604, 4
    %v6606 = vmin.f32 %v6604, %v6605
    %v6607 = vrot.slane %v6606, 2
    %v6608 = vmin.f32 %v6606, %v6607
    %v6609 = vrot.slane %v6608, 1
    %v6610 = vmin.f32 %v6608, %v6609
    %v6867 = vlaneseq
    %v6868 = vand.u32 %v6867, 127
    %v6869 = vlaneseq
    %v6870 = vshrl.u32 %v6869, 7
    %v6871 = vsub.s32 %v6868, %v6870
    %v6872 = vrot.slane %v5509, %v6871
    %v6873 = vadd.s32 %v6868, 4294967288
    %v6874 = vlaneseq
    %v6875 = vshrl.u32 %v6874, 7
    %v6876 = vsub.s32 %v6873, %v6875
    %v6877 = vrot.slane %v5512, %v6876
    %vm6878 = vcmask 130112
    %v6879 = vsel %vm6878, %v6877, %v6872
    %v6880 = vadd.s32 %v6868, 4294967280
    %v6881 = vlaneseq
    %v6882 = vshrl.u32 %v6881, 7
    %v6883 = vsub.s32 %v6880, %v6882
    %v6884 = vrot.slane %v5515, %v6883
    %vm6885 = vcmask 195712
    %v6886 = vsel %vm6885, %v6884, %v6879
    %v6887 = vadd.s32 %v6868, 4294967272
    %v6888 = vlaneseq
    %v6889 = vshrl.u32 %v6888, 7
    %v6890 = vsub.s32 %v6887, %v6889
    %v6891 = vrot.slane %v5518, %v6890
    %vm6892 = vcmask 261312
    %v6893 = vsel %vm6892, %v6891, %v6886
    %v6894 = vadd.s32 %v6868, 4294967264
    %v6895 = vlaneseq
    %v6896 = vshrl.u32 %v6895, 7
    %v6897 = vsub.s32 %v6894, %v6896
    %v6898 = vrot.slane %v5521, %v6897
    %vm6899 = vcmask 326912
    %v6900 = vsel %vm6899, %v6898, %v6893
    %v6901 = vadd.s32 %v6868, 4294967256
    %v6902 = vlaneseq
    %v6903 = vshrl.u32 %v6902, 7
    %v6904 = vsub.s32 %v6901, %v6903
    %v6905 = vrot.slane %v5524, %v6904
    %vm6906 = vcmask 392512
    %v6907 = vsel %vm6906, %v6905, %v6900
    %v6908 = vadd.s32 %v6868, 4294967248
    %v6909 = vlaneseq
    %v6910 = vshrl.u32 %v6909, 7
    %v6911 = vsub.s32 %v6908, %v6910
    %v6912 = vrot.slane %v5527, %v6911
    %vm6913 = vcmask 458112
    %v6914 = vsel %vm6913, %v6912, %v6907
    %v6915 = vadd.s32 %v6868, 4294967240
    %v6916 = vlaneseq
    %v6917 = vshrl.u32 %v6916, 7
    %v6918 = vsub.s32 %v6915, %v6917
    %v6919 = vrot.slane %v5530, %v6918
    %vm6920 = vcmask 523712
    %v6921 = vsel %vm6920, %v6919, %v6914
    %v6922 = vadd.s32 %v6868, 4294967232
    %v6923 = vlaneseq
    %v6924 = vshrl.u32 %v6923, 7
    %v6925 = vsub.s32 %v6922, %v6924
    %v6926 = vrot.slane %v5533, %v6925
    %vm6927 = vcmask 589312
    %v6928 = vsel %vm6927, %v6926, %v6921
    %v6929 = vadd.s32 %v6868, 4294967224
    %v6930 = vlaneseq
    %v6931 = vshrl.u32 %v6930, 7
    %v6932 = vsub.s32 %v6929, %v6931
    %v6933 = vrot.slane %v5536, %v6932
    %vm6934 = vcmask 654912
    %v6935 = vsel %vm6934, %v6933, %v6928
    %v6936 = vadd.s32 %v6868, 4294967216
    %v6937 = vlaneseq
    %v6938 = vshrl.u32 %v6937, 7
    %v6939 = vsub.s32 %v6936, %v6938
    %v6940 = vrot.slane %v5539, %v6939
    %vm6941 = vcmask 720512
    %v6942 = vsel %vm6941, %v6940, %v6935
    %v6943 = vadd.s32 %v6868, 4294967208
    %v6944 = vlaneseq
    %v6945 = vshrl.u32 %v6944, 7
    %v6946 = vsub.s32 %v6943, %v6945
    %v6947 = vrot.slane %v5542, %v6946
    %vm6948 = vcmask 786112
    %v6949 = vsel %vm6948, %v6947, %v6942
    %v6950 = vadd.s32 %v6868, 4294967200
    %v6951 = vlaneseq
    %v6952 = vshrl.u32 %v6951, 7
    %v6953 = vsub.s32 %v6950, %v6952
    %v6954 = vrot.slane %v5545, %v6953
    %vm6955 = vcmask 851712
    %v6956 = vsel %vm6955, %v6954, %v6949
    %v6957 = vadd.s32 %v6868, 4294967192
    %v6958 = vlaneseq
    %v6959 = vshrl.u32 %v6958, 7
    %v6960 = vsub.s32 %v6957, %v6959
    %v6961 = vrot.slane %v5548, %v6960
    %vm6962 = vcmask 917312
    %v6963 = vsel %vm6962, %v6961, %v6956
    %v6964 = vadd.s32 %v6868, 4294967184
    %v6965 = vlaneseq
    %v6966 = vshrl.u32 %v6965, 7
    %v6967 = vsub.s32 %v6964, %v6966
    %v6968 = vrot.slane %v5551, %v6967
    %vm6969 = vcmask 982912
    %v6970 = vsel %vm6969, %v6968, %v6963
    %v6971 = vadd.s32 %v6868, 4294967176
    %v6972 = vlaneseq
    %v6973 = vshrl.u32 %v6972, 7
    %v6974 = vsub.s32 %v6971, %v6973
    %v6975 = vrot.slane %v5554, %v6974
    %vm6976 = vcmask 1048512
    %v6977 = vsel %vm6976, %v6975, %v6970
    %v6978 = vlaneseq
    %v6979 = vshrl.u32 %v6978, 7
    %v6980 = vsub.s32 %v6868, %v6979
    %v6981 = vrot.slane %v5557, %v6980
    %v6982 = vlaneseq
    %v6983 = vshrl.u32 %v6982, 7
    %v6984 = vsub.s32 %v6873, %v6983
    %v6985 = vrot.slane %v5560, %v6984
    %v6986 = vsel %vm6878, %v6985, %v6981
    %v6987 = vlaneseq
    %v6988 = vshrl.u32 %v6987, 7
    %v6989 = vsub.s32 %v6880, %v6988
    %v6990 = vrot.slane %v5563, %v6989
    %v6991 = vsel %vm6885, %v6990, %v6986
    %v6992 = vlaneseq
    %v6993 = vshrl.u32 %v6992, 7
    %v6994 = vsub.s32 %v6887, %v6993
    %v6995 = vrot.slane %v5566, %v6994
    %v6996 = vsel %vm6892, %v6995, %v6991
    %v6997 = vlaneseq
    %v6998 = vshrl.u32 %v6997, 7
    %v6999 = vsub.s32 %v6894, %v6998
    %v7000 = vrot.slane %v5569, %v6999
    %v7001 = vsel %vm6899, %v7000, %v6996
    %v7002 = vlaneseq
    %v7003 = vshrl.u32 %v7002, 7
    %v7004 = vsub.s32 %v6901, %v7003
    %v7005 = vrot.slane %v5572, %v7004
    %v7006 = vsel %vm6906, %v7005, %v7001
    %v7007 = vlaneseq
    %v7008 = vshrl.u32 %v7007, 7
    %v7009 = vsub.s32 %v6908, %v7008
    %v7010 = vrot.slane %v5575, %v7009
    %v7011 = vsel %vm6913, %v7010, %v7006
    %v7012 = vlaneseq
    %v7013 = vshrl.u32 %v7012, 7
    %v7014 = vsub.s32 %v6915, %v7013
    %v7015 = vrot.slane %v5578, %v7014
    %v7016 = vsel %vm6920, %v7015, %v7011
    %v7017 = vlaneseq
    %v7018 = vshrl.u32 %v7017, 7
    %v7019 = vsub.s32 %v6922, %v7018
    %v7020 = vrot.slane %v5581, %v7019
    %v7021 = vsel %vm6927, %v7020, %v7016
    %v7022 = vlaneseq
    %v7023 = vshrl.u32 %v7022, 7
    %v7024 = vsub.s32 %v6929, %v7023
    %v7025 = vrot.slane %v5584, %v7024
    %v7026 = vsel %vm6934, %v7025, %v7021
    %v7027 = vlaneseq
    %v7028 = vshrl.u32 %v7027, 7
    %v7029 = vsub.s32 %v6936, %v7028
    %v7030 = vrot.slane %v5587, %v7029
    %v7031 = vsel %vm6941, %v7030, %v7026
    %v7032 = vlaneseq
    %v7033 = vshrl.u32 %v7032, 7
    %v7034 = vsub.s32 %v6943, %v7033
    %v7035 = vrot.slane %v5590, %v7034
    %v7036 = vsel %vm6948, %v7035, %v7031
    %v7037 = vlaneseq
    %v7038 = vshrl.u32 %v7037, 7
    %v7039 = vsub.s32 %v6950, %v7038
    %v7040 = vrot.slane %v5593, %v7039
    %v7041 = vsel %vm6955, %v7040, %v7036
    %v7042 = vlaneseq
    %v7043 = vshrl.u32 %v7042, 7
    %v7044 = vsub.s32 %v6957, %v7043
    %v7045 = vrot.slane %v5596, %v7044
    %v7046 = vsel %vm6962, %v7045, %v7041
    %v7047 = vlaneseq
    %v7048 = vshrl.u32 %v7047, 7
    %v7049 = vsub.s32 %v6964, %v7048
    %v7050 = vrot.slane %v5599, %v7049
    %v7051 = vsel %vm6969, %v7050, %v7046
    %v7052 = vlaneseq
    %v7053 = vshrl.u32 %v7052, 7
    %v7054 = vsub.s32 %v6971, %v7053
    %v7055 = vrot.slane %v5602, %v7054
    %v7056 = vsel %vm6976, %v7055, %v7051
    %v7057 = vlaneseq
    %v7058 = vshrl.u32 %v7057, 7
    %v7059 = vsub.s32 %v6868, %v7058
    %v7060 = vrot.slane %v5605, %v7059
    %v7061 = vlaneseq
    %v7062 = vshrl.u32 %v7061, 7
    %v7063 = vsub.s32 %v6873, %v7062
    %v7064 = vrot.slane %v5608, %v7063
    %v7065 = vsel %vm6878, %v7064, %v7060
    %v7066 = vlaneseq
    %v7067 = vshrl.u32 %v7066, 7
    %v7068 = vsub.s32 %v6880, %v7067
    %v7069 = vrot.slane %v5611, %v7068
    %v7070 = vsel %vm6885, %v7069, %v7065
    %v7071 = vlaneseq
    %v7072 = vshrl.u32 %v7071, 7
    %v7073 = vsub.s32 %v6887, %v7072
    %v7074 = vrot.slane %v5614, %v7073
    %v7075 = vsel %vm6892, %v7074, %v7070
    %v7076 = vlaneseq
    %v7077 = vshrl.u32 %v7076, 7
    %v7078 = vsub.s32 %v6894, %v7077
    %v7079 = vrot.slane %v5617, %v7078
    %v7080 = vsel %vm6899, %v7079, %v7075
    %v7081 = vlaneseq
    %v7082 = vshrl.u32 %v7081, 7
    %v7083 = vsub.s32 %v6901, %v7082
    %v7084 = vrot.slane %v5620, %v7083
    %v7085 = vsel %vm6906, %v7084, %v7080
    %v7086 = vlaneseq
    %v7087 = vshrl.u32 %v7086, 7
    %v7088 = vsub.s32 %v6908, %v7087
    %v7089 = vrot.slane %v5623, %v7088
    %v7090 = vsel %vm6913, %v7089, %v7085
    %v7091 = vlaneseq
    %v7092 = vshrl.u32 %v7091, 7
    %v7093 = vsub.s32 %v6915, %v7092
    %v7094 = vrot.slane %v5626, %v7093
    %v7095 = vsel %vm6920, %v7094, %v7090
    %v7096 = vlaneseq
    %v7097 = vshrl.u32 %v7096, 7
    %v7098 = vsub.s32 %v6922, %v7097
    %v7099 = vrot.slane %v5629, %v7098
    %v7100 = vsel %vm6927, %v7099, %v7095
    %v7101 = vlaneseq
    %v7102 = vshrl.u32 %v7101, 7
    %v7103 = vsub.s32 %v6929, %v7102
    %v7104 = vrot.slane %v5632, %v7103
    %v7105 = vsel %vm6934, %v7104, %v7100
    %v7106 = vlaneseq
    %v7107 = vshrl.u32 %v7106, 7
    %v7108 = vsub.s32 %v6936, %v7107
    %v7109 = vrot.slane %v5635, %v7108
    %v7110 = vsel %vm6941, %v7109, %v7105
    %v7111 = vlaneseq
    %v7112 = vshrl.u32 %v7111, 7
    %v7113 = vsub.s32 %v6943, %v7112
    %v7114 = vrot.slane %v5638, %v7113
    %v7115 = vsel %vm6948, %v7114, %v7110
    %v7116 = vlaneseq
    %v7117 = vshrl.u32 %v7116, 7
    %v7118 = vsub.s32 %v6950, %v7117
    %v7119 = vrot.slane %v5641, %v7118
    %v7120 = vsel %vm6955, %v7119, %v7115
    %v7121 = vlaneseq
    %v7122 = vshrl.u32 %v7121, 7
    %v7123 = vsub.s32 %v6957, %v7122
    %v7124 = vrot.slane %v5644, %v7123
    %v7125 = vsel %vm6962, %v7124, %v7120
    %v7126 = vlaneseq
    %v7127 = vshrl.u32 %v7126, 7
    %v7128 = vsub.s32 %v6964, %v7127
    %v7129 = vrot.slane %v5647, %v7128
    %v7130 = vsel %vm6969, %v7129, %v7125
    %v7131 = vlaneseq
    %v7132 = vshrl.u32 %v7131, 7
    %v7133 = vsub.s32 %v6971, %v7132
    %v7134 = vrot.slane %v5650, %v7133
    %v7135 = vsel %vm6976, %v7134, %v7130
    %v7136 = vlaneseq
    %v7137 = vshrl.u32 %v7136, 7
    %v7138 = vsub.s32 %v6868, %v7137
    %v7139 = vrot.slane %v5653, %v7138
    %v7140 = vlaneseq
    %v7141 = vshrl.u32 %v7140, 7
    %v7142 = vsub.s32 %v6873, %v7141
    %v7143 = vrot.slane %v5656, %v7142
    %v7144 = vsel %vm6878, %v7143, %v7139
    %v7145 = vlaneseq
    %v7146 = vshrl.u32 %v7145, 7
    %v7147 = vsub.s32 %v6880, %v7146
    %v7148 = vrot.slane %v5659, %v7147
    %v7149 = vsel %vm6885, %v7148, %v7144
    %v7150 = vlaneseq
    %v7151 = vshrl.u32 %v7150, 7
    %v7152 = vsub.s32 %v6887, %v7151
    %v7153 = vrot.slane %v5662, %v7152
    %v7154 = vsel %vm6892, %v7153, %v7149
    %v7155 = vlaneseq
    %v7156 = vshrl.u32 %v7155, 7
    %v7157 = vsub.s32 %v6894, %v7156
    %v7158 = vrot.slane %v5665, %v7157
    %v7159 = vsel %vm6899, %v7158, %v7154
    %v7160 = vlaneseq
    %v7161 = vshrl.u32 %v7160, 7
    %v7162 = vsub.s32 %v6901, %v7161
    %v7163 = vrot.slane %v5668, %v7162
    %v7164 = vsel %vm6906, %v7163, %v7159
    %v7165 = vlaneseq
    %v7166 = vshrl.u32 %v7165, 7
    %v7167 = vsub.s32 %v6908, %v7166
    %v7168 = vrot.slane %v5671, %v7167
    %v7169 = vsel %vm6913, %v7168, %v7164
    %v7170 = vlaneseq
    %v7171 = vshrl.u32 %v7170, 7
    %v7172 = vsub.s32 %v6915, %v7171
    %v7173 = vrot.slane %v5674, %v7172
    %v7174 = vsel %vm6920, %v7173, %v7169
    %v7175 = vlaneseq
    %v7176 = vshrl.u32 %v7175, 7
    %v7177 = vsub.s32 %v6922, %v7176
    %v7178 = vrot.slane %v5677, %v7177
    %v7179 = vsel %vm6927, %v7178, %v7174
    %v7180 = vlaneseq
    %v7181 = vshrl.u32 %v7180, 7
    %v7182 = vsub.s32 %v6929, %v7181
    %v7183 = vrot.slane %v5680, %v7182
    %v7184 = vsel %vm6934, %v7183, %v7179
    %v7185 = vlaneseq
    %v7186 = vshrl.u32 %v7185, 7
    %v7187 = vsub.s32 %v6936, %v7186
    %v7188 = vrot.slane %v5683, %v7187
    %v7189 = vsel %vm6941, %v7188, %v7184
    %v7190 = vlaneseq
    %v7191 = vshrl.u32 %v7190, 7
    %v7192 = vsub.s32 %v6943, %v7191
    %v7193 = vrot.slane %v5686, %v7192
    %v7194 = vsel %vm6948, %v7193, %v7189
    %v7195 = vlaneseq
    %v7196 = vshrl.u32 %v7195, 7
    %v7197 = vsub.s32 %v6950, %v7196
    %v7198 = vrot.slane %v5689, %v7197
    %v7199 = vsel %vm6955, %v7198, %v7194
    %v7200 = vlaneseq
    %v7201 = vshrl.u32 %v7200, 7
    %v7202 = vsub.s32 %v6957, %v7201
    %v7203 = vrot.slane %v5692, %v7202
    %v7204 = vsel %vm6962, %v7203, %v7199
    %v7205 = vlaneseq
    %v7206 = vshrl.u32 %v7205, 7
    %v7207 = vsub.s32 %v6964, %v7206
    %v7208 = vrot.slane %v5695, %v7207
    %v7209 = vsel %vm6969, %v7208, %v7204
    %v7210 = vlaneseq
    %v7211 = vshrl.u32 %v7210, 7
    %v7212 = vsub.s32 %v6971, %v7211
    %v7213 = vrot.slane %v5698, %v7212
    %v7214 = vsel %vm6976, %v7213, %v7209
    %v7215 = vlaneseq
    %v7216 = vshrl.u32 %v7215, 7
    %v7217 = vsub.s32 %v6868, %v7216
    %v7218 = vrot.slane %v5701, %v7217
    %v7219 = vlaneseq
    %v7220 = vshrl.u32 %v7219, 7
    %v7221 = vsub.s32 %v6873, %v7220
    %v7222 = vrot.slane %v5704, %v7221
    %v7223 = vsel %vm6878, %v7222, %v7218
    %v7224 = vlaneseq
    %v7225 = vshrl.u32 %v7224, 7
    %v7226 = vsub.s32 %v6880, %v7225
    %v7227 = vrot.slane %v5707, %v7226
    %v7228 = vsel %vm6885, %v7227, %v7223
    %v7229 = vlaneseq
    %v7230 = vshrl.u32 %v7229, 7
    %v7231 = vsub.s32 %v6887, %v7230
    %v7232 = vrot.slane %v5710, %v7231
    %v7233 = vsel %vm6892, %v7232, %v7228
    %v7234 = vlaneseq
    %v7235 = vshrl.u32 %v7234, 7
    %v7236 = vsub.s32 %v6894, %v7235
    %v7237 = vrot.slane %v5713, %v7236
    %v7238 = vsel %vm6899, %v7237, %v7233
    %v7239 = vlaneseq
    %v7240 = vshrl.u32 %v7239, 7
    %v7241 = vsub.s32 %v6901, %v7240
    %v7242 = vrot.slane %v5716, %v7241
    %v7243 = vsel %vm6906, %v7242, %v7238
    %v7244 = vlaneseq
    %v7245 = vshrl.u32 %v7244, 7
    %v7246 = vsub.s32 %v6908, %v7245
    %v7247 = vrot.slane %v5719, %v7246
    %v7248 = vsel %vm6913, %v7247, %v7243
    %v7249 = vlaneseq
    %v7250 = vshrl.u32 %v7249, 7
    %v7251 = vsub.s32 %v6915, %v7250
    %v7252 = vrot.slane %v5722, %v7251
    %v7253 = vsel %vm6920, %v7252, %v7248
    %v7254 = vlaneseq
    %v7255 = vshrl.u32 %v7254, 7
    %v7256 = vsub.s32 %v6922, %v7255
    %v7257 = vrot.slane %v5725, %v7256
    %v7258 = vsel %vm6927, %v7257, %v7253
    %v7259 = vlaneseq
    %v7260 = vshrl.u32 %v7259, 7
    %v7261 = vsub.s32 %v6929, %v7260
    %v7262 = vrot.slane %v5728, %v7261
    %v7263 = vsel %vm6934, %v7262, %v7258
    %v7264 = vlaneseq
    %v7265 = vshrl.u32 %v7264, 7
    %v7266 = vsub.s32 %v6936, %v7265
    %v7267 = vrot.slane %v5731, %v7266
    %v7268 = vsel %vm6941, %v7267, %v7263
    %v7269 = vlaneseq
    %v7270 = vshrl.u32 %v7269, 7
    %v7271 = vsub.s32 %v6943, %v7270
    %v7272 = vrot.slane %v5734, %v7271
    %v7273 = vsel %vm6948, %v7272, %v7268
    %v7274 = vlaneseq
    %v7275 = vshrl.u32 %v7274, 7
    %v7276 = vsub.s32 %v6950, %v7275
    %v7277 = vrot.slane %v5737, %v7276
    %v7278 = vsel %vm6955, %v7277, %v7273
    %v7279 = vlaneseq
    %v7280 = vshrl.u32 %v7279, 7
    %v7281 = vsub.s32 %v6957, %v7280
    %v7282 = vrot.slane %v5740, %v7281
    %v7283 = vsel %vm6962, %v7282, %v7278
    %v7284 = vlaneseq
    %v7285 = vshrl.u32 %v7284, 7
    %v7286 = vsub.s32 %v6964, %v7285
    %v7287 = vrot.slane %v5743, %v7286
    %v7288 = vsel %vm6969, %v7287, %v7283
    %v7289 = vlaneseq
    %v7290 = vshrl.u32 %v7289, 7
    %v7291 = vsub.s32 %v6971, %v7290
    %v7292 = vrot.slane %v5746, %v7291
    %v7293 = vsel %vm6976, %v7292, %v7288
    %v7294 = vlaneseq
    %v7295 = vshrl.u32 %v7294, 7
    %v7296 = vsub.s32 %v6868, %v7295
    %v7297 = vrot.slane %v5749, %v7296
    %v7298 = vlaneseq
    %v7299 = vshrl.u32 %v7298, 7
    %v7300 = vsub.s32 %v6873, %v7299
    %v7301 = vrot.slane %v5752, %v7300
    %v7302 = vsel %vm6878, %v7301, %v7297
    %v7303 = vlaneseq
    %v7304 = vshrl.u32 %v7303, 7
    %v7305 = vsub.s32 %v6880, %v7304
    %v7306 = vrot.slane %v5755, %v7305
    %v7307 = vsel %vm6885, %v7306, %v7302
    %v7308 = vlaneseq
    %v7309 = vshrl.u32 %v7308, 7
    %v7310 = vsub.s32 %v6887, %v7309
    %v7311 = vrot.slane %v5758, %v7310
    %v7312 = vsel %vm6892, %v7311, %v7307
    %v7313 = vlaneseq
    %v7314 = vshrl.u32 %v7313, 7
    %v7315 = vsub.s32 %v6894, %v7314
    %v7316 = vrot.slane %v5761, %v7315
    %v7317 = vsel %vm6899, %v7316, %v7312
    %v7318 = vlaneseq
    %v7319 = vshrl.u32 %v7318, 7
    %v7320 = vsub.s32 %v6901, %v7319
    %v7321 = vrot.slane %v5764, %v7320
    %v7322 = vsel %vm6906, %v7321, %v7317
    %v7323 = vlaneseq
    %v7324 = vshrl.u32 %v7323, 7
    %v7325 = vsub.s32 %v6908, %v7324
    %v7326 = vrot.slane %v5767, %v7325
    %v7327 = vsel %vm6913, %v7326, %v7322
    %v7328 = vlaneseq
    %v7329 = vshrl.u32 %v7328, 7
    %v7330 = vsub.s32 %v6915, %v7329
    %v7331 = vrot.slane %v5770, %v7330
    %v7332 = vsel %vm6920, %v7331, %v7327
    %v7333 = vlaneseq
    %v7334 = vshrl.u32 %v7333, 7
    %v7335 = vsub.s32 %v6922, %v7334
    %v7336 = vrot.slane %v5773, %v7335
    %v7337 = vsel %vm6927, %v7336, %v7332
    %v7338 = vlaneseq
    %v7339 = vshrl.u32 %v7338, 7
    %v7340 = vsub.s32 %v6929, %v7339
    %v7341 = vrot.slane %v5776, %v7340
    %v7342 = vsel %vm6934, %v7341, %v7337
    %v7343 = vlaneseq
    %v7344 = vshrl.u32 %v7343, 7
    %v7345 = vsub.s32 %v6936, %v7344
    %v7346 = vrot.slane %v5779, %v7345
    %v7347 = vsel %vm6941, %v7346, %v7342
    %v7348 = vlaneseq
    %v7349 = vshrl.u32 %v7348, 7
    %v7350 = vsub.s32 %v6943, %v7349
    %v7351 = vrot.slane %v5782, %v7350
    %v7352 = vsel %vm6948, %v7351, %v7347
    %v7353 = vlaneseq
    %v7354 = vshrl.u32 %v7353, 7
    %v7355 = vsub.s32 %v6950, %v7354
    %v7356 = vrot.slane %v5785, %v7355
    %v7357 = vsel %vm6955, %v7356, %v7352
    %v7358 = vlaneseq
    %v7359 = vshrl.u32 %v7358, 7
    %v7360 = vsub.s32 %v6957, %v7359
    %v7361 = vrot.slane %v5788, %v7360
    %v7362 = vsel %vm6962, %v7361, %v7357
    %v7363 = vlaneseq
    %v7364 = vshrl.u32 %v7363, 7
    %v7365 = vsub.s32 %v6964, %v7364
    %v7366 = vrot.slane %v5791, %v7365
    %v7367 = vsel %vm6969, %v7366, %v7362
    %v7368 = vlaneseq
    %v7369 = vshrl.u32 %v7368, 7
    %v7370 = vsub.s32 %v6971, %v7369
    %v7371 = vrot.slane %v5794, %v7370
    %v7372 = vsel %vm6976, %v7371, %v7367
    %v7373 = vlaneseq
    %v7374 = vshrl.u32 %v7373, 7
    %v7375 = vsub.s32 %v6868, %v7374
    %v7376 = vrot.slane %v5797, %v7375
    %v7377 = vlaneseq
    %v7378 = vshrl.u32 %v7377, 7
    %v7379 = vsub.s32 %v6873, %v7378
    %v7380 = vrot.slane %v5800, %v7379
    %v7381 = vsel %vm6878, %v7380, %v7376
    %v7382 = vlaneseq
    %v7383 = vshrl.u32 %v7382, 7
    %v7384 = vsub.s32 %v6880, %v7383
    %v7385 = vrot.slane %v5803, %v7384
    %v7386 = vsel %vm6885, %v7385, %v7381
    %v7387 = vlaneseq
    %v7388 = vshrl.u32 %v7387, 7
    %v7389 = vsub.s32 %v6887, %v7388
    %v7390 = vrot.slane %v5806, %v7389
    %v7391 = vsel %vm6892, %v7390, %v7386
    %v7392 = vlaneseq
    %v7393 = vshrl.u32 %v7392, 7
    %v7394 = vsub.s32 %v6894, %v7393
    %v7395 = vrot.slane %v5809, %v7394
    %v7396 = vsel %vm6899, %v7395, %v7391
    %v7397 = vlaneseq
    %v7398 = vshrl.u32 %v7397, 7
    %v7399 = vsub.s32 %v6901, %v7398
    %v7400 = vrot.slane %v5812, %v7399
    %v7401 = vsel %vm6906, %v7400, %v7396
    %v7402 = vlaneseq
    %v7403 = vshrl.u32 %v7402, 7
    %v7404 = vsub.s32 %v6908, %v7403
    %v7405 = vrot.slane %v5815, %v7404
    %v7406 = vsel %vm6913, %v7405, %v7401
    %v7407 = vlaneseq
    %v7408 = vshrl.u32 %v7407, 7
    %v7409 = vsub.s32 %v6915, %v7408
    %v7410 = vrot.slane %v5818, %v7409
    %v7411 = vsel %vm6920, %v7410, %v7406
    %v7412 = vlaneseq
    %v7413 = vshrl.u32 %v7412, 7
    %v7414 = vsub.s32 %v6922, %v7413
    %v7415 = vrot.slane %v5821, %v7414
    %v7416 = vsel %vm6927, %v7415, %v7411
    %v7417 = vlaneseq
    %v7418 = vshrl.u32 %v7417, 7
    %v7419 = vsub.s32 %v6929, %v7418
    %v7420 = vrot.slane %v5824, %v7419
    %v7421 = vsel %vm6934, %v7420, %v7416
    %v7422 = vlaneseq
    %v7423 = vshrl.u32 %v7422, 7
    %v7424 = vsub.s32 %v6936, %v7423
    %v7425 = vrot.slane %v5827, %v7424
    %v7426 = vsel %vm6941, %v7425, %v7421
    %v7427 = vlaneseq
    %v7428 = vshrl.u32 %v7427, 7
    %v7429 = vsub.s32 %v6943, %v7428
    %v7430 = vrot.slane %v5830, %v7429
    %v7431 = vsel %vm6948, %v7430, %v7426
    %v7432 = vlaneseq
    %v7433 = vshrl.u32 %v7432, 7
    %v7434 = vsub.s32 %v6950, %v7433
    %v7435 = vrot.slane %v5833, %v7434
    %v7436 = vsel %vm6955, %v7435, %v7431
    %v7437 = vlaneseq
    %v7438 = vshrl.u32 %v7437, 7
    %v7439 = vsub.s32 %v6957, %v7438
    %v7440 = vrot.slane %v5836, %v7439
    %v7441 = vsel %vm6962, %v7440, %v7436
    %v7442 = vlaneseq
    %v7443 = vshrl.u32 %v7442, 7
    %v7444 = vsub.s32 %v6964, %v7443
    %v7445 = vrot.slane %v5839, %v7444
    %v7446 = vsel %vm6969, %v7445, %v7441
    %v7447 = vlaneseq
    %v7448 = vshrl.u32 %v7447, 7
    %v7449 = vsub.s32 %v6971, %v7448
    %v7450 = vrot.slane %v5842, %v7449
    %v7451 = vsel %vm6976, %v7450, %v7446
    %v7452 = vlaneseq
    %v7453 = vshrl.u32 %v7452, 7
    %v7454 = vsub.s32 %v6868, %v7453
    %v7455 = vrot.slane %v5845, %v7454
    %v7456 = vlaneseq
    %v7457 = vshrl.u32 %v7456, 7
    %v7458 = vsub.s32 %v6873, %v7457
    %v7459 = vrot.slane %v5848, %v7458
    %v7460 = vsel %vm6878, %v7459, %v7455
    %v7461 = vlaneseq
    %v7462 = vshrl.u32 %v7461, 7
    %v7463 = vsub.s32 %v6880, %v7462
    %v7464 = vrot.slane %v5851, %v7463
    %v7465 = vsel %vm6885, %v7464, %v7460
    %v7466 = vlaneseq
    %v7467 = vshrl.u32 %v7466, 7
    %v7468 = vsub.s32 %v6887, %v7467
    %v7469 = vrot.slane %v5854, %v7468
    %v7470 = vsel %vm6892, %v7469, %v7465
    %v7471 = vlaneseq
    %v7472 = vshrl.u32 %v7471, 7
    %v7473 = vsub.s32 %v6894, %v7472
    %v7474 = vrot.slane %v5857, %v7473
    %v7475 = vsel %vm6899, %v7474, %v7470
    %v7476 = vlaneseq
    %v7477 = vshrl.u32 %v7476, 7
    %v7478 = vsub.s32 %v6901, %v7477
    %v7479 = vrot.slane %v5860, %v7478
    %v7480 = vsel %vm6906, %v7479, %v7475
    %v7481 = vlaneseq
    %v7482 = vshrl.u32 %v7481, 7
    %v7483 = vsub.s32 %v6908, %v7482
    %v7484 = vrot.slane %v5863, %v7483
    %v7485 = vsel %vm6913, %v7484, %v7480
    %v7486 = vlaneseq
    %v7487 = vshrl.u32 %v7486, 7
    %v7488 = vsub.s32 %v6915, %v7487
    %v7489 = vrot.slane %v5866, %v7488
    %v7490 = vsel %vm6920, %v7489, %v7485
    %v7491 = vlaneseq
    %v7492 = vshrl.u32 %v7491, 7
    %v7493 = vsub.s32 %v6922, %v7492
    %v7494 = vrot.slane %v5869, %v7493
    %v7495 = vsel %vm6927, %v7494, %v7490
    %v7496 = vlaneseq
    %v7497 = vshrl.u32 %v7496, 7
    %v7498 = vsub.s32 %v6929, %v7497
    %v7499 = vrot.slane %v5872, %v7498
    %v7500 = vsel %vm6934, %v7499, %v7495
    %v7501 = vlaneseq
    %v7502 = vshrl.u32 %v7501, 7
    %v7503 = vsub.s32 %v6936, %v7502
    %v7504 = vrot.slane %v5875, %v7503
    %v7505 = vsel %vm6941, %v7504, %v7500
    %v7506 = vlaneseq
    %v7507 = vshrl.u32 %v7506, 7
    %v7508 = vsub.s32 %v6943, %v7507
    %v7509 = vrot.slane %v5878, %v7508
    %v7510 = vsel %vm6948, %v7509, %v7505
    %v7511 = vlaneseq
    %v7512 = vshrl.u32 %v7511, 7
    %v7513 = vsub.s32 %v6950, %v7512
    %v7514 = vrot.slane %v5881, %v7513
    %v7515 = vsel %vm6955, %v7514, %v7510
    %v7516 = vlaneseq
    %v7517 = vshrl.u32 %v7516, 7
    %v7518 = vsub.s32 %v6957, %v7517
    %v7519 = vrot.slane %v5884, %v7518
    %v7520 = vsel %vm6962, %v7519, %v7515
    %v7521 = vlaneseq
    %v7522 = vshrl.u32 %v7521, 7
    %v7523 = vsub.s32 %v6964, %v7522
    %v7524 = vrot.slane %v5887, %v7523
    %v7525 = vsel %vm6969, %v7524, %v7520
    %v7526 = vlaneseq
    %v7527 = vshrl.u32 %v7526, 7
    %v7528 = vsub.s32 %v6971, %v7527
    %v7529 = vrot.slane %v5890, %v7528
    %v7530 = vsel %vm6976, %v7529, %v7525
    %v7531 = vlaneseq
    %v7532 = vshrl.u32 %v7531, 7
    %v7533 = vsub.s32 %v6868, %v7532
    %v7534 = vrot.slane %v5893, %v7533
    %v7535 = vlaneseq
    %v7536 = vshrl.u32 %v7535, 7
    %v7537 = vsub.s32 %v6873, %v7536
    %v7538 = vrot.slane %v5896, %v7537
    %v7539 = vsel %vm6878, %v7538, %v7534
    %v7540 = vlaneseq
    %v7541 = vshrl.u32 %v7540, 7
    %v7542 = vsub.s32 %v6880, %v7541
    %v7543 = vrot.slane %v5899, %v7542
    %v7544 = vsel %vm6885, %v7543, %v7539
    %v7545 = vlaneseq
    %v7546 = vshrl.u32 %v7545, 7
    %v7547 = vsub.s32 %v6887, %v7546
    %v7548 = vrot.slane %v5902, %v7547
    %v7549 = vsel %vm6892, %v7548, %v7544
    %v7550 = vlaneseq
    %v7551 = vshrl.u32 %v7550, 7
    %v7552 = vsub.s32 %v6894, %v7551
    %v7553 = vrot.slane %v5905, %v7552
    %v7554 = vsel %vm6899, %v7553, %v7549
    %v7555 = vlaneseq
    %v7556 = vshrl.u32 %v7555, 7
    %v7557 = vsub.s32 %v6901, %v7556
    %v7558 = vrot.slane %v5908, %v7557
    %v7559 = vsel %vm6906, %v7558, %v7554
    %v7560 = vlaneseq
    %v7561 = vshrl.u32 %v7560, 7
    %v7562 = vsub.s32 %v6908, %v7561
    %v7563 = vrot.slane %v5911, %v7562
    %v7564 = vsel %vm6913, %v7563, %v7559
    %v7565 = vlaneseq
    %v7566 = vshrl.u32 %v7565, 7
    %v7567 = vsub.s32 %v6915, %v7566
    %v7568 = vrot.slane %v5914, %v7567
    %v7569 = vsel %vm6920, %v7568, %v7564
    %v7570 = vlaneseq
    %v7571 = vshrl.u32 %v7570, 7
    %v7572 = vsub.s32 %v6922, %v7571
    %v7573 = vrot.slane %v5917, %v7572
    %v7574 = vsel %vm6927, %v7573, %v7569
    %v7575 = vlaneseq
    %v7576 = vshrl.u32 %v7575, 7
    %v7577 = vsub.s32 %v6929, %v7576
    %v7578 = vrot.slane %v5920, %v7577
    %v7579 = vsel %vm6934, %v7578, %v7574
    %v7580 = vlaneseq
    %v7581 = vshrl.u32 %v7580, 7
    %v7582 = vsub.s32 %v6936, %v7581
    %v7583 = vrot.slane %v5923, %v7582
    %v7584 = vsel %vm6941, %v7583, %v7579
    %v7585 = vlaneseq
    %v7586 = vshrl.u32 %v7585, 7
    %v7587 = vsub.s32 %v6943, %v7586
    %v7588 = vrot.slane %v5926, %v7587
    %v7589 = vsel %vm6948, %v7588, %v7584
    %v7590 = vlaneseq
    %v7591 = vshrl.u32 %v7590, 7
    %v7592 = vsub.s32 %v6950, %v7591
    %v7593 = vrot.slane %v5929, %v7592
    %v7594 = vsel %vm6955, %v7593, %v7589
    %v7595 = vlaneseq
    %v7596 = vshrl.u32 %v7595, 7
    %v7597 = vsub.s32 %v6957, %v7596
    %v7598 = vrot.slane %v5932, %v7597
    %v7599 = vsel %vm6962, %v7598, %v7594
    %v7600 = vlaneseq
    %v7601 = vshrl.u32 %v7600, 7
    %v7602 = vsub.s32 %v6964, %v7601
    %v7603 = vrot.slane %v5935, %v7602
    %v7604 = vsel %vm6969, %v7603, %v7599
    %v7605 = vlaneseq
    %v7606 = vshrl.u32 %v7605, 7
    %v7607 = vsub.s32 %v6971, %v7606
    %v7608 = vrot.slane %v5938, %v7607
    %v7609 = vsel %vm6976, %v7608, %v7604
    %v7610 = vlaneseq
    %v7611 = vshrl.u32 %v7610, 7
    %v7612 = vsub.s32 %v6868, %v7611
    %v7613 = vrot.slane %v5941, %v7612
    %v7614 = vlaneseq
    %v7615 = vshrl.u32 %v7614, 7
    %v7616 = vsub.s32 %v6873, %v7615
    %v7617 = vrot.slane %v5944, %v7616
    %v7618 = vsel %vm6878, %v7617, %v7613
    %v7619 = vlaneseq
    %v7620 = vshrl.u32 %v7619, 7
    %v7621 = vsub.s32 %v6880, %v7620
    %v7622 = vrot.slane %v5947, %v7621
    %v7623 = vsel %vm6885, %v7622, %v7618
    %v7624 = vlaneseq
    %v7625 = vshrl.u32 %v7624, 7
    %v7626 = vsub.s32 %v6887, %v7625
    %v7627 = vrot.slane %v5950, %v7626
    %v7628 = vsel %vm6892, %v7627, %v7623
    %v7629 = vlaneseq
    %v7630 = vshrl.u32 %v7629, 7
    %v7631 = vsub.s32 %v6894, %v7630
    %v7632 = vrot.slane %v5953, %v7631
    %v7633 = vsel %vm6899, %v7632, %v7628
    %v7634 = vlaneseq
    %v7635 = vshrl.u32 %v7634, 7
    %v7636 = vsub.s32 %v6901, %v7635
    %v7637 = vrot.slane %v5956, %v7636
    %v7638 = vsel %vm6906, %v7637, %v7633
    %v7639 = vlaneseq
    %v7640 = vshrl.u32 %v7639, 7
    %v7641 = vsub.s32 %v6908, %v7640
    %v7642 = vrot.slane %v5959, %v7641
    %v7643 = vsel %vm6913, %v7642, %v7638
    %v7644 = vlaneseq
    %v7645 = vshrl.u32 %v7644, 7
    %v7646 = vsub.s32 %v6915, %v7645
    %v7647 = vrot.slane %v5962, %v7646
    %v7648 = vsel %vm6920, %v7647, %v7643
    %v7649 = vlaneseq
    %v7650 = vshrl.u32 %v7649, 7
    %v7651 = vsub.s32 %v6922, %v7650
    %v7652 = vrot.slane %v5965, %v7651
    %v7653 = vsel %vm6927, %v7652, %v7648
    %v7654 = vlaneseq
    %v7655 = vshrl.u32 %v7654, 7
    %v7656 = vsub.s32 %v6929, %v7655
    %v7657 = vrot.slane %v5968, %v7656
    %v7658 = vsel %vm6934, %v7657, %v7653
    %v7659 = vlaneseq
    %v7660 = vshrl.u32 %v7659, 7
    %v7661 = vsub.s32 %v6936, %v7660
    %v7662 = vrot.slane %v5971, %v7661
    %v7663 = vsel %vm6941, %v7662, %v7658
    %v7664 = vlaneseq
    %v7665 = vshrl.u32 %v7664, 7
    %v7666 = vsub.s32 %v6943, %v7665
    %v7667 = vrot.slane %v5974, %v7666
    %v7668 = vsel %vm6948, %v7667, %v7663
    %v7669 = vlaneseq
    %v7670 = vshrl.u32 %v7669, 7
    %v7671 = vsub.s32 %v6950, %v7670
    %v7672 = vrot.slane %v5977, %v7671
    %v7673 = vsel %vm6955, %v7672, %v7668
    %v7674 = vlaneseq
    %v7675 = vshrl.u32 %v7674, 7
    %v7676 = vsub.s32 %v6957, %v7675
    %v7677 = vrot.slane %v5980, %v7676
    %v7678 = vsel %vm6962, %v7677, %v7673
    %v7679 = vlaneseq
    %v7680 = vshrl.u32 %v7679, 7
    %v7681 = vsub.s32 %v6964, %v7680
    %v7682 = vrot.slane %v5983, %v7681
    %v7683 = vsel %vm6969, %v7682, %v7678
    %v7684 = vlaneseq
    %v7685 = vshrl.u32 %v7684, 7
    %v7686 = vsub.s32 %v6971, %v7685
    %v7687 = vrot.slane %v5986, %v7686
    %v7688 = vsel %vm6976, %v7687, %v7683
    %v7689 = vlaneseq
    %v7690 = vshrl.u32 %v7689, 7
    %v7691 = vsub.s32 %v6868, %v7690
    %v7692 = vrot.slane %v5989, %v7691
    %v7693 = vlaneseq
    %v7694 = vshrl.u32 %v7693, 7
    %v7695 = vsub.s32 %v6873, %v7694
    %v7696 = vrot.slane %v5992, %v7695
    %v7697 = vsel %vm6878, %v7696, %v7692
    %v7698 = vlaneseq
    %v7699 = vshrl.u32 %v7698, 7
    %v7700 = vsub.s32 %v6880, %v7699
    %v7701 = vrot.slane %v5995, %v7700
    %v7702 = vsel %vm6885, %v7701, %v7697
    %v7703 = vlaneseq
    %v7704 = vshrl.u32 %v7703, 7
    %v7705 = vsub.s32 %v6887, %v7704
    %v7706 = vrot.slane %v5998, %v7705
    %v7707 = vsel %vm6892, %v7706, %v7702
    %v7708 = vlaneseq
    %v7709 = vshrl.u32 %v7708, 7
    %v7710 = vsub.s32 %v6894, %v7709
    %v7711 = vrot.slane %v6001, %v7710
    %v7712 = vsel %vm6899, %v7711, %v7707
    %v7713 = vlaneseq
    %v7714 = vshrl.u32 %v7713, 7
    %v7715 = vsub.s32 %v6901, %v7714
    %v7716 = vrot.slane %v6004, %v7715
    %v7717 = vsel %vm6906, %v7716, %v7712
    %v7718 = vlaneseq
    %v7719 = vshrl.u32 %v7718, 7
    %v7720 = vsub.s32 %v6908, %v7719
    %v7721 = vrot.slane %v6007, %v7720
    %v7722 = vsel %vm6913, %v7721, %v7717
    %v7723 = vlaneseq
    %v7724 = vshrl.u32 %v7723, 7
    %v7725 = vsub.s32 %v6915, %v7724
    %v7726 = vrot.slane %v6010, %v7725
    %v7727 = vsel %vm6920, %v7726, %v7722
    %v7728 = vlaneseq
    %v7729 = vshrl.u32 %v7728, 7
    %v7730 = vsub.s32 %v6922, %v7729
    %v7731 = vrot.slane %v6013, %v7730
    %v7732 = vsel %vm6927, %v7731, %v7727
    %v7733 = vlaneseq
    %v7734 = vshrl.u32 %v7733, 7
    %v7735 = vsub.s32 %v6929, %v7734
    %v7736 = vrot.slane %v6016, %v7735
    %v7737 = vsel %vm6934, %v7736, %v7732
    %v7738 = vlaneseq
    %v7739 = vshrl.u32 %v7738, 7
    %v7740 = vsub.s32 %v6936, %v7739
    %v7741 = vrot.slane %v6019, %v7740
    %v7742 = vsel %vm6941, %v7741, %v7737
    %v7743 = vlaneseq
    %v7744 = vshrl.u32 %v7743, 7
    %v7745 = vsub.s32 %v6943, %v7744
    %v7746 = vrot.slane %v6022, %v7745
    %v7747 = vsel %vm6948, %v7746, %v7742
    %v7748 = vlaneseq
    %v7749 = vshrl.u32 %v7748, 7
    %v7750 = vsub.s32 %v6950, %v7749
    %v7751 = vrot.slane %v6025, %v7750
    %v7752 = vsel %vm6955, %v7751, %v7747
    %v7753 = vlaneseq
    %v7754 = vshrl.u32 %v7753, 7
    %v7755 = vsub.s32 %v6957, %v7754
    %v7756 = vrot.slane %v6028, %v7755
    %v7757 = vsel %vm6962, %v7756, %v7752
    %v7758 = vlaneseq
    %v7759 = vshrl.u32 %v7758, 7
    %v7760 = vsub.s32 %v6964, %v7759
    %v7761 = vrot.slane %v6031, %v7760
    %v7762 = vsel %vm6969, %v7761, %v7757
    %v7763 = vlaneseq
    %v7764 = vshrl.u32 %v7763, 7
    %v7765 = vsub.s32 %v6971, %v7764
    %v7766 = vrot.slane %v6034, %v7765
    %v7767 = vsel %vm6976, %v7766, %v7762
    %v7768 = vlaneseq
    %v7769 = vshrl.u32 %v7768, 7
    %v7770 = vsub.s32 %v6868, %v7769
    %v7771 = vrot.slane %v6037, %v7770
    %v7772 = vlaneseq
    %v7773 = vshrl.u32 %v7772, 7
    %v7774 = vsub.s32 %v6873, %v7773
    %v7775 = vrot.slane %v6040, %v7774
    %v7776 = vsel %vm6878, %v7775, %v7771
    %v7777 = vlaneseq
    %v7778 = vshrl.u32 %v7777, 7
    %v7779 = vsub.s32 %v6880, %v7778
    %v7780 = vrot.slane %v6043, %v7779
    %v7781 = vsel %vm6885, %v7780, %v7776
    %v7782 = vlaneseq
    %v7783 = vshrl.u32 %v7782, 7
    %v7784 = vsub.s32 %v6887, %v7783
    %v7785 = vrot.slane %v6046, %v7784
    %v7786 = vsel %vm6892, %v7785, %v7781
    %v7787 = vlaneseq
    %v7788 = vshrl.u32 %v7787, 7
    %v7789 = vsub.s32 %v6894, %v7788
    %v7790 = vrot.slane %v6049, %v7789
    %v7791 = vsel %vm6899, %v7790, %v7786
    %v7792 = vlaneseq
    %v7793 = vshrl.u32 %v7792, 7
    %v7794 = vsub.s32 %v6901, %v7793
    %v7795 = vrot.slane %v6052, %v7794
    %v7796 = vsel %vm6906, %v7795, %v7791
    %v7797 = vlaneseq
    %v7798 = vshrl.u32 %v7797, 7
    %v7799 = vsub.s32 %v6908, %v7798
    %v7800 = vrot.slane %v6055, %v7799
    %v7801 = vsel %vm6913, %v7800, %v7796
    %v7802 = vlaneseq
    %v7803 = vshrl.u32 %v7802, 7
    %v7804 = vsub.s32 %v6915, %v7803
    %v7805 = vrot.slane %v6058, %v7804
    %v7806 = vsel %vm6920, %v7805, %v7801
    %v7807 = vlaneseq
    %v7808 = vshrl.u32 %v7807, 7
    %v7809 = vsub.s32 %v6922, %v7808
    %v7810 = vrot.slane %v6061, %v7809
    %v7811 = vsel %vm6927, %v7810, %v7806
    %v7812 = vlaneseq
    %v7813 = vshrl.u32 %v7812, 7
    %v7814 = vsub.s32 %v6929, %v7813
    %v7815 = vrot.slane %v6064, %v7814
    %v7816 = vsel %vm6934, %v7815, %v7811
    %v7817 = vlaneseq
    %v7818 = vshrl.u32 %v7817, 7
    %v7819 = vsub.s32 %v6936, %v7818
    %v7820 = vrot.slane %v6067, %v7819
    %v7821 = vsel %vm6941, %v7820, %v7816
    %v7822 = vlaneseq
    %v7823 = vshrl.u32 %v7822, 7
    %v7824 = vsub.s32 %v6943, %v7823
    %v7825 = vrot.slane %v6070, %v7824
    %v7826 = vsel %vm6948, %v7825, %v7821
    %v7827 = vlaneseq
    %v7828 = vshrl.u32 %v7827, 7
    %v7829 = vsub.s32 %v6950, %v7828
    %v7830 = vrot.slane %v6073, %v7829
    %v7831 = vsel %vm6955, %v7830, %v7826
    %v7832 = vlaneseq
    %v7833 = vshrl.u32 %v7832, 7
    %v7834 = vsub.s32 %v6957, %v7833
    %v7835 = vrot.slane %v6076, %v7834
    %v7836 = vsel %vm6962, %v7835, %v7831
    %v7837 = vlaneseq
    %v7838 = vshrl.u32 %v7837, 7
    %v7839 = vsub.s32 %v6964, %v7838
    %v7840 = vrot.slane %v6079, %v7839
    %v7841 = vsel %vm6969, %v7840, %v7836
    %v7842 = vlaneseq
    %v7843 = vshrl.u32 %v7842, 7
    %v7844 = vsub.s32 %v6971, %v7843
    %v7845 = vrot.slane %v6082, %v7844
    %v7846 = vsel %vm6976, %v7845, %v7841
    %v7847 = vlaneseq
    %v7848 = vshrl.u32 %v7847, 7
    %v7849 = vsub.s32 %v6868, %v7848
    %v7850 = vrot.slane %v6085, %v7849
    %v7851 = vlaneseq
    %v7852 = vshrl.u32 %v7851, 7
    %v7853 = vsub.s32 %v6873, %v7852
    %v7854 = vrot.slane %v6088, %v7853
    %v7855 = vsel %vm6878, %v7854, %v7850
    %v7856 = vlaneseq
    %v7857 = vshrl.u32 %v7856, 7
    %v7858 = vsub.s32 %v6880, %v7857
    %v7859 = vrot.slane %v6091, %v7858
    %v7860 = vsel %vm6885, %v7859, %v7855
    %v7861 = vlaneseq
    %v7862 = vshrl.u32 %v7861, 7
    %v7863 = vsub.s32 %v6887, %v7862
    %v7864 = vrot.slane %v6094, %v7863
    %v7865 = vsel %vm6892, %v7864, %v7860
    %v7866 = vlaneseq
    %v7867 = vshrl.u32 %v7866, 7
    %v7868 = vsub.s32 %v6894, %v7867
    %v7869 = vrot.slane %v6097, %v7868
    %v7870 = vsel %vm6899, %v7869, %v7865
    %v7871 = vlaneseq
    %v7872 = vshrl.u32 %v7871, 7
    %v7873 = vsub.s32 %v6901, %v7872
    %v7874 = vrot.slane %v6100, %v7873
    %v7875 = vsel %vm6906, %v7874, %v7870
    %v7876 = vlaneseq
    %v7877 = vshrl.u32 %v7876, 7
    %v7878 = vsub.s32 %v6908, %v7877
    %v7879 = vrot.slane %v6103, %v7878
    %v7880 = vsel %vm6913, %v7879, %v7875
    %v7881 = vlaneseq
    %v7882 = vshrl.u32 %v7881, 7
    %v7883 = vsub.s32 %v6915, %v7882
    %v7884 = vrot.slane %v6106, %v7883
    %v7885 = vsel %vm6920, %v7884, %v7880
    %v7886 = vlaneseq
    %v7887 = vshrl.u32 %v7886, 7
    %v7888 = vsub.s32 %v6922, %v7887
    %v7889 = vrot.slane %v6109, %v7888
    %v7890 = vsel %vm6927, %v7889, %v7885
    %v7891 = vlaneseq
    %v7892 = vshrl.u32 %v7891, 7
    %v7893 = vsub.s32 %v6929, %v7892
    %v7894 = vrot.slane %v6112, %v7893
    %v7895 = vsel %vm6934, %v7894, %v7890
    %v7896 = vlaneseq
    %v7897 = vshrl.u32 %v7896, 7
    %v7898 = vsub.s32 %v6936, %v7897
    %v7899 = vrot.slane %v6115, %v7898
    %v7900 = vsel %vm6941, %v7899, %v7895
    %v7901 = vlaneseq
    %v7902 = vshrl.u32 %v7901, 7
    %v7903 = vsub.s32 %v6943, %v7902
    %v7904 = vrot.slane %v6118, %v7903
    %v7905 = vsel %vm6948, %v7904, %v7900
    %v7906 = vlaneseq
    %v7907 = vshrl.u32 %v7906, 7
    %v7908 = vsub.s32 %v6950, %v7907
    %v7909 = vrot.slane %v6121, %v7908
    %v7910 = vsel %vm6955, %v7909, %v7905
    %v7911 = vlaneseq
    %v7912 = vshrl.u32 %v7911, 7
    %v7913 = vsub.s32 %v6957, %v7912
    %v7914 = vrot.slane %v6124, %v7913
    %v7915 = vsel %vm6962, %v7914, %v7910
    %v7916 = vlaneseq
    %v7917 = vshrl.u32 %v7916, 7
    %v7918 = vsub.s32 %v6964, %v7917
    %v7919 = vrot.slane %v6127, %v7918
    %v7920 = vsel %vm6969, %v7919, %v7915
    %v7921 = vlaneseq
    %v7922 = vshrl.u32 %v7921, 7
    %v7923 = vsub.s32 %v6971, %v7922
    %v7924 = vrot.slane %v6130, %v7923
    %v7925 = vsel %vm6976, %v7924, %v7920
    %v7926 = vlaneseq
    %v7927 = vshrl.u32 %v7926, 7
    %v7928 = vsub.s32 %v6868, %v7927
    %v7929 = vrot.slane %v6133, %v7928
    %v7930 = vlaneseq
    %v7931 = vshrl.u32 %v7930, 7
    %v7932 = vsub.s32 %v6873, %v7931
    %v7933 = vrot.slane %v6136, %v7932
    %v7934 = vsel %vm6878, %v7933, %v7929
    %v7935 = vlaneseq
    %v7936 = vshrl.u32 %v7935, 7
    %v7937 = vsub.s32 %v6880, %v7936
    %v7938 = vrot.slane %v6139, %v7937
    %v7939 = vsel %vm6885, %v7938, %v7934
    %v7940 = vlaneseq
    %v7941 = vshrl.u32 %v7940, 7
    %v7942 = vsub.s32 %v6887, %v7941
    %v7943 = vrot.slane %v6142, %v7942
    %v7944 = vsel %vm6892, %v7943, %v7939
    %v7945 = vlaneseq
    %v7946 = vshrl.u32 %v7945, 7
    %v7947 = vsub.s32 %v6894, %v7946
    %v7948 = vrot.slane %v6145, %v7947
    %v7949 = vsel %vm6899, %v7948, %v7944
    %v7950 = vlaneseq
    %v7951 = vshrl.u32 %v7950, 7
    %v7952 = vsub.s32 %v6901, %v7951
    %v7953 = vrot.slane %v6148, %v7952
    %v7954 = vsel %vm6906, %v7953, %v7949
    %v7955 = vlaneseq
    %v7956 = vshrl.u32 %v7955, 7
    %v7957 = vsub.s32 %v6908, %v7956
    %v7958 = vrot.slane %v6151, %v7957
    %v7959 = vsel %vm6913, %v7958, %v7954
    %v7960 = vlaneseq
    %v7961 = vshrl.u32 %v7960, 7
    %v7962 = vsub.s32 %v6915, %v7961
    %v7963 = vrot.slane %v6154, %v7962
    %v7964 = vsel %vm6920, %v7963, %v7959
    %v7965 = vlaneseq
    %v7966 = vshrl.u32 %v7965, 7
    %v7967 = vsub.s32 %v6922, %v7966
    %v7968 = vrot.slane %v6157, %v7967
    %v7969 = vsel %vm6927, %v7968, %v7964
    %v7970 = vlaneseq
    %v7971 = vshrl.u32 %v7970, 7
    %v7972 = vsub.s32 %v6929, %v7971
    %v7973 = vrot.slane %v6160, %v7972
    %v7974 = vsel %vm6934, %v7973, %v7969
    %v7975 = vlaneseq
    %v7976 = vshrl.u32 %v7975, 7
    %v7977 = vsub.s32 %v6936, %v7976
    %v7978 = vrot.slane %v6163, %v7977
    %v7979 = vsel %vm6941, %v7978, %v7974
    %v7980 = vlaneseq
    %v7981 = vshrl.u32 %v7980, 7
    %v7982 = vsub.s32 %v6943, %v7981
    %v7983 = vrot.slane %v6166, %v7982
    %v7984 = vsel %vm6948, %v7983, %v7979
    %v7985 = vlaneseq
    %v7986 = vshrl.u32 %v7985, 7
    %v7987 = vsub.s32 %v6950, %v7986
    %v7988 = vrot.slane %v6169, %v7987
    %v7989 = vsel %vm6955, %v7988, %v7984
    %v7990 = vlaneseq
    %v7991 = vshrl.u32 %v7990, 7
    %v7992 = vsub.s32 %v6957, %v7991
    %v7993 = vrot.slane %v6172, %v7992
    %v7994 = vsel %vm6962, %v7993, %v7989
    %v7995 = vlaneseq
    %v7996 = vshrl.u32 %v7995, 7
    %v7997 = vsub.s32 %v6964, %v7996
    %v7998 = vrot.slane %v6175, %v7997
    %v7999 = vsel %vm6969, %v7998, %v7994
    %v8000 = vlaneseq
    %v8001 = vshrl.u32 %v8000, 7
    %v8002 = vsub.s32 %v6971, %v8001
    %v8003 = vrot.slane %v6178, %v8002
    %v8004 = vsel %vm6976, %v8003, %v7999
    %v8005 = vlaneseq
    %v8006 = vshrl.u32 %v8005, 7
    %v8007 = vsub.s32 %v6868, %v8006
    %v8008 = vrot.slane %v6181, %v8007
    %v8009 = vlaneseq
    %v8010 = vshrl.u32 %v8009, 7
    %v8011 = vsub.s32 %v6873, %v8010
    %v8012 = vrot.slane %v6184, %v8011
    %v8013 = vsel %vm6878, %v8012, %v8008
    %v8014 = vlaneseq
    %v8015 = vshrl.u32 %v8014, 7
    %v8016 = vsub.s32 %v6880, %v8015
    %v8017 = vrot.slane %v6187, %v8016
    %v8018 = vsel %vm6885, %v8017, %v8013
    %v8019 = vlaneseq
    %v8020 = vshrl.u32 %v8019, 7
    %v8021 = vsub.s32 %v6887, %v8020
    %v8022 = vrot.slane %v6190, %v8021
    %v8023 = vsel %vm6892, %v8022, %v8018
    %v8024 = vlaneseq
    %v8025 = vshrl.u32 %v8024, 7
    %v8026 = vsub.s32 %v6894, %v8025
    %v8027 = vrot.slane %v6193, %v8026
    %v8028 = vsel %vm6899, %v8027, %v8023
    %v8029 = vlaneseq
    %v8030 = vshrl.u32 %v8029, 7
    %v8031 = vsub.s32 %v6901, %v8030
    %v8032 = vrot.slane %v6196, %v8031
    %v8033 = vsel %vm6906, %v8032, %v8028
    %v8034 = vlaneseq
    %v8035 = vshrl.u32 %v8034, 7
    %v8036 = vsub.s32 %v6908, %v8035
    %v8037 = vrot.slane %v6199, %v8036
    %v8038 = vsel %vm6913, %v8037, %v8033
    %v8039 = vlaneseq
    %v8040 = vshrl.u32 %v8039, 7
    %v8041 = vsub.s32 %v6915, %v8040
    %v8042 = vrot.slane %v6202, %v8041
    %v8043 = vsel %vm6920, %v8042, %v8038
    %v8044 = vlaneseq
    %v8045 = vshrl.u32 %v8044, 7
    %v8046 = vsub.s32 %v6922, %v8045
    %v8047 = vrot.slane %v6205, %v8046
    %v8048 = vsel %vm6927, %v8047, %v8043
    %v8049 = vlaneseq
    %v8050 = vshrl.u32 %v8049, 7
    %v8051 = vsub.s32 %v6929, %v8050
    %v8052 = vrot.slane %v6208, %v8051
    %v8053 = vsel %vm6934, %v8052, %v8048
    %v8054 = vlaneseq
    %v8055 = vshrl.u32 %v8054, 7
    %v8056 = vsub.s32 %v6936, %v8055
    %v8057 = vrot.slane %v6211, %v8056
    %v8058 = vsel %vm6941, %v8057, %v8053
    %v8059 = vlaneseq
    %v8060 = vshrl.u32 %v8059, 7
    %v8061 = vsub.s32 %v6943, %v8060
    %v8062 = vrot.slane %v6214, %v8061
    %v8063 = vsel %vm6948, %v8062, %v8058
    %v8064 = vlaneseq
    %v8065 = vshrl.u32 %v8064, 7
    %v8066 = vsub.s32 %v6950, %v8065
    %v8067 = vrot.slane %v6217, %v8066
    %v8068 = vsel %vm6955, %v8067, %v8063
    %v8069 = vlaneseq
    %v8070 = vshrl.u32 %v8069, 7
    %v8071 = vsub.s32 %v6957, %v8070
    %v8072 = vrot.slane %v6220, %v8071
    %v8073 = vsel %vm6962, %v8072, %v8068
    %v8074 = vlaneseq
    %v8075 = vshrl.u32 %v8074, 7
    %v8076 = vsub.s32 %v6964, %v8075
    %v8077 = vrot.slane %v6223, %v8076
    %v8078 = vsel %vm6969, %v8077, %v8073
    %v8079 = vlaneseq
    %v8080 = vshrl.u32 %v8079, 7
    %v8081 = vsub.s32 %v6971, %v8080
    %v8082 = vrot.slane %v6226, %v8081
    %v8083 = vsel %vm6976, %v8082, %v8078
    %v8084 = vlaneseq
    %v8085 = vshrl.u32 %v8084, 7
    %v8086 = vsub.s32 %v6868, %v8085
    %v8087 = vrot.slane %v6229, %v8086
    %v8088 = vlaneseq
    %v8089 = vshrl.u32 %v8088, 7
    %v8090 = vsub.s32 %v6873, %v8089
    %v8091 = vrot.slane %v6232, %v8090
    %v8092 = vsel %vm6878, %v8091, %v8087
    %v8093 = vlaneseq
    %v8094 = vshrl.u32 %v8093, 7
    %v8095 = vsub.s32 %v6880, %v8094
    %v8096 = vrot.slane %v6235, %v8095
    %v8097 = vsel %vm6885, %v8096, %v8092
    %v8098 = vlaneseq
    %v8099 = vshrl.u32 %v8098, 7
    %v8100 = vsub.s32 %v6887, %v8099
    %v8101 = vrot.slane %v6238, %v8100
    %v8102 = vsel %vm6892, %v8101, %v8097
    %v8103 = vlaneseq
    %v8104 = vshrl.u32 %v8103, 7
    %v8105 = vsub.s32 %v6894, %v8104
    %v8106 = vrot.slane %v6241, %v8105
    %v8107 = vsel %vm6899, %v8106, %v8102
    %v8108 = vlaneseq
    %v8109 = vshrl.u32 %v8108, 7
    %v8110 = vsub.s32 %v6901, %v8109
    %v8111 = vrot.slane %v6244, %v8110
    %v8112 = vsel %vm6906, %v8111, %v8107
    %v8113 = vlaneseq
    %v8114 = vshrl.u32 %v8113, 7
    %v8115 = vsub.s32 %v6908, %v8114
    %v8116 = vrot.slane %v6247, %v8115
    %v8117 = vsel %vm6913, %v8116, %v8112
    %v8118 = vlaneseq
    %v8119 = vshrl.u32 %v8118, 7
    %v8120 = vsub.s32 %v6915, %v8119
    %v8121 = vrot.slane %v6250, %v8120
    %v8122 = vsel %vm6920, %v8121, %v8117
    %v8123 = vlaneseq
    %v8124 = vshrl.u32 %v8123, 7
    %v8125 = vsub.s32 %v6922, %v8124
    %v8126 = vrot.slane %v6253, %v8125
    %v8127 = vsel %vm6927, %v8126, %v8122
    %v8128 = vlaneseq
    %v8129 = vshrl.u32 %v8128, 7
    %v8130 = vsub.s32 %v6929, %v8129
    %v8131 = vrot.slane %v6256, %v8130
    %v8132 = vsel %vm6934, %v8131, %v8127
    %v8133 = vlaneseq
    %v8134 = vshrl.u32 %v8133, 7
    %v8135 = vsub.s32 %v6936, %v8134
    %v8136 = vrot.slane %v6259, %v8135
    %v8137 = vsel %vm6941, %v8136, %v8132
    %v8138 = vlaneseq
    %v8139 = vshrl.u32 %v8138, 7
    %v8140 = vsub.s32 %v6943, %v8139
    %v8141 = vrot.slane %v6262, %v8140
    %v8142 = vsel %vm6948, %v8141, %v8137
    %v8143 = vlaneseq
    %v8144 = vshrl.u32 %v8143, 7
    %v8145 = vsub.s32 %v6950, %v8144
    %v8146 = vrot.slane %v6265, %v8145
    %v8147 = vsel %vm6955, %v8146, %v8142
    %v8148 = vlaneseq
    %v8149 = vshrl.u32 %v8148, 7
    %v8150 = vsub.s32 %v6957, %v8149
    %v8151 = vrot.slane %v6268, %v8150
    %v8152 = vsel %vm6962, %v8151, %v8147
    %v8153 = vlaneseq
    %v8154 = vshrl.u32 %v8153, 7
    %v8155 = vsub.s32 %v6964, %v8154
    %v8156 = vrot.slane %v6271, %v8155
    %v8157 = vsel %vm6969, %v8156, %v8152
    %v8158 = vlaneseq
    %v8159 = vshrl.u32 %v8158, 7
    %v8160 = vsub.s32 %v6971, %v8159
    %v8161 = vrot.slane %v6274, %v8160
    %v8162 = vsel %vm6976, %v8161, %v8157
    %vm8163 = vcmask 1041409
    %v8164 = vsel %vm8163, %v7056, %v6977
    %vm8165 = vcmask 1042434
    %v8166 = vsel %vm8165, %v7135, %v8164
    %vm8167 = vcmask 1043459
    %v8168 = vsel %vm8167, %v7214, %v8166
    %vm8169 = vcmask 1044484
    %v8170 = vsel %vm8169, %v7293, %v8168
    %vm8171 = vcmask 1045509
    %v8172 = vsel %vm8171, %v7372, %v8170
    %vm8173 = vcmask 1046534
    %v8174 = vsel %vm8173, %v7451, %v8172
    %vm8175 = vcmask 1047559
    %v8176 = vsel %vm8175, %v7530, %v8174
    %v8177 = vsel %vm8163, %v7688, %v7609
    %v8178 = vsel %vm8165, %v7767, %v8177
    %v8179 = vsel %vm8167, %v7846, %v8178
    %v8180 = vsel %vm8169, %v7925, %v8179
    %v8181 = vsel %vm8171, %v8004, %v8180
    %v8182 = vsel %vm8173, %v8083, %v8181
    %v8183 = vsel %vm8175, %v8162, %v8182
    %8186 = vadd.xlane.f32.xlu0 %v8176
    %v8187 = vpop.xlane.xlu0 %8186
    %8188 = vadd.xlane.f32.xlu0 %v8183
    %v8189 = vpop.xlane.xlu0 %8188
    %v8190 = vmul.f32 %v8187, 0.0078125
    %v8191 = vmul.f32 %v8189, 0.0078125
    %v8208 = vsel %vm8163, %v6316, %v6295
    %v8209 = vsel %vm8165, %v6337, %v8208
    %v8210 = vsel %vm8167, %v6358, %v8209
    %v8211 = vsel %vm8169, %v6379, %v8210
    %v8212 = vsel %vm8171, %v6400, %v8211
    %v8213 = vsel %vm8173, %v6421, %v8212
    %v8214 = vsel %vm8175, %v6442, %v8213
    %v8215 = vsel %vm8163, %v6484, %v6463
    %v8216 = vsel %vm8165, %v6505, %v8215
    %v8217 = vsel %vm8167, %v6526, %v8216
    %v8218 = vsel %vm8169, %v6547, %v8217
    %v8219 = vsel %vm8171, %v6568, %v8218
    %v8220 = vsel %vm8173, %v6589, %v8219
    %v8221 = vsel %vm8175, %v6610, %v8220
    %v8224 = vsel %vm5506, %v8214, 0.0
    %8225 = vadd.xlane.f32.xlu0 %v8224
    %v8226 = vpop.xlane.xlu0 %8225
    %v8227 = vsel %vm5506, %v8221, 0.0
    %8228 = vadd.xlane.f32.xlu0 %v8227
    %v8229 = vpop.xlane.xlu0 %8228
    %v8230 = vmul.f32 %v8226, 0.010416667
    %v8231 = vmul.f32 %v8229, 0.010416667
    %v8232 = vadd.f32 %v8190, %v8230
    %v8233 = vadd.f32 %v8191, %v8231
    %v8234 = vld [vmem:[#allocation2] sm:$0x1]
    %v8235 = vadd.f32 %v8232, %v8233
    %v8236 = vrot.slane %v8235, 4
    %v8237 = vadd.f32 %v8235, %v8236
    %v8238 = vrot.slane %v8237, 2
    %v8239 = vadd.f32 %v8237, %v8238
    %v8240 = vrot.slane %v8239, 1
    %v8241 = vadd.f32 %v8239, %v8240
    %v8242 = vmul.f32 %v8241, 0.0625
    %v8243 = vadd.f32 %v8234, %v8242
    %vm8244 = vcmask 0
    %8245 = vst.msk [vmem:[#allocation2] sm:$0x1] %vm8244, %v8243
    // Predicated region
    $region14: #{chamfer_distance_l1.1} parent=1 // pred_check
      _
    $region15: #{chamfer_distance_l1.1} parent=1 // pred_check_branch
      %8247 = sbr.rel (0) target = $region17
    $region16: #{chamfer_distance_l1.1} parent=1 // pred_region
      %s8249 = ssub.s32 16, 16
      %8250 = vsyncadd [#allocation3], %s8249
      %s8252 = sshll.u32 [#allocation2], 4
      %s8253 = int_to_ptr.vmem [resolvable:$true] %s8252
      %8255 = dma.vmem_to_hbm [thread:$0]  %s8253, 16, %s2, [#allocation3]
    $region17: #{chamfer_distance_l1.1} parent=1 // pred_fallthru
      _
    // Predicated region
    $region18: #{chamfer_distance_l1.1} parent=1 // pred_check
      _
    $region19: #{chamfer_distance_l1.1} parent=1 // pred_check_branch
      %8257 = sbr.rel (0) target = $region21
    $region20: #{chamfer_distance_l1.1} parent=1 // pred_region
      %8258 = dma.done [#allocation3], 16
    $region21: #{chamfer_distance_l1.1} parent=1 // pred_fallthru
      _
    %8259 = vsyncpa [#allocation3], 1

</llo_original>
